<compile_context>
chip_gen: v6e
topology: v6e:2x2x1
jax: 0.10.0
libtpu: 0.0.40
codegen_flags: <defaults>
</compile_context>

<pallas_src>
import jax
import jax.numpy as jnp
from jax import lax
from jax.experimental import pallas as pl
from jax.experimental.pallas import tpu as pltpu


# ---------------------------- fused Pallas kernel ----------------------------

def _make_fused_kernel(N):
    # Geometry fixed by the module for a (32, 16) input.
    PH1, PW1 = 14, 6             # pooled conv1 spatial
    IMG1 = PH1 * PW1             # 84 rows / image in the pooled1 slab
    OH2 = 10                     # conv2 valid output height
    PH2, PW2 = 5, 2              # pooled conv2 spatial
    KH2, KW2 = 5, 3              # conv2 kernel
    C1, C2 = 64, 128             # conv channel counts
    R1 = N * IMG1                # valid pooled1 rows (= rows per conv1 pool-corner chunk)
    EXT = (N - 1) * IMG1 + OH2 * PW1   # "extended" conv2 rows (valid + wrap), 144 for N=2

    def kernel(p1_ref, w1_ref, b1_ref, w2_ref, b2_ref,
               wf1_ref, bf1_ref, wf2_ref, bf2_ref,
               o_ref, pooled1_ref, acc2_ref, fcin_ref):
        # ---- conv1 (im2col GEMM, batch folded) + maxpool2x2 + ReLU, fused ----
        # p1_ref: (4, R1, 128) bf16; chunk k = pool corner 2*di+dj, rows inside
        # a chunk are (n, ph, pw).  Pool = elementwise max over the 4 chunks.
        m = jnp.dot(p1_ref[0], w1_ref[...], preferred_element_type=jnp.float32)
        for k in range(1, 4):
            m = jnp.maximum(
                m, jnp.dot(p1_ref[k], w1_ref[...],
                           preferred_element_type=jnp.float32))
        pooled1 = jnp.maximum(m + b1_ref[...], 0.0)           # (R1, 64) f32
        pooled1_ref[pl.ds(0, R1), :] = pooled1
        pooled1_ref[pl.ds(R1, 8), :] = jnp.zeros((8, C1), jnp.float32)

        # ---- conv2 as 15 shifted GEMMs, f32 accumulation ----------------------
        # pooled1 rows are n*84 + h*6 + w; the slab for kernel tap (ki, kj) is
        # the contiguous row window [ki*6+kj, ki*6+kj+EXT).  Rows whose implied
        # w >= 4 (or that straddle two images) are wrap garbage and are never
        # read back by the pooling stage below.
        acc2 = jnp.zeros((EXT, C2), jnp.float32)
        for ki in range(KH2):
            for kj in range(KW2):
                idx = ki * KW2 + kj
                lhs = pooled1_ref[pl.ds(ki * PW1 + kj, EXT), :]
                acc2 = acc2 + jnp.dot(
                    lhs.astype(jnp.bfloat16),
                    w2_ref[pl.ds(idx * C1, C1), :],
                    preferred_element_type=jnp.float32)
        acc2_ref[...] = acc2 + b2_ref[...]

        # ---- maxpool2x2 + ReLU on conv2, scattered into the fc1 input row -----
        # Tiny: N*5*2 = 20 positions of 128 lanes each.  fc feature order is
        # (ph, pw, c); fc1's weight rows were pre-permuted to match.
        for n in range(N):
            for ph in range(PH2):
                for pw in range(PW2):
                    base = n * IMG1 + (2 * ph) * PW1 + 2 * pw
                    v = acc2_ref[pl.ds(base, 1), :]
                    v = jnp.maximum(v, acc2_ref[pl.ds(base + 1, 1), :])
                    v = jnp.maximum(v, acc2_ref[pl.ds(base + PW1, 1), :])
                    v = jnp.maximum(v, acc2_ref[pl.ds(base + PW1 + 1, 1), :])
                    col = (ph * PW2 + pw) * C2
                    fcin_ref[pl.ds(n, 1), pl.ds(col, C2)] = jnp.maximum(v, 0.0)

        # ---- fc1 + ReLU + fc2 --------------------------------------------------
        # N=2 wastes the MXU M dimension; unavoidable at batch 2 (see review).
        xfc = fcin_ref[pl.ds(0, N), :].astype(jnp.bfloat16)    # (N, 1280)
        h = jnp.dot(xfc, wf1_ref[...], preferred_element_type=jnp.float32)
        h = jnp.maximum(h + bf1_ref[...], 0.0)
        out = jnp.dot(h.astype(jnp.bfloat16), wf2_ref[...],
                      preferred_element_type=jnp.float32) + bf2_ref[...]
        o_ref[...] = out

    return kernel


# ---------------------------- host-side glue ----------------------------

def _conv1_patches_pooled_order(x):
    """x: (N, 3, 32, 16) NCHW -> conv1 im2col patches, pool-corner major.

    Output (4, N*84, 128) bf16.  Chunk k = 2*di+dj holds the patches for conv1
    output positions (2*ph+di, 2*pw+dj); rows inside a chunk are (n, ph, pw).
    K order is (kh, kw, cin) = 75, zero-padded to 128 lanes.
    """
    N = x.shape[0]
    cols = [x[:, :, i:i + 28, j:j + 12] for i in range(5) for j in range(5)]
    p = jnp.stack(cols, axis=1)                  # (N, 25, 3, 28, 12)
    p = p.transpose(0, 3, 4, 1, 2)               # (N, 28, 12, 25, 3)
    p = p.reshape(N, 14, 2, 6, 2, 75)            # oh -> (ph, di), ow -> (pw, dj)
    p = p.transpose(2, 4, 0, 1, 3, 5)            # (di, dj, N, ph, pw, 75)
    p = p.reshape(4, N * 84, 75)
    p = jnp.pad(p, ((0, 0), (0, 0), (0, 128 - 75)))
    return p.astype(jnp.bfloat16)


def prepare_params(params):
    """One-time (outside the jitted forward) repack of weights to kernel layouts."""
    w_c1, b_c1, w_c2, b_c2, w_f1, b_f1, w_f2, b_f2 = params
    # conv1: (64, 3, 5, 5) -> (K=75 -> 128, 64), K order = (kh, kw, cin)
    w1m = w_c1.transpose(2, 3, 1, 0).reshape(75, 64)
    w1m = jnp.pad(w1m, ((0, 128 - 75), (0, 0))).astype(jnp.bfloat16)
    # conv2: (128, 64, 5, 3) -> (15*64, 128), row = (kh*3+kw)*64 + cin
    w2m = w_c2.transpose(2, 3, 1, 0).reshape(960, 128).astype(jnp.bfloat16)
    # fc1: (512, 1280) -> (1280, 512); torch flatten order is (c, h, w), the
    # kernel produces (h, w, c), so permute the rows accordingly.
    wf1 = w_f1.T.reshape(128, 5, 2, 512).transpose(1, 2, 0, 3)
    wf1 = wf1.reshape(1280, 512).astype(jnp.bfloat16)
    wf2 = w_f2.T.astype(jnp.bfloat16)
    return (w1m, b_c1.astype(jnp.float32).reshape(1, 64),
            w2m, b_c2.astype(jnp.float32).reshape(1, 128),
            wf1, b_f1.astype(jnp.float32).reshape(1, 512),
            wf2, b_f2.astype(jnp.float32).reshape(1, 256))


def cifarnet_forward(x, prepped):
    """x: (N, 3, 32, 16) f32 NCHW -> (N, 256) f32."""
    (w1m, b1, w2m, b2, wf1, bf1, wf2, bf2) = prepped
    N = x.shape[0]
    R1 = N * 84
    EXT = (N - 1) * 84 + 60
    p1 = _conv1_patches_pooled_order(x)          # (4, R1, 128) bf16

    return pl.pallas_call(
        _make_fused_kernel(N),
        out_shape=jax.ShapeDtypeStruct((N, 256), jnp.float32),
        grid=(1,),
        in_specs=[
            pl.BlockSpec((4, R1, 128), lambda i: (0, 0, 0)),   # conv1 patches
            pl.BlockSpec((128, 64), lambda i: (0, 0)),         # conv1 weights
            pl.BlockSpec((1, 64), lambda i: (0, 0)),           # conv1 bias
            pl.BlockSpec((960, 128), lambda i: (0, 0)),        # conv2 weights
            pl.BlockSpec((1, 128), lambda i: (0, 0)),          # conv2 bias
            pl.BlockSpec((1280, 512), lambda i: (0, 0)),       # fc1 weights
            pl.BlockSpec((1, 512), lambda i: (0, 0)),          # fc1 bias
            pl.BlockSpec((512, 256), lambda i: (0, 0)),        # fc2 weights
            pl.BlockSpec((1, 256), lambda i: (0, 0)),          # fc2 bias
        ],
        out_specs=pl.BlockSpec((N, 256), lambda i: (0, 0)),
        scratch_shapes=[
            pltpu.VMEM((R1 + 8, 64), jnp.float32),    # pooled conv1 feature map
            pltpu.VMEM((EXT, 128), jnp.float32),      # conv2 accumulator
            pltpu.VMEM((max(8, N), 1280), jnp.float32),  # flattened fc1 input
        ],
        compiler_params=pltpu.CompilerParams(
            dimension_semantics=("arbitrary",)),
    )(p1, w1m, b1, w2m, b2, wf1, bf1, wf2, bf2)


# ---------------------------- pure-JAX reference ----------------------------

def reference_forward(x, params):
    (w_c1, b_c1, w_c2, b_c2, w_f1, b_f1, w_f2, b_f2) = params
    dn = ("NCHW", "OIHW", "NCHW")
    hp = lax.Precision.HIGHEST

    def pool(v):
        return lax.reduce_window(v, -jnp.inf, lax.max,
                                 (1, 1, 2, 2), (1, 1, 2, 2), "VALID")

    y = lax.conv_general_dilated(x, w_c1, (1, 1), "VALID",
                                 dimension_numbers=dn, precision=hp)
    y = jnp.maximum(pool(y + b_c1[None, :, None, None]), 0.0)
    y = lax.conv_general_dilated(y, w_c2, (1, 1), "VALID",
                                 dimension_numbers=dn, precision=hp)
    y = jnp.maximum(pool(y + b_c2[None, :, None, None]), 0.0)
    y = y.reshape(y.shape[0], -1)
    y = jnp.maximum(jnp.dot(y, w_f1.T, precision=hp) + b_f1, 0.0)
    return jnp.dot(y, w_f2.T, precision=hp) + b_f2


# ---------------------------- main ----------------------------

def _uniform(key, shape, fan_in):
    bound = 1.0 / (fan_in ** 0.5)
    return jax.random.uniform(key, shape, jnp.float32, -bound, bound)


if __name__ == "__main__":
    key = jax.random.PRNGKey(0)
    keys = jax.random.split(key, 9)

    # deterministic torch-like uniform(+-1/sqrt(fan_in)) init
    params = (
        _uniform(keys[0], (64, 3, 5, 5), 3 * 5 * 5),     # conv1.weight
        _uniform(keys[1], (64,), 3 * 5 * 5),             # conv1.bias
        _uniform(keys[2], (128, 64, 5, 3), 64 * 5 * 3),  # conv2.weight
        _uniform(keys[3], (128,), 64 * 5 * 3),           # conv2.bias
        _uniform(keys[4], (512, 1280), 1280),            # fc1.weight
        _uniform(keys[5], (512,), 1280),                 # fc1.bias
        _uniform(keys[6], (256, 512), 512),              # fc2.weight
        _uniform(keys[7], (256,), 512),                  # fc2.bias
    )

    # fc1's 128*5*2 fan-in implies a 32x16 spatial input with 3 channels
    x = jax.random.normal(keys[8], (2, 3, 32, 16), jnp.float32)

    prepped = prepare_params(params)                     # one-time repack (outside jit)

    out = jax.jit(cifarnet_forward)(x, prepped)
    out = jax.block_until_ready(out)
    assert out.shape == (2, 256), out.shape

    ref = jax.block_until_ready(reference_forward(x, params))
    err = float(jnp.max(jnp.abs(out - ref)))
    scale = float(jnp.max(jnp.abs(ref))) + 1e-6
    assert err <= 5e-2 * scale, f"mismatch: max_abs_err={err}, scale={scale}"

    print("KERNEL_OK")
</pallas_src>

<mosaic_0001>
module attributes {stable_mosaic.version = 11 : i64} {
  func.func @kernel(%arg0: i32, %arg1: memref<4x168x128xbf16, #tpu.memory_space<vmem>>, %arg2: memref<128x64xbf16, #tpu.memory_space<vmem>>, %arg3: memref<1x64xf32, #tpu.memory_space<vmem>>, %arg4: memref<960x128xbf16, #tpu.memory_space<vmem>>, %arg5: memref<1x128xf32, #tpu.memory_space<vmem>>, %arg6: memref<1280x512xbf16, #tpu.memory_space<vmem>>, %arg7: memref<1x512xf32, #tpu.memory_space<vmem>>, %arg8: memref<512x256xbf16, #tpu.memory_space<vmem>>, %arg9: memref<1x256xf32, #tpu.memory_space<vmem>>, %arg10: memref<2x256xf32, #tpu.memory_space<vmem>>, %arg11: memref<176x64xf32, #tpu.memory_space<vmem>>, %arg12: memref<144x128xf32, #tpu.memory_space<vmem>>, %arg13: memref<8x1280xf32, #tpu.memory_space<vmem>>) attributes {dimension_semantics = [#tpu.dimension_semantics<arbitrary>], iteration_bounds = array<i64: 1>, scalar_prefetch = 0 : i64, scratch_operands = 3 : i64, tpu.core_type = #tpu.core_type<tc>, window_params = [{pipeline_mode = #tpu.pipeline_mode<synchronous>, transform_indices = @transform_0, window_bounds = array<i64: 4, 168, 128>}, {pipeline_mode = #tpu.pipeline_mode<synchronous>, transform_indices = @transform_1, window_bounds = array<i64: 128, 64>}, {pipeline_mode = #tpu.pipeline_mode<synchronous>, transform_indices = @transform_2, window_bounds = array<i64: 1, 64>}, {pipeline_mode = #tpu.pipeline_mode<synchronous>, transform_indices = @transform_3, window_bounds = array<i64: 960, 128>}, {pipeline_mode = #tpu.pipeline_mode<synchronous>, transform_indices = @transform_4, window_bounds = array<i64: 1, 128>}, {pipeline_mode = #tpu.pipeline_mode<synchronous>, transform_indices = @transform_5, window_bounds = array<i64: 1280, 512>}, {pipeline_mode = #tpu.pipeline_mode<synchronous>, transform_indices = @transform_6, window_bounds = array<i64: 1, 512>}, {pipeline_mode = #tpu.pipeline_mode<synchronous>, transform_indices = @transform_7, window_bounds = array<i64: 512, 256>}, {pipeline_mode = #tpu.pipeline_mode<synchronous>, transform_indices = @transform_8, window_bounds = array<i64: 1, 256>}, {pipeline_mode = #tpu.pipeline_mode<synchronous>, transform_indices = @transform_9, window_bounds = array<i64: 2, 256>}]} {
    %c0 = arith.constant 0 : index
    %c0_0 = arith.constant 0 : index
    %c0_1 = arith.constant 0 : index
    %0 = vector.load %arg1[%c0, %c0_0, %c0_1] : memref<4x168x128xbf16, #tpu.memory_space<vmem>>, vector<1x168x128xbf16>
    %1 = vector.shape_cast %0 : vector<1x168x128xbf16> to vector<168x128xbf16>
    %c0_2 = arith.constant 0 : index
    %c0_3 = arith.constant 0 : index
    %2 = vector.load %arg2[%c0_2, %c0_3] : memref<128x64xbf16, #tpu.memory_space<vmem>>, vector<128x64xbf16>
    %cst = arith.constant dense<0.000000e+00> : vector<168x64xf32>
    %3 = tpu.matmul %1, %2, %cst {dimension_numbers = #tpu.dot_dimension_numbers<[1], [0], [0], [1], [0, 0, 1, 1], [], []>} : vector<168x128xbf16>, vector<128x64xbf16>, vector<168x64xf32> -> vector<168x64xf32>
    %c1 = arith.constant 1 : index
    %c0_4 = arith.constant 0 : index
    %c0_5 = arith.constant 0 : index
    %4 = vector.load %arg1[%c1, %c0_4, %c0_5] : memref<4x168x128xbf16, #tpu.memory_space<vmem>>, vector<1x168x128xbf16>
    %5 = vector.shape_cast %4 : vector<1x168x128xbf16> to vector<168x128xbf16>
    %c0_6 = arith.constant 0 : index
    %c0_7 = arith.constant 0 : index
    %6 = vector.load %arg2[%c0_6, %c0_7] : memref<128x64xbf16, #tpu.memory_space<vmem>>, vector<128x64xbf16>
    %cst_8 = arith.constant dense<0.000000e+00> : vector<168x64xf32>
    %7 = tpu.matmul %5, %6, %cst_8 {dimension_numbers = #tpu.dot_dimension_numbers<[1], [0], [0], [1], [0, 0, 1, 1], [], []>} : vector<168x128xbf16>, vector<128x64xbf16>, vector<168x64xf32> -> vector<168x64xf32>
    %8 = arith.maximumf %3, %7 : vector<168x64xf32>
    %c2 = arith.constant 2 : index
    %c0_9 = arith.constant 0 : index
    %c0_10 = arith.constant 0 : index
    %9 = vector.load %arg1[%c2, %c0_9, %c0_10] : memref<4x168x128xbf16, #tpu.memory_space<vmem>>, vector<1x168x128xbf16>
    %10 = vector.shape_cast %9 : vector<1x168x128xbf16> to vector<168x128xbf16>
    %c0_11 = arith.constant 0 : index
    %c0_12 = arith.constant 0 : index
    %11 = vector.load %arg2[%c0_11, %c0_12] : memref<128x64xbf16, #tpu.memory_space<vmem>>, vector<128x64xbf16>
    %cst_13 = arith.constant dense<0.000000e+00> : vector<168x64xf32>
    %12 = tpu.matmul %10, %11, %cst_13 {dimension_numbers = #tpu.dot_dimension_numbers<[1], [0], [0], [1], [0, 0, 1, 1], [], []>} : vector<168x128xbf16>, vector<128x64xbf16>, vector<168x64xf32> -> vector<168x64xf32>
    %13 = arith.maximumf %8, %12 : vector<168x64xf32>
    %c3 = arith.constant 3 : index
    %c0_14 = arith.constant 0 : index
    %c0_15 = arith.constant 0 : index
    %14 = vector.load %arg1[%c3, %c0_14, %c0_15] : memref<4x168x128xbf16, #tpu.memory_space<vmem>>, vector<1x168x128xbf16>
    %15 = vector.shape_cast %14 : vector<1x168x128xbf16> to vector<168x128xbf16>
    %c0_16 = arith.constant 0 : index
    %c0_17 = arith.constant 0 : index
    %16 = vector.load %arg2[%c0_16, %c0_17] : memref<128x64xbf16, #tpu.memory_space<vmem>>, vector<128x64xbf16>
    %cst_18 = arith.constant dense<0.000000e+00> : vector<168x64xf32>
    %17 = tpu.matmul %15, %16, %cst_18 {dimension_numbers = #tpu.dot_dimension_numbers<[1], [0], [0], [1], [0, 0, 1, 1], [], []>} : vector<168x128xbf16>, vector<128x64xbf16>, vector<168x64xf32> -> vector<168x64xf32>
    %18 = arith.maximumf %13, %17 : vector<168x64xf32>
    %c0_19 = arith.constant 0 : index
    %c0_20 = arith.constant 0 : index
    %19 = vector.load %arg3[%c0_19, %c0_20] : memref<1x64xf32, #tpu.memory_space<vmem>>, vector<1x64xf32>
    %20 = vector.broadcast %19 : vector<1x64xf32> to vector<168x64xf32>
    %21 = arith.addf %18, %20 : vector<168x64xf32>
    %cst_21 = arith.constant 0.000000e+00 : f32
    %22 = vector.broadcast %cst_21 : f32 to vector<168x64xf32>
    %23 = arith.maximumf %21, %22 : vector<168x64xf32>
    %c0_22 = arith.constant 0 : index
    %c0_23 = arith.constant 0 : index
    %24 = vector.load %arg11[%c0_22, %c0_23] : memref<176x64xf32, #tpu.memory_space<vmem>>, vector<168x64xf32>
    tpu.vector_store %arg11[%c0_22, %c0_23], %23 {strides = array<i32>} : memref<176x64xf32, #tpu.memory_space<vmem>>, vector<168x64xf32>,
    %cst_24 = arith.constant 0.000000e+00 : f32
    %25 = vector.broadcast %cst_24 : f32 to vector<8x64xf32>
    %c168 = arith.constant 168 : index
    %c0_25 = arith.constant 0 : index
    %26 = vector.load %arg11[%c168, %c0_25] : memref<176x64xf32, #tpu.memory_space<vmem>>, vector<8x64xf32>
    tpu.vector_store %arg11[%c168, %c0_25], %25 {strides = array<i32>} : memref<176x64xf32, #tpu.memory_space<vmem>>, vector<8x64xf32>,
    %cst_26 = arith.constant 0.000000e+00 : f32
    %27 = vector.broadcast %cst_26 : f32 to vector<144x128xf32>
    %c0_27 = arith.constant 0 : index
    %c0_28 = arith.constant 0 : index
    %28 = vector.load %arg11[%c0_27, %c0_28] : memref<176x64xf32, #tpu.memory_space<vmem>>, vector<144x64xf32>
    %29 = arith.truncf %28 : vector<144x64xf32> to vector<144x64xbf16>
    %c0_29 = arith.constant 0 : index
    %c0_30 = arith.constant 0 : index
    %30 = vector.load %arg4[%c0_29, %c0_30] : memref<960x128xbf16, #tpu.memory_space<vmem>>, vector<64x128xbf16>
    %cst_31 = arith.constant dense<0.000000e+00> : vector<144x128xf32>
    %31 = tpu.matmul %29, %30, %cst_31 {dimension_numbers = #tpu.dot_dimension_numbers<[1], [0], [0], [1], [0, 0, 1, 1], [], []>} : vector<144x64xbf16>, vector<64x128xbf16>, vector<144x128xf32> -> vector<144x128xf32>
    %32 = arith.addf %27, %31 : vector<144x128xf32>
    %c1_32 = arith.constant 1 : index
    %c0_33 = arith.constant 0 : index
    %33 = vector.load %arg11[%c1_32, %c0_33] : memref<176x64xf32, #tpu.memory_space<vmem>>, vector<144x64xf32>
    %34 = arith.truncf %33 : vector<144x64xf32> to vector<144x64xbf16>
    %c64 = arith.constant 64 : index
    %c0_34 = arith.constant 0 : index
    %35 = vector.load %arg4[%c64, %c0_34] : memref<960x128xbf16, #tpu.memory_space<vmem>>, vector<64x128xbf16>
    %cst_35 = arith.constant dense<0.000000e+00> : vector<144x128xf32>
    %36 = tpu.matmul %34, %35, %cst_35 {dimension_numbers = #tpu.dot_dimension_numbers<[1], [0], [0], [1], [0, 0, 1, 1], [], []>} : vector<144x64xbf16>, vector<64x128xbf16>, vector<144x128xf32> -> vector<144x128xf32>
    %37 = arith.addf %32, %36 : vector<144x128xf32>
    %c2_36 = arith.constant 2 : index
    %c0_37 = arith.constant 0 : index
    %38 = vector.load %arg11[%c2_36, %c0_37] : memref<176x64xf32, #tpu.memory_space<vmem>>, vector<144x64xf32>
    %39 = arith.truncf %38 : vector<144x64xf32> to vector<144x64xbf16>
    %c128 = arith.constant 128 : index
    %c0_38 = arith.constant 0 : index
    %40 = vector.load %arg4[%c128, %c0_38] : memref<960x128xbf16, #tpu.memory_space<vmem>>, vector<64x128xbf16>
    %cst_39 = arith.constant dense<0.000000e+00> : vector<144x128xf32>
    %41 = tpu.matmul %39, %40, %cst_39 {dimension_numbers = #tpu.dot_dimension_numbers<[1], [0], [0], [1], [0, 0, 1, 1], [], []>} : vector<144x64xbf16>, vector<64x128xbf16>, vector<144x128xf32> -> vector<144x128xf32>
    %42 = arith.addf %37, %41 : vector<144x128xf32>
    %c6 = arith.constant 6 : index
    %c0_40 = arith.constant 0 : index
    %43 = vector.load %arg11[%c6, %c0_40] : memref<176x64xf32, #tpu.memory_space<vmem>>, vector<144x64xf32>
    %44 = arith.truncf %43 : vector<144x64xf32> to vector<144x64xbf16>
    %c192 = arith.constant 192 : index
    %c0_41 = arith.constant 0 : index
    %45 = vector.load %arg4[%c192, %c0_41] : memref<960x128xbf16, #tpu.memory_space<vmem>>, vector<64x128xbf16>
    %cst_42 = arith.constant dense<0.000000e+00> : vector<144x128xf32>
    %46 = tpu.matmul %44, %45, %cst_42 {dimension_numbers = #tpu.dot_dimension_numbers<[1], [0], [0], [1], [0, 0, 1, 1], [], []>} : vector<144x64xbf16>, vector<64x128xbf16>, vector<144x128xf32> -> vector<144x128xf32>
    %47 = arith.addf %42, %46 : vector<144x128xf32>
    %c7 = arith.constant 7 : index
    %c0_43 = arith.constant 0 : index
    %48 = vector.load %arg11[%c7, %c0_43] : memref<176x64xf32, #tpu.memory_space<vmem>>, vector<144x64xf32>
    %49 = arith.truncf %48 : vector<144x64xf32> to vector<144x64xbf16>
    %c256 = arith.constant 256 : index
    %c0_44 = arith.constant 0 : index
    %50 = vector.load %arg4[%c256, %c0_44] : memref<960x128xbf16, #tpu.memory_space<vmem>>, vector<64x128xbf16>
    %cst_45 = arith.constant dense<0.000000e+00> : vector<144x128xf32>
    %51 = tpu.matmul %49, %50, %cst_45 {dimension_numbers = #tpu.dot_dimension_numbers<[1], [0], [0], [1], [0, 0, 1, 1], [], []>} : vector<144x64xbf16>, vector<64x128xbf16>, vector<144x128xf32> -> vector<144x128xf32>
    %52 = arith.addf %47, %51 : vector<144x128xf32>
    %c8 = arith.constant 8 : index
    %c0_46 = arith.constant 0 : index
    %53 = vector.load %arg11[%c8, %c0_46] : memref<176x64xf32, #tpu.memory_space<vmem>>, vector<144x64xf32>
    %54 = arith.truncf %53 : vector<144x64xf32> to vector<144x64xbf16>
    %c320 = arith.constant 320 : index
    %c0_47 = arith.constant 0 : index
    %55 = vector.load %arg4[%c320, %c0_47] : memref<960x128xbf16, #tpu.memory_space<vmem>>, vector<64x128xbf16>
    %cst_48 = arith.constant dense<0.000000e+00> : vector<144x128xf32>
    %56 = tpu.matmul %54, %55, %cst_48 {dimension_numbers = #tpu.dot_dimension_numbers<[1], [0], [0], [1], [0, 0, 1, 1], [], []>} : vector<144x64xbf16>, vector<64x128xbf16>, vector<144x128xf32> -> vector<144x128xf32>
    %57 = arith.addf %52, %56 : vector<144x128xf32>
    %c12 = arith.constant 12 : index
    %c0_49 = arith.constant 0 : index
    %58 = vector.load %arg11[%c12, %c0_49] : memref<176x64xf32, #tpu.memory_space<vmem>>, vector<144x64xf32>
    %59 = arith.truncf %58 : vector<144x64xf32> to vector<144x64xbf16>
    %c384 = arith.constant 384 : index
    %c0_50 = arith.constant 0 : index
    %60 = vector.load %arg4[%c384, %c0_50] : memref<960x128xbf16, #tpu.memory_space<vmem>>, vector<64x128xbf16>
    %cst_51 = arith.constant dense<0.000000e+00> : vector<144x128xf32>
    %61 = tpu.matmul %59, %60, %cst_51 {dimension_numbers = #tpu.dot_dimension_numbers<[1], [0], [0], [1], [0, 0, 1, 1], [], []>} : vector<144x64xbf16>, vector<64x128xbf16>, vector<144x128xf32> -> vector<144x128xf32>
    %62 = arith.addf %57, %61 : vector<144x128xf32>
    %c13 = arith.constant 13 : index
    %c0_52 = arith.constant 0 : index
    %63 = vector.load %arg11[%c13, %c0_52] : memref<176x64xf32, #tpu.memory_space<vmem>>, vector<144x64xf32>
    %64 = arith.truncf %63 : vector<144x64xf32> to vector<144x64xbf16>
    %c448 = arith.constant 448 : index
    %c0_53 = arith.constant 0 : index
    %65 = vector.load %arg4[%c448, %c0_53] : memref<960x128xbf16, #tpu.memory_space<vmem>>, vector<64x128xbf16>
    %cst_54 = arith.constant dense<0.000000e+00> : vector<144x128xf32>
    %66 = tpu.matmul %64, %65, %cst_54 {dimension_numbers = #tpu.dot_dimension_numbers<[1], [0], [0], [1], [0, 0, 1, 1], [], []>} : vector<144x64xbf16>, vector<64x128xbf16>, vector<144x128xf32> -> vector<144x128xf32>
    %67 = arith.addf %62, %66 : vector<144x128xf32>
    %c14 = arith.constant 14 : index
    %c0_55 = arith.constant 0 : index
    %68 = vector.load %arg11[%c14, %c0_55] : memref<176x64xf32, #tpu.memory_space<vmem>>, vector<144x64xf32>
    %69 = arith.truncf %68 : vector<144x64xf32> to vector<144x64xbf16>
    %c512 = arith.constant 512 : index
    %c0_56 = arith.constant 0 : index
    %70 = vector.load %arg4[%c512, %c0_56] : memref<960x128xbf16, #tpu.memory_space<vmem>>, vector<64x128xbf16>
    %cst_57 = arith.constant dense<0.000000e+00> : vector<144x128xf32>
    %71 = tpu.matmul %69, %70, %cst_57 {dimension_numbers = #tpu.dot_dimension_numbers<[1], [0], [0], [1], [0, 0, 1, 1], [], []>} : vector<144x64xbf16>, vector<64x128xbf16>, vector<144x128xf32> -> vector<144x128xf32>
    %72 = arith.addf %67, %71 : vector<144x128xf32>
    %c18 = arith.constant 18 : index
    %c0_58 = arith.constant 0 : index
    %73 = vector.load %arg11[%c18, %c0_58] : memref<176x64xf32, #tpu.memory_space<vmem>>, vector<144x64xf32>
    %74 = arith.truncf %73 : vector<144x64xf32> to vector<144x64xbf16>
    %c576 = arith.constant 576 : index
    %c0_59 = arith.constant 0 : index
    %75 = vector.load %arg4[%c576, %c0_59] : memref<960x128xbf16, #tpu.memory_space<vmem>>, vector<64x128xbf16>
    %cst_60 = arith.constant dense<0.000000e+00> : vector<144x128xf32>
    %76 = tpu.matmul %74, %75, %cst_60 {dimension_numbers = #tpu.dot_dimension_numbers<[1], [0], [0], [1], [0, 0, 1, 1], [], []>} : vector<144x64xbf16>, vector<64x128xbf16>, vector<144x128xf32> -> vector<144x128xf32>
    %77 = arith.addf %72, %76 : vector<144x128xf32>
    %c19 = arith.constant 19 : index
    %c0_61 = arith.constant 0 : index
    %78 = vector.load %arg11[%c19, %c0_61] : memref<176x64xf32, #tpu.memory_space<vmem>>, vector<144x64xf32>
    %79 = arith.truncf %78 : vector<144x64xf32> to vector<144x64xbf16>
    %c640 = arith.constant 640 : index
    %c0_62 = arith.constant 0 : index
    %80 = vector.load %arg4[%c640, %c0_62] : memref<960x128xbf16, #tpu.memory_space<vmem>>, vector<64x128xbf16>
    %cst_63 = arith.constant dense<0.000000e+00> : vector<144x128xf32>
    %81 = tpu.matmul %79, %80, %cst_63 {dimension_numbers = #tpu.dot_dimension_numbers<[1], [0], [0], [1], [0, 0, 1, 1], [], []>} : vector<144x64xbf16>, vector<64x128xbf16>, vector<144x128xf32> -> vector<144x128xf32>
    %82 = arith.addf %77, %81 : vector<144x128xf32>
    %c20 = arith.constant 20 : index
    %c0_64 = arith.constant 0 : index
    %83 = vector.load %arg11[%c20, %c0_64] : memref<176x64xf32, #tpu.memory_space<vmem>>, vector<144x64xf32>
    %84 = arith.truncf %83 : vector<144x64xf32> to vector<144x64xbf16>
    %c704 = arith.constant 704 : index
    %c0_65 = arith.constant 0 : index
    %85 = vector.load %arg4[%c704, %c0_65] : memref<960x128xbf16, #tpu.memory_space<vmem>>, vector<64x128xbf16>
    %cst_66 = arith.constant dense<0.000000e+00> : vector<144x128xf32>
    %86 = tpu.matmul %84, %85, %cst_66 {dimension_numbers = #tpu.dot_dimension_numbers<[1], [0], [0], [1], [0, 0, 1, 1], [], []>} : vector<144x64xbf16>, vector<64x128xbf16>, vector<144x128xf32> -> vector<144x128xf32>
    %87 = arith.addf %82, %86 : vector<144x128xf32>
    %c24 = arith.constant 24 : index
    %c0_67 = arith.constant 0 : index
    %88 = vector.load %arg11[%c24, %c0_67] : memref<176x64xf32, #tpu.memory_space<vmem>>, vector<144x64xf32>
    %89 = arith.truncf %88 : vector<144x64xf32> to vector<144x64xbf16>
    %c768 = arith.constant 768 : index
    %c0_68 = arith.constant 0 : index
    %90 = vector.load %arg4[%c768, %c0_68] : memref<960x128xbf16, #tpu.memory_space<vmem>>, vector<64x128xbf16>
    %cst_69 = arith.constant dense<0.000000e+00> : vector<144x128xf32>
    %91 = tpu.matmul %89, %90, %cst_69 {dimension_numbers = #tpu.dot_dimension_numbers<[1], [0], [0], [1], [0, 0, 1, 1], [], []>} : vector<144x64xbf16>, vector<64x128xbf16>, vector<144x128xf32> -> vector<144x128xf32>
    %92 = arith.addf %87, %91 : vector<144x128xf32>
    %c25 = arith.constant 25 : index
    %c0_70 = arith.constant 0 : index
    %93 = vector.load %arg11[%c25, %c0_70] : memref<176x64xf32, #tpu.memory_space<vmem>>, vector<144x64xf32>
    %94 = arith.truncf %93 : vector<144x64xf32> to vector<144x64xbf16>
    %c832 = arith.constant 832 : index
    %c0_71 = arith.constant 0 : index
    %95 = vector.load %arg4[%c832, %c0_71] : memref<960x128xbf16, #tpu.memory_space<vmem>>, vector<64x128xbf16>
    %cst_72 = arith.constant dense<0.000000e+00> : vector<144x128xf32>
    %96 = tpu.matmul %94, %95, %cst_72 {dimension_numbers = #tpu.dot_dimension_numbers<[1], [0], [0], [1], [0, 0, 1, 1], [], []>} : vector<144x64xbf16>, vector<64x128xbf16>, vector<144x128xf32> -> vector<144x128xf32>
    %97 = arith.addf %92, %96 : vector<144x128xf32>
    %c26 = arith.constant 26 : index
    %c0_73 = arith.constant 0 : index
    %98 = vector.load %arg11[%c26, %c0_73] : memref<176x64xf32, #tpu.memory_space<vmem>>, vector<144x64xf32>
    %99 = arith.truncf %98 : vector<144x64xf32> to vector<144x64xbf16>
    %c896 = arith.constant 896 : index
    %c0_74 = arith.constant 0 : index
    %100 = vector.load %arg4[%c896, %c0_74] : memref<960x128xbf16, #tpu.memory_space<vmem>>, vector<64x128xbf16>
    %cst_75 = arith.constant dense<0.000000e+00> : vector<144x128xf32>
    %101 = tpu.matmul %99, %100, %cst_75 {dimension_numbers = #tpu.dot_dimension_numbers<[1], [0], [0], [1], [0, 0, 1, 1], [], []>} : vector<144x64xbf16>, vector<64x128xbf16>, vector<144x128xf32> -> vector<144x128xf32>
    %102 = arith.addf %97, %101 : vector<144x128xf32>
    %c0_76 = arith.constant 0 : index
    %c0_77 = arith.constant 0 : index
    %103 = vector.load %arg5[%c0_76, %c0_77] : memref<1x128xf32, #tpu.memory_space<vmem>>, vector<1x128xf32>
    %104 = vector.broadcast %103 : vector<1x128xf32> to vector<144x128xf32>
    %105 = arith.addf %102, %104 : vector<144x128xf32>
    %c0_78 = arith.constant 0 : index
    %c0_79 = arith.constant 0 : index
    %106 = vector.load %arg12[%c0_78, %c0_79] : memref<144x128xf32, #tpu.memory_space<vmem>>, vector<144x128xf32>
    tpu.vector_store %arg12[%c0_78, %c0_79], %105 {strides = array<i32>} : memref<144x128xf32, #tpu.memory_space<vmem>>, vector<144x128xf32>,
    %c0_80 = arith.constant 0 : index
    %c0_81 = arith.constant 0 : index
    %107 = vector.load %arg12[%c0_80, %c0_81] : memref<144x128xf32, #tpu.memory_space<vmem>>, vector<1x128xf32>
    %c1_82 = arith.constant 1 : index
    %c0_83 = arith.constant 0 : index
    %108 = vector.load %arg12[%c1_82, %c0_83] : memref<144x128xf32, #tpu.memory_space<vmem>>, vector<1x128xf32>
    %109 = arith.maximumf %107, %108 : vector<1x128xf32>
    %c6_84 = arith.constant 6 : index
    %c0_85 = arith.constant 0 : index
    %110 = vector.load %arg12[%c6_84, %c0_85] : memref<144x128xf32, #tpu.memory_space<vmem>>, vector<1x128xf32>
    %111 = arith.maximumf %109, %110 : vector<1x128xf32>
    %c7_86 = arith.constant 7 : index
    %c0_87 = arith.constant 0 : index
    %112 = vector.load %arg12[%c7_86, %c0_87] : memref<144x128xf32, #tpu.memory_space<vmem>>, vector<1x128xf32>
    %113 = arith.maximumf %111, %112 : vector<1x128xf32>
    %cst_88 = arith.constant 0.000000e+00 : f32
    %114 = vector.broadcast %cst_88 : f32 to vector<1x128xf32>
    %115 = arith.maximumf %113, %114 : vector<1x128xf32>
    %c0_89 = arith.constant 0 : index
    %c0_90 = arith.constant 0 : index
    %116 = vector.load %arg13[%c0_89, %c0_90] : memref<8x1280xf32, #tpu.memory_space<vmem>>, vector<1x128xf32>
    tpu.vector_store %arg13[%c0_89, %c0_90], %115 {strides = array<i32>} : memref<8x1280xf32, #tpu.memory_space<vmem>>, vector<1x128xf32>,
    %c2_91 = arith.constant 2 : index
    %c0_92 = arith.constant 0 : index
    %117 = vector.load %arg12[%c2_91, %c0_92] : memref<144x128xf32, #tpu.memory_space<vmem>>, vector<1x128xf32>
    %c3_93 = arith.constant 3 : index
    %c0_94 = arith.constant 0 : index
    %118 = vector.load %arg12[%c3_93, %c0_94] : memref<144x128xf32, #tpu.memory_space<vmem>>, vector<1x128xf32>
    %119 = arith.maximumf %117, %118 : vector<1x128xf32>
    %c8_95 = arith.constant 8 : index
    %c0_96 = arith.constant 0 : index
    %120 = vector.load %arg12[%c8_95, %c0_96] : memref<144x128xf32, #tpu.memory_space<vmem>>, vector<1x128xf32>
    %121 = arith.maximumf %119, %120 : vector<1x128xf32>
    %c9 = arith.constant 9 : index
    %c0_97 = arith.constant 0 : index
    %122 = vector.load %arg12[%c9, %c0_97] : memref<144x128xf32, #tpu.memory_space<vmem>>, vector<1x128xf32>
    %123 = arith.maximumf %121, %122 : vector<1x128xf32>
    %cst_98 = arith.constant 0.000000e+00 : f32
    %124 = vector.broadcast %cst_98 : f32 to vector<1x128xf32>
    %125 = arith.maximumf %123, %124 : vector<1x128xf32>
    %c0_99 = arith.constant 0 : index
    %c128_100 = arith.constant 128 : index
    %126 = vector.load %arg13[%c0_99, %c128_100] : memref<8x1280xf32, #tpu.memory_space<vmem>>, vector<1x128xf32>
    tpu.vector_store %arg13[%c0_99, %c128_100], %125 {strides = array<i32>} : memref<8x1280xf32, #tpu.memory_space<vmem>>, vector<1x128xf32>,
    %c12_101 = arith.constant 12 : index
    %c0_102 = arith.constant 0 : index
    %127 = vector.load %arg12[%c12_101, %c0_102] : memref<144x128xf32, #tpu.memory_space<vmem>>, vector<1x128xf32>
    %c13_103 = arith.constant 13 : index
    %c0_104 = arith.constant 0 : index
    %128 = vector.load %arg12[%c13_103, %c0_104] : memref<144x128xf32, #tpu.memory_space<vmem>>, vector<1x128xf32>
    %129 = arith.maximumf %127, %128 : vector<1x128xf32>
    %c18_105 = arith.constant 18 : index
    %c0_106 = arith.constant 0 : index
    %130 = vector.load %arg12[%c18_105, %c0_106] : memref<144x128xf32, #tpu.memory_space<vmem>>, vector<1x128xf32>
    %131 = arith.maximumf %129, %130 : vector<1x128xf32>
    %c19_107 = arith.constant 19 : index
    %c0_108 = arith.constant 0 : index
    %132 = vector.load %arg12[%c19_107, %c0_108] : memref<144x128xf32, #tpu.memory_space<vmem>>, vector<1x128xf32>
    %133 = arith.maximumf %131, %132 : vector<1x128xf32>
    %cst_109 = arith.constant 0.000000e+00 : f32
    %134 = vector.broadcast %cst_109 : f32 to vector<1x128xf32>
    %135 = arith.maximumf %133, %134 : vector<1x128xf32>
    %c0_110 = arith.constant 0 : index
    %c256_111 = arith.constant 256 : index
    %136 = vector.load %arg13[%c0_110, %c256_111] : memref<8x1280xf32, #tpu.memory_space<vmem>>, vector<1x128xf32>
    tpu.vector_store %arg13[%c0_110, %c256_111], %135 {strides = array<i32>} : memref<8x1280xf32, #tpu.memory_space<vmem>>, vector<1x128xf32>,
    %c14_112 = arith.constant 14 : index
    %c0_113 = arith.constant 0 : index
    %137 = vector.load %arg12[%c14_112, %c0_113] : memref<144x128xf32, #tpu.memory_space<vmem>>, vector<1x128xf32>
    %c15 = arith.constant 15 : index
    %c0_114 = arith.constant 0 : index
    %138 = vector.load %arg12[%c15, %c0_114] : memref<144x128xf32, #tpu.memory_space<vmem>>, vector<1x128xf32>
    %139 = arith.maximumf %137, %138 : vector<1x128xf32>
    %c20_115 = arith.constant 20 : index
    %c0_116 = arith.constant 0 : index
    %140 = vector.load %arg12[%c20_115, %c0_116] : memref<144x128xf32, #tpu.memory_space<vmem>>, vector<1x128xf32>
    %141 = arith.maximumf %139, %140 : vector<1x128xf32>
    %c21 = arith.constant 21 : index
    %c0_117 = arith.constant 0 : index
    %142 = vector.load %arg12[%c21, %c0_117] : memref<144x128xf32, #tpu.memory_space<vmem>>, vector<1x128xf32>
    %143 = arith.maximumf %141, %142 : vector<1x128xf32>
    %cst_118 = arith.constant 0.000000e+00 : f32
    %144 = vector.broadcast %cst_118 : f32 to vector<1x128xf32>
    %145 = arith.maximumf %143, %144 : vector<1x128xf32>
    %c0_119 = arith.constant 0 : index
    %c384_120 = arith.constant 384 : index
    %146 = vector.load %arg13[%c0_119, %c384_120] : memref<8x1280xf32, #tpu.memory_space<vmem>>, vector<1x128xf32>
    tpu.vector_store %arg13[%c0_119, %c384_120], %145 {strides = array<i32>} : memref<8x1280xf32, #tpu.memory_space<vmem>>, vector<1x128xf32>,
    %c24_121 = arith.constant 24 : index
    %c0_122 = arith.constant 0 : index
    %147 = vector.load %arg12[%c24_121, %c0_122] : memref<144x128xf32, #tpu.memory_space<vmem>>, vector<1x128xf32>
    %c25_123 = arith.constant 25 : index
    %c0_124 = arith.constant 0 : index
    %148 = vector.load %arg12[%c25_123, %c0_124] : memref<144x128xf32, #tpu.memory_space<vmem>>, vector<1x128xf32>
    %149 = arith.maximumf %147, %148 : vector<1x128xf32>
    %c30 = arith.constant 30 : index
    %c0_125 = arith.constant 0 : index
    %150 = vector.load %arg12[%c30, %c0_125] : memref<144x128xf32, #tpu.memory_space<vmem>>, vector<1x128xf32>
    %151 = arith.maximumf %149, %150 : vector<1x128xf32>
    %c31 = arith.constant 31 : index
    %c0_126 = arith.constant 0 : index
    %152 = vector.load %arg12[%c31, %c0_126] : memref<144x128xf32, #tpu.memory_space<vmem>>, vector<1x128xf32>
    %153 = arith.maximumf %151, %152 : vector<1x128xf32>
    %cst_127 = arith.constant 0.000000e+00 : f32
    %154 = vector.broadcast %cst_127 : f32 to vector<1x128xf32>
    %155 = arith.maximumf %153, %154 : vector<1x128xf32>
    %c0_128 = arith.constant 0 : index
    %c512_129 = arith.constant 512 : index
    %156 = vector.load %arg13[%c0_128, %c512_129] : memref<8x1280xf32, #tpu.memory_space<vmem>>, vector<1x128xf32>
    tpu.vector_store %arg13[%c0_128, %c512_129], %155 {strides = array<i32>} : memref<8x1280xf32, #tpu.memory_space<vmem>>, vector<1x128xf32>,
    %c26_130 = arith.constant 26 : index
    %c0_131 = arith.constant 0 : index
    %157 = vector.load %arg12[%c26_130, %c0_131] : memref<144x128xf32, #tpu.memory_space<vmem>>, vector<1x128xf32>
    %c27 = arith.constant 27 : index
    %c0_132 = arith.constant 0 : index
    %158 = vector.load %arg12[%c27, %c0_132] : memref<144x128xf32, #tpu.memory_space<vmem>>, vector<1x128xf32>
    %159 = arith.maximumf %157, %158 : vector<1x128xf32>
    %c32 = arith.constant 32 : index
    %c0_133 = arith.constant 0 : index
    %160 = vector.load %arg12[%c32, %c0_133] : memref<144x128xf32, #tpu.memory_space<vmem>>, vector<1x128xf32>
    %161 = arith.maximumf %159, %160 : vector<1x128xf32>
    %c33 = arith.constant 33 : index
    %c0_134 = arith.constant 0 : index
    %162 = vector.load %arg12[%c33, %c0_134] : memref<144x128xf32, #tpu.memory_space<vmem>>, vector<1x128xf32>
    %163 = arith.maximumf %161, %162 : vector<1x128xf32>
    %cst_135 = arith.constant 0.000000e+00 : f32
    %164 = vector.broadcast %cst_135 : f32 to vector<1x128xf32>
    %165 = arith.maximumf %163, %164 : vector<1x128xf32>
    %c0_136 = arith.constant 0 : index
    %c640_137 = arith.constant 640 : index
    %166 = vector.load %arg13[%c0_136, %c640_137] : memref<8x1280xf32, #tpu.memory_space<vmem>>, vector<1x128xf32>
    tpu.vector_store %arg13[%c0_136, %c640_137], %165 {strides = array<i32>} : memref<8x1280xf32, #tpu.memory_space<vmem>>, vector<1x128xf32>,
    %c36 = arith.constant 36 : index
    %c0_138 = arith.constant 0 : index
    %167 = vector.load %arg12[%c36, %c0_138] : memref<144x128xf32, #tpu.memory_space<vmem>>, vector<1x128xf32>
    %c37 = arith.constant 37 : index
    %c0_139 = arith.constant 0 : index
    %168 = vector.load %arg12[%c37, %c0_139] : memref<144x128xf32, #tpu.memory_space<vmem>>, vector<1x128xf32>
    %169 = arith.maximumf %167, %168 : vector<1x128xf32>
    %c42 = arith.constant 42 : index
    %c0_140 = arith.constant 0 : index
    %170 = vector.load %arg12[%c42, %c0_140] : memref<144x128xf32, #tpu.memory_space<vmem>>, vector<1x128xf32>
    %171 = arith.maximumf %169, %170 : vector<1x128xf32>
    %c43 = arith.constant 43 : index
    %c0_141 = arith.constant 0 : index
    %172 = vector.load %arg12[%c43, %c0_141] : memref<144x128xf32, #tpu.memory_space<vmem>>, vector<1x128xf32>
    %173 = arith.maximumf %171, %172 : vector<1x128xf32>
    %cst_142 = arith.constant 0.000000e+00 : f32
    %174 = vector.broadcast %cst_142 : f32 to vector<1x128xf32>
    %175 = arith.maximumf %173, %174 : vector<1x128xf32>
    %c0_143 = arith.constant 0 : index
    %c768_144 = arith.constant 768 : index
    %176 = vector.load %arg13[%c0_143, %c768_144] : memref<8x1280xf32, #tpu.memory_space<vmem>>, vector<1x128xf32>
    tpu.vector_store %arg13[%c0_143, %c768_144], %175 {strides = array<i32>} : memref<8x1280xf32, #tpu.memory_space<vmem>>, vector<1x128xf32>,
    %c38 = arith.constant 38 : index
    %c0_145 = arith.constant 0 : index
    %177 = vector.load %arg12[%c38, %c0_145] : memref<144x128xf32, #tpu.memory_space<vmem>>, vector<1x128xf32>
    %c39 = arith.constant 39 : index
    %c0_146 = arith.constant 0 : index
    %178 = vector.load %arg12[%c39, %c0_146] : memref<144x128xf32, #tpu.memory_space<vmem>>, vector<1x128xf32>
    %179 = arith.maximumf %177, %178 : vector<1x128xf32>
    %c44 = arith.constant 44 : index
    %c0_147 = arith.constant 0 : index
    %180 = vector.load %arg12[%c44, %c0_147] : memref<144x128xf32, #tpu.memory_space<vmem>>, vector<1x128xf32>
    %181 = arith.maximumf %179, %180 : vector<1x128xf32>
    %c45 = arith.constant 45 : index
    %c0_148 = arith.constant 0 : index
    %182 = vector.load %arg12[%c45, %c0_148] : memref<144x128xf32, #tpu.memory_space<vmem>>, vector<1x128xf32>
    %183 = arith.maximumf %181, %182 : vector<1x128xf32>
    %cst_149 = arith.constant 0.000000e+00 : f32
    %184 = vector.broadcast %cst_149 : f32 to vector<1x128xf32>
    %185 = arith.maximumf %183, %184 : vector<1x128xf32>
    %c0_150 = arith.constant 0 : index
    %c896_151 = arith.constant 896 : index
    %186 = vector.load %arg13[%c0_150, %c896_151] : memref<8x1280xf32, #tpu.memory_space<vmem>>, vector<1x128xf32>
    tpu.vector_store %arg13[%c0_150, %c896_151], %185 {strides = array<i32>} : memref<8x1280xf32, #tpu.memory_space<vmem>>, vector<1x128xf32>,
    %c48 = arith.constant 48 : index
    %c0_152 = arith.constant 0 : index
    %187 = vector.load %arg12[%c48, %c0_152] : memref<144x128xf32, #tpu.memory_space<vmem>>, vector<1x128xf32>
    %c49 = arith.constant 49 : index
    %c0_153 = arith.constant 0 : index
    %188 = vector.load %arg12[%c49, %c0_153] : memref<144x128xf32, #tpu.memory_space<vmem>>, vector<1x128xf32>
    %189 = arith.maximumf %187, %188 : vector<1x128xf32>
    %c54 = arith.constant 54 : index
    %c0_154 = arith.constant 0 : index
    %190 = vector.load %arg12[%c54, %c0_154] : memref<144x128xf32, #tpu.memory_space<vmem>>, vector<1x128xf32>
    %191 = arith.maximumf %189, %190 : vector<1x128xf32>
    %c55 = arith.constant 55 : index
    %c0_155 = arith.constant 0 : index
    %192 = vector.load %arg12[%c55, %c0_155] : memref<144x128xf32, #tpu.memory_space<vmem>>, vector<1x128xf32>
    %193 = arith.maximumf %191, %192 : vector<1x128xf32>
    %cst_156 = arith.constant 0.000000e+00 : f32
    %194 = vector.broadcast %cst_156 : f32 to vector<1x128xf32>
    %195 = arith.maximumf %193, %194 : vector<1x128xf32>
    %c0_157 = arith.constant 0 : index
    %c1024 = arith.constant 1024 : index
    %196 = vector.load %arg13[%c0_157, %c1024] : memref<8x1280xf32, #tpu.memory_space<vmem>>, vector<1x128xf32>
    tpu.vector_store %arg13[%c0_157, %c1024], %195 {strides = array<i32>} : memref<8x1280xf32, #tpu.memory_space<vmem>>, vector<1x128xf32>,
    %c50 = arith.constant 50 : index
    %c0_158 = arith.constant 0 : index
    %197 = vector.load %arg12[%c50, %c0_158] : memref<144x128xf32, #tpu.memory_space<vmem>>, vector<1x128xf32>
    %c51 = arith.constant 51 : index
    %c0_159 = arith.constant 0 : index
    %198 = vector.load %arg12[%c51, %c0_159] : memref<144x128xf32, #tpu.memory_space<vmem>>, vector<1x128xf32>
    %199 = arith.maximumf %197, %198 : vector<1x128xf32>
    %c56 = arith.constant 56 : index
    %c0_160 = arith.constant 0 : index
    %200 = vector.load %arg12[%c56, %c0_160] : memref<144x128xf32, #tpu.memory_space<vmem>>, vector<1x128xf32>
    %201 = arith.maximumf %199, %200 : vector<1x128xf32>
    %c57 = arith.constant 57 : index
    %c0_161 = arith.constant 0 : index
    %202 = vector.load %arg12[%c57, %c0_161] : memref<144x128xf32, #tpu.memory_space<vmem>>, vector<1x128xf32>
    %203 = arith.maximumf %201, %202 : vector<1x128xf32>
    %cst_162 = arith.constant 0.000000e+00 : f32
    %204 = vector.broadcast %cst_162 : f32 to vector<1x128xf32>
    %205 = arith.maximumf %203, %204 : vector<1x128xf32>
    %c0_163 = arith.constant 0 : index
    %c1152 = arith.constant 1152 : index
    %206 = vector.load %arg13[%c0_163, %c1152] : memref<8x1280xf32, #tpu.memory_space<vmem>>, vector<1x128xf32>
    tpu.vector_store %arg13[%c0_163, %c1152], %205 {strides = array<i32>} : memref<8x1280xf32, #tpu.memory_space<vmem>>, vector<1x128xf32>,
    %c84 = arith.constant 84 : index
    %c0_164 = arith.constant 0 : index
    %207 = vector.load %arg12[%c84, %c0_164] : memref<144x128xf32, #tpu.memory_space<vmem>>, vector<1x128xf32>
    %c85 = arith.constant 85 : index
    %c0_165 = arith.constant 0 : index
    %208 = vector.load %arg12[%c85, %c0_165] : memref<144x128xf32, #tpu.memory_space<vmem>>, vector<1x128xf32>
    %209 = arith.maximumf %207, %208 : vector<1x128xf32>
    %c90 = arith.constant 90 : index
    %c0_166 = arith.constant 0 : index
    %210 = vector.load %arg12[%c90, %c0_166] : memref<144x128xf32, #tpu.memory_space<vmem>>, vector<1x128xf32>
    %211 = arith.maximumf %209, %210 : vector<1x128xf32>
    %c91 = arith.constant 91 : index
    %c0_167 = arith.constant 0 : index
    %212 = vector.load %arg12[%c91, %c0_167] : memref<144x128xf32, #tpu.memory_space<vmem>>, vector<1x128xf32>
    %213 = arith.maximumf %211, %212 : vector<1x128xf32>
    %cst_168 = arith.constant 0.000000e+00 : f32
    %214 = vector.broadcast %cst_168 : f32 to vector<1x128xf32>
    %215 = arith.maximumf %213, %214 : vector<1x128xf32>
    %c1_169 = arith.constant 1 : index
    %c0_170 = arith.constant 0 : index
    %216 = vector.load %arg13[%c1_169, %c0_170] : memref<8x1280xf32, #tpu.memory_space<vmem>>, vector<1x128xf32>
    tpu.vector_store %arg13[%c1_169, %c0_170], %215 {strides = array<i32>} : memref<8x1280xf32, #tpu.memory_space<vmem>>, vector<1x128xf32>,
    %c86 = arith.constant 86 : index
    %c0_171 = arith.constant 0 : index
    %217 = vector.load %arg12[%c86, %c0_171] : memref<144x128xf32, #tpu.memory_space<vmem>>, vector<1x128xf32>
    %c87 = arith.constant 87 : index
    %c0_172 = arith.constant 0 : index
    %218 = vector.load %arg12[%c87, %c0_172] : memref<144x128xf32, #tpu.memory_space<vmem>>, vector<1x128xf32>
    %219 = arith.maximumf %217, %218 : vector<1x128xf32>
    %c92 = arith.constant 92 : index
    %c0_173 = arith.constant 0 : index
    %220 = vector.load %arg12[%c92, %c0_173] : memref<144x128xf32, #tpu.memory_space<vmem>>, vector<1x128xf32>
    %221 = arith.maximumf %219, %220 : vector<1x128xf32>
    %c93 = arith.constant 93 : index
    %c0_174 = arith.constant 0 : index
    %222 = vector.load %arg12[%c93, %c0_174] : memref<144x128xf32, #tpu.memory_space<vmem>>, vector<1x128xf32>
    %223 = arith.maximumf %221, %222 : vector<1x128xf32>
    %cst_175 = arith.constant 0.000000e+00 : f32
    %224 = vector.broadcast %cst_175 : f32 to vector<1x128xf32>
    %225 = arith.maximumf %223, %224 : vector<1x128xf32>
    %c1_176 = arith.constant 1 : index
    %c128_177 = arith.constant 128 : index
    %226 = vector.load %arg13[%c1_176, %c128_177] : memref<8x1280xf32, #tpu.memory_space<vmem>>, vector<1x128xf32>
    tpu.vector_store %arg13[%c1_176, %c128_177], %225 {strides = array<i32>} : memref<8x1280xf32, #tpu.memory_space<vmem>>, vector<1x128xf32>,
    %c96 = arith.constant 96 : index
    %c0_178 = arith.constant 0 : index
    %227 = vector.load %arg12[%c96, %c0_178] : memref<144x128xf32, #tpu.memory_space<vmem>>, vector<1x128xf32>
    %c97 = arith.constant 97 : index
    %c0_179 = arith.constant 0 : index
    %228 = vector.load %arg12[%c97, %c0_179] : memref<144x128xf32, #tpu.memory_space<vmem>>, vector<1x128xf32>
    %229 = arith.maximumf %227, %228 : vector<1x128xf32>
    %c102 = arith.constant 102 : index
    %c0_180 = arith.constant 0 : index
    %230 = vector.load %arg12[%c102, %c0_180] : memref<144x128xf32, #tpu.memory_space<vmem>>, vector<1x128xf32>
    %231 = arith.maximumf %229, %230 : vector<1x128xf32>
    %c103 = arith.constant 103 : index
    %c0_181 = arith.constant 0 : index
    %232 = vector.load %arg12[%c103, %c0_181] : memref<144x128xf32, #tpu.memory_space<vmem>>, vector<1x128xf32>
    %233 = arith.maximumf %231, %232 : vector<1x128xf32>
    %cst_182 = arith.constant 0.000000e+00 : f32
    %234 = vector.broadcast %cst_182 : f32 to vector<1x128xf32>
    %235 = arith.maximumf %233, %234 : vector<1x128xf32>
    %c1_183 = arith.constant 1 : index
    %c256_184 = arith.constant 256 : index
    %236 = vector.load %arg13[%c1_183, %c256_184] : memref<8x1280xf32, #tpu.memory_space<vmem>>, vector<1x128xf32>
    tpu.vector_store %arg13[%c1_183, %c256_184], %235 {strides = array<i32>} : memref<8x1280xf32, #tpu.memory_space<vmem>>, vector<1x128xf32>,
    %c98 = arith.constant 98 : index
    %c0_185 = arith.constant 0 : index
    %237 = vector.load %arg12[%c98, %c0_185] : memref<144x128xf32, #tpu.memory_space<vmem>>, vector<1x128xf32>
    %c99 = arith.constant 99 : index
    %c0_186 = arith.constant 0 : index
    %238 = vector.load %arg12[%c99, %c0_186] : memref<144x128xf32, #tpu.memory_space<vmem>>, vector<1x128xf32>
    %239 = arith.maximumf %237, %238 : vector<1x128xf32>
    %c104 = arith.constant 104 : index
    %c0_187 = arith.constant 0 : index
    %240 = vector.load %arg12[%c104, %c0_187] : memref<144x128xf32, #tpu.memory_space<vmem>>, vector<1x128xf32>
    %241 = arith.maximumf %239, %240 : vector<1x128xf32>
    %c105 = arith.constant 105 : index
    %c0_188 = arith.constant 0 : index
    %242 = vector.load %arg12[%c105, %c0_188] : memref<144x128xf32, #tpu.memory_space<vmem>>, vector<1x128xf32>
    %243 = arith.maximumf %241, %242 : vector<1x128xf32>
    %cst_189 = arith.constant 0.000000e+00 : f32
    %244 = vector.broadcast %cst_189 : f32 to vector<1x128xf32>
    %245 = arith.maximumf %243, %244 : vector<1x128xf32>
    %c1_190 = arith.constant 1 : index
    %c384_191 = arith.constant 384 : index
    %246 = vector.load %arg13[%c1_190, %c384_191] : memref<8x1280xf32, #tpu.memory_space<vmem>>, vector<1x128xf32>
    tpu.vector_store %arg13[%c1_190, %c384_191], %245 {strides = array<i32>} : memref<8x1280xf32, #tpu.memory_space<vmem>>, vector<1x128xf32>,
    %c108 = arith.constant 108 : index
    %c0_192 = arith.constant 0 : index
    %247 = vector.load %arg12[%c108, %c0_192] : memref<144x128xf32, #tpu.memory_space<vmem>>, vector<1x128xf32>
    %c109 = arith.constant 109 : index
    %c0_193 = arith.constant 0 : index
    %248 = vector.load %arg12[%c109, %c0_193] : memref<144x128xf32, #tpu.memory_space<vmem>>, vector<1x128xf32>
    %249 = arith.maximumf %247, %248 : vector<1x128xf32>
    %c114 = arith.constant 114 : index
    %c0_194 = arith.constant 0 : index
    %250 = vector.load %arg12[%c114, %c0_194] : memref<144x128xf32, #tpu.memory_space<vmem>>, vector<1x128xf32>
    %251 = arith.maximumf %249, %250 : vector<1x128xf32>
    %c115 = arith.constant 115 : index
    %c0_195 = arith.constant 0 : index
    %252 = vector.load %arg12[%c115, %c0_195] : memref<144x128xf32, #tpu.memory_space<vmem>>, vector<1x128xf32>
    %253 = arith.maximumf %251, %252 : vector<1x128xf32>
    %cst_196 = arith.constant 0.000000e+00 : f32
    %254 = vector.broadcast %cst_196 : f32 to vector<1x128xf32>
    %255 = arith.maximumf %253, %254 : vector<1x128xf32>
    %c1_197 = arith.constant 1 : index
    %c512_198 = arith.constant 512 : index
    %256 = vector.load %arg13[%c1_197, %c512_198] : memref<8x1280xf32, #tpu.memory_space<vmem>>, vector<1x128xf32>
    tpu.vector_store %arg13[%c1_197, %c512_198], %255 {strides = array<i32>} : memref<8x1280xf32, #tpu.memory_space<vmem>>, vector<1x128xf32>,
    %c110 = arith.constant 110 : index
    %c0_199 = arith.constant 0 : index
    %257 = vector.load %arg12[%c110, %c0_199] : memref<144x128xf32, #tpu.memory_space<vmem>>, vector<1x128xf32>
    %c111 = arith.constant 111 : index
    %c0_200 = arith.constant 0 : index
    %258 = vector.load %arg12[%c111, %c0_200] : memref<144x128xf32, #tpu.memory_space<vmem>>, vector<1x128xf32>
    %259 = arith.maximumf %257, %258 : vector<1x128xf32>
    %c116 = arith.constant 116 : index
    %c0_201 = arith.constant 0 : index
    %260 = vector.load %arg12[%c116, %c0_201] : memref<144x128xf32, #tpu.memory_space<vmem>>, vector<1x128xf32>
    %261 = arith.maximumf %259, %260 : vector<1x128xf32>
    %c117 = arith.constant 117 : index
    %c0_202 = arith.constant 0 : index
    %262 = vector.load %arg12[%c117, %c0_202] : memref<144x128xf32, #tpu.memory_space<vmem>>, vector<1x128xf32>
    %263 = arith.maximumf %261, %262 : vector<1x128xf32>
    %cst_203 = arith.constant 0.000000e+00 : f32
    %264 = vector.broadcast %cst_203 : f32 to vector<1x128xf32>
    %265 = arith.maximumf %263, %264 : vector<1x128xf32>
    %c1_204 = arith.constant 1 : index
    %c640_205 = arith.constant 640 : index
    %266 = vector.load %arg13[%c1_204, %c640_205] : memref<8x1280xf32, #tpu.memory_space<vmem>>, vector<1x128xf32>
    tpu.vector_store %arg13[%c1_204, %c640_205], %265 {strides = array<i32>} : memref<8x1280xf32, #tpu.memory_space<vmem>>, vector<1x128xf32>,
    %c120 = arith.constant 120 : index
    %c0_206 = arith.constant 0 : index
    %267 = vector.load %arg12[%c120, %c0_206] : memref<144x128xf32, #tpu.memory_space<vmem>>, vector<1x128xf32>
    %c121 = arith.constant 121 : index
    %c0_207 = arith.constant 0 : index
    %268 = vector.load %arg12[%c121, %c0_207] : memref<144x128xf32, #tpu.memory_space<vmem>>, vector<1x128xf32>
    %269 = arith.maximumf %267, %268 : vector<1x128xf32>
    %c126 = arith.constant 126 : index
    %c0_208 = arith.constant 0 : index
    %270 = vector.load %arg12[%c126, %c0_208] : memref<144x128xf32, #tpu.memory_space<vmem>>, vector<1x128xf32>
    %271 = arith.maximumf %269, %270 : vector<1x128xf32>
    %c127 = arith.constant 127 : index
    %c0_209 = arith.constant 0 : index
    %272 = vector.load %arg12[%c127, %c0_209] : memref<144x128xf32, #tpu.memory_space<vmem>>, vector<1x128xf32>
    %273 = arith.maximumf %271, %272 : vector<1x128xf32>
    %cst_210 = arith.constant 0.000000e+00 : f32
    %274 = vector.broadcast %cst_210 : f32 to vector<1x128xf32>
    %275 = arith.maximumf %273, %274 : vector<1x128xf32>
    %c1_211 = arith.constant 1 : index
    %c768_212 = arith.constant 768 : index
    %276 = vector.load %arg13[%c1_211, %c768_212] : memref<8x1280xf32, #tpu.memory_space<vmem>>, vector<1x128xf32>
    tpu.vector_store %arg13[%c1_211, %c768_212], %275 {strides = array<i32>} : memref<8x1280xf32, #tpu.memory_space<vmem>>, vector<1x128xf32>,
    %c122 = arith.constant 122 : index
    %c0_213 = arith.constant 0 : index
    %277 = vector.load %arg12[%c122, %c0_213] : memref<144x128xf32, #tpu.memory_space<vmem>>, vector<1x128xf32>
    %c123 = arith.constant 123 : index
    %c0_214 = arith.constant 0 : index
    %278 = vector.load %arg12[%c123, %c0_214] : memref<144x128xf32, #tpu.memory_space<vmem>>, vector<1x128xf32>
    %279 = arith.maximumf %277, %278 : vector<1x128xf32>
    %c128_215 = arith.constant 128 : index
    %c0_216 = arith.constant 0 : index
    %280 = vector.load %arg12[%c128_215, %c0_216] : memref<144x128xf32, #tpu.memory_space<vmem>>, vector<1x128xf32>
    %281 = arith.maximumf %279, %280 : vector<1x128xf32>
    %c129 = arith.constant 129 : index
    %c0_217 = arith.constant 0 : index
    %282 = vector.load %arg12[%c129, %c0_217] : memref<144x128xf32, #tpu.memory_space<vmem>>, vector<1x128xf32>
    %283 = arith.maximumf %281, %282 : vector<1x128xf32>
    %cst_218 = arith.constant 0.000000e+00 : f32
    %284 = vector.broadcast %cst_218 : f32 to vector<1x128xf32>
    %285 = arith.maximumf %283, %284 : vector<1x128xf32>
    %c1_219 = arith.constant 1 : index
    %c896_220 = arith.constant 896 : index
    %286 = vector.load %arg13[%c1_219, %c896_220] : memref<8x1280xf32, #tpu.memory_space<vmem>>, vector<1x128xf32>
    tpu.vector_store %arg13[%c1_219, %c896_220], %285 {strides = array<i32>} : memref<8x1280xf32, #tpu.memory_space<vmem>>, vector<1x128xf32>,
    %c132 = arith.constant 132 : index
    %c0_221 = arith.constant 0 : index
    %287 = vector.load %arg12[%c132, %c0_221] : memref<144x128xf32, #tpu.memory_space<vmem>>, vector<1x128xf32>
    %c133 = arith.constant 133 : index
    %c0_222 = arith.constant 0 : index
    %288 = vector.load %arg12[%c133, %c0_222] : memref<144x128xf32, #tpu.memory_space<vmem>>, vector<1x128xf32>
    %289 = arith.maximumf %287, %288 : vector<1x128xf32>
    %c138 = arith.constant 138 : index
    %c0_223 = arith.constant 0 : index
    %290 = vector.load %arg12[%c138, %c0_223] : memref<144x128xf32, #tpu.memory_space<vmem>>, vector<1x128xf32>
    %291 = arith.maximumf %289, %290 : vector<1x128xf32>
    %c139 = arith.constant 139 : index
    %c0_224 = arith.constant 0 : index
    %292 = vector.load %arg12[%c139, %c0_224] : memref<144x128xf32, #tpu.memory_space<vmem>>, vector<1x128xf32>
    %293 = arith.maximumf %291, %292 : vector<1x128xf32>
    %cst_225 = arith.constant 0.000000e+00 : f32
    %294 = vector.broadcast %cst_225 : f32 to vector<1x128xf32>
    %295 = arith.maximumf %293, %294 : vector<1x128xf32>
    %c1_226 = arith.constant 1 : index
    %c1024_227 = arith.constant 1024 : index
    %296 = vector.load %arg13[%c1_226, %c1024_227] : memref<8x1280xf32, #tpu.memory_space<vmem>>, vector<1x128xf32>
    tpu.vector_store %arg13[%c1_226, %c1024_227], %295 {strides = array<i32>} : memref<8x1280xf32, #tpu.memory_space<vmem>>, vector<1x128xf32>,
    %c134 = arith.constant 134 : index
    %c0_228 = arith.constant 0 : index
    %297 = vector.load %arg12[%c134, %c0_228] : memref<144x128xf32, #tpu.memory_space<vmem>>, vector<1x128xf32>
    %c135 = arith.constant 135 : index
    %c0_229 = arith.constant 0 : index
    %298 = vector.load %arg12[%c135, %c0_229] : memref<144x128xf32, #tpu.memory_space<vmem>>, vector<1x128xf32>
    %299 = arith.maximumf %297, %298 : vector<1x128xf32>
    %c140 = arith.constant 140 : index
    %c0_230 = arith.constant 0 : index
    %300 = vector.load %arg12[%c140, %c0_230] : memref<144x128xf32, #tpu.memory_space<vmem>>, vector<1x128xf32>
    %301 = arith.maximumf %299, %300 : vector<1x128xf32>
    %c141 = arith.constant 141 : index
    %c0_231 = arith.constant 0 : index
    %302 = vector.load %arg12[%c141, %c0_231] : memref<144x128xf32, #tpu.memory_space<vmem>>, vector<1x128xf32>
    %303 = arith.maximumf %301, %302 : vector<1x128xf32>
    %cst_232 = arith.constant 0.000000e+00 : f32
    %304 = vector.broadcast %cst_232 : f32 to vector<1x128xf32>
    %305 = arith.maximumf %303, %304 : vector<1x128xf32>
    %c1_233 = arith.constant 1 : index
    %c1152_234 = arith.constant 1152 : index
    %306 = vector.load %arg13[%c1_233, %c1152_234] : memref<8x1280xf32, #tpu.memory_space<vmem>>, vector<1x128xf32>
    tpu.vector_store %arg13[%c1_233, %c1152_234], %305 {strides = array<i32>} : memref<8x1280xf32, #tpu.memory_space<vmem>>, vector<1x128xf32>,
    %c0_235 = arith.constant 0 : index
    %c0_236 = arith.constant 0 : index
    %307 = vector.load %arg13[%c0_235, %c0_236] : memref<8x1280xf32, #tpu.memory_space<vmem>>, vector<2x1280xf32>
    %308 = arith.truncf %307 : vector<2x1280xf32> to vector<2x1280xbf16>
    %c0_237 = arith.constant 0 : index
    %c0_238 = arith.constant 0 : index
    %309 = vector.load %arg6[%c0_237, %c0_238] : memref<1280x512xbf16, #tpu.memory_space<vmem>>, vector<1280x512xbf16>
    %cst_239 = arith.constant dense<0.000000e+00> : vector<2x512xf32>
    %310 = tpu.matmul %308, %309, %cst_239 {dimension_numbers = #tpu.dot_dimension_numbers<[1], [0], [0], [1], [0, 0, 1, 1], [], []>} : vector<2x1280xbf16>, vector<1280x512xbf16>, vector<2x512xf32> -> vector<2x512xf32>
    %c0_240 = arith.constant 0 : index
    %c0_241 = arith.constant 0 : index
    %311 = vector.load %arg7[%c0_240, %c0_241] : memref<1x512xf32, #tpu.memory_space<vmem>>, vector<1x512xf32>
    %312 = vector.broadcast %311 : vector<1x512xf32> to vector<2x512xf32>
    %313 = arith.addf %310, %312 : vector<2x512xf32>
    %cst_242 = arith.constant 0.000000e+00 : f32
    %314 = vector.broadcast %cst_242 : f32 to vector<2x512xf32>
    %315 = arith.maximumf %313, %314 : vector<2x512xf32>
    %316 = arith.truncf %315 : vector<2x512xf32> to vector<2x512xbf16>
    %c0_243 = arith.constant 0 : index
    %c0_244 = arith.constant 0 : index
    %317 = vector.load %arg8[%c0_243, %c0_244] : memref<512x256xbf16, #tpu.memory_space<vmem>>, vector<512x256xbf16>
    %cst_245 = arith.constant dense<0.000000e+00> : vector<2x256xf32>
    %318 = tpu.matmul %316, %317, %cst_245 {dimension_numbers = #tpu.dot_dimension_numbers<[1], [0], [0], [1], [0, 0, 1, 1], [], []>} : vector<2x512xbf16>, vector<512x256xbf16>, vector<2x256xf32> -> vector<2x256xf32>
    %c0_246 = arith.constant 0 : index
    %c0_247 = arith.constant 0 : index
    %319 = vector.load %arg9[%c0_246, %c0_247] : memref<1x256xf32, #tpu.memory_space<vmem>>, vector<1x256xf32>
    %320 = vector.broadcast %319 : vector<1x256xf32> to vector<2x256xf32>
    %321 = arith.addf %318, %320 : vector<2x256xf32>
    %c0_248 = arith.constant 0 : index
    %c0_249 = arith.constant 0 : index
    %322 = vector.load %arg10[%c0_248, %c0_249] : memref<2x256xf32, #tpu.memory_space<vmem>>, vector<2x256xf32>
    tpu.vector_store %arg10[%c0_248, %c0_249], %321 {strides = array<i32>} : memref<2x256xf32, #tpu.memory_space<vmem>>, vector<2x256xf32>,
    return
  }
  func.func @transform_0(%arg0: i32) -> (i32, i32, i32) {
    %c0_i32 = arith.constant 0 : i32
    %c0_i32_0 = arith.constant 0 : i32
    %c0_i32_1 = arith.constant 0 : i32
    %c0_i32_2 = arith.constant 0 : i32
    return %c0_i32, %c0_i32_0, %c0_i32_1 : i32, i32, i32
  }
  func.func @transform_1(%arg0: i32) -> (i32, i32) {
    %c0_i32 = arith.constant 0 : i32
    %c0_i32_0 = arith.constant 0 : i32
    %c0_i32_1 = arith.constant 0 : i32
    return %c0_i32, %c0_i32_0 : i32, i32
  }
  func.func @transform_2(%arg0: i32) -> (i32, i32) {
    %c0_i32 = arith.constant 0 : i32
    %c0_i32_0 = arith.constant 0 : i32
    %c0_i32_1 = arith.constant 0 : i32
    return %c0_i32, %c0_i32_0 : i32, i32
  }
  func.func @transform_3(%arg0: i32) -> (i32, i32) {
    %c0_i32 = arith.constant 0 : i32
    %c0_i32_0 = arith.constant 0 : i32
    %c0_i32_1 = arith.constant 0 : i32
    return %c0_i32, %c0_i32_0 : i32, i32
  }
  func.func @transform_4(%arg0: i32) -> (i32, i32) {
    %c0_i32 = arith.constant 0 : i32
    %c0_i32_0 = arith.constant 0 : i32
    %c0_i32_1 = arith.constant 0 : i32
    return %c0_i32, %c0_i32_0 : i32, i32
  }
  func.func @transform_5(%arg0: i32) -> (i32, i32) {
    %c0_i32 = arith.constant 0 : i32
    %c0_i32_0 = arith.constant 0 : i32
    %c0_i32_1 = arith.constant 0 : i32
    return %c0_i32, %c0_i32_0 : i32, i32
  }
  func.func @transform_6(%arg0: i32) -> (i32, i32) {
    %c0_i32 = arith.constant 0 : i32
    %c0_i32_0 = arith.constant 0 : i32
    %c0_i32_1 = arith.constant 0 : i32
    return %c0_i32, %c0_i32_0 : i32, i32
  }
  func.func @transform_7(%arg0: i32) -> (i32, i32) {
    %c0_i32 = arith.constant 0 : i32
    %c0_i32_0 = arith.constant 0 : i32
    %c0_i32_1 = arith.constant 0 : i32
    return %c0_i32, %c0_i32_0 : i32, i32
  }
  func.func @transform_8(%arg0: i32) -> (i32, i32) {
    %c0_i32 = arith.constant 0 : i32
    %c0_i32_0 = arith.constant 0 : i32
    %c0_i32_1 = arith.constant 0 : i32
    return %c0_i32, %c0_i32_0 : i32, i32
  }
  func.func @transform_9(%arg0: i32) -> (i32, i32) {
    %c0_i32 = arith.constant 0 : i32
    %c0_i32_0 = arith.constant 0 : i32
    %c0_i32_1 = arith.constant 0 : i32
    return %c0_i32, %c0_i32_0 : i32, i32
  }
}

</mosaic_0001>

<llo_original>
// kernel: cifarnet_forward.1
$region0: #{cifarnet_forward.1}
  #allocation0 [shape = 'u32[]', space=smem, size = 0x4, offset = 0x4, fixed_abs, tag = 'smem constant byte address 0x4 - core index']
  #allocation1 [shape = 'u32[144,128]{1,0:T(1,128)}', space=vmem, size = 0x12000, scoped, tag = 'internal scratch']
  #allocation2 [shape = 'f32[176,64]{1,0:T(8,128)}', space=vmem, size = 0x16000, scoped, tag = 'scratch operand']
  #allocation3 [shape = 'f32[144,128]{1,0:T(8,128)}', space=vmem, size = 0x12000, scoped, tag = 'scratch operand']
  #allocation4 [shape = 'f32[8,1280]{1,0:T(8,128)}', space=vmem, size = 0xa000, scoped, tag = 'scratch operand']
  %s0 = inlined_call_operand.vmem [shape: bf16[4,168,128], index: 0, kind: input, shape index: {}]
  %s1 = inlined_call_operand.vmem [shape: bf16[128,64], index: 1, kind: input, shape index: {}]
  %s2 = inlined_call_operand.vmem [shape: f32[1,64], index: 2, kind: input, shape index: {}]
  %s3 = inlined_call_operand.vmem [shape: bf16[960,128], index: 3, kind: input, shape index: {}]
  %s4 = inlined_call_operand.vmem [shape: f32[1,128], index: 4, kind: input, shape index: {}]
  %s5 = inlined_call_operand.vmem [shape: bf16[1280,512], index: 5, kind: input, shape index: {}]
  %s6 = inlined_call_operand.vmem [shape: f32[1,512], index: 6, kind: input, shape index: {}]
  %s7 = inlined_call_operand.vmem [shape: bf16[512,256], index: 7, kind: input, shape index: {}]
  %s8 = inlined_call_operand.vmem [shape: f32[1,256], index: 8, kind: input, shape index: {}]
  %s9 = inlined_call_operand.hbm [shape: f32[2,256], index: 9, kind: output, shape index: {}]
  %s10 = sld [smem:[#allocation0]]
  $region46: #{cifarnet_forward.1} parent=0
    _
  %s12 = ssub.s32 1, %s10
  %s13 = scalar_select 0, %s12, %s10
  $region1: #{cifarnet_forward.1} parent=0
    #allocation5 [shape = 'u8[2048]{0}', space=vmem, size = 0x800, scoped, tag = 'output window, operand 0, single buffered']
    #allocation6 [shape = 's32[1]{0}', space=sflag, size = 0x4, scoped, tag = 'scoped memory for cifarnet_forward.1']
    %14 = vsyncpa [#allocation6], 0
    // Predicated region
    $region2: #{cifarnet_forward.1} parent=1 // pred_check
      _
    $region3: #{cifarnet_forward.1} parent=1 // pred_check_branch
      %16 = sbr.rel (0) target = $region5
    $region4: #{cifarnet_forward.1} parent=1 // pred_region
      _
    $region5: #{cifarnet_forward.1} parent=1 // pred_fallthru
      _
    // Predicated region
    $region6: #{cifarnet_forward.1} parent=1 // pred_check
      _
    $region7: #{cifarnet_forward.1} parent=1 // pred_check_branch
      %18 = sbr.rel (0) target = $region9
    $region8: #{cifarnet_forward.1} parent=1 // pred_region
      _
    $region9: #{cifarnet_forward.1} parent=1 // pred_fallthru
      _
    // Predicated region
    $region10: #{cifarnet_forward.1} parent=1 // pred_check
      _
    $region11: #{cifarnet_forward.1} parent=1 // pred_check_branch
      %20 = sbr.rel (0) target = $region13
    $region12: #{cifarnet_forward.1} parent=1 // pred_region
      _
    $region13: #{cifarnet_forward.1} parent=1 // pred_fallthru
      _
    // Predicated region
    $region14: #{cifarnet_forward.1} parent=1 // pred_check
      _
    $region15: #{cifarnet_forward.1} parent=1 // pred_check_branch
      %22 = sbr.rel (0) target = $region17
    $region16: #{cifarnet_forward.1} parent=1 // pred_region
      _
    $region17: #{cifarnet_forward.1} parent=1 // pred_fallthru
      _
    // Predicated region
    $region18: #{cifarnet_forward.1} parent=1 // pred_check
      _
    $region19: #{cifarnet_forward.1} parent=1 // pred_check_branch
      %24 = sbr.rel (0) target = $region21
    $region20: #{cifarnet_forward.1} parent=1 // pred_region
      _
    $region21: #{cifarnet_forward.1} parent=1 // pred_fallthru
      _
    // Predicated region
    $region22: #{cifarnet_forward.1} parent=1 // pred_check
      _
    $region23: #{cifarnet_forward.1} parent=1 // pred_check_branch
      %26 = sbr.rel (0) target = $region25
    $region24: #{cifarnet_forward.1} parent=1 // pred_region
      _
    $region25: #{cifarnet_forward.1} parent=1 // pred_fallthru
      _
    // Predicated region
    $region26: #{cifarnet_forward.1} parent=1 // pred_check
      _
    $region27: #{cifarnet_forward.1} parent=1 // pred_check_branch
      %28 = sbr.rel (0) target = $region29
    $region28: #{cifarnet_forward.1} parent=1 // pred_region
      _
    $region29: #{cifarnet_forward.1} parent=1 // pred_fallthru
      _
    // Predicated region
    $region30: #{cifarnet_forward.1} parent=1 // pred_check
      _
    $region31: #{cifarnet_forward.1} parent=1 // pred_check_branch
      %30 = sbr.rel (0) target = $region33
    $region32: #{cifarnet_forward.1} parent=1 // pred_region
      _
    $region33: #{cifarnet_forward.1} parent=1 // pred_fallthru
      _
    // Predicated region
    $region34: #{cifarnet_forward.1} parent=1 // pred_check
      _
    $region35: #{cifarnet_forward.1} parent=1 // pred_check_branch
      %32 = sbr.rel (0) target = $region37
    $region36: #{cifarnet_forward.1} parent=1 // pred_region
      _
    $region37: #{cifarnet_forward.1} parent=1 // pred_fallthru
      _
    %v34 = vld [vmem:[%s0] sm:$0xf]
    %v35 = vld [vmem:[%s0 + $0x4] sm:$0xf]
    %v36 = vld [vmem:[%s0 + $0x8] sm:$0xf]
    %v37 = vld [vmem:[%s0 + $0xc] sm:$0xf]
    %v38 = vld [vmem:[%s0 + $0x10] sm:$0xf]
    %v39 = vld [vmem:[%s0 + $0x14] sm:$0xf]
    %v40 = vld [vmem:[%s0 + $0x18] sm:$0xf]
    %v41 = vld [vmem:[%s0 + $0x1c] sm:$0xf]
    %v42 = vld [vmem:[%s0 + $0x20] sm:$0xf]
    %v43 = vld [vmem:[%s0 + $0x24] sm:$0xf]
    %v44 = vld [vmem:[%s0 + $0x28] sm:$0xf]
    %v45 = vld [vmem:[%s0 + $0x2c] sm:$0xf]
    %v46 = vld [vmem:[%s0 + $0x30] sm:$0xf]
    %v47 = vld [vmem:[%s0 + $0x34] sm:$0xf]
    %v48 = vld [vmem:[%s0 + $0x38] sm:$0xf]
    %v49 = vld [vmem:[%s0 + $0x3c] sm:$0xf]
    %v50 = vld [vmem:[%s0 + $0x40] sm:$0xf]
    %v51 = vld [vmem:[%s0 + $0x44] sm:$0xf]
    %v52 = vld [vmem:[%s0 + $0x48] sm:$0xf]
    %v53 = vld [vmem:[%s0 + $0x4c] sm:$0xf]
    %v54 = vld [vmem:[%s0 + $0x50] sm:$0xf]
    %v55 = vld [vmem:[%s1] sm:$0xf]
    %v56 = vld [vmem:[%s1 + $0x4] sm:$0xf]
    %v57 = vld [vmem:[%s1 + $0x8] sm:$0xf]
    %v58 = vld [vmem:[%s1 + $0xc] sm:$0xf]
    %v59 = vld [vmem:[%s1 + $0x10] sm:$0xf]
    %v60 = vld [vmem:[%s1 + $0x14] sm:$0xf]
    %v61 = vld [vmem:[%s1 + $0x18] sm:$0xf]
    %v62 = vld [vmem:[%s1 + $0x1c] sm:$0xf]
    %v63 = vld [vmem:[%s1 + $0x20] sm:$0xf]
    %v64 = vld [vmem:[%s1 + $0x24] sm:$0xf]
    %v65 = vld [vmem:[%s1 + $0x28] sm:$0xf]
    %v66 = vld [vmem:[%s1 + $0x2c] sm:$0xf]
    %v67 = vld [vmem:[%s1 + $0x30] sm:$0xf]
    %v68 = vld [vmem:[%s1 + $0x34] sm:$0xf]
    %v69 = vld [vmem:[%s1 + $0x38] sm:$0xf]
    %v70 = vld [vmem:[%s1 + $0x3c] sm:$0xf]
    %v92 = vunpack.c.l.b16 %v34
    %v93 = vunpack.c.l.b16 %v35
    %v94 = vunpack.c.l.b16 %v36
    %v95 = vunpack.c.l.b16 %v37
    %v96 = vunpack.c.l.b16 %v38
    %v97 = vunpack.c.l.b16 %v39
    %v98 = vunpack.c.l.b16 %v40
    %v99 = vunpack.c.l.b16 %v41
    %v100 = vunpack.c.l.b16 %v42
    %v101 = vunpack.c.l.b16 %v43
    %v102 = vunpack.c.l.b16 %v44
    %v103 = vunpack.c.l.b16 %v45
    %v104 = vunpack.c.l.b16 %v46
    %v105 = vunpack.c.l.b16 %v47
    %v106 = vunpack.c.l.b16 %v48
    %v107 = vunpack.c.l.b16 %v49
    %v108 = vunpack.c.l.b16 %v50
    %v109 = vunpack.c.l.b16 %v51
    %v110 = vunpack.c.l.b16 %v52
    %v111 = vunpack.c.l.b16 %v53
    %v112 = vunpack.c.l.b16 %v54
    %v113 = vpack.c.b16 %v93, %v92
    %v114 = vpack.c.b16 %v95, %v94
    %v115 = vpack.c.b16 %v97, %v96
    %v116 = vpack.c.b16 %v99, %v98
    %v117 = vpack.c.b16 %v101, %v100
    %v118 = vpack.c.b16 %v103, %v102
    %v119 = vpack.c.b16 %v105, %v104
    %v120 = vpack.c.b16 %v107, %v106
    %v121 = vpack.c.b16 %v109, %v108
    %v122 = vpack.c.b16 %v111, %v110
    %v123 = vpack.c.b16 %v112, %v112
    %v151 = vunpack.c.l.b16 %v55
    %v152 = vunpack.c.l.b16 %v56
    %v153 = vunpack.c.l.b16 %v57
    %v154 = vunpack.c.l.b16 %v58
    %v155 = vunpack.c.l.b16 %v59
    %v156 = vunpack.c.l.b16 %v60
    %v157 = vunpack.c.l.b16 %v61
    %v158 = vunpack.c.l.b16 %v62
    %v159 = vunpack.c.l.b16 %v63
    %v160 = vunpack.c.l.b16 %v64
    %v161 = vunpack.c.l.b16 %v65
    %v162 = vunpack.c.l.b16 %v66
    %v163 = vunpack.c.l.b16 %v67
    %v164 = vunpack.c.l.b16 %v68
    %v165 = vunpack.c.l.b16 %v69
    %v166 = vunpack.c.l.b16 %v70
    %v167 = vpack.c.b16 %v152, %v151
    %v168 = vpack.c.b16 %v154, %v153
    %v169 = vpack.c.b16 %v156, %v155
    %v170 = vpack.c.b16 %v158, %v157
    %v171 = vpack.c.b16 %v160, %v159
    %v172 = vpack.c.b16 %v162, %v161
    %v173 = vpack.c.b16 %v164, %v163
    %v174 = vpack.c.b16 %v166, %v165
    %183 = vmatprep.subr.bf16.mxu0 0
    %184 = vmatpush1.bf16.msra.mxu0 %v174
    %185 = vmatprep.subr.bf16.mxu0 0
    %186 = vmatpush1.bf16.msra.mxu0 %v173
    %187 = vmatprep.subr.bf16.mxu0 0
    %188 = vmatpush1.bf16.msra.mxu0 %v172
    %189 = vmatprep.subr.bf16.mxu0 0
    %190 = vmatpush1.bf16.msra.mxu0 %v171
    %191 = vmatprep.subr.bf16.mxu0 0
    %192 = vmatpush1.bf16.msra.mxu0 %v170
    %193 = vmatprep.subr.bf16.mxu0 0
    %194 = vmatpush1.bf16.msra.mxu0 %v169
    %195 = vmatprep.subr.bf16.mxu0 0
    %196 = vmatpush1.bf16.msra.mxu0 %v168
    %197 = vmatprep.subr.bf16.mxu0 0
    %198 = vmatpush1.bf16.msra.mxu0 %v167
    %199 = vmatprep.subr.bf16.mxu0 0
    %200 = vmatpush2.bf16.msra.mxu0 0
    %201 = vmatprep.subr.bf16.mxu0 0
    %202 = vmatpush2.bf16.msra.mxu0 0
    %203 = vmatprep.subr.bf16.mxu0 0
    %204 = vmatpush2.bf16.msra.mxu0 0
    %205 = vmatprep.subr.bf16.mxu0 0
    %206 = vmatpush2.bf16.msra.mxu0 0
    %207 = vmatprep.subr.bf16.mxu0 0
    %208 = vmatpush2.bf16.msra.mxu0 0
    %209 = vmatprep.subr.bf16.mxu0 0
    %210 = vmatpush2.bf16.msra.mxu0 0
    %211 = vmatprep.subr.bf16.mxu0 0
    %212 = vmatpush2.bf16.msra.mxu0 0
    %213 = vmatprep.subr.bf16.mxu0 0
    %214 = vmatpush2.bf16.msra.mxu0 0
    %215 = vmatprep.mubr.bf16.mxu0 0
    %216 = vmatmul.mubr.bf16.gmra.mxu0 %v113
    %v217 = vpop.f32.mrf.mxu0
    %v218 = vadd.f32 0.0, %v217
    %v219 = vpop.f32.mrf.mxu0
    %v220 = vpop.f32.mrf.mxu0
    %v221 = vadd.f32 0.0, %v220
    %v222 = vpop.f32.mrf.mxu0
    %223 = vmatprep.mubr.bf16.mxu0 0
    %224 = vmatmul.mubr.bf16.gmra.mxu0 %v114
    %v225 = vpop.f32.mrf.mxu0
    %v226 = vadd.f32 0.0, %v225
    %v227 = vpop.f32.mrf.mxu0
    %v228 = vpop.f32.mrf.mxu0
    %v229 = vadd.f32 0.0, %v228
    %v230 = vpop.f32.mrf.mxu0
    %231 = vmatprep.mubr.bf16.mxu0 0
    %232 = vmatmul.mubr.bf16.gmra.mxu0 %v115
    %v233 = vpop.f32.mrf.mxu0
    %v234 = vadd.f32 0.0, %v233
    %v235 = vpop.f32.mrf.mxu0
    %v236 = vpop.f32.mrf.mxu0
    %v237 = vadd.f32 0.0, %v236
    %v238 = vpop.f32.mrf.mxu0
    %239 = vmatprep.mubr.bf16.mxu0 0
    %240 = vmatmul.mubr.bf16.gmra.mxu0 %v116
    %v241 = vpop.f32.mrf.mxu0
    %v242 = vadd.f32 0.0, %v241
    %v243 = vpop.f32.mrf.mxu0
    %v244 = vpop.f32.mrf.mxu0
    %v245 = vadd.f32 0.0, %v244
    %v246 = vpop.f32.mrf.mxu0
    %247 = vmatprep.mubr.bf16.mxu0 0
    %248 = vmatmul.mubr.bf16.gmra.mxu0 %v117
    %v249 = vpop.f32.mrf.mxu0
    %v250 = vadd.f32 0.0, %v249
    %v251 = vpop.f32.mrf.mxu0
    %v252 = vpop.f32.mrf.mxu0
    %v253 = vadd.f32 0.0, %v252
    %v254 = vpop.f32.mrf.mxu0
    %255 = vmatprep.mubr.bf16.mxu0 0
    %256 = vmatmul.mubr.bf16.gmra.mxu0 %v118
    %v257 = vpop.f32.mrf.mxu0
    %v258 = vadd.f32 0.0, %v257
    %v259 = vpop.f32.mrf.mxu0
    %v260 = vpop.f32.mrf.mxu0
    %v261 = vadd.f32 0.0, %v260
    %v262 = vpop.f32.mrf.mxu0
    %263 = vmatprep.mubr.bf16.mxu0 0
    %264 = vmatmul.mubr.bf16.gmra.mxu0 %v119
    %v265 = vpop.f32.mrf.mxu0
    %v266 = vadd.f32 0.0, %v265
    %v267 = vpop.f32.mrf.mxu0
    %v268 = vpop.f32.mrf.mxu0
    %v269 = vadd.f32 0.0, %v268
    %v270 = vpop.f32.mrf.mxu0
    %271 = vmatprep.mubr.bf16.mxu0 0
    %272 = vmatmul.mubr.bf16.gmra.mxu0 %v120
    %v273 = vpop.f32.mrf.mxu0
    %v274 = vadd.f32 0.0, %v273
    %v275 = vpop.f32.mrf.mxu0
    %v276 = vpop.f32.mrf.mxu0
    %v277 = vadd.f32 0.0, %v276
    %v278 = vpop.f32.mrf.mxu0
    %279 = vmatprep.mubr.bf16.mxu0 0
    %280 = vmatmul.mubr.bf16.gmra.mxu0 %v121
    %v281 = vpop.f32.mrf.mxu0
    %v282 = vadd.f32 0.0, %v281
    %v283 = vpop.f32.mrf.mxu0
    %v284 = vpop.f32.mrf.mxu0
    %v285 = vadd.f32 0.0, %v284
    %v286 = vpop.f32.mrf.mxu0
    %287 = vmatprep.mubr.bf16.mxu0 0
    %288 = vmatmul.mubr.bf16.gmra.mxu0 %v122
    %v289 = vpop.f32.mrf.mxu0
    %v290 = vadd.f32 0.0, %v289
    %v291 = vpop.f32.mrf.mxu0
    %v292 = vpop.f32.mrf.mxu0
    %v293 = vadd.f32 0.0, %v292
    %v294 = vpop.f32.mrf.mxu0
    %295 = vmatprep.mubr.bf16.mxu0 0
    %296 = vmatmul.mubr.bf16.gmra.mxu0 %v123
    %v297 = vpop.f32.mrf.mxu0
    %v298 = vadd.f32 0.0, %v297
    %v299 = vpop.f32.mrf.mxu0
    %v300 = vpop.f32.mrf.mxu0
    %v301 = vpop.f32.mrf.mxu0
    %302 = vdwg.mxu0
    %s303 = scalar_lea.vmem %s0, 84
    %v304 = vld [vmem:[%s303] sm:$0xf]
    %v305 = vld [vmem:[%s303 + $0x4] sm:$0xf]
    %v306 = vld [vmem:[%s303 + $0x8] sm:$0xf]
    %v307 = vld [vmem:[%s303 + $0xc] sm:$0xf]
    %v308 = vld [vmem:[%s303 + $0x10] sm:$0xf]
    %v309 = vld [vmem:[%s303 + $0x14] sm:$0xf]
    %v310 = vld [vmem:[%s303 + $0x18] sm:$0xf]
    %v311 = vld [vmem:[%s303 + $0x1c] sm:$0xf]
    %v312 = vld [vmem:[%s303 + $0x20] sm:$0xf]
    %v313 = vld [vmem:[%s303 + $0x24] sm:$0xf]
    %v314 = vld [vmem:[%s303 + $0x28] sm:$0xf]
    %v315 = vld [vmem:[%s303 + $0x2c] sm:$0xf]
    %v316 = vld [vmem:[%s303 + $0x30] sm:$0xf]
    %v317 = vld [vmem:[%s303 + $0x34] sm:$0xf]
    %v318 = vld [vmem:[%s303 + $0x38] sm:$0xf]
    %v319 = vld [vmem:[%s303 + $0x3c] sm:$0xf]
    %v320 = vld [vmem:[%s303 + $0x40] sm:$0xf]
    %v321 = vld [vmem:[%s303 + $0x44] sm:$0xf]
    %v322 = vld [vmem:[%s303 + $0x48] sm:$0xf]
    %v323 = vld [vmem:[%s303 + $0x4c] sm:$0xf]
    %v324 = vld [vmem:[%s303 + $0x50] sm:$0xf]
    %v346 = vunpack.c.l.b16 %v304
    %v347 = vunpack.c.l.b16 %v305
    %v348 = vunpack.c.l.b16 %v306
    %v349 = vunpack.c.l.b16 %v307
    %v350 = vunpack.c.l.b16 %v308
    %v351 = vunpack.c.l.b16 %v309
    %v352 = vunpack.c.l.b16 %v310
    %v353 = vunpack.c.l.b16 %v311
    %v354 = vunpack.c.l.b16 %v312
    %v355 = vunpack.c.l.b16 %v313
    %v356 = vunpack.c.l.b16 %v314
    %v357 = vunpack.c.l.b16 %v315
    %v358 = vunpack.c.l.b16 %v316
    %v359 = vunpack.c.l.b16 %v317
    %v360 = vunpack.c.l.b16 %v318
    %v361 = vunpack.c.l.b16 %v319
    %v362 = vunpack.c.l.b16 %v320
    %v363 = vunpack.c.l.b16 %v321
    %v364 = vunpack.c.l.b16 %v322
    %v365 = vunpack.c.l.b16 %v323
    %v366 = vunpack.c.l.b16 %v324
    %v367 = vpack.c.b16 %v347, %v346
    %v368 = vpack.c.b16 %v349, %v348
    %v369 = vpack.c.b16 %v351, %v350
    %v370 = vpack.c.b16 %v353, %v352
    %v371 = vpack.c.b16 %v355, %v354
    %v372 = vpack.c.b16 %v357, %v356
    %v373 = vpack.c.b16 %v359, %v358
    %v374 = vpack.c.b16 %v361, %v360
    %v375 = vpack.c.b16 %v363, %v362
    %v376 = vpack.c.b16 %v365, %v364
    %v377 = vpack.c.b16 %v366, %v366
    %389 = vmatprep.subr.bf16.mxu0 0
    %390 = vmatpush1.bf16.msra.mxu0 %v174
    %391 = vmatprep.subr.bf16.mxu0 0
    %392 = vmatpush1.bf16.msra.mxu0 %v173
    %393 = vmatprep.subr.bf16.mxu0 0
    %394 = vmatpush1.bf16.msra.mxu0 %v172
    %395 = vmatprep.subr.bf16.mxu0 0
    %396 = vmatpush1.bf16.msra.mxu0 %v171
    %397 = vmatprep.subr.bf16.mxu0 0
    %398 = vmatpush1.bf16.msra.mxu0 %v170
    %399 = vmatprep.subr.bf16.mxu0 0
    %400 = vmatpush1.bf16.msra.mxu0 %v169
    %401 = vmatprep.subr.bf16.mxu0 0
    %402 = vmatpush1.bf16.msra.mxu0 %v168
    %403 = vmatprep.subr.bf16.mxu0 0
    %404 = vmatpush1.bf16.msra.mxu0 %v167
    %405 = vmatprep.subr.bf16.mxu0 0
    %406 = vmatpush2.bf16.msra.mxu0 0
    %407 = vmatprep.subr.bf16.mxu0 0
    %408 = vmatpush2.bf16.msra.mxu0 0
    %409 = vmatprep.subr.bf16.mxu0 0
    %410 = vmatpush2.bf16.msra.mxu0 0
    %411 = vmatprep.subr.bf16.mxu0 0
    %412 = vmatpush2.bf16.msra.mxu0 0
    %413 = vmatprep.subr.bf16.mxu0 0
    %414 = vmatpush2.bf16.msra.mxu0 0
    %415 = vmatprep.subr.bf16.mxu0 0
    %416 = vmatpush2.bf16.msra.mxu0 0
    %417 = vmatprep.subr.bf16.mxu0 0
    %418 = vmatpush2.bf16.msra.mxu0 0
    %419 = vmatprep.subr.bf16.mxu0 0
    %420 = vmatpush2.bf16.msra.mxu0 0
    %421 = vmatprep.mubr.bf16.mxu0 0
    %422 = vmatmul.mubr.bf16.gmra.mxu0 %v367
    %v423 = vpop.f32.mrf.mxu0
    %v424 = vadd.f32 0.0, %v423
    %v425 = vpop.f32.mrf.mxu0
    %v426 = vpop.f32.mrf.mxu0
    %v427 = vadd.f32 0.0, %v426
    %v428 = vpop.f32.mrf.mxu0
    %429 = vmatprep.mubr.bf16.mxu0 0
    %430 = vmatmul.mubr.bf16.gmra.mxu0 %v368
    %v431 = vpop.f32.mrf.mxu0
    %v432 = vadd.f32 0.0, %v431
    %v433 = vpop.f32.mrf.mxu0
    %v434 = vpop.f32.mrf.mxu0
    %v435 = vadd.f32 0.0, %v434
    %v436 = vpop.f32.mrf.mxu0
    %437 = vmatprep.mubr.bf16.mxu0 0
    %438 = vmatmul.mubr.bf16.gmra.mxu0 %v369
    %v439 = vpop.f32.mrf.mxu0
    %v440 = vadd.f32 0.0, %v439
    %v441 = vpop.f32.mrf.mxu0
    %v442 = vpop.f32.mrf.mxu0
    %v443 = vadd.f32 0.0, %v442
    %v444 = vpop.f32.mrf.mxu0
    %445 = vmatprep.mubr.bf16.mxu0 0
    %446 = vmatmul.mubr.bf16.gmra.mxu0 %v370
    %v447 = vpop.f32.mrf.mxu0
    %v448 = vadd.f32 0.0, %v447
    %v449 = vpop.f32.mrf.mxu0
    %v450 = vpop.f32.mrf.mxu0
    %v451 = vadd.f32 0.0, %v450
    %v452 = vpop.f32.mrf.mxu0
    %453 = vmatprep.mubr.bf16.mxu0 0
    %454 = vmatmul.mubr.bf16.gmra.mxu0 %v371
    %v455 = vpop.f32.mrf.mxu0
    %v456 = vadd.f32 0.0, %v455
    %v457 = vpop.f32.mrf.mxu0
    %v458 = vpop.f32.mrf.mxu0
    %v459 = vadd.f32 0.0, %v458
    %v460 = vpop.f32.mrf.mxu0
    %461 = vmatprep.mubr.bf16.mxu0 0
    %462 = vmatmul.mubr.bf16.gmra.mxu0 %v372
    %v463 = vpop.f32.mrf.mxu0
    %v464 = vadd.f32 0.0, %v463
    %v465 = vpop.f32.mrf.mxu0
    %v466 = vpop.f32.mrf.mxu0
    %v467 = vadd.f32 0.0, %v466
    %v468 = vpop.f32.mrf.mxu0
    %469 = vmatprep.mubr.bf16.mxu0 0
    %470 = vmatmul.mubr.bf16.gmra.mxu0 %v373
    %v471 = vpop.f32.mrf.mxu0
    %v472 = vadd.f32 0.0, %v471
    %v473 = vpop.f32.mrf.mxu0
    %v474 = vpop.f32.mrf.mxu0
    %v475 = vadd.f32 0.0, %v474
    %v476 = vpop.f32.mrf.mxu0
    %477 = vmatprep.mubr.bf16.mxu0 0
    %478 = vmatmul.mubr.bf16.gmra.mxu0 %v374
    %v479 = vpop.f32.mrf.mxu0
    %v480 = vadd.f32 0.0, %v479
    %v481 = vpop.f32.mrf.mxu0
    %v482 = vpop.f32.mrf.mxu0
    %v483 = vadd.f32 0.0, %v482
    %v484 = vpop.f32.mrf.mxu0
    %485 = vmatprep.mubr.bf16.mxu0 0
    %486 = vmatmul.mubr.bf16.gmra.mxu0 %v375
    %v487 = vpop.f32.mrf.mxu0
    %v488 = vadd.f32 0.0, %v487
    %v489 = vpop.f32.mrf.mxu0
    %v490 = vpop.f32.mrf.mxu0
    %v491 = vadd.f32 0.0, %v490
    %v492 = vpop.f32.mrf.mxu0
    %493 = vmatprep.mubr.bf16.mxu0 0
    %494 = vmatmul.mubr.bf16.gmra.mxu0 %v376
    %v495 = vpop.f32.mrf.mxu0
    %v496 = vadd.f32 0.0, %v495
    %v497 = vpop.f32.mrf.mxu0
    %v498 = vpop.f32.mrf.mxu0
    %v499 = vadd.f32 0.0, %v498
    %v500 = vpop.f32.mrf.mxu0
    %501 = vmatprep.mubr.bf16.mxu0 0
    %502 = vmatmul.mubr.bf16.gmra.mxu0 %v377
    %v503 = vpop.f32.mrf.mxu0
    %v504 = vadd.f32 0.0, %v503
    %v505 = vpop.f32.mrf.mxu0
    %v506 = vpop.f32.mrf.mxu0
    %v507 = vpop.f32.mrf.mxu0
    %508 = vdwg.mxu0
    %v509 = vmax.f32 %v218, %v424
    %v510 = vmax.f32 %v221, %v427
    %v511 = vmax.f32 %v226, %v432
    %v512 = vmax.f32 %v229, %v435
    %v513 = vmax.f32 %v234, %v440
    %v514 = vmax.f32 %v237, %v443
    %v515 = vmax.f32 %v242, %v448
    %v516 = vmax.f32 %v245, %v451
    %v517 = vmax.f32 %v250, %v456
    %v518 = vmax.f32 %v253, %v459
    %v519 = vmax.f32 %v258, %v464
    %v520 = vmax.f32 %v261, %v467
    %v521 = vmax.f32 %v266, %v472
    %v522 = vmax.f32 %v269, %v475
    %v523 = vmax.f32 %v274, %v480
    %v524 = vmax.f32 %v277, %v483
    %v525 = vmax.f32 %v282, %v488
    %v526 = vmax.f32 %v285, %v491
    %v527 = vmax.f32 %v290, %v496
    %v528 = vmax.f32 %v293, %v499
    %v529 = vmax.f32 %v298, %v504
    %s530 = scalar_lea.vmem %s0, 168
    %v531 = vld [vmem:[%s530] sm:$0xf]
    %v532 = vld [vmem:[%s530 + $0x4] sm:$0xf]
    %v533 = vld [vmem:[%s530 + $0x8] sm:$0xf]
    %v534 = vld [vmem:[%s530 + $0xc] sm:$0xf]
    %v535 = vld [vmem:[%s530 + $0x10] sm:$0xf]
    %v536 = vld [vmem:[%s530 + $0x14] sm:$0xf]
    %v537 = vld [vmem:[%s530 + $0x18] sm:$0xf]
    %v538 = vld [vmem:[%s530 + $0x1c] sm:$0xf]
    %v539 = vld [vmem:[%s530 + $0x20] sm:$0xf]
    %v540 = vld [vmem:[%s530 + $0x24] sm:$0xf]
    %v541 = vld [vmem:[%s530 + $0x28] sm:$0xf]
    %v542 = vld [vmem:[%s530 + $0x2c] sm:$0xf]
    %v543 = vld [vmem:[%s530 + $0x30] sm:$0xf]
    %v544 = vld [vmem:[%s530 + $0x34] sm:$0xf]
    %v545 = vld [vmem:[%s530 + $0x38] sm:$0xf]
    %v546 = vld [vmem:[%s530 + $0x3c] sm:$0xf]
    %v547 = vld [vmem:[%s530 + $0x40] sm:$0xf]
    %v548 = vld [vmem:[%s530 + $0x44] sm:$0xf]
    %v549 = vld [vmem:[%s530 + $0x48] sm:$0xf]
    %v550 = vld [vmem:[%s530 + $0x4c] sm:$0xf]
    %v551 = vld [vmem:[%s530 + $0x50] sm:$0xf]
    %v573 = vunpack.c.l.b16 %v531
    %v574 = vunpack.c.l.b16 %v532
    %v575 = vunpack.c.l.b16 %v533
    %v576 = vunpack.c.l.b16 %v534
    %v577 = vunpack.c.l.b16 %v535
    %v578 = vunpack.c.l.b16 %v536
    %v579 = vunpack.c.l.b16 %v537
    %v580 = vunpack.c.l.b16 %v538
    %v581 = vunpack.c.l.b16 %v539
    %v582 = vunpack.c.l.b16 %v540
    %v583 = vunpack.c.l.b16 %v541
    %v584 = vunpack.c.l.b16 %v542
    %v585 = vunpack.c.l.b16 %v543
    %v586 = vunpack.c.l.b16 %v544
    %v587 = vunpack.c.l.b16 %v545
    %v588 = vunpack.c.l.b16 %v546
    %v589 = vunpack.c.l.b16 %v547
    %v590 = vunpack.c.l.b16 %v548
    %v591 = vunpack.c.l.b16 %v549
    %v592 = vunpack.c.l.b16 %v550
    %v593 = vunpack.c.l.b16 %v551
    %v594 = vpack.c.b16 %v574, %v573
    %v595 = vpack.c.b16 %v576, %v575
    %v596 = vpack.c.b16 %v578, %v577
    %v597 = vpack.c.b16 %v580, %v579
    %v598 = vpack.c.b16 %v582, %v581
    %v599 = vpack.c.b16 %v584, %v583
    %v600 = vpack.c.b16 %v586, %v585
    %v601 = vpack.c.b16 %v588, %v587
    %v602 = vpack.c.b16 %v590, %v589
    %v603 = vpack.c.b16 %v592, %v591
    %v604 = vpack.c.b16 %v593, %v593
    %616 = vmatprep.subr.bf16.mxu0 0
    %617 = vmatpush1.bf16.msra.mxu0 %v174
    %618 = vmatprep.subr.bf16.mxu0 0
    %619 = vmatpush1.bf16.msra.mxu0 %v173
    %620 = vmatprep.subr.bf16.mxu0 0
    %621 = vmatpush1.bf16.msra.mxu0 %v172
    %622 = vmatprep.subr.bf16.mxu0 0
    %623 = vmatpush1.bf16.msra.mxu0 %v171
    %624 = vmatprep.subr.bf16.mxu0 0
    %625 = vmatpush1.bf16.msra.mxu0 %v170
    %626 = vmatprep.subr.bf16.mxu0 0
    %627 = vmatpush1.bf16.msra.mxu0 %v169
    %628 = vmatprep.subr.bf16.mxu0 0
    %629 = vmatpush1.bf16.msra.mxu0 %v168
    %630 = vmatprep.subr.bf16.mxu0 0
    %631 = vmatpush1.bf16.msra.mxu0 %v167
    %632 = vmatprep.subr.bf16.mxu0 0
    %633 = vmatpush2.bf16.msra.mxu0 0
    %634 = vmatprep.subr.bf16.mxu0 0
    %635 = vmatpush2.bf16.msra.mxu0 0
    %636 = vmatprep.subr.bf16.mxu0 0
    %637 = vmatpush2.bf16.msra.mxu0 0
    %638 = vmatprep.subr.bf16.mxu0 0
    %639 = vmatpush2.bf16.msra.mxu0 0
    %640 = vmatprep.subr.bf16.mxu0 0
    %641 = vmatpush2.bf16.msra.mxu0 0
    %642 = vmatprep.subr.bf16.mxu0 0
    %643 = vmatpush2.bf16.msra.mxu0 0
    %644 = vmatprep.subr.bf16.mxu0 0
    %645 = vmatpush2.bf16.msra.mxu0 0
    %646 = vmatprep.subr.bf16.mxu0 0
    %647 = vmatpush2.bf16.msra.mxu0 0
    %648 = vmatprep.mubr.bf16.mxu0 0
    %649 = vmatmul.mubr.bf16.gmra.mxu0 %v594
    %v650 = vpop.f32.mrf.mxu0
    %v651 = vadd.f32 0.0, %v650
    %v652 = vpop.f32.mrf.mxu0
    %v653 = vpop.f32.mrf.mxu0
    %v654 = vadd.f32 0.0, %v653
    %v655 = vpop.f32.mrf.mxu0
    %656 = vmatprep.mubr.bf16.mxu0 0
    %657 = vmatmul.mubr.bf16.gmra.mxu0 %v595
    %v658 = vpop.f32.mrf.mxu0
    %v659 = vadd.f32 0.0, %v658
    %v660 = vpop.f32.mrf.mxu0
    %v661 = vpop.f32.mrf.mxu0
    %v662 = vadd.f32 0.0, %v661
    %v663 = vpop.f32.mrf.mxu0
    %664 = vmatprep.mubr.bf16.mxu0 0
    %665 = vmatmul.mubr.bf16.gmra.mxu0 %v596
    %v666 = vpop.f32.mrf.mxu0
    %v667 = vadd.f32 0.0, %v666
    %v668 = vpop.f32.mrf.mxu0
    %v669 = vpop.f32.mrf.mxu0
    %v670 = vadd.f32 0.0, %v669
    %v671 = vpop.f32.mrf.mxu0
    %672 = vmatprep.mubr.bf16.mxu0 0
    %673 = vmatmul.mubr.bf16.gmra.mxu0 %v597
    %v674 = vpop.f32.mrf.mxu0
    %v675 = vadd.f32 0.0, %v674
    %v676 = vpop.f32.mrf.mxu0
    %v677 = vpop.f32.mrf.mxu0
    %v678 = vadd.f32 0.0, %v677
    %v679 = vpop.f32.mrf.mxu0
    %680 = vmatprep.mubr.bf16.mxu0 0
    %681 = vmatmul.mubr.bf16.gmra.mxu0 %v598
    %v682 = vpop.f32.mrf.mxu0
    %v683 = vadd.f32 0.0, %v682
    %v684 = vpop.f32.mrf.mxu0
    %v685 = vpop.f32.mrf.mxu0
    %v686 = vadd.f32 0.0, %v685
    %v687 = vpop.f32.mrf.mxu0
    %688 = vmatprep.mubr.bf16.mxu0 0
    %689 = vmatmul.mubr.bf16.gmra.mxu0 %v599
    %v690 = vpop.f32.mrf.mxu0
    %v691 = vadd.f32 0.0, %v690
    %v692 = vpop.f32.mrf.mxu0
    %v693 = vpop.f32.mrf.mxu0
    %v694 = vadd.f32 0.0, %v693
    %v695 = vpop.f32.mrf.mxu0
    %696 = vmatprep.mubr.bf16.mxu0 0
    %697 = vmatmul.mubr.bf16.gmra.mxu0 %v600
    %v698 = vpop.f32.mrf.mxu0
    %v699 = vadd.f32 0.0, %v698
    %v700 = vpop.f32.mrf.mxu0
    %v701 = vpop.f32.mrf.mxu0
    %v702 = vadd.f32 0.0, %v701
    %v703 = vpop.f32.mrf.mxu0
    %704 = vmatprep.mubr.bf16.mxu0 0
    %705 = vmatmul.mubr.bf16.gmra.mxu0 %v601
    %v706 = vpop.f32.mrf.mxu0
    %v707 = vadd.f32 0.0, %v706
    %v708 = vpop.f32.mrf.mxu0
    %v709 = vpop.f32.mrf.mxu0
    %v710 = vadd.f32 0.0, %v709
    %v711 = vpop.f32.mrf.mxu0
    %712 = vmatprep.mubr.bf16.mxu0 0
    %713 = vmatmul.mubr.bf16.gmra.mxu0 %v602
    %v714 = vpop.f32.mrf.mxu0
    %v715 = vadd.f32 0.0, %v714
    %v716 = vpop.f32.mrf.mxu0
    %v717 = vpop.f32.mrf.mxu0
    %v718 = vadd.f32 0.0, %v717
    %v719 = vpop.f32.mrf.mxu0
    %720 = vmatprep.mubr.bf16.mxu0 0
    %721 = vmatmul.mubr.bf16.gmra.mxu0 %v603
    %v722 = vpop.f32.mrf.mxu0
    %v723 = vadd.f32 0.0, %v722
    %v724 = vpop.f32.mrf.mxu0
    %v725 = vpop.f32.mrf.mxu0
    %v726 = vadd.f32 0.0, %v725
    %v727 = vpop.f32.mrf.mxu0
    %728 = vmatprep.mubr.bf16.mxu0 0
    %729 = vmatmul.mubr.bf16.gmra.mxu0 %v604
    %v730 = vpop.f32.mrf.mxu0
    %v731 = vadd.f32 0.0, %v730
    %v732 = vpop.f32.mrf.mxu0
    %v733 = vpop.f32.mrf.mxu0
    %v734 = vpop.f32.mrf.mxu0
    %735 = vdwg.mxu0
    %v736 = vmax.f32 %v509, %v651
    %v737 = vmax.f32 %v510, %v654
    %v738 = vmax.f32 %v511, %v659
    %v739 = vmax.f32 %v512, %v662
    %v740 = vmax.f32 %v513, %v667
    %v741 = vmax.f32 %v514, %v670
    %v742 = vmax.f32 %v515, %v675
    %v743 = vmax.f32 %v516, %v678
    %v744 = vmax.f32 %v517, %v683
    %v745 = vmax.f32 %v518, %v686
    %v746 = vmax.f32 %v519, %v691
    %v747 = vmax.f32 %v520, %v694
    %v748 = vmax.f32 %v521, %v699
    %v749 = vmax.f32 %v522, %v702
    %v750 = vmax.f32 %v523, %v707
    %v751 = vmax.f32 %v524, %v710
    %v752 = vmax.f32 %v525, %v715
    %v753 = vmax.f32 %v526, %v718
    %v754 = vmax.f32 %v527, %v723
    %v755 = vmax.f32 %v528, %v726
    %v756 = vmax.f32 %v529, %v731
    %s757 = scalar_lea.vmem %s0, 252
    %v758 = vld [vmem:[%s757] sm:$0xf]
    %v759 = vld [vmem:[%s757 + $0x4] sm:$0xf]
    %v760 = vld [vmem:[%s757 + $0x8] sm:$0xf]
    %v761 = vld [vmem:[%s757 + $0xc] sm:$0xf]
    %v762 = vld [vmem:[%s757 + $0x10] sm:$0xf]
    %v763 = vld [vmem:[%s757 + $0x14] sm:$0xf]
    %v764 = vld [vmem:[%s757 + $0x18] sm:$0xf]
    %v765 = vld [vmem:[%s757 + $0x1c] sm:$0xf]
    %v766 = vld [vmem:[%s757 + $0x20] sm:$0xf]
    %v767 = vld [vmem:[%s757 + $0x24] sm:$0xf]
    %v768 = vld [vmem:[%s757 + $0x28] sm:$0xf]
    %v769 = vld [vmem:[%s757 + $0x2c] sm:$0xf]
    %v770 = vld [vmem:[%s757 + $0x30] sm:$0xf]
    %v771 = vld [vmem:[%s757 + $0x34] sm:$0xf]
    %v772 = vld [vmem:[%s757 + $0x38] sm:$0xf]
    %v773 = vld [vmem:[%s757 + $0x3c] sm:$0xf]
    %v774 = vld [vmem:[%s757 + $0x40] sm:$0xf]
    %v775 = vld [vmem:[%s757 + $0x44] sm:$0xf]
    %v776 = vld [vmem:[%s757 + $0x48] sm:$0xf]
    %v777 = vld [vmem:[%s757 + $0x4c] sm:$0xf]
    %v778 = vld [vmem:[%s757 + $0x50] sm:$0xf]
    %v800 = vunpack.c.l.b16 %v758
    %v801 = vunpack.c.l.b16 %v759
    %v802 = vunpack.c.l.b16 %v760
    %v803 = vunpack.c.l.b16 %v761
    %v804 = vunpack.c.l.b16 %v762
    %v805 = vunpack.c.l.b16 %v763
    %v806 = vunpack.c.l.b16 %v764
    %v807 = vunpack.c.l.b16 %v765
    %v808 = vunpack.c.l.b16 %v766
    %v809 = vunpack.c.l.b16 %v767
    %v810 = vunpack.c.l.b16 %v768
    %v811 = vunpack.c.l.b16 %v769
    %v812 = vunpack.c.l.b16 %v770
    %v813 = vunpack.c.l.b16 %v771
    %v814 = vunpack.c.l.b16 %v772
    %v815 = vunpack.c.l.b16 %v773
    %v816 = vunpack.c.l.b16 %v774
    %v817 = vunpack.c.l.b16 %v775
    %v818 = vunpack.c.l.b16 %v776
    %v819 = vunpack.c.l.b16 %v777
    %v820 = vunpack.c.l.b16 %v778
    %v821 = vpack.c.b16 %v801, %v800
    %v822 = vpack.c.b16 %v803, %v802
    %v823 = vpack.c.b16 %v805, %v804
    %v824 = vpack.c.b16 %v807, %v806
    %v825 = vpack.c.b16 %v809, %v808
    %v826 = vpack.c.b16 %v811, %v810
    %v827 = vpack.c.b16 %v813, %v812
    %v828 = vpack.c.b16 %v815, %v814
    %v829 = vpack.c.b16 %v817, %v816
    %v830 = vpack.c.b16 %v819, %v818
    %v831 = vpack.c.b16 %v820, %v820
    %843 = vmatprep.subr.bf16.mxu0 0
    %844 = vmatpush1.bf16.msra.mxu0 %v174
    %845 = vmatprep.subr.bf16.mxu0 0
    %846 = vmatpush1.bf16.msra.mxu0 %v173
    %847 = vmatprep.subr.bf16.mxu0 0
    %848 = vmatpush1.bf16.msra.mxu0 %v172
    %849 = vmatprep.subr.bf16.mxu0 0
    %850 = vmatpush1.bf16.msra.mxu0 %v171
    %851 = vmatprep.subr.bf16.mxu0 0
    %852 = vmatpush1.bf16.msra.mxu0 %v170
    %853 = vmatprep.subr.bf16.mxu0 0
    %854 = vmatpush1.bf16.msra.mxu0 %v169
    %855 = vmatprep.subr.bf16.mxu0 0
    %856 = vmatpush1.bf16.msra.mxu0 %v168
    %857 = vmatprep.subr.bf16.mxu0 0
    %858 = vmatpush1.bf16.msra.mxu0 %v167
    %859 = vmatprep.subr.bf16.mxu0 0
    %860 = vmatpush2.bf16.msra.mxu0 0
    %861 = vmatprep.subr.bf16.mxu0 0
    %862 = vmatpush2.bf16.msra.mxu0 0
    %863 = vmatprep.subr.bf16.mxu0 0
    %864 = vmatpush2.bf16.msra.mxu0 0
    %865 = vmatprep.subr.bf16.mxu0 0
    %866 = vmatpush2.bf16.msra.mxu0 0
    %867 = vmatprep.subr.bf16.mxu0 0
    %868 = vmatpush2.bf16.msra.mxu0 0
    %869 = vmatprep.subr.bf16.mxu0 0
    %870 = vmatpush2.bf16.msra.mxu0 0
    %871 = vmatprep.subr.bf16.mxu0 0
    %872 = vmatpush2.bf16.msra.mxu0 0
    %873 = vmatprep.subr.bf16.mxu0 0
    %874 = vmatpush2.bf16.msra.mxu0 0
    %875 = vmatprep.mubr.bf16.mxu0 0
    %876 = vmatmul.mubr.bf16.gmra.mxu0 %v821
    %v877 = vpop.f32.mrf.mxu0
    %v878 = vadd.f32 0.0, %v877
    %v879 = vpop.f32.mrf.mxu0
    %v880 = vpop.f32.mrf.mxu0
    %v881 = vadd.f32 0.0, %v880
    %v882 = vpop.f32.mrf.mxu0
    %883 = vmatprep.mubr.bf16.mxu0 0
    %884 = vmatmul.mubr.bf16.gmra.mxu0 %v822
    %v885 = vpop.f32.mrf.mxu0
    %v886 = vadd.f32 0.0, %v885
    %v887 = vpop.f32.mrf.mxu0
    %v888 = vpop.f32.mrf.mxu0
    %v889 = vadd.f32 0.0, %v888
    %v890 = vpop.f32.mrf.mxu0
    %891 = vmatprep.mubr.bf16.mxu0 0
    %892 = vmatmul.mubr.bf16.gmra.mxu0 %v823
    %v893 = vpop.f32.mrf.mxu0
    %v894 = vadd.f32 0.0, %v893
    %v895 = vpop.f32.mrf.mxu0
    %v896 = vpop.f32.mrf.mxu0
    %v897 = vadd.f32 0.0, %v896
    %v898 = vpop.f32.mrf.mxu0
    %899 = vmatprep.mubr.bf16.mxu0 0
    %900 = vmatmul.mubr.bf16.gmra.mxu0 %v824
    %v901 = vpop.f32.mrf.mxu0
    %v902 = vadd.f32 0.0, %v901
    %v903 = vpop.f32.mrf.mxu0
    %v904 = vpop.f32.mrf.mxu0
    %v905 = vadd.f32 0.0, %v904
    %v906 = vpop.f32.mrf.mxu0
    %907 = vmatprep.mubr.bf16.mxu0 0
    %908 = vmatmul.mubr.bf16.gmra.mxu0 %v825
    %v909 = vpop.f32.mrf.mxu0
    %v910 = vadd.f32 0.0, %v909
    %v911 = vpop.f32.mrf.mxu0
    %v912 = vpop.f32.mrf.mxu0
    %v913 = vadd.f32 0.0, %v912
    %v914 = vpop.f32.mrf.mxu0
    %915 = vmatprep.mubr.bf16.mxu0 0
    %916 = vmatmul.mubr.bf16.gmra.mxu0 %v826
    %v917 = vpop.f32.mrf.mxu0
    %v918 = vadd.f32 0.0, %v917
    %v919 = vpop.f32.mrf.mxu0
    %v920 = vpop.f32.mrf.mxu0
    %v921 = vadd.f32 0.0, %v920
    %v922 = vpop.f32.mrf.mxu0
    %923 = vmatprep.mubr.bf16.mxu0 0
    %924 = vmatmul.mubr.bf16.gmra.mxu0 %v827
    %v925 = vpop.f32.mrf.mxu0
    %v926 = vadd.f32 0.0, %v925
    %v927 = vpop.f32.mrf.mxu0
    %v928 = vpop.f32.mrf.mxu0
    %v929 = vadd.f32 0.0, %v928
    %v930 = vpop.f32.mrf.mxu0
    %931 = vmatprep.mubr.bf16.mxu0 0
    %932 = vmatmul.mubr.bf16.gmra.mxu0 %v828
    %v933 = vpop.f32.mrf.mxu0
    %v934 = vadd.f32 0.0, %v933
    %v935 = vpop.f32.mrf.mxu0
    %v936 = vpop.f32.mrf.mxu0
    %v937 = vadd.f32 0.0, %v936
    %v938 = vpop.f32.mrf.mxu0
    %939 = vmatprep.mubr.bf16.mxu0 0
    %940 = vmatmul.mubr.bf16.gmra.mxu0 %v829
    %v941 = vpop.f32.mrf.mxu0
    %v942 = vadd.f32 0.0, %v941
    %v943 = vpop.f32.mrf.mxu0
    %v944 = vpop.f32.mrf.mxu0
    %v945 = vadd.f32 0.0, %v944
    %v946 = vpop.f32.mrf.mxu0
    %947 = vmatprep.mubr.bf16.mxu0 0
    %948 = vmatmul.mubr.bf16.gmra.mxu0 %v830
    %v949 = vpop.f32.mrf.mxu0
    %v950 = vadd.f32 0.0, %v949
    %v951 = vpop.f32.mrf.mxu0
    %v952 = vpop.f32.mrf.mxu0
    %v953 = vadd.f32 0.0, %v952
    %v954 = vpop.f32.mrf.mxu0
    %955 = vmatprep.mubr.bf16.mxu0 0
    %956 = vmatmul.mubr.bf16.gmra.mxu0 %v831
    %v957 = vpop.f32.mrf.mxu0
    %v958 = vadd.f32 0.0, %v957
    %v959 = vpop.f32.mrf.mxu0
    %v960 = vpop.f32.mrf.mxu0
    %v961 = vpop.f32.mrf.mxu0
    %962 = vdwg.mxu0
    %v963 = vmax.f32 %v736, %v878
    %v964 = vmax.f32 %v737, %v881
    %v965 = vmax.f32 %v738, %v886
    %v966 = vmax.f32 %v739, %v889
    %v967 = vmax.f32 %v740, %v894
    %v968 = vmax.f32 %v741, %v897
    %v969 = vmax.f32 %v742, %v902
    %v970 = vmax.f32 %v743, %v905
    %v971 = vmax.f32 %v744, %v910
    %v972 = vmax.f32 %v745, %v913
    %v973 = vmax.f32 %v746, %v918
    %v974 = vmax.f32 %v747, %v921
    %v975 = vmax.f32 %v748, %v926
    %v976 = vmax.f32 %v749, %v929
    %v977 = vmax.f32 %v750, %v934
    %v978 = vmax.f32 %v751, %v937
    %v979 = vmax.f32 %v752, %v942
    %v980 = vmax.f32 %v753, %v945
    %v981 = vmax.f32 %v754, %v950
    %v982 = vmax.f32 %v755, %v953
    %v983 = vmax.f32 %v756, %v958
    %v984 = vld [vmem:[%s2] sm:$0x1]
    %v986 = vlaneseq
    %v987 = vshrl.u32 %v986, 7
    %v988 = vsub.s32 0, %v987
    %v989 = vrot.slane %v984, %v988
    %v991 = vadd.f32 %v963, %v989
    %v992 = vadd.f32 %v964, %v989
    %v993 = vadd.f32 %v965, %v989
    %v994 = vadd.f32 %v966, %v989
    %v995 = vadd.f32 %v967, %v989
    %v996 = vadd.f32 %v968, %v989
    %v997 = vadd.f32 %v969, %v989
    %v998 = vadd.f32 %v970, %v989
    %v999 = vadd.f32 %v971, %v989
    %v1000 = vadd.f32 %v972, %v989
    %v1001 = vadd.f32 %v973, %v989
    %v1002 = vadd.f32 %v974, %v989
    %v1003 = vadd.f32 %v975, %v989
    %v1004 = vadd.f32 %v976, %v989
    %v1005 = vadd.f32 %v977, %v989
    %v1006 = vadd.f32 %v978, %v989
    %v1007 = vadd.f32 %v979, %v989
    %v1008 = vadd.f32 %v980, %v989
    %v1009 = vadd.f32 %v981, %v989
    %v1010 = vadd.f32 %v982, %v989
    %v1011 = vadd.f32 %v983, %v989
    %v1012 = vmax.f32 %v991, 0.0
    %v1013 = vmax.f32 %v992, 0.0
    %v1014 = vmax.f32 %v993, 0.0
    %v1015 = vmax.f32 %v994, 0.0
    %v1016 = vmax.f32 %v995, 0.0
    %v1017 = vmax.f32 %v996, 0.0
    %v1018 = vmax.f32 %v997, 0.0
    %v1019 = vmax.f32 %v998, 0.0
    %v1020 = vmax.f32 %v999, 0.0
    %v1021 = vmax.f32 %v1000, 0.0
    %v1022 = vmax.f32 %v1001, 0.0
    %v1023 = vmax.f32 %v1002, 0.0
    %v1024 = vmax.f32 %v1003, 0.0
    %v1025 = vmax.f32 %v1004, 0.0
    %v1026 = vmax.f32 %v1005, 0.0
    %v1027 = vmax.f32 %v1006, 0.0
    %v1028 = vmax.f32 %v1007, 0.0
    %v1029 = vmax.f32 %v1008, 0.0
    %v1030 = vmax.f32 %v1009, 0.0
    %v1031 = vmax.f32 %v1010, 0.0
    %v1032 = vmax.f32 %v1011, 0.0
    %vm1033 = vcmask 523264
    %1034 = vst.msk [vmem:[#allocation2] sm:$0xff] %vm1033, %v1012
    %1035 = vst.msk [vmem:[#allocation2 + $0x8] sm:$0xff] %vm1033, %v1013
    %1036 = vst.msk [vmem:[#allocation2 + $0x10] sm:$0xff] %vm1033, %v1014
    %1037 = vst.msk [vmem:[#allocation2 + $0x18] sm:$0xff] %vm1033, %v1015
    %1038 = vst.msk [vmem:[#allocation2 + $0x20] sm:$0xff] %vm1033, %v1016
    %1039 = vst.msk [vmem:[#allocation2 + $0x28] sm:$0xff] %vm1033, %v1017
    %1040 = vst.msk [vmem:[#allocation2 + $0x30] sm:$0xff] %vm1033, %v1018
    %1041 = vst.msk [vmem:[#allocation2 + $0x38] sm:$0xff] %vm1033, %v1019
    %1042 = vst.msk [vmem:[#allocation2 + $0x40] sm:$0xff] %vm1033, %v1020
    %1043 = vst.msk [vmem:[#allocation2 + $0x48] sm:$0xff] %vm1033, %v1021
    %1044 = vst.msk [vmem:[#allocation2 + $0x50] sm:$0xff] %vm1033, %v1022
    %1045 = vst.msk [vmem:[#allocation2 + $0x58] sm:$0xff] %vm1033, %v1023
    %1046 = vst.msk [vmem:[#allocation2 + $0x60] sm:$0xff] %vm1033, %v1024
    %1047 = vst.msk [vmem:[#allocation2 + $0x68] sm:$0xff] %vm1033, %v1025
    %1048 = vst.msk [vmem:[#allocation2 + $0x70] sm:$0xff] %vm1033, %v1026
    %1049 = vst.msk [vmem:[#allocation2 + $0x78] sm:$0xff] %vm1033, %v1027
    %1050 = vst.msk [vmem:[#allocation2 + $0x80] sm:$0xff] %vm1033, %v1028
    %1051 = vst.msk [vmem:[#allocation2 + $0x88] sm:$0xff] %vm1033, %v1029
    %1052 = vst.msk [vmem:[#allocation2 + $0x90] sm:$0xff] %vm1033, %v1030
    %1053 = vst.msk [vmem:[#allocation2 + $0x98] sm:$0xff] %vm1033, %v1031
    %1054 = vst.msk [vmem:[#allocation2 + $0xa0] sm:$0xff] %vm1033, %v1032
    %1055 = vst.msk [vmem:[#allocation2 + $0xa8] sm:$0xff] %vm1033, 0.0
    %v1056 = vld [vmem:[#allocation2] sm:$0xff]
    %v1057 = vld [vmem:[#allocation2 + $0x8] sm:$0xff]
    %v1058 = vld [vmem:[#allocation2 + $0x10] sm:$0xff]
    %v1059 = vld [vmem:[#allocation2 + $0x18] sm:$0xff]
    %v1060 = vld [vmem:[#allocation2 + $0x20] sm:$0xff]
    %v1061 = vld [vmem:[#allocation2 + $0x28] sm:$0xff]
    %v1062 = vld [vmem:[#allocation2 + $0x30] sm:$0xff]
    %v1063 = vld [vmem:[#allocation2 + $0x38] sm:$0xff]
    %v1064 = vld [vmem:[#allocation2 + $0x40] sm:$0xff]
    %v1065 = vld [vmem:[#allocation2 + $0x48] sm:$0xff]
    %v1066 = vld [vmem:[#allocation2 + $0x50] sm:$0xff]
    %v1067 = vld [vmem:[#allocation2 + $0x58] sm:$0xff]
    %v1068 = vld [vmem:[#allocation2 + $0x60] sm:$0xff]
    %v1069 = vld [vmem:[#allocation2 + $0x68] sm:$0xff]
    %v1070 = vld [vmem:[#allocation2 + $0x70] sm:$0xff]
    %v1071 = vld [vmem:[#allocation2 + $0x78] sm:$0xff]
    %v1072 = vld [vmem:[#allocation2 + $0x80] sm:$0xff]
    %v1073 = vld [vmem:[#allocation2 + $0x88] sm:$0xff]
    %v1074 = vpack.c.bf16 %v1057, %v1056
    %v1075 = vpack.c.bf16 %v1059, %v1058
    %v1076 = vpack.c.bf16 %v1061, %v1060
    %v1077 = vpack.c.bf16 %v1063, %v1062
    %v1078 = vpack.c.bf16 %v1065, %v1064
    %v1079 = vpack.c.bf16 %v1067, %v1066
    %v1080 = vpack.c.bf16 %v1069, %v1068
    %v1081 = vpack.c.bf16 %v1071, %v1070
    %v1082 = vpack.c.bf16 %v1073, %v1072
    %v1083 = vld [vmem:[%s3] sm:$0xf]
    %v1084 = vld [vmem:[%s3 + $0x4] sm:$0xf]
    %v1085 = vld [vmem:[%s3 + $0x8] sm:$0xf]
    %v1086 = vld [vmem:[%s3 + $0xc] sm:$0xf]
    %v1087 = vld [vmem:[%s3 + $0x10] sm:$0xf]
    %v1088 = vld [vmem:[%s3 + $0x14] sm:$0xf]
    %v1089 = vld [vmem:[%s3 + $0x18] sm:$0xf]
    %v1090 = vld [vmem:[%s3 + $0x1c] sm:$0xf]
    %v1091 = vld [vmem:[#allocation2 + $0x1] sm:$0xff]
    %v1092 = vld [vmem:[#allocation2 + $0x9] sm:$0xff]
    %v1093 = vld [vmem:[#allocation2 + $0x11] sm:$0xff]
    %v1094 = vld [vmem:[#allocation2 + $0x19] sm:$0xff]
    %v1095 = vld [vmem:[#allocation2 + $0x21] sm:$0xff]
    %v1096 = vld [vmem:[#allocation2 + $0x29] sm:$0xff]
    %v1097 = vld [vmem:[#allocation2 + $0x31] sm:$0xff]
    %v1098 = vld [vmem:[#allocation2 + $0x39] sm:$0xff]
    %v1099 = vld [vmem:[#allocation2 + $0x41] sm:$0xff]
    %v1100 = vld [vmem:[#allocation2 + $0x49] sm:$0xff]
    %v1101 = vld [vmem:[#allocation2 + $0x51] sm:$0xff]
    %v1102 = vld [vmem:[#allocation2 + $0x59] sm:$0xff]
    %v1103 = vld [vmem:[#allocation2 + $0x61] sm:$0xff]
    %v1104 = vld [vmem:[#allocation2 + $0x69] sm:$0xff]
    %v1105 = vld [vmem:[#allocation2 + $0x71] sm:$0xff]
    %v1106 = vld [vmem:[#allocation2 + $0x79] sm:$0xff]
    %v1107 = vld [vmem:[#allocation2 + $0x81] sm:$0xff]
    %v1108 = vld [vmem:[#allocation2 + $0x89] sm:$0xff]
    %v1109 = vpack.c.bf16 %v1092, %v1091
    %v1110 = vpack.c.bf16 %v1094, %v1093
    %v1111 = vpack.c.bf16 %v1096, %v1095
    %v1112 = vpack.c.bf16 %v1098, %v1097
    %v1113 = vpack.c.bf16 %v1100, %v1099
    %v1114 = vpack.c.bf16 %v1102, %v1101
    %v1115 = vpack.c.bf16 %v1104, %v1103
    %v1116 = vpack.c.bf16 %v1106, %v1105
    %v1117 = vpack.c.bf16 %v1108, %v1107
    %v1118 = vld [vmem:[%s3 + $0x20] sm:$0xf]
    %v1119 = vld [vmem:[%s3 + $0x24] sm:$0xf]
    %v1120 = vld [vmem:[%s3 + $0x28] sm:$0xf]
    %v1121 = vld [vmem:[%s3 + $0x2c] sm:$0xf]
    %v1122 = vld [vmem:[%s3 + $0x30] sm:$0xf]
    %v1123 = vld [vmem:[%s3 + $0x34] sm:$0xf]
    %v1124 = vld [vmem:[%s3 + $0x38] sm:$0xf]
    %v1125 = vld [vmem:[%s3 + $0x3c] sm:$0xf]
    %v1134 = vunpack.c.l.b16 %v1118
    %v1135 = vunpack.c.l.b16 %v1119
    %v1136 = vunpack.c.l.b16 %v1120
    %v1137 = vunpack.c.l.b16 %v1121
    %v1138 = vunpack.c.l.b16 %v1122
    %v1139 = vunpack.c.l.b16 %v1123
    %v1140 = vunpack.c.l.b16 %v1124
    %v1141 = vunpack.c.l.b16 %v1125
    %v1142 = vpack.c.b16 %v1135, %v1134
    %v1143 = vpack.c.b16 %v1137, %v1136
    %v1144 = vpack.c.b16 %v1139, %v1138
    %v1145 = vpack.c.b16 %v1141, %v1140
    %v1151 = vsel %vm1033, %v1109, 0
    %v1154 = vsel %vm1033, %v1110, 0
    %v1157 = vsel %vm1033, %v1111, 0
    %v1160 = vsel %vm1033, %v1112, 0
    %v1163 = vsel %vm1033, %v1113, 0
    %v1166 = vsel %vm1033, %v1114, 0
    %v1169 = vsel %vm1033, %v1115, 0
    %v1172 = vsel %vm1033, %v1116, 0
    %v1175 = vsel %vm1033, %v1117, 0
    %1177 = vmatprep.subr.bf16.mxu0 0
    %1178 = vmatpush1.bf16.msra.mxu0 0
    %1179 = vmatprep.subr.bf16.mxu0 0
    %1180 = vmatpush1.bf16.msra.mxu0 0
    %1181 = vmatprep.subr.bf16.mxu0 0
    %1182 = vmatpush1.bf16.msra.mxu0 0
    %1183 = vmatprep.subr.bf16.mxu0 0
    %1184 = vmatpush1.bf16.msra.mxu0 0
    %1185 = vmatprep.subr.bf16.mxu0 0
    %1186 = vmatpush1.bf16.msra.mxu0 %v1145
    %1187 = vmatprep.subr.bf16.mxu0 0
    %1188 = vmatpush1.bf16.msra.mxu0 %v1144
    %1189 = vmatprep.subr.bf16.mxu0 0
    %1190 = vmatpush1.bf16.msra.mxu0 %v1143
    %1191 = vmatprep.subr.bf16.mxu0 0
    %1192 = vmatpush1.bf16.msra.mxu0 %v1142
    %1193 = vmatprep.subr.bf16.mxu0 0
    %1194 = vmatpush2.bf16.msra.mxu0 0
    %1195 = vmatprep.subr.bf16.mxu0 0
    %1196 = vmatpush2.bf16.msra.mxu0 0
    %1197 = vmatprep.subr.bf16.mxu0 0
    %1198 = vmatpush2.bf16.msra.mxu0 0
    %1199 = vmatprep.subr.bf16.mxu0 0
    %1200 = vmatpush2.bf16.msra.mxu0 0
    %1201 = vmatprep.subr.bf16.mxu0 0
    %1202 = vmatpush2.bf16.msra.mxu0 0
    %1203 = vmatprep.subr.bf16.mxu0 0
    %1204 = vmatpush2.bf16.msra.mxu0 0
    %1205 = vmatprep.subr.bf16.mxu0 0
    %1206 = vmatpush2.bf16.msra.mxu0 0
    %1207 = vmatprep.subr.bf16.mxu0 0
    %1208 = vmatpush2.bf16.msra.mxu0 0
    %1209 = vmatprep.mubr.bf16.mxu0 0
    %1210 = vmatmul.mubr.bf16.gmra.mxu0 %v1151
    %v1211 = vpop.f32.mrf.mxu0
    %v1212 = vadd.f32 0.0, %v1211
    %v1213 = vpop.f32.mrf.mxu0
    %v1214 = vpop.f32.mrf.mxu0
    %v1215 = vadd.f32 0.0, %v1214
    %v1216 = vpop.f32.mrf.mxu0
    %1217 = vmatprep.mubr.bf16.mxu0 0
    %1218 = vmatmul.mubr.bf16.gmra.mxu0 %v1154
    %v1219 = vpop.f32.mrf.mxu0
    %v1220 = vadd.f32 0.0, %v1219
    %v1221 = vpop.f32.mrf.mxu0
    %v1222 = vpop.f32.mrf.mxu0
    %v1223 = vadd.f32 0.0, %v1222
    %v1224 = vpop.f32.mrf.mxu0
    %1225 = vmatprep.mubr.bf16.mxu0 0
    %1226 = vmatmul.mubr.bf16.gmra.mxu0 %v1157
    %v1227 = vpop.f32.mrf.mxu0
    %v1228 = vadd.f32 0.0, %v1227
    %v1229 = vpop.f32.mrf.mxu0
    %v1230 = vpop.f32.mrf.mxu0
    %v1231 = vadd.f32 0.0, %v1230
    %v1232 = vpop.f32.mrf.mxu0
    %1233 = vmatprep.mubr.bf16.mxu0 0
    %1234 = vmatmul.mubr.bf16.gmra.mxu0 %v1160
    %v1235 = vpop.f32.mrf.mxu0
    %v1236 = vadd.f32 0.0, %v1235
    %v1237 = vpop.f32.mrf.mxu0
    %v1238 = vpop.f32.mrf.mxu0
    %v1239 = vadd.f32 0.0, %v1238
    %v1240 = vpop.f32.mrf.mxu0
    %1241 = vmatprep.mubr.bf16.mxu0 0
    %1242 = vmatmul.mubr.bf16.gmra.mxu0 %v1163
    %v1243 = vpop.f32.mrf.mxu0
    %v1244 = vadd.f32 0.0, %v1243
    %v1245 = vpop.f32.mrf.mxu0
    %v1246 = vpop.f32.mrf.mxu0
    %v1247 = vadd.f32 0.0, %v1246
    %v1248 = vpop.f32.mrf.mxu0
    %1249 = vmatprep.mubr.bf16.mxu0 0
    %1250 = vmatmul.mubr.bf16.gmra.mxu0 %v1166
    %v1251 = vpop.f32.mrf.mxu0
    %v1252 = vadd.f32 0.0, %v1251
    %v1253 = vpop.f32.mrf.mxu0
    %v1254 = vpop.f32.mrf.mxu0
    %v1255 = vadd.f32 0.0, %v1254
    %v1256 = vpop.f32.mrf.mxu0
    %1257 = vmatprep.mubr.bf16.mxu0 0
    %1258 = vmatmul.mubr.bf16.gmra.mxu0 %v1169
    %v1259 = vpop.f32.mrf.mxu0
    %v1260 = vadd.f32 0.0, %v1259
    %v1261 = vpop.f32.mrf.mxu0
    %v1262 = vpop.f32.mrf.mxu0
    %v1263 = vadd.f32 0.0, %v1262
    %v1264 = vpop.f32.mrf.mxu0
    %1265 = vmatprep.mubr.bf16.mxu0 0
    %1266 = vmatmul.mubr.bf16.gmra.mxu0 %v1172
    %v1267 = vpop.f32.mrf.mxu0
    %v1268 = vadd.f32 0.0, %v1267
    %v1269 = vpop.f32.mrf.mxu0
    %v1270 = vpop.f32.mrf.mxu0
    %v1271 = vadd.f32 0.0, %v1270
    %v1272 = vpop.f32.mrf.mxu0
    %1273 = vmatprep.mubr.bf16.mxu0 0
    %1274 = vmatmul.mubr.bf16.gmra.mxu0 %v1175
    %v1275 = vpop.f32.mrf.mxu0
    %v1276 = vadd.f32 0.0, %v1275
    %v1277 = vpop.f32.mrf.mxu0
    %v1278 = vpop.f32.mrf.mxu0
    %v1279 = vadd.f32 0.0, %v1278
    %v1280 = vpop.f32.mrf.mxu0
    %1281 = vdwg.mxu0
    %v1290 = vunpack.c.l.b16 %v1083
    %v1291 = vunpack.c.l.b16 %v1084
    %v1292 = vunpack.c.l.b16 %v1085
    %v1293 = vunpack.c.l.b16 %v1086
    %v1294 = vunpack.c.l.b16 %v1087
    %v1295 = vunpack.c.l.b16 %v1088
    %v1296 = vunpack.c.l.b16 %v1089
    %v1297 = vunpack.c.l.b16 %v1090
    %v1298 = vpack.c.b16 %v1291, %v1290
    %v1299 = vpack.c.b16 %v1293, %v1292
    %v1300 = vpack.c.b16 %v1295, %v1294
    %v1301 = vpack.c.b16 %v1297, %v1296
    %v1307 = vsel %vm1033, %v1074, 0
    %v1310 = vsel %vm1033, %v1075, 0
    %v1313 = vsel %vm1033, %v1076, 0
    %v1316 = vsel %vm1033, %v1077, 0
    %v1319 = vsel %vm1033, %v1078, 0
    %v1322 = vsel %vm1033, %v1079, 0
    %v1325 = vsel %vm1033, %v1080, 0
    %v1328 = vsel %vm1033, %v1081, 0
    %v1331 = vsel %vm1033, %v1082, 0
    %1333 = vmatprep.subr.bf16.mxu0 0
    %1334 = vmatpush1.bf16.msra.mxu0 0
    %1335 = vmatprep.subr.bf16.mxu0 0
    %1336 = vmatpush1.bf16.msra.mxu0 0
    %1337 = vmatprep.subr.bf16.mxu0 0
    %1338 = vmatpush1.bf16.msra.mxu0 0
    %1339 = vmatprep.subr.bf16.mxu0 0
    %1340 = vmatpush1.bf16.msra.mxu0 0
    %1341 = vmatprep.subr.bf16.mxu0 0
    %1342 = vmatpush1.bf16.msra.mxu0 %v1301
    %1343 = vmatprep.subr.bf16.mxu0 0
    %1344 = vmatpush1.bf16.msra.mxu0 %v1300
    %1345 = vmatprep.subr.bf16.mxu0 0
    %1346 = vmatpush1.bf16.msra.mxu0 %v1299
    %1347 = vmatprep.subr.bf16.mxu0 0
    %1348 = vmatpush1.bf16.msra.mxu0 %v1298
    %1349 = vmatprep.subr.bf16.mxu0 0
    %1350 = vmatpush2.bf16.msra.mxu0 0
    %1351 = vmatprep.subr.bf16.mxu0 0
    %1352 = vmatpush2.bf16.msra.mxu0 0
    %1353 = vmatprep.subr.bf16.mxu0 0
    %1354 = vmatpush2.bf16.msra.mxu0 0
    %1355 = vmatprep.subr.bf16.mxu0 0
    %1356 = vmatpush2.bf16.msra.mxu0 0
    %1357 = vmatprep.subr.bf16.mxu0 0
    %1358 = vmatpush2.bf16.msra.mxu0 0
    %1359 = vmatprep.subr.bf16.mxu0 0
    %1360 = vmatpush2.bf16.msra.mxu0 0
    %1361 = vmatprep.subr.bf16.mxu0 0
    %1362 = vmatpush2.bf16.msra.mxu0 0
    %1363 = vmatprep.subr.bf16.mxu0 0
    %1364 = vmatpush2.bf16.msra.mxu0 0
    %1365 = vmatprep.mubr.bf16.mxu0 0
    %1366 = vmatmul.mubr.bf16.gmra.mxu0 %v1307
    %v1367 = vpop.f32.mrf.mxu0
    %v1368 = vadd.f32 %v1212, %v1367
    %v1369 = vpop.f32.mrf.mxu0
    %v1370 = vpop.f32.mrf.mxu0
    %v1371 = vadd.f32 %v1215, %v1370
    %v1372 = vpop.f32.mrf.mxu0
    %1373 = vmatprep.mubr.bf16.mxu0 0
    %1374 = vmatmul.mubr.bf16.gmra.mxu0 %v1310
    %v1375 = vpop.f32.mrf.mxu0
    %v1376 = vadd.f32 %v1220, %v1375
    %v1377 = vpop.f32.mrf.mxu0
    %v1378 = vpop.f32.mrf.mxu0
    %v1379 = vadd.f32 %v1223, %v1378
    %v1380 = vpop.f32.mrf.mxu0
    %1381 = vmatprep.mubr.bf16.mxu0 0
    %1382 = vmatmul.mubr.bf16.gmra.mxu0 %v1313
    %v1383 = vpop.f32.mrf.mxu0
    %v1384 = vadd.f32 %v1228, %v1383
    %v1385 = vpop.f32.mrf.mxu0
    %v1386 = vpop.f32.mrf.mxu0
    %v1387 = vadd.f32 %v1231, %v1386
    %v1388 = vpop.f32.mrf.mxu0
    %1389 = vmatprep.mubr.bf16.mxu0 0
    %1390 = vmatmul.mubr.bf16.gmra.mxu0 %v1316
    %v1391 = vpop.f32.mrf.mxu0
    %v1392 = vadd.f32 %v1236, %v1391
    %v1393 = vpop.f32.mrf.mxu0
    %v1394 = vpop.f32.mrf.mxu0
    %v1395 = vadd.f32 %v1239, %v1394
    %v1396 = vpop.f32.mrf.mxu0
    %1397 = vmatprep.mubr.bf16.mxu0 0
    %1398 = vmatmul.mubr.bf16.gmra.mxu0 %v1319
    %v1399 = vpop.f32.mrf.mxu0
    %v1400 = vadd.f32 %v1244, %v1399
    %v1401 = vpop.f32.mrf.mxu0
    %v1402 = vpop.f32.mrf.mxu0
    %v1403 = vadd.f32 %v1247, %v1402
    %v1404 = vpop.f32.mrf.mxu0
    %1405 = vmatprep.mubr.bf16.mxu0 0
    %1406 = vmatmul.mubr.bf16.gmra.mxu0 %v1322
    %v1407 = vpop.f32.mrf.mxu0
    %v1408 = vadd.f32 %v1252, %v1407
    %v1409 = vpop.f32.mrf.mxu0
    %v1410 = vpop.f32.mrf.mxu0
    %v1411 = vadd.f32 %v1255, %v1410
    %v1412 = vpop.f32.mrf.mxu0
    %1413 = vmatprep.mubr.bf16.mxu0 0
    %1414 = vmatmul.mubr.bf16.gmra.mxu0 %v1325
    %v1415 = vpop.f32.mrf.mxu0
    %v1416 = vadd.f32 %v1260, %v1415
    %v1417 = vpop.f32.mrf.mxu0
    %v1418 = vpop.f32.mrf.mxu0
    %v1419 = vadd.f32 %v1263, %v1418
    %v1420 = vpop.f32.mrf.mxu0
    %1421 = vmatprep.mubr.bf16.mxu0 0
    %1422 = vmatmul.mubr.bf16.gmra.mxu0 %v1328
    %v1423 = vpop.f32.mrf.mxu0
    %v1424 = vadd.f32 %v1268, %v1423
    %v1425 = vpop.f32.mrf.mxu0
    %v1426 = vpop.f32.mrf.mxu0
    %v1427 = vadd.f32 %v1271, %v1426
    %v1428 = vpop.f32.mrf.mxu0
    %1429 = vmatprep.mubr.bf16.mxu0 0
    %1430 = vmatmul.mubr.bf16.gmra.mxu0 %v1331
    %v1431 = vpop.f32.mrf.mxu0
    %v1432 = vadd.f32 %v1276, %v1431
    %v1433 = vpop.f32.mrf.mxu0
    %v1434 = vpop.f32.mrf.mxu0
    %v1435 = vadd.f32 %v1279, %v1434
    %v1436 = vpop.f32.mrf.mxu0
    %1437 = vdwg.mxu0
    %v1438 = vld [vmem:[#allocation2 + $0x2] sm:$0xff]
    %v1439 = vld [vmem:[#allocation2 + $0xa] sm:$0xff]
    %v1440 = vld [vmem:[#allocation2 + $0x12] sm:$0xff]
    %v1441 = vld [vmem:[#allocation2 + $0x1a] sm:$0xff]
    %v1442 = vld [vmem:[#allocation2 + $0x22] sm:$0xff]
    %v1443 = vld [vmem:[#allocation2 + $0x2a] sm:$0xff]
    %v1444 = vld [vmem:[#allocation2 + $0x32] sm:$0xff]
    %v1445 = vld [vmem:[#allocation2 + $0x3a] sm:$0xff]
    %v1446 = vld [vmem:[#allocation2 + $0x42] sm:$0xff]
    %v1447 = vld [vmem:[#allocation2 + $0x4a] sm:$0xff]
    %v1448 = vld [vmem:[#allocation2 + $0x52] sm:$0xff]
    %v1449 = vld [vmem:[#allocation2 + $0x5a] sm:$0xff]
    %v1450 = vld [vmem:[#allocation2 + $0x62] sm:$0xff]
    %v1451 = vld [vmem:[#allocation2 + $0x6a] sm:$0xff]
    %v1452 = vld [vmem:[#allocation2 + $0x72] sm:$0xff]
    %v1453 = vld [vmem:[#allocation2 + $0x7a] sm:$0xff]
    %v1454 = vld [vmem:[#allocation2 + $0x82] sm:$0xff]
    %v1455 = vld [vmem:[#allocation2 + $0x8a] sm:$0xff]
    %v1456 = vpack.c.bf16 %v1439, %v1438
    %v1457 = vpack.c.bf16 %v1441, %v1440
    %v1458 = vpack.c.bf16 %v1443, %v1442
    %v1459 = vpack.c.bf16 %v1445, %v1444
    %v1460 = vpack.c.bf16 %v1447, %v1446
    %v1461 = vpack.c.bf16 %v1449, %v1448
    %v1462 = vpack.c.bf16 %v1451, %v1450
    %v1463 = vpack.c.bf16 %v1453, %v1452
    %v1464 = vpack.c.bf16 %v1455, %v1454
    %v1465 = vld [vmem:[%s3 + $0x40] sm:$0xf]
    %v1466 = vld [vmem:[%s3 + $0x44] sm:$0xf]
    %v1467 = vld [vmem:[%s3 + $0x48] sm:$0xf]
    %v1468 = vld [vmem:[%s3 + $0x4c] sm:$0xf]
    %v1469 = vld [vmem:[%s3 + $0x50] sm:$0xf]
    %v1470 = vld [vmem:[%s3 + $0x54] sm:$0xf]
    %v1471 = vld [vmem:[%s3 + $0x58] sm:$0xf]
    %v1472 = vld [vmem:[%s3 + $0x5c] sm:$0xf]
    %v1481 = vunpack.c.l.b16 %v1465
    %v1482 = vunpack.c.l.b16 %v1466
    %v1483 = vunpack.c.l.b16 %v1467
    %v1484 = vunpack.c.l.b16 %v1468
    %v1485 = vunpack.c.l.b16 %v1469
    %v1486 = vunpack.c.l.b16 %v1470
    %v1487 = vunpack.c.l.b16 %v1471
    %v1488 = vunpack.c.l.b16 %v1472
    %v1489 = vpack.c.b16 %v1482, %v1481
    %v1490 = vpack.c.b16 %v1484, %v1483
    %v1491 = vpack.c.b16 %v1486, %v1485
    %v1492 = vpack.c.b16 %v1488, %v1487
    %v1498 = vsel %vm1033, %v1456, 0
    %v1501 = vsel %vm1033, %v1457, 0
    %v1504 = vsel %vm1033, %v1458, 0
    %v1507 = vsel %vm1033, %v1459, 0
    %v1510 = vsel %vm1033, %v1460, 0
    %v1513 = vsel %vm1033, %v1461, 0
    %v1516 = vsel %vm1033, %v1462, 0
    %v1519 = vsel %vm1033, %v1463, 0
    %v1522 = vsel %vm1033, %v1464, 0
    %1524 = vmatprep.subr.bf16.mxu0 0
    %1525 = vmatpush1.bf16.msra.mxu0 0
    %1526 = vmatprep.subr.bf16.mxu0 0
    %1527 = vmatpush1.bf16.msra.mxu0 0
    %1528 = vmatprep.subr.bf16.mxu0 0
    %1529 = vmatpush1.bf16.msra.mxu0 0
    %1530 = vmatprep.subr.bf16.mxu0 0
    %1531 = vmatpush1.bf16.msra.mxu0 0
    %1532 = vmatprep.subr.bf16.mxu0 0
    %1533 = vmatpush1.bf16.msra.mxu0 %v1492
    %1534 = vmatprep.subr.bf16.mxu0 0
    %1535 = vmatpush1.bf16.msra.mxu0 %v1491
    %1536 = vmatprep.subr.bf16.mxu0 0
    %1537 = vmatpush1.bf16.msra.mxu0 %v1490
    %1538 = vmatprep.subr.bf16.mxu0 0
    %1539 = vmatpush1.bf16.msra.mxu0 %v1489
    %1540 = vmatprep.subr.bf16.mxu0 0
    %1541 = vmatpush2.bf16.msra.mxu0 0
    %1542 = vmatprep.subr.bf16.mxu0 0
    %1543 = vmatpush2.bf16.msra.mxu0 0
    %1544 = vmatprep.subr.bf16.mxu0 0
    %1545 = vmatpush2.bf16.msra.mxu0 0
    %1546 = vmatprep.subr.bf16.mxu0 0
    %1547 = vmatpush2.bf16.msra.mxu0 0
    %1548 = vmatprep.subr.bf16.mxu0 0
    %1549 = vmatpush2.bf16.msra.mxu0 0
    %1550 = vmatprep.subr.bf16.mxu0 0
    %1551 = vmatpush2.bf16.msra.mxu0 0
    %1552 = vmatprep.subr.bf16.mxu0 0
    %1553 = vmatpush2.bf16.msra.mxu0 0
    %1554 = vmatprep.subr.bf16.mxu0 0
    %1555 = vmatpush2.bf16.msra.mxu0 0
    %1556 = vmatprep.mubr.bf16.mxu0 0
    %1557 = vmatmul.mubr.bf16.gmra.mxu0 %v1498
    %v1558 = vpop.f32.mrf.mxu0
    %v1559 = vadd.f32 0.0, %v1558
    %v1560 = vpop.f32.mrf.mxu0
    %v1561 = vpop.f32.mrf.mxu0
    %v1562 = vadd.f32 0.0, %v1561
    %v1563 = vpop.f32.mrf.mxu0
    %1564 = vmatprep.mubr.bf16.mxu0 0
    %1565 = vmatmul.mubr.bf16.gmra.mxu0 %v1501
    %v1566 = vpop.f32.mrf.mxu0
    %v1567 = vadd.f32 0.0, %v1566
    %v1568 = vpop.f32.mrf.mxu0
    %v1569 = vpop.f32.mrf.mxu0
    %v1570 = vadd.f32 0.0, %v1569
    %v1571 = vpop.f32.mrf.mxu0
    %1572 = vmatprep.mubr.bf16.mxu0 0
    %1573 = vmatmul.mubr.bf16.gmra.mxu0 %v1504
    %v1574 = vpop.f32.mrf.mxu0
    %v1575 = vadd.f32 0.0, %v1574
    %v1576 = vpop.f32.mrf.mxu0
    %v1577 = vpop.f32.mrf.mxu0
    %v1578 = vadd.f32 0.0, %v1577
    %v1579 = vpop.f32.mrf.mxu0
    %1580 = vmatprep.mubr.bf16.mxu0 0
    %1581 = vmatmul.mubr.bf16.gmra.mxu0 %v1507
    %v1582 = vpop.f32.mrf.mxu0
    %v1583 = vadd.f32 0.0, %v1582
    %v1584 = vpop.f32.mrf.mxu0
    %v1585 = vpop.f32.mrf.mxu0
    %v1586 = vadd.f32 0.0, %v1585
    %v1587 = vpop.f32.mrf.mxu0
    %1588 = vmatprep.mubr.bf16.mxu0 0
    %1589 = vmatmul.mubr.bf16.gmra.mxu0 %v1510
    %v1590 = vpop.f32.mrf.mxu0
    %v1591 = vadd.f32 0.0, %v1590
    %v1592 = vpop.f32.mrf.mxu0
    %v1593 = vpop.f32.mrf.mxu0
    %v1594 = vadd.f32 0.0, %v1593
    %v1595 = vpop.f32.mrf.mxu0
    %1596 = vmatprep.mubr.bf16.mxu0 0
    %1597 = vmatmul.mubr.bf16.gmra.mxu0 %v1513
    %v1598 = vpop.f32.mrf.mxu0
    %v1599 = vadd.f32 0.0, %v1598
    %v1600 = vpop.f32.mrf.mxu0
    %v1601 = vpop.f32.mrf.mxu0
    %v1602 = vadd.f32 0.0, %v1601
    %v1603 = vpop.f32.mrf.mxu0
    %1604 = vmatprep.mubr.bf16.mxu0 0
    %1605 = vmatmul.mubr.bf16.gmra.mxu0 %v1516
    %v1606 = vpop.f32.mrf.mxu0
    %v1607 = vadd.f32 0.0, %v1606
    %v1608 = vpop.f32.mrf.mxu0
    %v1609 = vpop.f32.mrf.mxu0
    %v1610 = vadd.f32 0.0, %v1609
    %v1611 = vpop.f32.mrf.mxu0
    %1612 = vmatprep.mubr.bf16.mxu0 0
    %1613 = vmatmul.mubr.bf16.gmra.mxu0 %v1519
    %v1614 = vpop.f32.mrf.mxu0
    %v1615 = vadd.f32 0.0, %v1614
    %v1616 = vpop.f32.mrf.mxu0
    %v1617 = vpop.f32.mrf.mxu0
    %v1618 = vadd.f32 0.0, %v1617
    %v1619 = vpop.f32.mrf.mxu0
    %1620 = vmatprep.mubr.bf16.mxu0 0
    %1621 = vmatmul.mubr.bf16.gmra.mxu0 %v1522
    %v1622 = vpop.f32.mrf.mxu0
    %v1623 = vadd.f32 0.0, %v1622
    %v1624 = vpop.f32.mrf.mxu0
    %v1625 = vpop.f32.mrf.mxu0
    %v1626 = vadd.f32 0.0, %v1625
    %v1627 = vpop.f32.mrf.mxu0
    %1628 = vdwg.mxu0
    %v1629 = vadd.f32 %v1368, %v1559
    %v1630 = vadd.f32 %v1371, %v1562
    %v1631 = vadd.f32 %v1376, %v1567
    %v1632 = vadd.f32 %v1379, %v1570
    %v1633 = vadd.f32 %v1384, %v1575
    %v1634 = vadd.f32 %v1387, %v1578
    %v1635 = vadd.f32 %v1392, %v1583
    %v1636 = vadd.f32 %v1395, %v1586
    %v1637 = vadd.f32 %v1400, %v1591
    %v1638 = vadd.f32 %v1403, %v1594
    %v1639 = vadd.f32 %v1408, %v1599
    %v1640 = vadd.f32 %v1411, %v1602
    %v1641 = vadd.f32 %v1416, %v1607
    %v1642 = vadd.f32 %v1419, %v1610
    %v1643 = vadd.f32 %v1424, %v1615
    %v1644 = vadd.f32 %v1427, %v1618
    %v1645 = vadd.f32 %v1432, %v1623
    %v1646 = vadd.f32 %v1435, %v1626
    %v1647 = vld [vmem:[#allocation2 + $0x6] sm:$0xff]
    %v1648 = vld [vmem:[#allocation2 + $0xe] sm:$0xff]
    %v1649 = vld [vmem:[#allocation2 + $0x16] sm:$0xff]
    %v1650 = vld [vmem:[#allocation2 + $0x1e] sm:$0xff]
    %v1651 = vld [vmem:[#allocation2 + $0x26] sm:$0xff]
    %v1652 = vld [vmem:[#allocation2 + $0x2e] sm:$0xff]
    %v1653 = vld [vmem:[#allocation2 + $0x36] sm:$0xff]
    %v1654 = vld [vmem:[#allocation2 + $0x3e] sm:$0xff]
    %v1655 = vld [vmem:[#allocation2 + $0x46] sm:$0xff]
    %v1656 = vld [vmem:[#allocation2 + $0x4e] sm:$0xff]
    %v1657 = vld [vmem:[#allocation2 + $0x56] sm:$0xff]
    %v1658 = vld [vmem:[#allocation2 + $0x5e] sm:$0xff]
    %v1659 = vld [vmem:[#allocation2 + $0x66] sm:$0xff]
    %v1660 = vld [vmem:[#allocation2 + $0x6e] sm:$0xff]
    %v1661 = vld [vmem:[#allocation2 + $0x76] sm:$0xff]
    %v1662 = vld [vmem:[#allocation2 + $0x7e] sm:$0xff]
    %v1663 = vld [vmem:[#allocation2 + $0x86] sm:$0xff]
    %v1664 = vld [vmem:[#allocation2 + $0x8e] sm:$0xff]
    %v1665 = vpack.c.bf16 %v1648, %v1647
    %v1666 = vpack.c.bf16 %v1650, %v1649
    %v1667 = vpack.c.bf16 %v1652, %v1651
    %v1668 = vpack.c.bf16 %v1654, %v1653
    %v1669 = vpack.c.bf16 %v1656, %v1655
    %v1670 = vpack.c.bf16 %v1658, %v1657
    %v1671 = vpack.c.bf16 %v1660, %v1659
    %v1672 = vpack.c.bf16 %v1662, %v1661
    %v1673 = vpack.c.bf16 %v1664, %v1663
    %v1674 = vld [vmem:[%s3 + $0x60] sm:$0xf]
    %v1675 = vld [vmem:[%s3 + $0x64] sm:$0xf]
    %v1676 = vld [vmem:[%s3 + $0x68] sm:$0xf]
    %v1677 = vld [vmem:[%s3 + $0x6c] sm:$0xf]
    %v1678 = vld [vmem:[%s3 + $0x70] sm:$0xf]
    %v1679 = vld [vmem:[%s3 + $0x74] sm:$0xf]
    %v1680 = vld [vmem:[%s3 + $0x78] sm:$0xf]
    %v1681 = vld [vmem:[%s3 + $0x7c] sm:$0xf]
    %v1690 = vunpack.c.l.b16 %v1674
    %v1691 = vunpack.c.l.b16 %v1675
    %v1692 = vunpack.c.l.b16 %v1676
    %v1693 = vunpack.c.l.b16 %v1677
    %v1694 = vunpack.c.l.b16 %v1678
    %v1695 = vunpack.c.l.b16 %v1679
    %v1696 = vunpack.c.l.b16 %v1680
    %v1697 = vunpack.c.l.b16 %v1681
    %v1698 = vpack.c.b16 %v1691, %v1690
    %v1699 = vpack.c.b16 %v1693, %v1692
    %v1700 = vpack.c.b16 %v1695, %v1694
    %v1701 = vpack.c.b16 %v1697, %v1696
    %v1707 = vsel %vm1033, %v1665, 0
    %v1710 = vsel %vm1033, %v1666, 0
    %v1713 = vsel %vm1033, %v1667, 0
    %v1716 = vsel %vm1033, %v1668, 0
    %v1719 = vsel %vm1033, %v1669, 0
    %v1722 = vsel %vm1033, %v1670, 0
    %v1725 = vsel %vm1033, %v1671, 0
    %v1728 = vsel %vm1033, %v1672, 0
    %v1731 = vsel %vm1033, %v1673, 0
    %1733 = vmatprep.subr.bf16.mxu0 0
    %1734 = vmatpush1.bf16.msra.mxu0 0
    %1735 = vmatprep.subr.bf16.mxu0 0
    %1736 = vmatpush1.bf16.msra.mxu0 0
    %1737 = vmatprep.subr.bf16.mxu0 0
    %1738 = vmatpush1.bf16.msra.mxu0 0
    %1739 = vmatprep.subr.bf16.mxu0 0
    %1740 = vmatpush1.bf16.msra.mxu0 0
    %1741 = vmatprep.subr.bf16.mxu0 0
    %1742 = vmatpush1.bf16.msra.mxu0 %v1701
    %1743 = vmatprep.subr.bf16.mxu0 0
    %1744 = vmatpush1.bf16.msra.mxu0 %v1700
    %1745 = vmatprep.subr.bf16.mxu0 0
    %1746 = vmatpush1.bf16.msra.mxu0 %v1699
    %1747 = vmatprep.subr.bf16.mxu0 0
    %1748 = vmatpush1.bf16.msra.mxu0 %v1698
    %1749 = vmatprep.subr.bf16.mxu0 0
    %1750 = vmatpush2.bf16.msra.mxu0 0
    %1751 = vmatprep.subr.bf16.mxu0 0
    %1752 = vmatpush2.bf16.msra.mxu0 0
    %1753 = vmatprep.subr.bf16.mxu0 0
    %1754 = vmatpush2.bf16.msra.mxu0 0
    %1755 = vmatprep.subr.bf16.mxu0 0
    %1756 = vmatpush2.bf16.msra.mxu0 0
    %1757 = vmatprep.subr.bf16.mxu0 0
    %1758 = vmatpush2.bf16.msra.mxu0 0
    %1759 = vmatprep.subr.bf16.mxu0 0
    %1760 = vmatpush2.bf16.msra.mxu0 0
    %1761 = vmatprep.subr.bf16.mxu0 0
    %1762 = vmatpush2.bf16.msra.mxu0 0
    %1763 = vmatprep.subr.bf16.mxu0 0
    %1764 = vmatpush2.bf16.msra.mxu0 0
    %1765 = vmatprep.mubr.bf16.mxu0 0
    %1766 = vmatmul.mubr.bf16.gmra.mxu0 %v1707
    %v1767 = vpop.f32.mrf.mxu0
    %v1768 = vadd.f32 0.0, %v1767
    %v1769 = vpop.f32.mrf.mxu0
    %v1770 = vpop.f32.mrf.mxu0
    %v1771 = vadd.f32 0.0, %v1770
    %v1772 = vpop.f32.mrf.mxu0
    %1773 = vmatprep.mubr.bf16.mxu0 0
    %1774 = vmatmul.mubr.bf16.gmra.mxu0 %v1710
    %v1775 = vpop.f32.mrf.mxu0
    %v1776 = vadd.f32 0.0, %v1775
    %v1777 = vpop.f32.mrf.mxu0
    %v1778 = vpop.f32.mrf.mxu0
    %v1779 = vadd.f32 0.0, %v1778
    %v1780 = vpop.f32.mrf.mxu0
    %1781 = vmatprep.mubr.bf16.mxu0 0
    %1782 = vmatmul.mubr.bf16.gmra.mxu0 %v1713
    %v1783 = vpop.f32.mrf.mxu0
    %v1784 = vadd.f32 0.0, %v1783
    %v1785 = vpop.f32.mrf.mxu0
    %v1786 = vpop.f32.mrf.mxu0
    %v1787 = vadd.f32 0.0, %v1786
    %v1788 = vpop.f32.mrf.mxu0
    %1789 = vmatprep.mubr.bf16.mxu0 0
    %1790 = vmatmul.mubr.bf16.gmra.mxu0 %v1716
    %v1791 = vpop.f32.mrf.mxu0
    %v1792 = vadd.f32 0.0, %v1791
    %v1793 = vpop.f32.mrf.mxu0
    %v1794 = vpop.f32.mrf.mxu0
    %v1795 = vadd.f32 0.0, %v1794
    %v1796 = vpop.f32.mrf.mxu0
    %1797 = vmatprep.mubr.bf16.mxu0 0
    %1798 = vmatmul.mubr.bf16.gmra.mxu0 %v1719
    %v1799 = vpop.f32.mrf.mxu0
    %v1800 = vadd.f32 0.0, %v1799
    %v1801 = vpop.f32.mrf.mxu0
    %v1802 = vpop.f32.mrf.mxu0
    %v1803 = vadd.f32 0.0, %v1802
    %v1804 = vpop.f32.mrf.mxu0
    %1805 = vmatprep.mubr.bf16.mxu0 0
    %1806 = vmatmul.mubr.bf16.gmra.mxu0 %v1722
    %v1807 = vpop.f32.mrf.mxu0
    %v1808 = vadd.f32 0.0, %v1807
    %v1809 = vpop.f32.mrf.mxu0
    %v1810 = vpop.f32.mrf.mxu0
    %v1811 = vadd.f32 0.0, %v1810
    %v1812 = vpop.f32.mrf.mxu0
    %1813 = vmatprep.mubr.bf16.mxu0 0
    %1814 = vmatmul.mubr.bf16.gmra.mxu0 %v1725
    %v1815 = vpop.f32.mrf.mxu0
    %v1816 = vadd.f32 0.0, %v1815
    %v1817 = vpop.f32.mrf.mxu0
    %v1818 = vpop.f32.mrf.mxu0
    %v1819 = vadd.f32 0.0, %v1818
    %v1820 = vpop.f32.mrf.mxu0
    %1821 = vmatprep.mubr.bf16.mxu0 0
    %1822 = vmatmul.mubr.bf16.gmra.mxu0 %v1728
    %v1823 = vpop.f32.mrf.mxu0
    %v1824 = vadd.f32 0.0, %v1823
    %v1825 = vpop.f32.mrf.mxu0
    %v1826 = vpop.f32.mrf.mxu0
    %v1827 = vadd.f32 0.0, %v1826
    %v1828 = vpop.f32.mrf.mxu0
    %1829 = vmatprep.mubr.bf16.mxu0 0
    %1830 = vmatmul.mubr.bf16.gmra.mxu0 %v1731
    %v1831 = vpop.f32.mrf.mxu0
    %v1832 = vadd.f32 0.0, %v1831
    %v1833 = vpop.f32.mrf.mxu0
    %v1834 = vpop.f32.mrf.mxu0
    %v1835 = vadd.f32 0.0, %v1834
    %v1836 = vpop.f32.mrf.mxu0
    %1837 = vdwg.mxu0
    %v1838 = vadd.f32 %v1629, %v1768
    %v1839 = vadd.f32 %v1630, %v1771
    %v1840 = vadd.f32 %v1631, %v1776
    %v1841 = vadd.f32 %v1632, %v1779
    %v1842 = vadd.f32 %v1633, %v1784
    %v1843 = vadd.f32 %v1634, %v1787
    %v1844 = vadd.f32 %v1635, %v1792
    %v1845 = vadd.f32 %v1636, %v1795
    %v1846 = vadd.f32 %v1637, %v1800
    %v1847 = vadd.f32 %v1638, %v1803
    %v1848 = vadd.f32 %v1639, %v1808
    %v1849 = vadd.f32 %v1640, %v1811
    %v1850 = vadd.f32 %v1641, %v1816
    %v1851 = vadd.f32 %v1642, %v1819
    %v1852 = vadd.f32 %v1643, %v1824
    %v1853 = vadd.f32 %v1644, %v1827
    %v1854 = vadd.f32 %v1645, %v1832
    %v1855 = vadd.f32 %v1646, %v1835
    %v1856 = vld [vmem:[#allocation2 + $0x7] sm:$0xff]
    %v1857 = vld [vmem:[#allocation2 + $0xf] sm:$0xff]
    %v1858 = vld [vmem:[#allocation2 + $0x17] sm:$0xff]
    %v1859 = vld [vmem:[#allocation2 + $0x1f] sm:$0xff]
    %v1860 = vld [vmem:[#allocation2 + $0x27] sm:$0xff]
    %v1861 = vld [vmem:[#allocation2 + $0x2f] sm:$0xff]
    %v1862 = vld [vmem:[#allocation2 + $0x37] sm:$0xff]
    %v1863 = vld [vmem:[#allocation2 + $0x3f] sm:$0xff]
    %v1864 = vld [vmem:[#allocation2 + $0x47] sm:$0xff]
    %v1865 = vld [vmem:[#allocation2 + $0x4f] sm:$0xff]
    %v1866 = vld [vmem:[#allocation2 + $0x57] sm:$0xff]
    %v1867 = vld [vmem:[#allocation2 + $0x5f] sm:$0xff]
    %v1868 = vld [vmem:[#allocation2 + $0x67] sm:$0xff]
    %v1869 = vld [vmem:[#allocation2 + $0x6f] sm:$0xff]
    %v1870 = vld [vmem:[#allocation2 + $0x77] sm:$0xff]
    %v1871 = vld [vmem:[#allocation2 + $0x7f] sm:$0xff]
    %v1872 = vld [vmem:[#allocation2 + $0x87] sm:$0xff]
    %v1873 = vld [vmem:[#allocation2 + $0x8f] sm:$0xff]
    %v1874 = vpack.c.bf16 %v1857, %v1856
    %v1875 = vpack.c.bf16 %v1859, %v1858
    %v1876 = vpack.c.bf16 %v1861, %v1860
    %v1877 = vpack.c.bf16 %v1863, %v1862
    %v1878 = vpack.c.bf16 %v1865, %v1864
    %v1879 = vpack.c.bf16 %v1867, %v1866
    %v1880 = vpack.c.bf16 %v1869, %v1868
    %v1881 = vpack.c.bf16 %v1871, %v1870
    %v1882 = vpack.c.bf16 %v1873, %v1872
    %v1883 = vld [vmem:[%s3 + $0x80] sm:$0xf]
    %v1884 = vld [vmem:[%s3 + $0x84] sm:$0xf]
    %v1885 = vld [vmem:[%s3 + $0x88] sm:$0xf]
    %v1886 = vld [vmem:[%s3 + $0x8c] sm:$0xf]
    %v1887 = vld [vmem:[%s3 + $0x90] sm:$0xf]
    %v1888 = vld [vmem:[%s3 + $0x94] sm:$0xf]
    %v1889 = vld [vmem:[%s3 + $0x98] sm:$0xf]
    %v1890 = vld [vmem:[%s3 + $0x9c] sm:$0xf]
    %v1899 = vunpack.c.l.b16 %v1883
    %v1900 = vunpack.c.l.b16 %v1884
    %v1901 = vunpack.c.l.b16 %v1885
    %v1902 = vunpack.c.l.b16 %v1886
    %v1903 = vunpack.c.l.b16 %v1887
    %v1904 = vunpack.c.l.b16 %v1888
    %v1905 = vunpack.c.l.b16 %v1889
    %v1906 = vunpack.c.l.b16 %v1890
    %v1907 = vpack.c.b16 %v1900, %v1899
    %v1908 = vpack.c.b16 %v1902, %v1901
    %v1909 = vpack.c.b16 %v1904, %v1903
    %v1910 = vpack.c.b16 %v1906, %v1905
    %v1916 = vsel %vm1033, %v1874, 0
    %v1919 = vsel %vm1033, %v1875, 0
    %v1922 = vsel %vm1033, %v1876, 0
    %v1925 = vsel %vm1033, %v1877, 0
    %v1928 = vsel %vm1033, %v1878, 0
    %v1931 = vsel %vm1033, %v1879, 0
    %v1934 = vsel %vm1033, %v1880, 0
    %v1937 = vsel %vm1033, %v1881, 0
    %v1940 = vsel %vm1033, %v1882, 0
    %1942 = vmatprep.subr.bf16.mxu0 0
    %1943 = vmatpush1.bf16.msra.mxu0 0
    %1944 = vmatprep.subr.bf16.mxu0 0
    %1945 = vmatpush1.bf16.msra.mxu0 0
    %1946 = vmatprep.subr.bf16.mxu0 0
    %1947 = vmatpush1.bf16.msra.mxu0 0
    %1948 = vmatprep.subr.bf16.mxu0 0
    %1949 = vmatpush1.bf16.msra.mxu0 0
    %1950 = vmatprep.subr.bf16.mxu0 0
    %1951 = vmatpush1.bf16.msra.mxu0 %v1910
    %1952 = vmatprep.subr.bf16.mxu0 0
    %1953 = vmatpush1.bf16.msra.mxu0 %v1909
    %1954 = vmatprep.subr.bf16.mxu0 0
    %1955 = vmatpush1.bf16.msra.mxu0 %v1908
    %1956 = vmatprep.subr.bf16.mxu0 0
    %1957 = vmatpush1.bf16.msra.mxu0 %v1907
    %1958 = vmatprep.subr.bf16.mxu0 0
    %1959 = vmatpush2.bf16.msra.mxu0 0
    %1960 = vmatprep.subr.bf16.mxu0 0
    %1961 = vmatpush2.bf16.msra.mxu0 0
    %1962 = vmatprep.subr.bf16.mxu0 0
    %1963 = vmatpush2.bf16.msra.mxu0 0
    %1964 = vmatprep.subr.bf16.mxu0 0
    %1965 = vmatpush2.bf16.msra.mxu0 0
    %1966 = vmatprep.subr.bf16.mxu0 0
    %1967 = vmatpush2.bf16.msra.mxu0 0
    %1968 = vmatprep.subr.bf16.mxu0 0
    %1969 = vmatpush2.bf16.msra.mxu0 0
    %1970 = vmatprep.subr.bf16.mxu0 0
    %1971 = vmatpush2.bf16.msra.mxu0 0
    %1972 = vmatprep.subr.bf16.mxu0 0
    %1973 = vmatpush2.bf16.msra.mxu0 0
    %1974 = vmatprep.mubr.bf16.mxu0 0
    %1975 = vmatmul.mubr.bf16.gmra.mxu0 %v1916
    %v1976 = vpop.f32.mrf.mxu0
    %v1977 = vadd.f32 0.0, %v1976
    %v1978 = vpop.f32.mrf.mxu0
    %v1979 = vpop.f32.mrf.mxu0
    %v1980 = vadd.f32 0.0, %v1979
    %v1981 = vpop.f32.mrf.mxu0
    %1982 = vmatprep.mubr.bf16.mxu0 0
    %1983 = vmatmul.mubr.bf16.gmra.mxu0 %v1919
    %v1984 = vpop.f32.mrf.mxu0
    %v1985 = vadd.f32 0.0, %v1984
    %v1986 = vpop.f32.mrf.mxu0
    %v1987 = vpop.f32.mrf.mxu0
    %v1988 = vadd.f32 0.0, %v1987
    %v1989 = vpop.f32.mrf.mxu0
    %1990 = vmatprep.mubr.bf16.mxu0 0
    %1991 = vmatmul.mubr.bf16.gmra.mxu0 %v1922
    %v1992 = vpop.f32.mrf.mxu0
    %v1993 = vadd.f32 0.0, %v1992
    %v1994 = vpop.f32.mrf.mxu0
    %v1995 = vpop.f32.mrf.mxu0
    %v1996 = vadd.f32 0.0, %v1995
    %v1997 = vpop.f32.mrf.mxu0
    %1998 = vmatprep.mubr.bf16.mxu0 0
    %1999 = vmatmul.mubr.bf16.gmra.mxu0 %v1925
    %v2000 = vpop.f32.mrf.mxu0
    %v2001 = vadd.f32 0.0, %v2000
    %v2002 = vpop.f32.mrf.mxu0
    %v2003 = vpop.f32.mrf.mxu0
    %v2004 = vadd.f32 0.0, %v2003
    %v2005 = vpop.f32.mrf.mxu0
    %2006 = vmatprep.mubr.bf16.mxu0 0
    %2007 = vmatmul.mubr.bf16.gmra.mxu0 %v1928
    %v2008 = vpop.f32.mrf.mxu0
    %v2009 = vadd.f32 0.0, %v2008
    %v2010 = vpop.f32.mrf.mxu0
    %v2011 = vpop.f32.mrf.mxu0
    %v2012 = vadd.f32 0.0, %v2011
    %v2013 = vpop.f32.mrf.mxu0
    %2014 = vmatprep.mubr.bf16.mxu0 0
    %2015 = vmatmul.mubr.bf16.gmra.mxu0 %v1931
    %v2016 = vpop.f32.mrf.mxu0
    %v2017 = vadd.f32 0.0, %v2016
    %v2018 = vpop.f32.mrf.mxu0
    %v2019 = vpop.f32.mrf.mxu0
    %v2020 = vadd.f32 0.0, %v2019
    %v2021 = vpop.f32.mrf.mxu0
    %2022 = vmatprep.mubr.bf16.mxu0 0
    %2023 = vmatmul.mubr.bf16.gmra.mxu0 %v1934
    %v2024 = vpop.f32.mrf.mxu0
    %v2025 = vadd.f32 0.0, %v2024
    %v2026 = vpop.f32.mrf.mxu0
    %v2027 = vpop.f32.mrf.mxu0
    %v2028 = vadd.f32 0.0, %v2027
    %v2029 = vpop.f32.mrf.mxu0
    %2030 = vmatprep.mubr.bf16.mxu0 0
    %2031 = vmatmul.mubr.bf16.gmra.mxu0 %v1937
    %v2032 = vpop.f32.mrf.mxu0
    %v2033 = vadd.f32 0.0, %v2032
    %v2034 = vpop.f32.mrf.mxu0
    %v2035 = vpop.f32.mrf.mxu0
    %v2036 = vadd.f32 0.0, %v2035
    %v2037 = vpop.f32.mrf.mxu0
    %2038 = vmatprep.mubr.bf16.mxu0 0
    %2039 = vmatmul.mubr.bf16.gmra.mxu0 %v1940
    %v2040 = vpop.f32.mrf.mxu0
    %v2041 = vadd.f32 0.0, %v2040
    %v2042 = vpop.f32.mrf.mxu0
    %v2043 = vpop.f32.mrf.mxu0
    %v2044 = vadd.f32 0.0, %v2043
    %v2045 = vpop.f32.mrf.mxu0
    %2046 = vdwg.mxu0
    %v2047 = vadd.f32 %v1838, %v1977
    %v2048 = vadd.f32 %v1839, %v1980
    %v2049 = vadd.f32 %v1840, %v1985
    %v2050 = vadd.f32 %v1841, %v1988
    %v2051 = vadd.f32 %v1842, %v1993
    %v2052 = vadd.f32 %v1843, %v1996
    %v2053 = vadd.f32 %v1844, %v2001
    %v2054 = vadd.f32 %v1845, %v2004
    %v2055 = vadd.f32 %v1846, %v2009
    %v2056 = vadd.f32 %v1847, %v2012
    %v2057 = vadd.f32 %v1848, %v2017
    %v2058 = vadd.f32 %v1849, %v2020
    %v2059 = vadd.f32 %v1850, %v2025
    %v2060 = vadd.f32 %v1851, %v2028
    %v2061 = vadd.f32 %v1852, %v2033
    %v2062 = vadd.f32 %v1853, %v2036
    %v2063 = vadd.f32 %v1854, %v2041
    %v2064 = vadd.f32 %v1855, %v2044
    %v2065 = vld [vmem:[#allocation2 + $0x8] sm:$0xff]
    %v2066 = vld [vmem:[#allocation2 + $0x10] sm:$0xff]
    %v2067 = vld [vmem:[#allocation2 + $0x18] sm:$0xff]
    %v2068 = vld [vmem:[#allocation2 + $0x20] sm:$0xff]
    %v2069 = vld [vmem:[#allocation2 + $0x28] sm:$0xff]
    %v2070 = vld [vmem:[#allocation2 + $0x30] sm:$0xff]
    %v2071 = vld [vmem:[#allocation2 + $0x38] sm:$0xff]
    %v2072 = vld [vmem:[#allocation2 + $0x40] sm:$0xff]
    %v2073 = vld [vmem:[#allocation2 + $0x48] sm:$0xff]
    %v2074 = vld [vmem:[#allocation2 + $0x50] sm:$0xff]
    %v2075 = vld [vmem:[#allocation2 + $0x58] sm:$0xff]
    %v2076 = vld [vmem:[#allocation2 + $0x60] sm:$0xff]
    %v2077 = vld [vmem:[#allocation2 + $0x68] sm:$0xff]
    %v2078 = vld [vmem:[#allocation2 + $0x70] sm:$0xff]
    %v2079 = vld [vmem:[#allocation2 + $0x78] sm:$0xff]
    %v2080 = vld [vmem:[#allocation2 + $0x80] sm:$0xff]
    %v2081 = vld [vmem:[#allocation2 + $0x88] sm:$0xff]
    %v2082 = vld [vmem:[#allocation2 + $0x90] sm:$0xff]
    %v2083 = vpack.c.bf16 %v2066, %v2065
    %v2084 = vpack.c.bf16 %v2068, %v2067
    %v2085 = vpack.c.bf16 %v2070, %v2069
    %v2086 = vpack.c.bf16 %v2072, %v2071
    %v2087 = vpack.c.bf16 %v2074, %v2073
    %v2088 = vpack.c.bf16 %v2076, %v2075
    %v2089 = vpack.c.bf16 %v2078, %v2077
    %v2090 = vpack.c.bf16 %v2080, %v2079
    %v2091 = vpack.c.bf16 %v2082, %v2081
    %v2092 = vld [vmem:[%s3 + $0xa0] sm:$0xf]
    %v2093 = vld [vmem:[%s3 + $0xa4] sm:$0xf]
    %v2094 = vld [vmem:[%s3 + $0xa8] sm:$0xf]
    %v2095 = vld [vmem:[%s3 + $0xac] sm:$0xf]
    %v2096 = vld [vmem:[%s3 + $0xb0] sm:$0xf]
    %v2097 = vld [vmem:[%s3 + $0xb4] sm:$0xf]
    %v2098 = vld [vmem:[%s3 + $0xb8] sm:$0xf]
    %v2099 = vld [vmem:[%s3 + $0xbc] sm:$0xf]
    %v2108 = vunpack.c.l.b16 %v2092
    %v2109 = vunpack.c.l.b16 %v2093
    %v2110 = vunpack.c.l.b16 %v2094
    %v2111 = vunpack.c.l.b16 %v2095
    %v2112 = vunpack.c.l.b16 %v2096
    %v2113 = vunpack.c.l.b16 %v2097
    %v2114 = vunpack.c.l.b16 %v2098
    %v2115 = vunpack.c.l.b16 %v2099
    %v2116 = vpack.c.b16 %v2109, %v2108
    %v2117 = vpack.c.b16 %v2111, %v2110
    %v2118 = vpack.c.b16 %v2113, %v2112
    %v2119 = vpack.c.b16 %v2115, %v2114
    %v2125 = vsel %vm1033, %v2083, 0
    %v2128 = vsel %vm1033, %v2084, 0
    %v2131 = vsel %vm1033, %v2085, 0
    %v2134 = vsel %vm1033, %v2086, 0
    %v2137 = vsel %vm1033, %v2087, 0
    %v2140 = vsel %vm1033, %v2088, 0
    %v2143 = vsel %vm1033, %v2089, 0
    %v2146 = vsel %vm1033, %v2090, 0
    %v2149 = vsel %vm1033, %v2091, 0
    %2151 = vmatprep.subr.bf16.mxu0 0
    %2152 = vmatpush1.bf16.msra.mxu0 0
    %2153 = vmatprep.subr.bf16.mxu0 0
    %2154 = vmatpush1.bf16.msra.mxu0 0
    %2155 = vmatprep.subr.bf16.mxu0 0
    %2156 = vmatpush1.bf16.msra.mxu0 0
    %2157 = vmatprep.subr.bf16.mxu0 0
    %2158 = vmatpush1.bf16.msra.mxu0 0
    %2159 = vmatprep.subr.bf16.mxu0 0
    %2160 = vmatpush1.bf16.msra.mxu0 %v2119
    %2161 = vmatprep.subr.bf16.mxu0 0
    %2162 = vmatpush1.bf16.msra.mxu0 %v2118
    %2163 = vmatprep.subr.bf16.mxu0 0
    %2164 = vmatpush1.bf16.msra.mxu0 %v2117
    %2165 = vmatprep.subr.bf16.mxu0 0
    %2166 = vmatpush1.bf16.msra.mxu0 %v2116
    %2167 = vmatprep.subr.bf16.mxu0 0
    %2168 = vmatpush2.bf16.msra.mxu0 0
    %2169 = vmatprep.subr.bf16.mxu0 0
    %2170 = vmatpush2.bf16.msra.mxu0 0
    %2171 = vmatprep.subr.bf16.mxu0 0
    %2172 = vmatpush2.bf16.msra.mxu0 0
    %2173 = vmatprep.subr.bf16.mxu0 0
    %2174 = vmatpush2.bf16.msra.mxu0 0
    %2175 = vmatprep.subr.bf16.mxu0 0
    %2176 = vmatpush2.bf16.msra.mxu0 0
    %2177 = vmatprep.subr.bf16.mxu0 0
    %2178 = vmatpush2.bf16.msra.mxu0 0
    %2179 = vmatprep.subr.bf16.mxu0 0
    %2180 = vmatpush2.bf16.msra.mxu0 0
    %2181 = vmatprep.subr.bf16.mxu0 0
    %2182 = vmatpush2.bf16.msra.mxu0 0
    %2183 = vmatprep.mubr.bf16.mxu0 0
    %2184 = vmatmul.mubr.bf16.gmra.mxu0 %v2125
    %v2185 = vpop.f32.mrf.mxu0
    %v2186 = vadd.f32 0.0, %v2185
    %v2187 = vpop.f32.mrf.mxu0
    %v2188 = vpop.f32.mrf.mxu0
    %v2189 = vadd.f32 0.0, %v2188
    %v2190 = vpop.f32.mrf.mxu0
    %2191 = vmatprep.mubr.bf16.mxu0 0
    %2192 = vmatmul.mubr.bf16.gmra.mxu0 %v2128
    %v2193 = vpop.f32.mrf.mxu0
    %v2194 = vadd.f32 0.0, %v2193
    %v2195 = vpop.f32.mrf.mxu0
    %v2196 = vpop.f32.mrf.mxu0
    %v2197 = vadd.f32 0.0, %v2196
    %v2198 = vpop.f32.mrf.mxu0
    %2199 = vmatprep.mubr.bf16.mxu0 0
    %2200 = vmatmul.mubr.bf16.gmra.mxu0 %v2131
    %v2201 = vpop.f32.mrf.mxu0
    %v2202 = vadd.f32 0.0, %v2201
    %v2203 = vpop.f32.mrf.mxu0
    %v2204 = vpop.f32.mrf.mxu0
    %v2205 = vadd.f32 0.0, %v2204
    %v2206 = vpop.f32.mrf.mxu0
    %2207 = vmatprep.mubr.bf16.mxu0 0
    %2208 = vmatmul.mubr.bf16.gmra.mxu0 %v2134
    %v2209 = vpop.f32.mrf.mxu0
    %v2210 = vadd.f32 0.0, %v2209
    %v2211 = vpop.f32.mrf.mxu0
    %v2212 = vpop.f32.mrf.mxu0
    %v2213 = vadd.f32 0.0, %v2212
    %v2214 = vpop.f32.mrf.mxu0
    %2215 = vmatprep.mubr.bf16.mxu0 0
    %2216 = vmatmul.mubr.bf16.gmra.mxu0 %v2137
    %v2217 = vpop.f32.mrf.mxu0
    %v2218 = vadd.f32 0.0, %v2217
    %v2219 = vpop.f32.mrf.mxu0
    %v2220 = vpop.f32.mrf.mxu0
    %v2221 = vadd.f32 0.0, %v2220
    %v2222 = vpop.f32.mrf.mxu0
    %2223 = vmatprep.mubr.bf16.mxu0 0
    %2224 = vmatmul.mubr.bf16.gmra.mxu0 %v2140
    %v2225 = vpop.f32.mrf.mxu0
    %v2226 = vadd.f32 0.0, %v2225
    %v2227 = vpop.f32.mrf.mxu0
    %v2228 = vpop.f32.mrf.mxu0
    %v2229 = vadd.f32 0.0, %v2228
    %v2230 = vpop.f32.mrf.mxu0
    %2231 = vmatprep.mubr.bf16.mxu0 0
    %2232 = vmatmul.mubr.bf16.gmra.mxu0 %v2143
    %v2233 = vpop.f32.mrf.mxu0
    %v2234 = vadd.f32 0.0, %v2233
    %v2235 = vpop.f32.mrf.mxu0
    %v2236 = vpop.f32.mrf.mxu0
    %v2237 = vadd.f32 0.0, %v2236
    %v2238 = vpop.f32.mrf.mxu0
    %2239 = vmatprep.mubr.bf16.mxu0 0
    %2240 = vmatmul.mubr.bf16.gmra.mxu0 %v2146
    %v2241 = vpop.f32.mrf.mxu0
    %v2242 = vadd.f32 0.0, %v2241
    %v2243 = vpop.f32.mrf.mxu0
    %v2244 = vpop.f32.mrf.mxu0
    %v2245 = vadd.f32 0.0, %v2244
    %v2246 = vpop.f32.mrf.mxu0
    %2247 = vmatprep.mubr.bf16.mxu0 0
    %2248 = vmatmul.mubr.bf16.gmra.mxu0 %v2149
    %v2249 = vpop.f32.mrf.mxu0
    %v2250 = vadd.f32 0.0, %v2249
    %v2251 = vpop.f32.mrf.mxu0
    %v2252 = vpop.f32.mrf.mxu0
    %v2253 = vadd.f32 0.0, %v2252
    %v2254 = vpop.f32.mrf.mxu0
    %2255 = vdwg.mxu0
    %v2256 = vadd.f32 %v2047, %v2186
    %v2257 = vadd.f32 %v2048, %v2189
    %v2258 = vadd.f32 %v2049, %v2194
    %v2259 = vadd.f32 %v2050, %v2197
    %v2260 = vadd.f32 %v2051, %v2202
    %v2261 = vadd.f32 %v2052, %v2205
    %v2262 = vadd.f32 %v2053, %v2210
    %v2263 = vadd.f32 %v2054, %v2213
    %v2264 = vadd.f32 %v2055, %v2218
    %v2265 = vadd.f32 %v2056, %v2221
    %v2266 = vadd.f32 %v2057, %v2226
    %v2267 = vadd.f32 %v2058, %v2229
    %v2268 = vadd.f32 %v2059, %v2234
    %v2269 = vadd.f32 %v2060, %v2237
    %v2270 = vadd.f32 %v2061, %v2242
    %v2271 = vadd.f32 %v2062, %v2245
    %v2272 = vadd.f32 %v2063, %v2250
    %v2273 = vadd.f32 %v2064, %v2253
    %v2274 = vld [vmem:[#allocation2 + $0xc] sm:$0xff]
    %v2275 = vld [vmem:[#allocation2 + $0x14] sm:$0xff]
    %v2276 = vld [vmem:[#allocation2 + $0x1c] sm:$0xff]
    %v2277 = vld [vmem:[#allocation2 + $0x24] sm:$0xff]
    %v2278 = vld [vmem:[#allocation2 + $0x2c] sm:$0xff]
    %v2279 = vld [vmem:[#allocation2 + $0x34] sm:$0xff]
    %v2280 = vld [vmem:[#allocation2 + $0x3c] sm:$0xff]
    %v2281 = vld [vmem:[#allocation2 + $0x44] sm:$0xff]
    %v2282 = vld [vmem:[#allocation2 + $0x4c] sm:$0xff]
    %v2283 = vld [vmem:[#allocation2 + $0x54] sm:$0xff]
    %v2284 = vld [vmem:[#allocation2 + $0x5c] sm:$0xff]
    %v2285 = vld [vmem:[#allocation2 + $0x64] sm:$0xff]
    %v2286 = vld [vmem:[#allocation2 + $0x6c] sm:$0xff]
    %v2287 = vld [vmem:[#allocation2 + $0x74] sm:$0xff]
    %v2288 = vld [vmem:[#allocation2 + $0x7c] sm:$0xff]
    %v2289 = vld [vmem:[#allocation2 + $0x84] sm:$0xff]
    %v2290 = vld [vmem:[#allocation2 + $0x8c] sm:$0xff]
    %v2291 = vld [vmem:[#allocation2 + $0x94] sm:$0xff]
    %v2292 = vpack.c.bf16 %v2275, %v2274
    %v2293 = vpack.c.bf16 %v2277, %v2276
    %v2294 = vpack.c.bf16 %v2279, %v2278
    %v2295 = vpack.c.bf16 %v2281, %v2280
    %v2296 = vpack.c.bf16 %v2283, %v2282
    %v2297 = vpack.c.bf16 %v2285, %v2284
    %v2298 = vpack.c.bf16 %v2287, %v2286
    %v2299 = vpack.c.bf16 %v2289, %v2288
    %v2300 = vpack.c.bf16 %v2291, %v2290
    %v2301 = vld [vmem:[%s3 + $0xc0] sm:$0xf]
    %v2302 = vld [vmem:[%s3 + $0xc4] sm:$0xf]
    %v2303 = vld [vmem:[%s3 + $0xc8] sm:$0xf]
    %v2304 = vld [vmem:[%s3 + $0xcc] sm:$0xf]
    %v2305 = vld [vmem:[%s3 + $0xd0] sm:$0xf]
    %v2306 = vld [vmem:[%s3 + $0xd4] sm:$0xf]
    %v2307 = vld [vmem:[%s3 + $0xd8] sm:$0xf]
    %v2308 = vld [vmem:[%s3 + $0xdc] sm:$0xf]
    %v2317 = vunpack.c.l.b16 %v2301
    %v2318 = vunpack.c.l.b16 %v2302
    %v2319 = vunpack.c.l.b16 %v2303
    %v2320 = vunpack.c.l.b16 %v2304
    %v2321 = vunpack.c.l.b16 %v2305
    %v2322 = vunpack.c.l.b16 %v2306
    %v2323 = vunpack.c.l.b16 %v2307
    %v2324 = vunpack.c.l.b16 %v2308
    %v2325 = vpack.c.b16 %v2318, %v2317
    %v2326 = vpack.c.b16 %v2320, %v2319
    %v2327 = vpack.c.b16 %v2322, %v2321
    %v2328 = vpack.c.b16 %v2324, %v2323
    %v2334 = vsel %vm1033, %v2292, 0
    %v2337 = vsel %vm1033, %v2293, 0
    %v2340 = vsel %vm1033, %v2294, 0
    %v2343 = vsel %vm1033, %v2295, 0
    %v2346 = vsel %vm1033, %v2296, 0
    %v2349 = vsel %vm1033, %v2297, 0
    %v2352 = vsel %vm1033, %v2298, 0
    %v2355 = vsel %vm1033, %v2299, 0
    %v2358 = vsel %vm1033, %v2300, 0
    %2360 = vmatprep.subr.bf16.mxu0 0
    %2361 = vmatpush1.bf16.msra.mxu0 0
    %2362 = vmatprep.subr.bf16.mxu0 0
    %2363 = vmatpush1.bf16.msra.mxu0 0
    %2364 = vmatprep.subr.bf16.mxu0 0
    %2365 = vmatpush1.bf16.msra.mxu0 0
    %2366 = vmatprep.subr.bf16.mxu0 0
    %2367 = vmatpush1.bf16.msra.mxu0 0
    %2368 = vmatprep.subr.bf16.mxu0 0
    %2369 = vmatpush1.bf16.msra.mxu0 %v2328
    %2370 = vmatprep.subr.bf16.mxu0 0
    %2371 = vmatpush1.bf16.msra.mxu0 %v2327
    %2372 = vmatprep.subr.bf16.mxu0 0
    %2373 = vmatpush1.bf16.msra.mxu0 %v2326
    %2374 = vmatprep.subr.bf16.mxu0 0
    %2375 = vmatpush1.bf16.msra.mxu0 %v2325
    %2376 = vmatprep.subr.bf16.mxu0 0
    %2377 = vmatpush2.bf16.msra.mxu0 0
    %2378 = vmatprep.subr.bf16.mxu0 0
    %2379 = vmatpush2.bf16.msra.mxu0 0
    %2380 = vmatprep.subr.bf16.mxu0 0
    %2381 = vmatpush2.bf16.msra.mxu0 0
    %2382 = vmatprep.subr.bf16.mxu0 0
    %2383 = vmatpush2.bf16.msra.mxu0 0
    %2384 = vmatprep.subr.bf16.mxu0 0
    %2385 = vmatpush2.bf16.msra.mxu0 0
    %2386 = vmatprep.subr.bf16.mxu0 0
    %2387 = vmatpush2.bf16.msra.mxu0 0
    %2388 = vmatprep.subr.bf16.mxu0 0
    %2389 = vmatpush2.bf16.msra.mxu0 0
    %2390 = vmatprep.subr.bf16.mxu0 0
    %2391 = vmatpush2.bf16.msra.mxu0 0
    %2392 = vmatprep.mubr.bf16.mxu0 0
    %2393 = vmatmul.mubr.bf16.gmra.mxu0 %v2334
    %v2394 = vpop.f32.mrf.mxu0
    %v2395 = vadd.f32 0.0, %v2394
    %v2396 = vpop.f32.mrf.mxu0
    %v2397 = vpop.f32.mrf.mxu0
    %v2398 = vadd.f32 0.0, %v2397
    %v2399 = vpop.f32.mrf.mxu0
    %2400 = vmatprep.mubr.bf16.mxu0 0
    %2401 = vmatmul.mubr.bf16.gmra.mxu0 %v2337
    %v2402 = vpop.f32.mrf.mxu0
    %v2403 = vadd.f32 0.0, %v2402
    %v2404 = vpop.f32.mrf.mxu0
    %v2405 = vpop.f32.mrf.mxu0
    %v2406 = vadd.f32 0.0, %v2405
    %v2407 = vpop.f32.mrf.mxu0
    %2408 = vmatprep.mubr.bf16.mxu0 0
    %2409 = vmatmul.mubr.bf16.gmra.mxu0 %v2340
    %v2410 = vpop.f32.mrf.mxu0
    %v2411 = vadd.f32 0.0, %v2410
    %v2412 = vpop.f32.mrf.mxu0
    %v2413 = vpop.f32.mrf.mxu0
    %v2414 = vadd.f32 0.0, %v2413
    %v2415 = vpop.f32.mrf.mxu0
    %2416 = vmatprep.mubr.bf16.mxu0 0
    %2417 = vmatmul.mubr.bf16.gmra.mxu0 %v2343
    %v2418 = vpop.f32.mrf.mxu0
    %v2419 = vadd.f32 0.0, %v2418
    %v2420 = vpop.f32.mrf.mxu0
    %v2421 = vpop.f32.mrf.mxu0
    %v2422 = vadd.f32 0.0, %v2421
    %v2423 = vpop.f32.mrf.mxu0
    %2424 = vmatprep.mubr.bf16.mxu0 0
    %2425 = vmatmul.mubr.bf16.gmra.mxu0 %v2346
    %v2426 = vpop.f32.mrf.mxu0
    %v2427 = vadd.f32 0.0, %v2426
    %v2428 = vpop.f32.mrf.mxu0
    %v2429 = vpop.f32.mrf.mxu0
    %v2430 = vadd.f32 0.0, %v2429
    %v2431 = vpop.f32.mrf.mxu0
    %2432 = vmatprep.mubr.bf16.mxu0 0
    %2433 = vmatmul.mubr.bf16.gmra.mxu0 %v2349
    %v2434 = vpop.f32.mrf.mxu0
    %v2435 = vadd.f32 0.0, %v2434
    %v2436 = vpop.f32.mrf.mxu0
    %v2437 = vpop.f32.mrf.mxu0
    %v2438 = vadd.f32 0.0, %v2437
    %v2439 = vpop.f32.mrf.mxu0
    %2440 = vmatprep.mubr.bf16.mxu0 0
    %2441 = vmatmul.mubr.bf16.gmra.mxu0 %v2352
    %v2442 = vpop.f32.mrf.mxu0
    %v2443 = vadd.f32 0.0, %v2442
    %v2444 = vpop.f32.mrf.mxu0
    %v2445 = vpop.f32.mrf.mxu0
    %v2446 = vadd.f32 0.0, %v2445
    %v2447 = vpop.f32.mrf.mxu0
    %2448 = vmatprep.mubr.bf16.mxu0 0
    %2449 = vmatmul.mubr.bf16.gmra.mxu0 %v2355
    %v2450 = vpop.f32.mrf.mxu0
    %v2451 = vadd.f32 0.0, %v2450
    %v2452 = vpop.f32.mrf.mxu0
    %v2453 = vpop.f32.mrf.mxu0
    %v2454 = vadd.f32 0.0, %v2453
    %v2455 = vpop.f32.mrf.mxu0
    %2456 = vmatprep.mubr.bf16.mxu0 0
    %2457 = vmatmul.mubr.bf16.gmra.mxu0 %v2358
    %v2458 = vpop.f32.mrf.mxu0
    %v2459 = vadd.f32 0.0, %v2458
    %v2460 = vpop.f32.mrf.mxu0
    %v2461 = vpop.f32.mrf.mxu0
    %v2462 = vadd.f32 0.0, %v2461
    %v2463 = vpop.f32.mrf.mxu0
    %2464 = vdwg.mxu0
    %v2465 = vadd.f32 %v2256, %v2395
    %v2466 = vadd.f32 %v2257, %v2398
    %v2467 = vadd.f32 %v2258, %v2403
    %v2468 = vadd.f32 %v2259, %v2406
    %v2469 = vadd.f32 %v2260, %v2411
    %v2470 = vadd.f32 %v2261, %v2414
    %v2471 = vadd.f32 %v2262, %v2419
    %v2472 = vadd.f32 %v2263, %v2422
    %v2473 = vadd.f32 %v2264, %v2427
    %v2474 = vadd.f32 %v2265, %v2430
    %v2475 = vadd.f32 %v2266, %v2435
    %v2476 = vadd.f32 %v2267, %v2438
    %v2477 = vadd.f32 %v2268, %v2443
    %v2478 = vadd.f32 %v2269, %v2446
    %v2479 = vadd.f32 %v2270, %v2451
    %v2480 = vadd.f32 %v2271, %v2454
    %v2481 = vadd.f32 %v2272, %v2459
    %v2482 = vadd.f32 %v2273, %v2462
    %v2483 = vld [vmem:[#allocation2 + $0xd] sm:$0xff]
    %v2484 = vld [vmem:[#allocation2 + $0x15] sm:$0xff]
    %v2485 = vld [vmem:[#allocation2 + $0x1d] sm:$0xff]
    %v2486 = vld [vmem:[#allocation2 + $0x25] sm:$0xff]
    %v2487 = vld [vmem:[#allocation2 + $0x2d] sm:$0xff]
    %v2488 = vld [vmem:[#allocation2 + $0x35] sm:$0xff]
    %v2489 = vld [vmem:[#allocation2 + $0x3d] sm:$0xff]
    %v2490 = vld [vmem:[#allocation2 + $0x45] sm:$0xff]
    %v2491 = vld [vmem:[#allocation2 + $0x4d] sm:$0xff]
    %v2492 = vld [vmem:[#allocation2 + $0x55] sm:$0xff]
    %v2493 = vld [vmem:[#allocation2 + $0x5d] sm:$0xff]
    %v2494 = vld [vmem:[#allocation2 + $0x65] sm:$0xff]
    %v2495 = vld [vmem:[#allocation2 + $0x6d] sm:$0xff]
    %v2496 = vld [vmem:[#allocation2 + $0x75] sm:$0xff]
    %v2497 = vld [vmem:[#allocation2 + $0x7d] sm:$0xff]
    %v2498 = vld [vmem:[#allocation2 + $0x85] sm:$0xff]
    %v2499 = vld [vmem:[#allocation2 + $0x8d] sm:$0xff]
    %v2500 = vld [vmem:[#allocation2 + $0x95] sm:$0xff]
    %v2501 = vpack.c.bf16 %v2484, %v2483
    %v2502 = vpack.c.bf16 %v2486, %v2485
    %v2503 = vpack.c.bf16 %v2488, %v2487
    %v2504 = vpack.c.bf16 %v2490, %v2489
    %v2505 = vpack.c.bf16 %v2492, %v2491
    %v2506 = vpack.c.bf16 %v2494, %v2493
    %v2507 = vpack.c.bf16 %v2496, %v2495
    %v2508 = vpack.c.bf16 %v2498, %v2497
    %v2509 = vpack.c.bf16 %v2500, %v2499
    %v2510 = vld [vmem:[%s3 + $0xe0] sm:$0xf]
    %v2511 = vld [vmem:[%s3 + $0xe4] sm:$0xf]
    %v2512 = vld [vmem:[%s3 + $0xe8] sm:$0xf]
    %v2513 = vld [vmem:[%s3 + $0xec] sm:$0xf]
    %v2514 = vld [vmem:[%s3 + $0xf0] sm:$0xf]
    %v2515 = vld [vmem:[%s3 + $0xf4] sm:$0xf]
    %v2516 = vld [vmem:[%s3 + $0xf8] sm:$0xf]
    %v2517 = vld [vmem:[%s3 + $0xfc] sm:$0xf]
    %v2526 = vunpack.c.l.b16 %v2510
    %v2527 = vunpack.c.l.b16 %v2511
    %v2528 = vunpack.c.l.b16 %v2512
    %v2529 = vunpack.c.l.b16 %v2513
    %v2530 = vunpack.c.l.b16 %v2514
    %v2531 = vunpack.c.l.b16 %v2515
    %v2532 = vunpack.c.l.b16 %v2516
    %v2533 = vunpack.c.l.b16 %v2517
    %v2534 = vpack.c.b16 %v2527, %v2526
    %v2535 = vpack.c.b16 %v2529, %v2528
    %v2536 = vpack.c.b16 %v2531, %v2530
    %v2537 = vpack.c.b16 %v2533, %v2532
    %v2543 = vsel %vm1033, %v2501, 0
    %v2546 = vsel %vm1033, %v2502, 0
    %v2549 = vsel %vm1033, %v2503, 0
    %v2552 = vsel %vm1033, %v2504, 0
    %v2555 = vsel %vm1033, %v2505, 0
    %v2558 = vsel %vm1033, %v2506, 0
    %v2561 = vsel %vm1033, %v2507, 0
    %v2564 = vsel %vm1033, %v2508, 0
    %v2567 = vsel %vm1033, %v2509, 0
    %2569 = vmatprep.subr.bf16.mxu0 0
    %2570 = vmatpush1.bf16.msra.mxu0 0
    %2571 = vmatprep.subr.bf16.mxu0 0
    %2572 = vmatpush1.bf16.msra.mxu0 0
    %2573 = vmatprep.subr.bf16.mxu0 0
    %2574 = vmatpush1.bf16.msra.mxu0 0
    %2575 = vmatprep.subr.bf16.mxu0 0
    %2576 = vmatpush1.bf16.msra.mxu0 0
    %2577 = vmatprep.subr.bf16.mxu0 0
    %2578 = vmatpush1.bf16.msra.mxu0 %v2537
    %2579 = vmatprep.subr.bf16.mxu0 0
    %2580 = vmatpush1.bf16.msra.mxu0 %v2536
    %2581 = vmatprep.subr.bf16.mxu0 0
    %2582 = vmatpush1.bf16.msra.mxu0 %v2535
    %2583 = vmatprep.subr.bf16.mxu0 0
    %2584 = vmatpush1.bf16.msra.mxu0 %v2534
    %2585 = vmatprep.subr.bf16.mxu0 0
    %2586 = vmatpush2.bf16.msra.mxu0 0
    %2587 = vmatprep.subr.bf16.mxu0 0
    %2588 = vmatpush2.bf16.msra.mxu0 0
    %2589 = vmatprep.subr.bf16.mxu0 0
    %2590 = vmatpush2.bf16.msra.mxu0 0
    %2591 = vmatprep.subr.bf16.mxu0 0
    %2592 = vmatpush2.bf16.msra.mxu0 0
    %2593 = vmatprep.subr.bf16.mxu0 0
    %2594 = vmatpush2.bf16.msra.mxu0 0
    %2595 = vmatprep.subr.bf16.mxu0 0
    %2596 = vmatpush2.bf16.msra.mxu0 0
    %2597 = vmatprep.subr.bf16.mxu0 0
    %2598 = vmatpush2.bf16.msra.mxu0 0
    %2599 = vmatprep.subr.bf16.mxu0 0
    %2600 = vmatpush2.bf16.msra.mxu0 0
    %2601 = vmatprep.mubr.bf16.mxu0 0
    %2602 = vmatmul.mubr.bf16.gmra.mxu0 %v2543
    %v2603 = vpop.f32.mrf.mxu0
    %v2604 = vadd.f32 0.0, %v2603
    %v2605 = vpop.f32.mrf.mxu0
    %v2606 = vpop.f32.mrf.mxu0
    %v2607 = vadd.f32 0.0, %v2606
    %v2608 = vpop.f32.mrf.mxu0
    %2609 = vmatprep.mubr.bf16.mxu0 0
    %2610 = vmatmul.mubr.bf16.gmra.mxu0 %v2546
    %v2611 = vpop.f32.mrf.mxu0
    %v2612 = vadd.f32 0.0, %v2611
    %v2613 = vpop.f32.mrf.mxu0
    %v2614 = vpop.f32.mrf.mxu0
    %v2615 = vadd.f32 0.0, %v2614
    %v2616 = vpop.f32.mrf.mxu0
    %2617 = vmatprep.mubr.bf16.mxu0 0
    %2618 = vmatmul.mubr.bf16.gmra.mxu0 %v2549
    %v2619 = vpop.f32.mrf.mxu0
    %v2620 = vadd.f32 0.0, %v2619
    %v2621 = vpop.f32.mrf.mxu0
    %v2622 = vpop.f32.mrf.mxu0
    %v2623 = vadd.f32 0.0, %v2622
    %v2624 = vpop.f32.mrf.mxu0
    %2625 = vmatprep.mubr.bf16.mxu0 0
    %2626 = vmatmul.mubr.bf16.gmra.mxu0 %v2552
    %v2627 = vpop.f32.mrf.mxu0
    %v2628 = vadd.f32 0.0, %v2627
    %v2629 = vpop.f32.mrf.mxu0
    %v2630 = vpop.f32.mrf.mxu0
    %v2631 = vadd.f32 0.0, %v2630
    %v2632 = vpop.f32.mrf.mxu0
    %2633 = vmatprep.mubr.bf16.mxu0 0
    %2634 = vmatmul.mubr.bf16.gmra.mxu0 %v2555
    %v2635 = vpop.f32.mrf.mxu0
    %v2636 = vadd.f32 0.0, %v2635
    %v2637 = vpop.f32.mrf.mxu0
    %v2638 = vpop.f32.mrf.mxu0
    %v2639 = vadd.f32 0.0, %v2638
    %v2640 = vpop.f32.mrf.mxu0
    %2641 = vmatprep.mubr.bf16.mxu0 0
    %2642 = vmatmul.mubr.bf16.gmra.mxu0 %v2558
    %v2643 = vpop.f32.mrf.mxu0
    %v2644 = vadd.f32 0.0, %v2643
    %v2645 = vpop.f32.mrf.mxu0
    %v2646 = vpop.f32.mrf.mxu0
    %v2647 = vadd.f32 0.0, %v2646
    %v2648 = vpop.f32.mrf.mxu0
    %2649 = vmatprep.mubr.bf16.mxu0 0
    %2650 = vmatmul.mubr.bf16.gmra.mxu0 %v2561
    %v2651 = vpop.f32.mrf.mxu0
    %v2652 = vadd.f32 0.0, %v2651
    %v2653 = vpop.f32.mrf.mxu0
    %v2654 = vpop.f32.mrf.mxu0
    %v2655 = vadd.f32 0.0, %v2654
    %v2656 = vpop.f32.mrf.mxu0
    %2657 = vmatprep.mubr.bf16.mxu0 0
    %2658 = vmatmul.mubr.bf16.gmra.mxu0 %v2564
    %v2659 = vpop.f32.mrf.mxu0
    %v2660 = vadd.f32 0.0, %v2659
    %v2661 = vpop.f32.mrf.mxu0
    %v2662 = vpop.f32.mrf.mxu0
    %v2663 = vadd.f32 0.0, %v2662
    %v2664 = vpop.f32.mrf.mxu0
    %2665 = vmatprep.mubr.bf16.mxu0 0
    %2666 = vmatmul.mubr.bf16.gmra.mxu0 %v2567
    %v2667 = vpop.f32.mrf.mxu0
    %v2668 = vadd.f32 0.0, %v2667
    %v2669 = vpop.f32.mrf.mxu0
    %v2670 = vpop.f32.mrf.mxu0
    %v2671 = vadd.f32 0.0, %v2670
    %v2672 = vpop.f32.mrf.mxu0
    %2673 = vdwg.mxu0
    %v2674 = vadd.f32 %v2465, %v2604
    %v2675 = vadd.f32 %v2466, %v2607
    %v2676 = vadd.f32 %v2467, %v2612
    %v2677 = vadd.f32 %v2468, %v2615
    %v2678 = vadd.f32 %v2469, %v2620
    %v2679 = vadd.f32 %v2470, %v2623
    %v2680 = vadd.f32 %v2471, %v2628
    %v2681 = vadd.f32 %v2472, %v2631
    %v2682 = vadd.f32 %v2473, %v2636
    %v2683 = vadd.f32 %v2474, %v2639
    %v2684 = vadd.f32 %v2475, %v2644
    %v2685 = vadd.f32 %v2476, %v2647
    %v2686 = vadd.f32 %v2477, %v2652
    %v2687 = vadd.f32 %v2478, %v2655
    %v2688 = vadd.f32 %v2479, %v2660
    %v2689 = vadd.f32 %v2480, %v2663
    %v2690 = vadd.f32 %v2481, %v2668
    %v2691 = vadd.f32 %v2482, %v2671
    %v2692 = vld [vmem:[#allocation2 + $0xe] sm:$0xff]
    %v2693 = vld [vmem:[#allocation2 + $0x16] sm:$0xff]
    %v2694 = vld [vmem:[#allocation2 + $0x1e] sm:$0xff]
    %v2695 = vld [vmem:[#allocation2 + $0x26] sm:$0xff]
    %v2696 = vld [vmem:[#allocation2 + $0x2e] sm:$0xff]
    %v2697 = vld [vmem:[#allocation2 + $0x36] sm:$0xff]
    %v2698 = vld [vmem:[#allocation2 + $0x3e] sm:$0xff]
    %v2699 = vld [vmem:[#allocation2 + $0x46] sm:$0xff]
    %v2700 = vld [vmem:[#allocation2 + $0x4e] sm:$0xff]
    %v2701 = vld [vmem:[#allocation2 + $0x56] sm:$0xff]
    %v2702 = vld [vmem:[#allocation2 + $0x5e] sm:$0xff]
    %v2703 = vld [vmem:[#allocation2 + $0x66] sm:$0xff]
    %v2704 = vld [vmem:[#allocation2 + $0x6e] sm:$0xff]
    %v2705 = vld [vmem:[#allocation2 + $0x76] sm:$0xff]
    %v2706 = vld [vmem:[#allocation2 + $0x7e] sm:$0xff]
    %v2707 = vld [vmem:[#allocation2 + $0x86] sm:$0xff]
    %v2708 = vld [vmem:[#allocation2 + $0x8e] sm:$0xff]
    %v2709 = vld [vmem:[#allocation2 + $0x96] sm:$0xff]
    %v2710 = vpack.c.bf16 %v2693, %v2692
    %v2711 = vpack.c.bf16 %v2695, %v2694
    %v2712 = vpack.c.bf16 %v2697, %v2696
    %v2713 = vpack.c.bf16 %v2699, %v2698
    %v2714 = vpack.c.bf16 %v2701, %v2700
    %v2715 = vpack.c.bf16 %v2703, %v2702
    %v2716 = vpack.c.bf16 %v2705, %v2704
    %v2717 = vpack.c.bf16 %v2707, %v2706
    %v2718 = vpack.c.bf16 %v2709, %v2708
    %v2719 = vld [vmem:[%s3 + $0x100] sm:$0xf]
    %v2720 = vld [vmem:[%s3 + $0x104] sm:$0xf]
    %v2721 = vld [vmem:[%s3 + $0x108] sm:$0xf]
    %v2722 = vld [vmem:[%s3 + $0x10c] sm:$0xf]
    %v2723 = vld [vmem:[%s3 + $0x110] sm:$0xf]
    %v2724 = vld [vmem:[%s3 + $0x114] sm:$0xf]
    %v2725 = vld [vmem:[%s3 + $0x118] sm:$0xf]
    %v2726 = vld [vmem:[%s3 + $0x11c] sm:$0xf]
    %v2735 = vunpack.c.l.b16 %v2719
    %v2736 = vunpack.c.l.b16 %v2720
    %v2737 = vunpack.c.l.b16 %v2721
    %v2738 = vunpack.c.l.b16 %v2722
    %v2739 = vunpack.c.l.b16 %v2723
    %v2740 = vunpack.c.l.b16 %v2724
    %v2741 = vunpack.c.l.b16 %v2725
    %v2742 = vunpack.c.l.b16 %v2726
    %v2743 = vpack.c.b16 %v2736, %v2735
    %v2744 = vpack.c.b16 %v2738, %v2737
    %v2745 = vpack.c.b16 %v2740, %v2739
    %v2746 = vpack.c.b16 %v2742, %v2741
    %v2752 = vsel %vm1033, %v2710, 0
    %v2755 = vsel %vm1033, %v2711, 0
    %v2758 = vsel %vm1033, %v2712, 0
    %v2761 = vsel %vm1033, %v2713, 0
    %v2764 = vsel %vm1033, %v2714, 0
    %v2767 = vsel %vm1033, %v2715, 0
    %v2770 = vsel %vm1033, %v2716, 0
    %v2773 = vsel %vm1033, %v2717, 0
    %v2776 = vsel %vm1033, %v2718, 0
    %2778 = vmatprep.subr.bf16.mxu0 0
    %2779 = vmatpush1.bf16.msra.mxu0 0
    %2780 = vmatprep.subr.bf16.mxu0 0
    %2781 = vmatpush1.bf16.msra.mxu0 0
    %2782 = vmatprep.subr.bf16.mxu0 0
    %2783 = vmatpush1.bf16.msra.mxu0 0
    %2784 = vmatprep.subr.bf16.mxu0 0
    %2785 = vmatpush1.bf16.msra.mxu0 0
    %2786 = vmatprep.subr.bf16.mxu0 0
    %2787 = vmatpush1.bf16.msra.mxu0 %v2746
    %2788 = vmatprep.subr.bf16.mxu0 0
    %2789 = vmatpush1.bf16.msra.mxu0 %v2745
    %2790 = vmatprep.subr.bf16.mxu0 0
    %2791 = vmatpush1.bf16.msra.mxu0 %v2744
    %2792 = vmatprep.subr.bf16.mxu0 0
    %2793 = vmatpush1.bf16.msra.mxu0 %v2743
    %2794 = vmatprep.subr.bf16.mxu0 0
    %2795 = vmatpush2.bf16.msra.mxu0 0
    %2796 = vmatprep.subr.bf16.mxu0 0
    %2797 = vmatpush2.bf16.msra.mxu0 0
    %2798 = vmatprep.subr.bf16.mxu0 0
    %2799 = vmatpush2.bf16.msra.mxu0 0
    %2800 = vmatprep.subr.bf16.mxu0 0
    %2801 = vmatpush2.bf16.msra.mxu0 0
    %2802 = vmatprep.subr.bf16.mxu0 0
    %2803 = vmatpush2.bf16.msra.mxu0 0
    %2804 = vmatprep.subr.bf16.mxu0 0
    %2805 = vmatpush2.bf16.msra.mxu0 0
    %2806 = vmatprep.subr.bf16.mxu0 0
    %2807 = vmatpush2.bf16.msra.mxu0 0
    %2808 = vmatprep.subr.bf16.mxu0 0
    %2809 = vmatpush2.bf16.msra.mxu0 0
    %2810 = vmatprep.mubr.bf16.mxu0 0
    %2811 = vmatmul.mubr.bf16.gmra.mxu0 %v2752
    %v2812 = vpop.f32.mrf.mxu0
    %v2813 = vadd.f32 0.0, %v2812
    %v2814 = vpop.f32.mrf.mxu0
    %v2815 = vpop.f32.mrf.mxu0
    %v2816 = vadd.f32 0.0, %v2815
    %v2817 = vpop.f32.mrf.mxu0
    %2818 = vmatprep.mubr.bf16.mxu0 0
    %2819 = vmatmul.mubr.bf16.gmra.mxu0 %v2755
    %v2820 = vpop.f32.mrf.mxu0
    %v2821 = vadd.f32 0.0, %v2820
    %v2822 = vpop.f32.mrf.mxu0
    %v2823 = vpop.f32.mrf.mxu0
    %v2824 = vadd.f32 0.0, %v2823
    %v2825 = vpop.f32.mrf.mxu0
    %2826 = vmatprep.mubr.bf16.mxu0 0
    %2827 = vmatmul.mubr.bf16.gmra.mxu0 %v2758
    %v2828 = vpop.f32.mrf.mxu0
    %v2829 = vadd.f32 0.0, %v2828
    %v2830 = vpop.f32.mrf.mxu0
    %v2831 = vpop.f32.mrf.mxu0
    %v2832 = vadd.f32 0.0, %v2831
    %v2833 = vpop.f32.mrf.mxu0
    %2834 = vmatprep.mubr.bf16.mxu0 0
    %2835 = vmatmul.mubr.bf16.gmra.mxu0 %v2761
    %v2836 = vpop.f32.mrf.mxu0
    %v2837 = vadd.f32 0.0, %v2836
    %v2838 = vpop.f32.mrf.mxu0
    %v2839 = vpop.f32.mrf.mxu0
    %v2840 = vadd.f32 0.0, %v2839
    %v2841 = vpop.f32.mrf.mxu0
    %2842 = vmatprep.mubr.bf16.mxu0 0
    %2843 = vmatmul.mubr.bf16.gmra.mxu0 %v2764
    %v2844 = vpop.f32.mrf.mxu0
    %v2845 = vadd.f32 0.0, %v2844
    %v2846 = vpop.f32.mrf.mxu0
    %v2847 = vpop.f32.mrf.mxu0
    %v2848 = vadd.f32 0.0, %v2847
    %v2849 = vpop.f32.mrf.mxu0
    %2850 = vmatprep.mubr.bf16.mxu0 0
    %2851 = vmatmul.mubr.bf16.gmra.mxu0 %v2767
    %v2852 = vpop.f32.mrf.mxu0
    %v2853 = vadd.f32 0.0, %v2852
    %v2854 = vpop.f32.mrf.mxu0
    %v2855 = vpop.f32.mrf.mxu0
    %v2856 = vadd.f32 0.0, %v2855
    %v2857 = vpop.f32.mrf.mxu0
    %2858 = vmatprep.mubr.bf16.mxu0 0
    %2859 = vmatmul.mubr.bf16.gmra.mxu0 %v2770
    %v2860 = vpop.f32.mrf.mxu0
    %v2861 = vadd.f32 0.0, %v2860
    %v2862 = vpop.f32.mrf.mxu0
    %v2863 = vpop.f32.mrf.mxu0
    %v2864 = vadd.f32 0.0, %v2863
    %v2865 = vpop.f32.mrf.mxu0
    %2866 = vmatprep.mubr.bf16.mxu0 0
    %2867 = vmatmul.mubr.bf16.gmra.mxu0 %v2773
    %v2868 = vpop.f32.mrf.mxu0
    %v2869 = vadd.f32 0.0, %v2868
    %v2870 = vpop.f32.mrf.mxu0
    %v2871 = vpop.f32.mrf.mxu0
    %v2872 = vadd.f32 0.0, %v2871
    %v2873 = vpop.f32.mrf.mxu0
    %2874 = vmatprep.mubr.bf16.mxu0 0
    %2875 = vmatmul.mubr.bf16.gmra.mxu0 %v2776
    %v2876 = vpop.f32.mrf.mxu0
    %v2877 = vadd.f32 0.0, %v2876
    %v2878 = vpop.f32.mrf.mxu0
    %v2879 = vpop.f32.mrf.mxu0
    %v2880 = vadd.f32 0.0, %v2879
    %v2881 = vpop.f32.mrf.mxu0
    %2882 = vdwg.mxu0
    %v2883 = vadd.f32 %v2674, %v2813
    %v2884 = vadd.f32 %v2675, %v2816
    %v2885 = vadd.f32 %v2676, %v2821
    %v2886 = vadd.f32 %v2677, %v2824
    %v2887 = vadd.f32 %v2678, %v2829
    %v2888 = vadd.f32 %v2679, %v2832
    %v2889 = vadd.f32 %v2680, %v2837
    %v2890 = vadd.f32 %v2681, %v2840
    %v2891 = vadd.f32 %v2682, %v2845
    %v2892 = vadd.f32 %v2683, %v2848
    %v2893 = vadd.f32 %v2684, %v2853
    %v2894 = vadd.f32 %v2685, %v2856
    %v2895 = vadd.f32 %v2686, %v2861
    %v2896 = vadd.f32 %v2687, %v2864
    %v2897 = vadd.f32 %v2688, %v2869
    %v2898 = vadd.f32 %v2689, %v2872
    %v2899 = vadd.f32 %v2690, %v2877
    %v2900 = vadd.f32 %v2691, %v2880
    %v2901 = vld [vmem:[#allocation2 + $0x12] sm:$0xff]
    %v2902 = vld [vmem:[#allocation2 + $0x1a] sm:$0xff]
    %v2903 = vld [vmem:[#allocation2 + $0x22] sm:$0xff]
    %v2904 = vld [vmem:[#allocation2 + $0x2a] sm:$0xff]
    %v2905 = vld [vmem:[#allocation2 + $0x32] sm:$0xff]
    %v2906 = vld [vmem:[#allocation2 + $0x3a] sm:$0xff]
    %v2907 = vld [vmem:[#allocation2 + $0x42] sm:$0xff]
    %v2908 = vld [vmem:[#allocation2 + $0x4a] sm:$0xff]
    %v2909 = vld [vmem:[#allocation2 + $0x52] sm:$0xff]
    %v2910 = vld [vmem:[#allocation2 + $0x5a] sm:$0xff]
    %v2911 = vld [vmem:[#allocation2 + $0x62] sm:$0xff]
    %v2912 = vld [vmem:[#allocation2 + $0x6a] sm:$0xff]
    %v2913 = vld [vmem:[#allocation2 + $0x72] sm:$0xff]
    %v2914 = vld [vmem:[#allocation2 + $0x7a] sm:$0xff]
    %v2915 = vld [vmem:[#allocation2 + $0x82] sm:$0xff]
    %v2916 = vld [vmem:[#allocation2 + $0x8a] sm:$0xff]
    %v2917 = vld [vmem:[#allocation2 + $0x92] sm:$0xff]
    %v2918 = vld [vmem:[#allocation2 + $0x9a] sm:$0xff]
    %v2919 = vpack.c.bf16 %v2902, %v2901
    %v2920 = vpack.c.bf16 %v2904, %v2903
    %v2921 = vpack.c.bf16 %v2906, %v2905
    %v2922 = vpack.c.bf16 %v2908, %v2907
    %v2923 = vpack.c.bf16 %v2910, %v2909
    %v2924 = vpack.c.bf16 %v2912, %v2911
    %v2925 = vpack.c.bf16 %v2914, %v2913
    %v2926 = vpack.c.bf16 %v2916, %v2915
    %v2927 = vpack.c.bf16 %v2918, %v2917
    %v2928 = vld [vmem:[%s3 + $0x120] sm:$0xf]
    %v2929 = vld [vmem:[%s3 + $0x124] sm:$0xf]
    %v2930 = vld [vmem:[%s3 + $0x128] sm:$0xf]
    %v2931 = vld [vmem:[%s3 + $0x12c] sm:$0xf]
    %v2932 = vld [vmem:[%s3 + $0x130] sm:$0xf]
    %v2933 = vld [vmem:[%s3 + $0x134] sm:$0xf]
    %v2934 = vld [vmem:[%s3 + $0x138] sm:$0xf]
    %v2935 = vld [vmem:[%s3 + $0x13c] sm:$0xf]
    %v2944 = vunpack.c.l.b16 %v2928
    %v2945 = vunpack.c.l.b16 %v2929
    %v2946 = vunpack.c.l.b16 %v2930
    %v2947 = vunpack.c.l.b16 %v2931
    %v2948 = vunpack.c.l.b16 %v2932
    %v2949 = vunpack.c.l.b16 %v2933
    %v2950 = vunpack.c.l.b16 %v2934
    %v2951 = vunpack.c.l.b16 %v2935
    %v2952 = vpack.c.b16 %v2945, %v2944
    %v2953 = vpack.c.b16 %v2947, %v2946
    %v2954 = vpack.c.b16 %v2949, %v2948
    %v2955 = vpack.c.b16 %v2951, %v2950
    %v2961 = vsel %vm1033, %v2919, 0
    %v2964 = vsel %vm1033, %v2920, 0
    %v2967 = vsel %vm1033, %v2921, 0
    %v2970 = vsel %vm1033, %v2922, 0
    %v2973 = vsel %vm1033, %v2923, 0
    %v2976 = vsel %vm1033, %v2924, 0
    %v2979 = vsel %vm1033, %v2925, 0
    %v2982 = vsel %vm1033, %v2926, 0
    %v2985 = vsel %vm1033, %v2927, 0
    %2987 = vmatprep.subr.bf16.mxu0 0
    %2988 = vmatpush1.bf16.msra.mxu0 0
    %2989 = vmatprep.subr.bf16.mxu0 0
    %2990 = vmatpush1.bf16.msra.mxu0 0
    %2991 = vmatprep.subr.bf16.mxu0 0
    %2992 = vmatpush1.bf16.msra.mxu0 0
    %2993 = vmatprep.subr.bf16.mxu0 0
    %2994 = vmatpush1.bf16.msra.mxu0 0
    %2995 = vmatprep.subr.bf16.mxu0 0
    %2996 = vmatpush1.bf16.msra.mxu0 %v2955
    %2997 = vmatprep.subr.bf16.mxu0 0
    %2998 = vmatpush1.bf16.msra.mxu0 %v2954
    %2999 = vmatprep.subr.bf16.mxu0 0
    %3000 = vmatpush1.bf16.msra.mxu0 %v2953
    %3001 = vmatprep.subr.bf16.mxu0 0
    %3002 = vmatpush1.bf16.msra.mxu0 %v2952
    %3003 = vmatprep.subr.bf16.mxu0 0
    %3004 = vmatpush2.bf16.msra.mxu0 0
    %3005 = vmatprep.subr.bf16.mxu0 0
    %3006 = vmatpush2.bf16.msra.mxu0 0
    %3007 = vmatprep.subr.bf16.mxu0 0
    %3008 = vmatpush2.bf16.msra.mxu0 0
    %3009 = vmatprep.subr.bf16.mxu0 0
    %3010 = vmatpush2.bf16.msra.mxu0 0
    %3011 = vmatprep.subr.bf16.mxu0 0
    %3012 = vmatpush2.bf16.msra.mxu0 0
    %3013 = vmatprep.subr.bf16.mxu0 0
    %3014 = vmatpush2.bf16.msra.mxu0 0
    %3015 = vmatprep.subr.bf16.mxu0 0
    %3016 = vmatpush2.bf16.msra.mxu0 0
    %3017 = vmatprep.subr.bf16.mxu0 0
    %3018 = vmatpush2.bf16.msra.mxu0 0
    %3019 = vmatprep.mubr.bf16.mxu0 0
    %3020 = vmatmul.mubr.bf16.gmra.mxu0 %v2961
    %v3021 = vpop.f32.mrf.mxu0
    %v3022 = vadd.f32 0.0, %v3021
    %v3023 = vpop.f32.mrf.mxu0
    %v3024 = vpop.f32.mrf.mxu0
    %v3025 = vadd.f32 0.0, %v3024
    %v3026 = vpop.f32.mrf.mxu0
    %3027 = vmatprep.mubr.bf16.mxu0 0
    %3028 = vmatmul.mubr.bf16.gmra.mxu0 %v2964
    %v3029 = vpop.f32.mrf.mxu0
    %v3030 = vadd.f32 0.0, %v3029
    %v3031 = vpop.f32.mrf.mxu0
    %v3032 = vpop.f32.mrf.mxu0
    %v3033 = vadd.f32 0.0, %v3032
    %v3034 = vpop.f32.mrf.mxu0
    %3035 = vmatprep.mubr.bf16.mxu0 0
    %3036 = vmatmul.mubr.bf16.gmra.mxu0 %v2967
    %v3037 = vpop.f32.mrf.mxu0
    %v3038 = vadd.f32 0.0, %v3037
    %v3039 = vpop.f32.mrf.mxu0
    %v3040 = vpop.f32.mrf.mxu0
    %v3041 = vadd.f32 0.0, %v3040
    %v3042 = vpop.f32.mrf.mxu0
    %3043 = vmatprep.mubr.bf16.mxu0 0
    %3044 = vmatmul.mubr.bf16.gmra.mxu0 %v2970
    %v3045 = vpop.f32.mrf.mxu0
    %v3046 = vadd.f32 0.0, %v3045
    %v3047 = vpop.f32.mrf.mxu0
    %v3048 = vpop.f32.mrf.mxu0
    %v3049 = vadd.f32 0.0, %v3048
    %v3050 = vpop.f32.mrf.mxu0
    %3051 = vmatprep.mubr.bf16.mxu0 0
    %3052 = vmatmul.mubr.bf16.gmra.mxu0 %v2973
    %v3053 = vpop.f32.mrf.mxu0
    %v3054 = vadd.f32 0.0, %v3053
    %v3055 = vpop.f32.mrf.mxu0
    %v3056 = vpop.f32.mrf.mxu0
    %v3057 = vadd.f32 0.0, %v3056
    %v3058 = vpop.f32.mrf.mxu0
    %3059 = vmatprep.mubr.bf16.mxu0 0
    %3060 = vmatmul.mubr.bf16.gmra.mxu0 %v2976
    %v3061 = vpop.f32.mrf.mxu0
    %v3062 = vadd.f32 0.0, %v3061
    %v3063 = vpop.f32.mrf.mxu0
    %v3064 = vpop.f32.mrf.mxu0
    %v3065 = vadd.f32 0.0, %v3064
    %v3066 = vpop.f32.mrf.mxu0
    %3067 = vmatprep.mubr.bf16.mxu0 0
    %3068 = vmatmul.mubr.bf16.gmra.mxu0 %v2979
    %v3069 = vpop.f32.mrf.mxu0
    %v3070 = vadd.f32 0.0, %v3069
    %v3071 = vpop.f32.mrf.mxu0
    %v3072 = vpop.f32.mrf.mxu0
    %v3073 = vadd.f32 0.0, %v3072
    %v3074 = vpop.f32.mrf.mxu0
    %3075 = vmatprep.mubr.bf16.mxu0 0
    %3076 = vmatmul.mubr.bf16.gmra.mxu0 %v2982
    %v3077 = vpop.f32.mrf.mxu0
    %v3078 = vadd.f32 0.0, %v3077
    %v3079 = vpop.f32.mrf.mxu0
    %v3080 = vpop.f32.mrf.mxu0
    %v3081 = vadd.f32 0.0, %v3080
    %v3082 = vpop.f32.mrf.mxu0
    %3083 = vmatprep.mubr.bf16.mxu0 0
    %3084 = vmatmul.mubr.bf16.gmra.mxu0 %v2985
    %v3085 = vpop.f32.mrf.mxu0
    %v3086 = vadd.f32 0.0, %v3085
    %v3087 = vpop.f32.mrf.mxu0
    %v3088 = vpop.f32.mrf.mxu0
    %v3089 = vadd.f32 0.0, %v3088
    %v3090 = vpop.f32.mrf.mxu0
    %3091 = vdwg.mxu0
    %v3092 = vadd.f32 %v2883, %v3022
    %v3093 = vadd.f32 %v2884, %v3025
    %v3094 = vadd.f32 %v2885, %v3030
    %v3095 = vadd.f32 %v2886, %v3033
    %v3096 = vadd.f32 %v2887, %v3038
    %v3097 = vadd.f32 %v2888, %v3041
    %v3098 = vadd.f32 %v2889, %v3046
    %v3099 = vadd.f32 %v2890, %v3049
    %v3100 = vadd.f32 %v2891, %v3054
    %v3101 = vadd.f32 %v2892, %v3057
    %v3102 = vadd.f32 %v2893, %v3062
    %v3103 = vadd.f32 %v2894, %v3065
    %v3104 = vadd.f32 %v2895, %v3070
    %v3105 = vadd.f32 %v2896, %v3073
    %v3106 = vadd.f32 %v2897, %v3078
    %v3107 = vadd.f32 %v2898, %v3081
    %v3108 = vadd.f32 %v2899, %v3086
    %v3109 = vadd.f32 %v2900, %v3089
    %v3110 = vld [vmem:[#allocation2 + $0x13] sm:$0xff]
    %v3111 = vld [vmem:[#allocation2 + $0x1b] sm:$0xff]
    %v3112 = vld [vmem:[#allocation2 + $0x23] sm:$0xff]
    %v3113 = vld [vmem:[#allocation2 + $0x2b] sm:$0xff]
    %v3114 = vld [vmem:[#allocation2 + $0x33] sm:$0xff]
    %v3115 = vld [vmem:[#allocation2 + $0x3b] sm:$0xff]
    %v3116 = vld [vmem:[#allocation2 + $0x43] sm:$0xff]
    %v3117 = vld [vmem:[#allocation2 + $0x4b] sm:$0xff]
    %v3118 = vld [vmem:[#allocation2 + $0x53] sm:$0xff]
    %v3119 = vld [vmem:[#allocation2 + $0x5b] sm:$0xff]
    %v3120 = vld [vmem:[#allocation2 + $0x63] sm:$0xff]
    %v3121 = vld [vmem:[#allocation2 + $0x6b] sm:$0xff]
    %v3122 = vld [vmem:[#allocation2 + $0x73] sm:$0xff]
    %v3123 = vld [vmem:[#allocation2 + $0x7b] sm:$0xff]
    %v3124 = vld [vmem:[#allocation2 + $0x83] sm:$0xff]
    %v3125 = vld [vmem:[#allocation2 + $0x8b] sm:$0xff]
    %v3126 = vld [vmem:[#allocation2 + $0x93] sm:$0xff]
    %v3127 = vld [vmem:[#allocation2 + $0x9b] sm:$0xff]
    %v3128 = vpack.c.bf16 %v3111, %v3110
    %v3129 = vpack.c.bf16 %v3113, %v3112
    %v3130 = vpack.c.bf16 %v3115, %v3114
    %v3131 = vpack.c.bf16 %v3117, %v3116
    %v3132 = vpack.c.bf16 %v3119, %v3118
    %v3133 = vpack.c.bf16 %v3121, %v3120
    %v3134 = vpack.c.bf16 %v3123, %v3122
    %v3135 = vpack.c.bf16 %v3125, %v3124
    %v3136 = vpack.c.bf16 %v3127, %v3126
    %v3137 = vld [vmem:[%s3 + $0x140] sm:$0xf]
    %v3138 = vld [vmem:[%s3 + $0x144] sm:$0xf]
    %v3139 = vld [vmem:[%s3 + $0x148] sm:$0xf]
    %v3140 = vld [vmem:[%s3 + $0x14c] sm:$0xf]
    %v3141 = vld [vmem:[%s3 + $0x150] sm:$0xf]
    %v3142 = vld [vmem:[%s3 + $0x154] sm:$0xf]
    %v3143 = vld [vmem:[%s3 + $0x158] sm:$0xf]
    %v3144 = vld [vmem:[%s3 + $0x15c] sm:$0xf]
    %v3153 = vunpack.c.l.b16 %v3137
    %v3154 = vunpack.c.l.b16 %v3138
    %v3155 = vunpack.c.l.b16 %v3139
    %v3156 = vunpack.c.l.b16 %v3140
    %v3157 = vunpack.c.l.b16 %v3141
    %v3158 = vunpack.c.l.b16 %v3142
    %v3159 = vunpack.c.l.b16 %v3143
    %v3160 = vunpack.c.l.b16 %v3144
    %v3161 = vpack.c.b16 %v3154, %v3153
    %v3162 = vpack.c.b16 %v3156, %v3155
    %v3163 = vpack.c.b16 %v3158, %v3157
    %v3164 = vpack.c.b16 %v3160, %v3159
    %v3170 = vsel %vm1033, %v3128, 0
    %v3173 = vsel %vm1033, %v3129, 0
    %v3176 = vsel %vm1033, %v3130, 0
    %v3179 = vsel %vm1033, %v3131, 0
    %v3182 = vsel %vm1033, %v3132, 0
    %v3185 = vsel %vm1033, %v3133, 0
    %v3188 = vsel %vm1033, %v3134, 0
    %v3191 = vsel %vm1033, %v3135, 0
    %v3194 = vsel %vm1033, %v3136, 0
    %3196 = vmatprep.subr.bf16.mxu0 0
    %3197 = vmatpush1.bf16.msra.mxu0 0
    %3198 = vmatprep.subr.bf16.mxu0 0
    %3199 = vmatpush1.bf16.msra.mxu0 0
    %3200 = vmatprep.subr.bf16.mxu0 0
    %3201 = vmatpush1.bf16.msra.mxu0 0
    %3202 = vmatprep.subr.bf16.mxu0 0
    %3203 = vmatpush1.bf16.msra.mxu0 0
    %3204 = vmatprep.subr.bf16.mxu0 0
    %3205 = vmatpush1.bf16.msra.mxu0 %v3164
    %3206 = vmatprep.subr.bf16.mxu0 0
    %3207 = vmatpush1.bf16.msra.mxu0 %v3163
    %3208 = vmatprep.subr.bf16.mxu0 0
    %3209 = vmatpush1.bf16.msra.mxu0 %v3162
    %3210 = vmatprep.subr.bf16.mxu0 0
    %3211 = vmatpush1.bf16.msra.mxu0 %v3161
    %3212 = vmatprep.subr.bf16.mxu0 0
    %3213 = vmatpush2.bf16.msra.mxu0 0
    %3214 = vmatprep.subr.bf16.mxu0 0
    %3215 = vmatpush2.bf16.msra.mxu0 0
    %3216 = vmatprep.subr.bf16.mxu0 0
    %3217 = vmatpush2.bf16.msra.mxu0 0
    %3218 = vmatprep.subr.bf16.mxu0 0
    %3219 = vmatpush2.bf16.msra.mxu0 0
    %3220 = vmatprep.subr.bf16.mxu0 0
    %3221 = vmatpush2.bf16.msra.mxu0 0
    %3222 = vmatprep.subr.bf16.mxu0 0
    %3223 = vmatpush2.bf16.msra.mxu0 0
    %3224 = vmatprep.subr.bf16.mxu0 0
    %3225 = vmatpush2.bf16.msra.mxu0 0
    %3226 = vmatprep.subr.bf16.mxu0 0
    %3227 = vmatpush2.bf16.msra.mxu0 0
    %3228 = vmatprep.mubr.bf16.mxu0 0
    %3229 = vmatmul.mubr.bf16.gmra.mxu0 %v3170
    %v3230 = vpop.f32.mrf.mxu0
    %v3231 = vadd.f32 0.0, %v3230
    %v3232 = vpop.f32.mrf.mxu0
    %v3233 = vpop.f32.mrf.mxu0
    %v3234 = vadd.f32 0.0, %v3233
    %v3235 = vpop.f32.mrf.mxu0
    %3236 = vmatprep.mubr.bf16.mxu0 0
    %3237 = vmatmul.mubr.bf16.gmra.mxu0 %v3173
    %v3238 = vpop.f32.mrf.mxu0
    %v3239 = vadd.f32 0.0, %v3238
    %v3240 = vpop.f32.mrf.mxu0
    %v3241 = vpop.f32.mrf.mxu0
    %v3242 = vadd.f32 0.0, %v3241
    %v3243 = vpop.f32.mrf.mxu0
    %3244 = vmatprep.mubr.bf16.mxu0 0
    %3245 = vmatmul.mubr.bf16.gmra.mxu0 %v3176
    %v3246 = vpop.f32.mrf.mxu0
    %v3247 = vadd.f32 0.0, %v3246
    %v3248 = vpop.f32.mrf.mxu0
    %v3249 = vpop.f32.mrf.mxu0
    %v3250 = vadd.f32 0.0, %v3249
    %v3251 = vpop.f32.mrf.mxu0
    %3252 = vmatprep.mubr.bf16.mxu0 0
    %3253 = vmatmul.mubr.bf16.gmra.mxu0 %v3179
    %v3254 = vpop.f32.mrf.mxu0
    %v3255 = vadd.f32 0.0, %v3254
    %v3256 = vpop.f32.mrf.mxu0
    %v3257 = vpop.f32.mrf.mxu0
    %v3258 = vadd.f32 0.0, %v3257
    %v3259 = vpop.f32.mrf.mxu0
    %3260 = vmatprep.mubr.bf16.mxu0 0
    %3261 = vmatmul.mubr.bf16.gmra.mxu0 %v3182
    %v3262 = vpop.f32.mrf.mxu0
    %v3263 = vadd.f32 0.0, %v3262
    %v3264 = vpop.f32.mrf.mxu0
    %v3265 = vpop.f32.mrf.mxu0
    %v3266 = vadd.f32 0.0, %v3265
    %v3267 = vpop.f32.mrf.mxu0
    %3268 = vmatprep.mubr.bf16.mxu0 0
    %3269 = vmatmul.mubr.bf16.gmra.mxu0 %v3185
    %v3270 = vpop.f32.mrf.mxu0
    %v3271 = vadd.f32 0.0, %v3270
    %v3272 = vpop.f32.mrf.mxu0
    %v3273 = vpop.f32.mrf.mxu0
    %v3274 = vadd.f32 0.0, %v3273
    %v3275 = vpop.f32.mrf.mxu0
    %3276 = vmatprep.mubr.bf16.mxu0 0
    %3277 = vmatmul.mubr.bf16.gmra.mxu0 %v3188
    %v3278 = vpop.f32.mrf.mxu0
    %v3279 = vadd.f32 0.0, %v3278
    %v3280 = vpop.f32.mrf.mxu0
    %v3281 = vpop.f32.mrf.mxu0
    %v3282 = vadd.f32 0.0, %v3281
    %v3283 = vpop.f32.mrf.mxu0
    %3284 = vmatprep.mubr.bf16.mxu0 0
    %3285 = vmatmul.mubr.bf16.gmra.mxu0 %v3191
    %v3286 = vpop.f32.mrf.mxu0
    %v3287 = vadd.f32 0.0, %v3286
    %v3288 = vpop.f32.mrf.mxu0
    %v3289 = vpop.f32.mrf.mxu0
    %v3290 = vadd.f32 0.0, %v3289
    %v3291 = vpop.f32.mrf.mxu0
    %3292 = vmatprep.mubr.bf16.mxu0 0
    %3293 = vmatmul.mubr.bf16.gmra.mxu0 %v3194
    %v3294 = vpop.f32.mrf.mxu0
    %v3295 = vadd.f32 0.0, %v3294
    %v3296 = vpop.f32.mrf.mxu0
    %v3297 = vpop.f32.mrf.mxu0
    %v3298 = vadd.f32 0.0, %v3297
    %v3299 = vpop.f32.mrf.mxu0
    %3300 = vdwg.mxu0
    %v3301 = vadd.f32 %v3092, %v3231
    %v3302 = vadd.f32 %v3093, %v3234
    %v3303 = vadd.f32 %v3094, %v3239
    %v3304 = vadd.f32 %v3095, %v3242
    %v3305 = vadd.f32 %v3096, %v3247
    %v3306 = vadd.f32 %v3097, %v3250
    %v3307 = vadd.f32 %v3098, %v3255
    %v3308 = vadd.f32 %v3099, %v3258
    %v3309 = vadd.f32 %v3100, %v3263
    %v3310 = vadd.f32 %v3101, %v3266
    %v3311 = vadd.f32 %v3102, %v3271
    %v3312 = vadd.f32 %v3103, %v3274
    %v3313 = vadd.f32 %v3104, %v3279
    %v3314 = vadd.f32 %v3105, %v3282
    %v3315 = vadd.f32 %v3106, %v3287
    %v3316 = vadd.f32 %v3107, %v3290
    %v3317 = vadd.f32 %v3108, %v3295
    %v3318 = vadd.f32 %v3109, %v3298
    %v3319 = vld [vmem:[#allocation2 + $0x14] sm:$0xff]
    %v3320 = vld [vmem:[#allocation2 + $0x1c] sm:$0xff]
    %v3321 = vld [vmem:[#allocation2 + $0x24] sm:$0xff]
    %v3322 = vld [vmem:[#allocation2 + $0x2c] sm:$0xff]
    %v3323 = vld [vmem:[#allocation2 + $0x34] sm:$0xff]
    %v3324 = vld [vmem:[#allocation2 + $0x3c] sm:$0xff]
    %v3325 = vld [vmem:[#allocation2 + $0x44] sm:$0xff]
    %v3326 = vld [vmem:[#allocation2 + $0x4c] sm:$0xff]
    %v3327 = vld [vmem:[#allocation2 + $0x54] sm:$0xff]
    %v3328 = vld [vmem:[#allocation2 + $0x5c] sm:$0xff]
    %v3329 = vld [vmem:[#allocation2 + $0x64] sm:$0xff]
    %v3330 = vld [vmem:[#allocation2 + $0x6c] sm:$0xff]
    %v3331 = vld [vmem:[#allocation2 + $0x74] sm:$0xff]
    %v3332 = vld [vmem:[#allocation2 + $0x7c] sm:$0xff]
    %v3333 = vld [vmem:[#allocation2 + $0x84] sm:$0xff]
    %v3334 = vld [vmem:[#allocation2 + $0x8c] sm:$0xff]
    %v3335 = vld [vmem:[#allocation2 + $0x94] sm:$0xff]
    %v3336 = vld [vmem:[#allocation2 + $0x9c] sm:$0xff]
    %v3337 = vpack.c.bf16 %v3320, %v3319
    %v3338 = vpack.c.bf16 %v3322, %v3321
    %v3339 = vpack.c.bf16 %v3324, %v3323
    %v3340 = vpack.c.bf16 %v3326, %v3325
    %v3341 = vpack.c.bf16 %v3328, %v3327
    %v3342 = vpack.c.bf16 %v3330, %v3329
    %v3343 = vpack.c.bf16 %v3332, %v3331
    %v3344 = vpack.c.bf16 %v3334, %v3333
    %v3345 = vpack.c.bf16 %v3336, %v3335
    %v3346 = vld [vmem:[%s3 + $0x160] sm:$0xf]
    %v3347 = vld [vmem:[%s3 + $0x164] sm:$0xf]
    %v3348 = vld [vmem:[%s3 + $0x168] sm:$0xf]
    %v3349 = vld [vmem:[%s3 + $0x16c] sm:$0xf]
    %v3350 = vld [vmem:[%s3 + $0x170] sm:$0xf]
    %v3351 = vld [vmem:[%s3 + $0x174] sm:$0xf]
    %v3352 = vld [vmem:[%s3 + $0x178] sm:$0xf]
    %v3353 = vld [vmem:[%s3 + $0x17c] sm:$0xf]
    %v3362 = vunpack.c.l.b16 %v3346
    %v3363 = vunpack.c.l.b16 %v3347
    %v3364 = vunpack.c.l.b16 %v3348
    %v3365 = vunpack.c.l.b16 %v3349
    %v3366 = vunpack.c.l.b16 %v3350
    %v3367 = vunpack.c.l.b16 %v3351
    %v3368 = vunpack.c.l.b16 %v3352
    %v3369 = vunpack.c.l.b16 %v3353
    %v3370 = vpack.c.b16 %v3363, %v3362
    %v3371 = vpack.c.b16 %v3365, %v3364
    %v3372 = vpack.c.b16 %v3367, %v3366
    %v3373 = vpack.c.b16 %v3369, %v3368
    %v3379 = vsel %vm1033, %v3337, 0
    %v3382 = vsel %vm1033, %v3338, 0
    %v3385 = vsel %vm1033, %v3339, 0
    %v3388 = vsel %vm1033, %v3340, 0
    %v3391 = vsel %vm1033, %v3341, 0
    %v3394 = vsel %vm1033, %v3342, 0
    %v3397 = vsel %vm1033, %v3343, 0
    %v3400 = vsel %vm1033, %v3344, 0
    %v3403 = vsel %vm1033, %v3345, 0
    %3405 = vmatprep.subr.bf16.mxu0 0
    %3406 = vmatpush1.bf16.msra.mxu0 0
    %3407 = vmatprep.subr.bf16.mxu0 0
    %3408 = vmatpush1.bf16.msra.mxu0 0
    %3409 = vmatprep.subr.bf16.mxu0 0
    %3410 = vmatpush1.bf16.msra.mxu0 0
    %3411 = vmatprep.subr.bf16.mxu0 0
    %3412 = vmatpush1.bf16.msra.mxu0 0
    %3413 = vmatprep.subr.bf16.mxu0 0
    %3414 = vmatpush1.bf16.msra.mxu0 %v3373
    %3415 = vmatprep.subr.bf16.mxu0 0
    %3416 = vmatpush1.bf16.msra.mxu0 %v3372
    %3417 = vmatprep.subr.bf16.mxu0 0
    %3418 = vmatpush1.bf16.msra.mxu0 %v3371
    %3419 = vmatprep.subr.bf16.mxu0 0
    %3420 = vmatpush1.bf16.msra.mxu0 %v3370
    %3421 = vmatprep.subr.bf16.mxu0 0
    %3422 = vmatpush2.bf16.msra.mxu0 0
    %3423 = vmatprep.subr.bf16.mxu0 0
    %3424 = vmatpush2.bf16.msra.mxu0 0
    %3425 = vmatprep.subr.bf16.mxu0 0
    %3426 = vmatpush2.bf16.msra.mxu0 0
    %3427 = vmatprep.subr.bf16.mxu0 0
    %3428 = vmatpush2.bf16.msra.mxu0 0
    %3429 = vmatprep.subr.bf16.mxu0 0
    %3430 = vmatpush2.bf16.msra.mxu0 0
    %3431 = vmatprep.subr.bf16.mxu0 0
    %3432 = vmatpush2.bf16.msra.mxu0 0
    %3433 = vmatprep.subr.bf16.mxu0 0
    %3434 = vmatpush2.bf16.msra.mxu0 0
    %3435 = vmatprep.subr.bf16.mxu0 0
    %3436 = vmatpush2.bf16.msra.mxu0 0
    %3437 = vmatprep.mubr.bf16.mxu0 0
    %3438 = vmatmul.mubr.bf16.gmra.mxu0 %v3379
    %v3439 = vpop.f32.mrf.mxu0
    %v3440 = vadd.f32 0.0, %v3439
    %v3441 = vpop.f32.mrf.mxu0
    %v3442 = vpop.f32.mrf.mxu0
    %v3443 = vadd.f32 0.0, %v3442
    %v3444 = vpop.f32.mrf.mxu0
    %3445 = vmatprep.mubr.bf16.mxu0 0
    %3446 = vmatmul.mubr.bf16.gmra.mxu0 %v3382
    %v3447 = vpop.f32.mrf.mxu0
    %v3448 = vadd.f32 0.0, %v3447
    %v3449 = vpop.f32.mrf.mxu0
    %v3450 = vpop.f32.mrf.mxu0
    %v3451 = vadd.f32 0.0, %v3450
    %v3452 = vpop.f32.mrf.mxu0
    %3453 = vmatprep.mubr.bf16.mxu0 0
    %3454 = vmatmul.mubr.bf16.gmra.mxu0 %v3385
    %v3455 = vpop.f32.mrf.mxu0
    %v3456 = vadd.f32 0.0, %v3455
    %v3457 = vpop.f32.mrf.mxu0
    %v3458 = vpop.f32.mrf.mxu0
    %v3459 = vadd.f32 0.0, %v3458
    %v3460 = vpop.f32.mrf.mxu0
    %3461 = vmatprep.mubr.bf16.mxu0 0
    %3462 = vmatmul.mubr.bf16.gmra.mxu0 %v3388
    %v3463 = vpop.f32.mrf.mxu0
    %v3464 = vadd.f32 0.0, %v3463
    %v3465 = vpop.f32.mrf.mxu0
    %v3466 = vpop.f32.mrf.mxu0
    %v3467 = vadd.f32 0.0, %v3466
    %v3468 = vpop.f32.mrf.mxu0
    %3469 = vmatprep.mubr.bf16.mxu0 0
    %3470 = vmatmul.mubr.bf16.gmra.mxu0 %v3391
    %v3471 = vpop.f32.mrf.mxu0
    %v3472 = vadd.f32 0.0, %v3471
    %v3473 = vpop.f32.mrf.mxu0
    %v3474 = vpop.f32.mrf.mxu0
    %v3475 = vadd.f32 0.0, %v3474
    %v3476 = vpop.f32.mrf.mxu0
    %3477 = vmatprep.mubr.bf16.mxu0 0
    %3478 = vmatmul.mubr.bf16.gmra.mxu0 %v3394
    %v3479 = vpop.f32.mrf.mxu0
    %v3480 = vadd.f32 0.0, %v3479
    %v3481 = vpop.f32.mrf.mxu0
    %v3482 = vpop.f32.mrf.mxu0
    %v3483 = vadd.f32 0.0, %v3482
    %v3484 = vpop.f32.mrf.mxu0
    %3485 = vmatprep.mubr.bf16.mxu0 0
    %3486 = vmatmul.mubr.bf16.gmra.mxu0 %v3397
    %v3487 = vpop.f32.mrf.mxu0
    %v3488 = vadd.f32 0.0, %v3487
    %v3489 = vpop.f32.mrf.mxu0
    %v3490 = vpop.f32.mrf.mxu0
    %v3491 = vadd.f32 0.0, %v3490
    %v3492 = vpop.f32.mrf.mxu0
    %3493 = vmatprep.mubr.bf16.mxu0 0
    %3494 = vmatmul.mubr.bf16.gmra.mxu0 %v3400
    %v3495 = vpop.f32.mrf.mxu0
    %v3496 = vadd.f32 0.0, %v3495
    %v3497 = vpop.f32.mrf.mxu0
    %v3498 = vpop.f32.mrf.mxu0
    %v3499 = vadd.f32 0.0, %v3498
    %v3500 = vpop.f32.mrf.mxu0
    %3501 = vmatprep.mubr.bf16.mxu0 0
    %3502 = vmatmul.mubr.bf16.gmra.mxu0 %v3403
    %v3503 = vpop.f32.mrf.mxu0
    %v3504 = vadd.f32 0.0, %v3503
    %v3505 = vpop.f32.mrf.mxu0
    %v3506 = vpop.f32.mrf.mxu0
    %v3507 = vadd.f32 0.0, %v3506
    %v3508 = vpop.f32.mrf.mxu0
    %3509 = vdwg.mxu0
    %v3510 = vadd.f32 %v3301, %v3440
    %v3511 = vadd.f32 %v3302, %v3443
    %v3512 = vadd.f32 %v3303, %v3448
    %v3513 = vadd.f32 %v3304, %v3451
    %v3514 = vadd.f32 %v3305, %v3456
    %v3515 = vadd.f32 %v3306, %v3459
    %v3516 = vadd.f32 %v3307, %v3464
    %v3517 = vadd.f32 %v3308, %v3467
    %v3518 = vadd.f32 %v3309, %v3472
    %v3519 = vadd.f32 %v3310, %v3475
    %v3520 = vadd.f32 %v3311, %v3480
    %v3521 = vadd.f32 %v3312, %v3483
    %v3522 = vadd.f32 %v3313, %v3488
    %v3523 = vadd.f32 %v3314, %v3491
    %v3524 = vadd.f32 %v3315, %v3496
    %v3525 = vadd.f32 %v3316, %v3499
    %v3526 = vadd.f32 %v3317, %v3504
    %v3527 = vadd.f32 %v3318, %v3507
    %v3528 = vld [vmem:[#allocation2 + $0x18] sm:$0xff]
    %v3529 = vld [vmem:[#allocation2 + $0x20] sm:$0xff]
    %v3530 = vld [vmem:[#allocation2 + $0x28] sm:$0xff]
    %v3531 = vld [vmem:[#allocation2 + $0x30] sm:$0xff]
    %v3532 = vld [vmem:[#allocation2 + $0x38] sm:$0xff]
    %v3533 = vld [vmem:[#allocation2 + $0x40] sm:$0xff]
    %v3534 = vld [vmem:[#allocation2 + $0x48] sm:$0xff]
    %v3535 = vld [vmem:[#allocation2 + $0x50] sm:$0xff]
    %v3536 = vld [vmem:[#allocation2 + $0x58] sm:$0xff]
    %v3537 = vld [vmem:[#allocation2 + $0x60] sm:$0xff]
    %v3538 = vld [vmem:[#allocation2 + $0x68] sm:$0xff]
    %v3539 = vld [vmem:[#allocation2 + $0x70] sm:$0xff]
    %v3540 = vld [vmem:[#allocation2 + $0x78] sm:$0xff]
    %v3541 = vld [vmem:[#allocation2 + $0x80] sm:$0xff]
    %v3542 = vld [vmem:[#allocation2 + $0x88] sm:$0xff]
    %v3543 = vld [vmem:[#allocation2 + $0x90] sm:$0xff]
    %v3544 = vld [vmem:[#allocation2 + $0x98] sm:$0xff]
    %v3545 = vld [vmem:[#allocation2 + $0xa0] sm:$0xff]
    %v3546 = vpack.c.bf16 %v3529, %v3528
    %v3547 = vpack.c.bf16 %v3531, %v3530
    %v3548 = vpack.c.bf16 %v3533, %v3532
    %v3549 = vpack.c.bf16 %v3535, %v3534
    %v3550 = vpack.c.bf16 %v3537, %v3536
    %v3551 = vpack.c.bf16 %v3539, %v3538
    %v3552 = vpack.c.bf16 %v3541, %v3540
    %v3553 = vpack.c.bf16 %v3543, %v3542
    %v3554 = vpack.c.bf16 %v3545, %v3544
    %v3555 = vld [vmem:[%s3 + $0x180] sm:$0xf]
    %v3556 = vld [vmem:[%s3 + $0x184] sm:$0xf]
    %v3557 = vld [vmem:[%s3 + $0x188] sm:$0xf]
    %v3558 = vld [vmem:[%s3 + $0x18c] sm:$0xf]
    %v3559 = vld [vmem:[%s3 + $0x190] sm:$0xf]
    %v3560 = vld [vmem:[%s3 + $0x194] sm:$0xf]
    %v3561 = vld [vmem:[%s3 + $0x198] sm:$0xf]
    %v3562 = vld [vmem:[%s3 + $0x19c] sm:$0xf]
    %v3571 = vunpack.c.l.b16 %v3555
    %v3572 = vunpack.c.l.b16 %v3556
    %v3573 = vunpack.c.l.b16 %v3557
    %v3574 = vunpack.c.l.b16 %v3558
    %v3575 = vunpack.c.l.b16 %v3559
    %v3576 = vunpack.c.l.b16 %v3560
    %v3577 = vunpack.c.l.b16 %v3561
    %v3578 = vunpack.c.l.b16 %v3562
    %v3579 = vpack.c.b16 %v3572, %v3571
    %v3580 = vpack.c.b16 %v3574, %v3573
    %v3581 = vpack.c.b16 %v3576, %v3575
    %v3582 = vpack.c.b16 %v3578, %v3577
    %v3588 = vsel %vm1033, %v3546, 0
    %v3591 = vsel %vm1033, %v3547, 0
    %v3594 = vsel %vm1033, %v3548, 0
    %v3597 = vsel %vm1033, %v3549, 0
    %v3600 = vsel %vm1033, %v3550, 0
    %v3603 = vsel %vm1033, %v3551, 0
    %v3606 = vsel %vm1033, %v3552, 0
    %v3609 = vsel %vm1033, %v3553, 0
    %v3612 = vsel %vm1033, %v3554, 0
    %3614 = vmatprep.subr.bf16.mxu0 0
    %3615 = vmatpush1.bf16.msra.mxu0 0
    %3616 = vmatprep.subr.bf16.mxu0 0
    %3617 = vmatpush1.bf16.msra.mxu0 0
    %3618 = vmatprep.subr.bf16.mxu0 0
    %3619 = vmatpush1.bf16.msra.mxu0 0
    %3620 = vmatprep.subr.bf16.mxu0 0
    %3621 = vmatpush1.bf16.msra.mxu0 0
    %3622 = vmatprep.subr.bf16.mxu0 0
    %3623 = vmatpush1.bf16.msra.mxu0 %v3582
    %3624 = vmatprep.subr.bf16.mxu0 0
    %3625 = vmatpush1.bf16.msra.mxu0 %v3581
    %3626 = vmatprep.subr.bf16.mxu0 0
    %3627 = vmatpush1.bf16.msra.mxu0 %v3580
    %3628 = vmatprep.subr.bf16.mxu0 0
    %3629 = vmatpush1.bf16.msra.mxu0 %v3579
    %3630 = vmatprep.subr.bf16.mxu0 0
    %3631 = vmatpush2.bf16.msra.mxu0 0
    %3632 = vmatprep.subr.bf16.mxu0 0
    %3633 = vmatpush2.bf16.msra.mxu0 0
    %3634 = vmatprep.subr.bf16.mxu0 0
    %3635 = vmatpush2.bf16.msra.mxu0 0
    %3636 = vmatprep.subr.bf16.mxu0 0
    %3637 = vmatpush2.bf16.msra.mxu0 0
    %3638 = vmatprep.subr.bf16.mxu0 0
    %3639 = vmatpush2.bf16.msra.mxu0 0
    %3640 = vmatprep.subr.bf16.mxu0 0
    %3641 = vmatpush2.bf16.msra.mxu0 0
    %3642 = vmatprep.subr.bf16.mxu0 0
    %3643 = vmatpush2.bf16.msra.mxu0 0
    %3644 = vmatprep.subr.bf16.mxu0 0
    %3645 = vmatpush2.bf16.msra.mxu0 0
    %3646 = vmatprep.mubr.bf16.mxu0 0
    %3647 = vmatmul.mubr.bf16.gmra.mxu0 %v3588
    %v3648 = vpop.f32.mrf.mxu0
    %v3649 = vadd.f32 0.0, %v3648
    %v3650 = vpop.f32.mrf.mxu0
    %v3651 = vpop.f32.mrf.mxu0
    %v3652 = vadd.f32 0.0, %v3651
    %v3653 = vpop.f32.mrf.mxu0
    %3654 = vmatprep.mubr.bf16.mxu0 0
    %3655 = vmatmul.mubr.bf16.gmra.mxu0 %v3591
    %v3656 = vpop.f32.mrf.mxu0
    %v3657 = vadd.f32 0.0, %v3656
    %v3658 = vpop.f32.mrf.mxu0
    %v3659 = vpop.f32.mrf.mxu0
    %v3660 = vadd.f32 0.0, %v3659
    %v3661 = vpop.f32.mrf.mxu0
    %3662 = vmatprep.mubr.bf16.mxu0 0
    %3663 = vmatmul.mubr.bf16.gmra.mxu0 %v3594
    %v3664 = vpop.f32.mrf.mxu0
    %v3665 = vadd.f32 0.0, %v3664
    %v3666 = vpop.f32.mrf.mxu0
    %v3667 = vpop.f32.mrf.mxu0
    %v3668 = vadd.f32 0.0, %v3667
    %v3669 = vpop.f32.mrf.mxu0
    %3670 = vmatprep.mubr.bf16.mxu0 0
    %3671 = vmatmul.mubr.bf16.gmra.mxu0 %v3597
    %v3672 = vpop.f32.mrf.mxu0
    %v3673 = vadd.f32 0.0, %v3672
    %v3674 = vpop.f32.mrf.mxu0
    %v3675 = vpop.f32.mrf.mxu0
    %v3676 = vadd.f32 0.0, %v3675
    %v3677 = vpop.f32.mrf.mxu0
    %3678 = vmatprep.mubr.bf16.mxu0 0
    %3679 = vmatmul.mubr.bf16.gmra.mxu0 %v3600
    %v3680 = vpop.f32.mrf.mxu0
    %v3681 = vadd.f32 0.0, %v3680
    %v3682 = vpop.f32.mrf.mxu0
    %v3683 = vpop.f32.mrf.mxu0
    %v3684 = vadd.f32 0.0, %v3683
    %v3685 = vpop.f32.mrf.mxu0
    %3686 = vmatprep.mubr.bf16.mxu0 0
    %3687 = vmatmul.mubr.bf16.gmra.mxu0 %v3603
    %v3688 = vpop.f32.mrf.mxu0
    %v3689 = vadd.f32 0.0, %v3688
    %v3690 = vpop.f32.mrf.mxu0
    %v3691 = vpop.f32.mrf.mxu0
    %v3692 = vadd.f32 0.0, %v3691
    %v3693 = vpop.f32.mrf.mxu0
    %3694 = vmatprep.mubr.bf16.mxu0 0
    %3695 = vmatmul.mubr.bf16.gmra.mxu0 %v3606
    %v3696 = vpop.f32.mrf.mxu0
    %v3697 = vadd.f32 0.0, %v3696
    %v3698 = vpop.f32.mrf.mxu0
    %v3699 = vpop.f32.mrf.mxu0
    %v3700 = vadd.f32 0.0, %v3699
    %v3701 = vpop.f32.mrf.mxu0
    %3702 = vmatprep.mubr.bf16.mxu0 0
    %3703 = vmatmul.mubr.bf16.gmra.mxu0 %v3609
    %v3704 = vpop.f32.mrf.mxu0
    %v3705 = vadd.f32 0.0, %v3704
    %v3706 = vpop.f32.mrf.mxu0
    %v3707 = vpop.f32.mrf.mxu0
    %v3708 = vadd.f32 0.0, %v3707
    %v3709 = vpop.f32.mrf.mxu0
    %3710 = vmatprep.mubr.bf16.mxu0 0
    %3711 = vmatmul.mubr.bf16.gmra.mxu0 %v3612
    %v3712 = vpop.f32.mrf.mxu0
    %v3713 = vadd.f32 0.0, %v3712
    %v3714 = vpop.f32.mrf.mxu0
    %v3715 = vpop.f32.mrf.mxu0
    %v3716 = vadd.f32 0.0, %v3715
    %v3717 = vpop.f32.mrf.mxu0
    %3718 = vdwg.mxu0
    %v3719 = vadd.f32 %v3510, %v3649
    %v3720 = vadd.f32 %v3511, %v3652
    %v3721 = vadd.f32 %v3512, %v3657
    %v3722 = vadd.f32 %v3513, %v3660
    %v3723 = vadd.f32 %v3514, %v3665
    %v3724 = vadd.f32 %v3515, %v3668
    %v3725 = vadd.f32 %v3516, %v3673
    %v3726 = vadd.f32 %v3517, %v3676
    %v3727 = vadd.f32 %v3518, %v3681
    %v3728 = vadd.f32 %v3519, %v3684
    %v3729 = vadd.f32 %v3520, %v3689
    %v3730 = vadd.f32 %v3521, %v3692
    %v3731 = vadd.f32 %v3522, %v3697
    %v3732 = vadd.f32 %v3523, %v3700
    %v3733 = vadd.f32 %v3524, %v3705
    %v3734 = vadd.f32 %v3525, %v3708
    %v3735 = vadd.f32 %v3526, %v3713
    %v3736 = vadd.f32 %v3527, %v3716
    %v3737 = vld [vmem:[#allocation2 + $0x19] sm:$0xff]
    %v3738 = vld [vmem:[#allocation2 + $0x21] sm:$0xff]
    %v3739 = vld [vmem:[#allocation2 + $0x29] sm:$0xff]
    %v3740 = vld [vmem:[#allocation2 + $0x31] sm:$0xff]
    %v3741 = vld [vmem:[#allocation2 + $0x39] sm:$0xff]
    %v3742 = vld [vmem:[#allocation2 + $0x41] sm:$0xff]
    %v3743 = vld [vmem:[#allocation2 + $0x49] sm:$0xff]
    %v3744 = vld [vmem:[#allocation2 + $0x51] sm:$0xff]
    %v3745 = vld [vmem:[#allocation2 + $0x59] sm:$0xff]
    %v3746 = vld [vmem:[#allocation2 + $0x61] sm:$0xff]
    %v3747 = vld [vmem:[#allocation2 + $0x69] sm:$0xff]
    %v3748 = vld [vmem:[#allocation2 + $0x71] sm:$0xff]
    %v3749 = vld [vmem:[#allocation2 + $0x79] sm:$0xff]
    %v3750 = vld [vmem:[#allocation2 + $0x81] sm:$0xff]
    %v3751 = vld [vmem:[#allocation2 + $0x89] sm:$0xff]
    %v3752 = vld [vmem:[#allocation2 + $0x91] sm:$0xff]
    %v3753 = vld [vmem:[#allocation2 + $0x99] sm:$0xff]
    %v3754 = vld [vmem:[#allocation2 + $0xa1] sm:$0xff]
    %v3755 = vpack.c.bf16 %v3738, %v3737
    %v3756 = vpack.c.bf16 %v3740, %v3739
    %v3757 = vpack.c.bf16 %v3742, %v3741
    %v3758 = vpack.c.bf16 %v3744, %v3743
    %v3759 = vpack.c.bf16 %v3746, %v3745
    %v3760 = vpack.c.bf16 %v3748, %v3747
    %v3761 = vpack.c.bf16 %v3750, %v3749
    %v3762 = vpack.c.bf16 %v3752, %v3751
    %v3763 = vpack.c.bf16 %v3754, %v3753
    %v3764 = vld [vmem:[%s3 + $0x1a0] sm:$0xf]
    %v3765 = vld [vmem:[%s3 + $0x1a4] sm:$0xf]
    %v3766 = vld [vmem:[%s3 + $0x1a8] sm:$0xf]
    %v3767 = vld [vmem:[%s3 + $0x1ac] sm:$0xf]
    %v3768 = vld [vmem:[%s3 + $0x1b0] sm:$0xf]
    %v3769 = vld [vmem:[%s3 + $0x1b4] sm:$0xf]
    %v3770 = vld [vmem:[%s3 + $0x1b8] sm:$0xf]
    %v3771 = vld [vmem:[%s3 + $0x1bc] sm:$0xf]
    %v3780 = vunpack.c.l.b16 %v3764
    %v3781 = vunpack.c.l.b16 %v3765
    %v3782 = vunpack.c.l.b16 %v3766
    %v3783 = vunpack.c.l.b16 %v3767
    %v3784 = vunpack.c.l.b16 %v3768
    %v3785 = vunpack.c.l.b16 %v3769
    %v3786 = vunpack.c.l.b16 %v3770
    %v3787 = vunpack.c.l.b16 %v3771
    %v3788 = vpack.c.b16 %v3781, %v3780
    %v3789 = vpack.c.b16 %v3783, %v3782
    %v3790 = vpack.c.b16 %v3785, %v3784
    %v3791 = vpack.c.b16 %v3787, %v3786
    %v3797 = vsel %vm1033, %v3755, 0
    %v3800 = vsel %vm1033, %v3756, 0
    %v3803 = vsel %vm1033, %v3757, 0
    %v3806 = vsel %vm1033, %v3758, 0
    %v3809 = vsel %vm1033, %v3759, 0
    %v3812 = vsel %vm1033, %v3760, 0
    %v3815 = vsel %vm1033, %v3761, 0
    %v3818 = vsel %vm1033, %v3762, 0
    %v3821 = vsel %vm1033, %v3763, 0
    %3823 = vmatprep.subr.bf16.mxu0 0
    %3824 = vmatpush1.bf16.msra.mxu0 0
    %3825 = vmatprep.subr.bf16.mxu0 0
    %3826 = vmatpush1.bf16.msra.mxu0 0
    %3827 = vmatprep.subr.bf16.mxu0 0
    %3828 = vmatpush1.bf16.msra.mxu0 0
    %3829 = vmatprep.subr.bf16.mxu0 0
    %3830 = vmatpush1.bf16.msra.mxu0 0
    %3831 = vmatprep.subr.bf16.mxu0 0
    %3832 = vmatpush1.bf16.msra.mxu0 %v3791
    %3833 = vmatprep.subr.bf16.mxu0 0
    %3834 = vmatpush1.bf16.msra.mxu0 %v3790
    %3835 = vmatprep.subr.bf16.mxu0 0
    %3836 = vmatpush1.bf16.msra.mxu0 %v3789
    %3837 = vmatprep.subr.bf16.mxu0 0
    %3838 = vmatpush1.bf16.msra.mxu0 %v3788
    %3839 = vmatprep.subr.bf16.mxu0 0
    %3840 = vmatpush2.bf16.msra.mxu0 0
    %3841 = vmatprep.subr.bf16.mxu0 0
    %3842 = vmatpush2.bf16.msra.mxu0 0
    %3843 = vmatprep.subr.bf16.mxu0 0
    %3844 = vmatpush2.bf16.msra.mxu0 0
    %3845 = vmatprep.subr.bf16.mxu0 0
    %3846 = vmatpush2.bf16.msra.mxu0 0
    %3847 = vmatprep.subr.bf16.mxu0 0
    %3848 = vmatpush2.bf16.msra.mxu0 0
    %3849 = vmatprep.subr.bf16.mxu0 0
    %3850 = vmatpush2.bf16.msra.mxu0 0
    %3851 = vmatprep.subr.bf16.mxu0 0
    %3852 = vmatpush2.bf16.msra.mxu0 0
    %3853 = vmatprep.subr.bf16.mxu0 0
    %3854 = vmatpush2.bf16.msra.mxu0 0
    %3855 = vmatprep.mubr.bf16.mxu0 0
    %3856 = vmatmul.mubr.bf16.gmra.mxu0 %v3797
    %v3857 = vpop.f32.mrf.mxu0
    %v3858 = vadd.f32 0.0, %v3857
    %v3859 = vpop.f32.mrf.mxu0
    %v3860 = vpop.f32.mrf.mxu0
    %v3861 = vadd.f32 0.0, %v3860
    %v3862 = vpop.f32.mrf.mxu0
    %3863 = vmatprep.mubr.bf16.mxu0 0
    %3864 = vmatmul.mubr.bf16.gmra.mxu0 %v3800
    %v3865 = vpop.f32.mrf.mxu0
    %v3866 = vadd.f32 0.0, %v3865
    %v3867 = vpop.f32.mrf.mxu0
    %v3868 = vpop.f32.mrf.mxu0
    %v3869 = vadd.f32 0.0, %v3868
    %v3870 = vpop.f32.mrf.mxu0
    %3871 = vmatprep.mubr.bf16.mxu0 0
    %3872 = vmatmul.mubr.bf16.gmra.mxu0 %v3803
    %v3873 = vpop.f32.mrf.mxu0
    %v3874 = vadd.f32 0.0, %v3873
    %v3875 = vpop.f32.mrf.mxu0
    %v3876 = vpop.f32.mrf.mxu0
    %v3877 = vadd.f32 0.0, %v3876
    %v3878 = vpop.f32.mrf.mxu0
    %3879 = vmatprep.mubr.bf16.mxu0 0
    %3880 = vmatmul.mubr.bf16.gmra.mxu0 %v3806
    %v3881 = vpop.f32.mrf.mxu0
    %v3882 = vadd.f32 0.0, %v3881
    %v3883 = vpop.f32.mrf.mxu0
    %v3884 = vpop.f32.mrf.mxu0
    %v3885 = vadd.f32 0.0, %v3884
    %v3886 = vpop.f32.mrf.mxu0
    %3887 = vmatprep.mubr.bf16.mxu0 0
    %3888 = vmatmul.mubr.bf16.gmra.mxu0 %v3809
    %v3889 = vpop.f32.mrf.mxu0
    %v3890 = vadd.f32 0.0, %v3889
    %v3891 = vpop.f32.mrf.mxu0
    %v3892 = vpop.f32.mrf.mxu0
    %v3893 = vadd.f32 0.0, %v3892
    %v3894 = vpop.f32.mrf.mxu0
    %3895 = vmatprep.mubr.bf16.mxu0 0
    %3896 = vmatmul.mubr.bf16.gmra.mxu0 %v3812
    %v3897 = vpop.f32.mrf.mxu0
    %v3898 = vadd.f32 0.0, %v3897
    %v3899 = vpop.f32.mrf.mxu0
    %v3900 = vpop.f32.mrf.mxu0
    %v3901 = vadd.f32 0.0, %v3900
    %v3902 = vpop.f32.mrf.mxu0
    %3903 = vmatprep.mubr.bf16.mxu0 0
    %3904 = vmatmul.mubr.bf16.gmra.mxu0 %v3815
    %v3905 = vpop.f32.mrf.mxu0
    %v3906 = vadd.f32 0.0, %v3905
    %v3907 = vpop.f32.mrf.mxu0
    %v3908 = vpop.f32.mrf.mxu0
    %v3909 = vadd.f32 0.0, %v3908
    %v3910 = vpop.f32.mrf.mxu0
    %3911 = vmatprep.mubr.bf16.mxu0 0
    %3912 = vmatmul.mubr.bf16.gmra.mxu0 %v3818
    %v3913 = vpop.f32.mrf.mxu0
    %v3914 = vadd.f32 0.0, %v3913
    %v3915 = vpop.f32.mrf.mxu0
    %v3916 = vpop.f32.mrf.mxu0
    %v3917 = vadd.f32 0.0, %v3916
    %v3918 = vpop.f32.mrf.mxu0
    %3919 = vmatprep.mubr.bf16.mxu0 0
    %3920 = vmatmul.mubr.bf16.gmra.mxu0 %v3821
    %v3921 = vpop.f32.mrf.mxu0
    %v3922 = vadd.f32 0.0, %v3921
    %v3923 = vpop.f32.mrf.mxu0
    %v3924 = vpop.f32.mrf.mxu0
    %v3925 = vadd.f32 0.0, %v3924
    %v3926 = vpop.f32.mrf.mxu0
    %3927 = vdwg.mxu0
    %v3928 = vadd.f32 %v3719, %v3858
    %v3929 = vadd.f32 %v3720, %v3861
    %v3930 = vadd.f32 %v3721, %v3866
    %v3931 = vadd.f32 %v3722, %v3869
    %v3932 = vadd.f32 %v3723, %v3874
    %v3933 = vadd.f32 %v3724, %v3877
    %v3934 = vadd.f32 %v3725, %v3882
    %v3935 = vadd.f32 %v3726, %v3885
    %v3936 = vadd.f32 %v3727, %v3890
    %v3937 = vadd.f32 %v3728, %v3893
    %v3938 = vadd.f32 %v3729, %v3898
    %v3939 = vadd.f32 %v3730, %v3901
    %v3940 = vadd.f32 %v3731, %v3906
    %v3941 = vadd.f32 %v3732, %v3909
    %v3942 = vadd.f32 %v3733, %v3914
    %v3943 = vadd.f32 %v3734, %v3917
    %v3944 = vadd.f32 %v3735, %v3922
    %v3945 = vadd.f32 %v3736, %v3925
    %v3946 = vld [vmem:[#allocation2 + $0x1a] sm:$0xff]
    %v3947 = vld [vmem:[#allocation2 + $0x22] sm:$0xff]
    %v3948 = vld [vmem:[#allocation2 + $0x2a] sm:$0xff]
    %v3949 = vld [vmem:[#allocation2 + $0x32] sm:$0xff]
    %v3950 = vld [vmem:[#allocation2 + $0x3a] sm:$0xff]
    %v3951 = vld [vmem:[#allocation2 + $0x42] sm:$0xff]
    %v3952 = vld [vmem:[#allocation2 + $0x4a] sm:$0xff]
    %v3953 = vld [vmem:[#allocation2 + $0x52] sm:$0xff]
    %v3954 = vld [vmem:[#allocation2 + $0x5a] sm:$0xff]
    %v3955 = vld [vmem:[#allocation2 + $0x62] sm:$0xff]
    %v3956 = vld [vmem:[#allocation2 + $0x6a] sm:$0xff]
    %v3957 = vld [vmem:[#allocation2 + $0x72] sm:$0xff]
    %v3958 = vld [vmem:[#allocation2 + $0x7a] sm:$0xff]
    %v3959 = vld [vmem:[#allocation2 + $0x82] sm:$0xff]
    %v3960 = vld [vmem:[#allocation2 + $0x8a] sm:$0xff]
    %v3961 = vld [vmem:[#allocation2 + $0x92] sm:$0xff]
    %v3962 = vld [vmem:[#allocation2 + $0x9a] sm:$0xff]
    %v3963 = vld [vmem:[#allocation2 + $0xa2] sm:$0xff]
    %v3964 = vpack.c.bf16 %v3947, %v3946
    %v3965 = vpack.c.bf16 %v3949, %v3948
    %v3966 = vpack.c.bf16 %v3951, %v3950
    %v3967 = vpack.c.bf16 %v3953, %v3952
    %v3968 = vpack.c.bf16 %v3955, %v3954
    %v3969 = vpack.c.bf16 %v3957, %v3956
    %v3970 = vpack.c.bf16 %v3959, %v3958
    %v3971 = vpack.c.bf16 %v3961, %v3960
    %v3972 = vpack.c.bf16 %v3963, %v3962
    %v3973 = vld [vmem:[%s3 + $0x1c0] sm:$0xf]
    %v3974 = vld [vmem:[%s3 + $0x1c4] sm:$0xf]
    %v3975 = vld [vmem:[%s3 + $0x1c8] sm:$0xf]
    %v3976 = vld [vmem:[%s3 + $0x1cc] sm:$0xf]
    %v3977 = vld [vmem:[%s3 + $0x1d0] sm:$0xf]
    %v3978 = vld [vmem:[%s3 + $0x1d4] sm:$0xf]
    %v3979 = vld [vmem:[%s3 + $0x1d8] sm:$0xf]
    %v3980 = vld [vmem:[%s3 + $0x1dc] sm:$0xf]
    %v3989 = vunpack.c.l.b16 %v3973
    %v3990 = vunpack.c.l.b16 %v3974
    %v3991 = vunpack.c.l.b16 %v3975
    %v3992 = vunpack.c.l.b16 %v3976
    %v3993 = vunpack.c.l.b16 %v3977
    %v3994 = vunpack.c.l.b16 %v3978
    %v3995 = vunpack.c.l.b16 %v3979
    %v3996 = vunpack.c.l.b16 %v3980
    %v3997 = vpack.c.b16 %v3990, %v3989
    %v3998 = vpack.c.b16 %v3992, %v3991
    %v3999 = vpack.c.b16 %v3994, %v3993
    %v4000 = vpack.c.b16 %v3996, %v3995
    %v4006 = vsel %vm1033, %v3964, 0
    %v4009 = vsel %vm1033, %v3965, 0
    %v4012 = vsel %vm1033, %v3966, 0
    %v4015 = vsel %vm1033, %v3967, 0
    %v4018 = vsel %vm1033, %v3968, 0
    %v4021 = vsel %vm1033, %v3969, 0
    %v4024 = vsel %vm1033, %v3970, 0
    %v4027 = vsel %vm1033, %v3971, 0
    %v4030 = vsel %vm1033, %v3972, 0
    %4032 = vmatprep.subr.bf16.mxu0 0
    %4033 = vmatpush1.bf16.msra.mxu0 0
    %4034 = vmatprep.subr.bf16.mxu0 0
    %4035 = vmatpush1.bf16.msra.mxu0 0
    %4036 = vmatprep.subr.bf16.mxu0 0
    %4037 = vmatpush1.bf16.msra.mxu0 0
    %4038 = vmatprep.subr.bf16.mxu0 0
    %4039 = vmatpush1.bf16.msra.mxu0 0
    %4040 = vmatprep.subr.bf16.mxu0 0
    %4041 = vmatpush1.bf16.msra.mxu0 %v4000
    %4042 = vmatprep.subr.bf16.mxu0 0
    %4043 = vmatpush1.bf16.msra.mxu0 %v3999
    %4044 = vmatprep.subr.bf16.mxu0 0
    %4045 = vmatpush1.bf16.msra.mxu0 %v3998
    %4046 = vmatprep.subr.bf16.mxu0 0
    %4047 = vmatpush1.bf16.msra.mxu0 %v3997
    %4048 = vmatprep.subr.bf16.mxu0 0
    %4049 = vmatpush2.bf16.msra.mxu0 0
    %4050 = vmatprep.subr.bf16.mxu0 0
    %4051 = vmatpush2.bf16.msra.mxu0 0
    %4052 = vmatprep.subr.bf16.mxu0 0
    %4053 = vmatpush2.bf16.msra.mxu0 0
    %4054 = vmatprep.subr.bf16.mxu0 0
    %4055 = vmatpush2.bf16.msra.mxu0 0
    %4056 = vmatprep.subr.bf16.mxu0 0
    %4057 = vmatpush2.bf16.msra.mxu0 0
    %4058 = vmatprep.subr.bf16.mxu0 0
    %4059 = vmatpush2.bf16.msra.mxu0 0
    %4060 = vmatprep.subr.bf16.mxu0 0
    %4061 = vmatpush2.bf16.msra.mxu0 0
    %4062 = vmatprep.subr.bf16.mxu0 0
    %4063 = vmatpush2.bf16.msra.mxu0 0
    %4064 = vmatprep.mubr.bf16.mxu0 0
    %4065 = vmatmul.mubr.bf16.gmra.mxu0 %v4006
    %v4066 = vpop.f32.mrf.mxu0
    %v4067 = vadd.f32 0.0, %v4066
    %v4068 = vpop.f32.mrf.mxu0
    %v4069 = vpop.f32.mrf.mxu0
    %v4070 = vadd.f32 0.0, %v4069
    %v4071 = vpop.f32.mrf.mxu0
    %4072 = vmatprep.mubr.bf16.mxu0 0
    %4073 = vmatmul.mubr.bf16.gmra.mxu0 %v4009
    %v4074 = vpop.f32.mrf.mxu0
    %v4075 = vadd.f32 0.0, %v4074
    %v4076 = vpop.f32.mrf.mxu0
    %v4077 = vpop.f32.mrf.mxu0
    %v4078 = vadd.f32 0.0, %v4077
    %v4079 = vpop.f32.mrf.mxu0
    %4080 = vmatprep.mubr.bf16.mxu0 0
    %4081 = vmatmul.mubr.bf16.gmra.mxu0 %v4012
    %v4082 = vpop.f32.mrf.mxu0
    %v4083 = vadd.f32 0.0, %v4082
    %v4084 = vpop.f32.mrf.mxu0
    %v4085 = vpop.f32.mrf.mxu0
    %v4086 = vadd.f32 0.0, %v4085
    %v4087 = vpop.f32.mrf.mxu0
    %4088 = vmatprep.mubr.bf16.mxu0 0
    %4089 = vmatmul.mubr.bf16.gmra.mxu0 %v4015
    %v4090 = vpop.f32.mrf.mxu0
    %v4091 = vadd.f32 0.0, %v4090
    %v4092 = vpop.f32.mrf.mxu0
    %v4093 = vpop.f32.mrf.mxu0
    %v4094 = vadd.f32 0.0, %v4093
    %v4095 = vpop.f32.mrf.mxu0
    %4096 = vmatprep.mubr.bf16.mxu0 0
    %4097 = vmatmul.mubr.bf16.gmra.mxu0 %v4018
    %v4098 = vpop.f32.mrf.mxu0
    %v4099 = vadd.f32 0.0, %v4098
    %v4100 = vpop.f32.mrf.mxu0
    %v4101 = vpop.f32.mrf.mxu0
    %v4102 = vadd.f32 0.0, %v4101
    %v4103 = vpop.f32.mrf.mxu0
    %4104 = vmatprep.mubr.bf16.mxu0 0
    %4105 = vmatmul.mubr.bf16.gmra.mxu0 %v4021
    %v4106 = vpop.f32.mrf.mxu0
    %v4107 = vadd.f32 0.0, %v4106
    %v4108 = vpop.f32.mrf.mxu0
    %v4109 = vpop.f32.mrf.mxu0
    %v4110 = vadd.f32 0.0, %v4109
    %v4111 = vpop.f32.mrf.mxu0
    %4112 = vmatprep.mubr.bf16.mxu0 0
    %4113 = vmatmul.mubr.bf16.gmra.mxu0 %v4024
    %v4114 = vpop.f32.mrf.mxu0
    %v4115 = vadd.f32 0.0, %v4114
    %v4116 = vpop.f32.mrf.mxu0
    %v4117 = vpop.f32.mrf.mxu0
    %v4118 = vadd.f32 0.0, %v4117
    %v4119 = vpop.f32.mrf.mxu0
    %4120 = vmatprep.mubr.bf16.mxu0 0
    %4121 = vmatmul.mubr.bf16.gmra.mxu0 %v4027
    %v4122 = vpop.f32.mrf.mxu0
    %v4123 = vadd.f32 0.0, %v4122
    %v4124 = vpop.f32.mrf.mxu0
    %v4125 = vpop.f32.mrf.mxu0
    %v4126 = vadd.f32 0.0, %v4125
    %v4127 = vpop.f32.mrf.mxu0
    %4128 = vmatprep.mubr.bf16.mxu0 0
    %4129 = vmatmul.mubr.bf16.gmra.mxu0 %v4030
    %v4130 = vpop.f32.mrf.mxu0
    %v4131 = vadd.f32 0.0, %v4130
    %v4132 = vpop.f32.mrf.mxu0
    %v4133 = vpop.f32.mrf.mxu0
    %v4134 = vadd.f32 0.0, %v4133
    %v4135 = vpop.f32.mrf.mxu0
    %4136 = vdwg.mxu0
    %v4137 = vadd.f32 %v3928, %v4067
    %v4138 = vadd.f32 %v3929, %v4070
    %v4139 = vadd.f32 %v3930, %v4075
    %v4140 = vadd.f32 %v3931, %v4078
    %v4141 = vadd.f32 %v3932, %v4083
    %v4142 = vadd.f32 %v3933, %v4086
    %v4143 = vadd.f32 %v3934, %v4091
    %v4144 = vadd.f32 %v3935, %v4094
    %v4145 = vadd.f32 %v3936, %v4099
    %v4146 = vadd.f32 %v3937, %v4102
    %v4147 = vadd.f32 %v3938, %v4107
    %v4148 = vadd.f32 %v3939, %v4110
    %v4149 = vadd.f32 %v3940, %v4115
    %v4150 = vadd.f32 %v3941, %v4118
    %v4151 = vadd.f32 %v3942, %v4123
    %v4152 = vadd.f32 %v3943, %v4126
    %v4153 = vadd.f32 %v3944, %v4131
    %v4154 = vadd.f32 %v3945, %v4134
    %v4155 = vld [vmem:[%s4] sm:$0x1]
    %v4157 = vlaneseq
    %v4158 = vshrl.u32 %v4157, 7
    %v4159 = vsub.s32 0, %v4158
    %v4160 = vrot.slane %v4155, %v4159
    %v4162 = vadd.f32 %v4137, %v4160
    %v4163 = vadd.f32 %v4138, %v4160
    %v4164 = vadd.f32 %v4139, %v4160
    %v4165 = vadd.f32 %v4140, %v4160
    %v4166 = vadd.f32 %v4141, %v4160
    %v4167 = vadd.f32 %v4142, %v4160
    %v4168 = vadd.f32 %v4143, %v4160
    %v4169 = vadd.f32 %v4144, %v4160
    %v4170 = vadd.f32 %v4145, %v4160
    %v4171 = vadd.f32 %v4146, %v4160
    %v4172 = vadd.f32 %v4147, %v4160
    %v4173 = vadd.f32 %v4148, %v4160
    %v4174 = vadd.f32 %v4149, %v4160
    %v4175 = vadd.f32 %v4150, %v4160
    %v4176 = vadd.f32 %v4151, %v4160
    %v4177 = vadd.f32 %v4152, %v4160
    %v4178 = vadd.f32 %v4153, %v4160
    %v4179 = vadd.f32 %v4154, %v4160
    %4180 = vst [vmem:[#allocation3] sm:$0xff] %v4162
    %4181 = vst [vmem:[#allocation3 + $0x8] sm:$0xff] %v4163
    %4182 = vst [vmem:[#allocation3 + $0x10] sm:$0xff] %v4164
    %4183 = vst [vmem:[#allocation3 + $0x18] sm:$0xff] %v4165
    %4184 = vst [vmem:[#allocation3 + $0x20] sm:$0xff] %v4166
    %4185 = vst [vmem:[#allocation3 + $0x28] sm:$0xff] %v4167
    %4186 = vst [vmem:[#allocation3 + $0x30] sm:$0xff] %v4168
    %4187 = vst [vmem:[#allocation3 + $0x38] sm:$0xff] %v4169
    %4188 = vst [vmem:[#allocation3 + $0x40] sm:$0xff] %v4170
    %4189 = vst [vmem:[#allocation3 + $0x48] sm:$0xff] %v4171
    %4190 = vst [vmem:[#allocation3 + $0x50] sm:$0xff] %v4172
    %4191 = vst [vmem:[#allocation3 + $0x58] sm:$0xff] %v4173
    %4192 = vst [vmem:[#allocation3 + $0x60] sm:$0xff] %v4174
    %4193 = vst [vmem:[#allocation3 + $0x68] sm:$0xff] %v4175
    %4194 = vst [vmem:[#allocation3 + $0x70] sm:$0xff] %v4176
    %4195 = vst [vmem:[#allocation3 + $0x78] sm:$0xff] %v4177
    %4196 = vst [vmem:[#allocation3 + $0x80] sm:$0xff] %v4178
    %4197 = vst [vmem:[#allocation3 + $0x88] sm:$0xff] %v4179
    %v4198 = vld [vmem:[#allocation3] sm:$0x1]
    %v4199 = vld [vmem:[#allocation3 + $0x1] sm:$0x1]
    %v4200 = vmax.f32 %v4198, %v4199
    %v4201 = vld [vmem:[#allocation3 + $0x6] sm:$0x1]
    %v4202 = vmax.f32 %v4200, %v4201
    %v4203 = vld [vmem:[#allocation3 + $0x7] sm:$0x1]
    %v4204 = vmax.f32 %v4202, %v4203
    %v4205 = vmax.f32 %v4204, 0.0
    %4206 = vst [vmem:[#allocation4] sm:$0x1] %v4205
    %v4207 = vld [vmem:[#allocation3 + $0x2] sm:$0x1]
    %v4208 = vld [vmem:[#allocation3 + $0x3] sm:$0x1]
    %v4209 = vmax.f32 %v4207, %v4208
    %v4210 = vld [vmem:[#allocation3 + $0x8] sm:$0x1]
    %v4211 = vmax.f32 %v4209, %v4210
    %v4212 = vld [vmem:[#allocation3 + $0x9] sm:$0x1]
    %v4213 = vmax.f32 %v4211, %v4212
    %v4214 = vmax.f32 %v4213, 0.0
    %4215 = vst [vmem:[#allocation4 + $0x8] sm:$0x1] %v4214
    %v4216 = vld [vmem:[#allocation3 + $0xc] sm:$0x1]
    %v4217 = vld [vmem:[#allocation3 + $0xd] sm:$0x1]
    %v4218 = vmax.f32 %v4216, %v4217
    %v4219 = vld [vmem:[#allocation3 + $0x12] sm:$0x1]
    %v4220 = vmax.f32 %v4218, %v4219
    %v4221 = vld [vmem:[#allocation3 + $0x13] sm:$0x1]
    %v4222 = vmax.f32 %v4220, %v4221
    %v4223 = vmax.f32 %v4222, 0.0
    %4224 = vst [vmem:[#allocation4 + $0x10] sm:$0x1] %v4223
    %v4225 = vld [vmem:[#allocation3 + $0xe] sm:$0x1]
    %v4226 = vld [vmem:[#allocation3 + $0xf] sm:$0x1]
    %v4227 = vmax.f32 %v4225, %v4226
    %v4228 = vld [vmem:[#allocation3 + $0x14] sm:$0x1]
    %v4229 = vmax.f32 %v4227, %v4228
    %v4230 = vld [vmem:[#allocation3 + $0x15] sm:$0x1]
    %v4231 = vmax.f32 %v4229, %v4230
    %v4232 = vmax.f32 %v4231, 0.0
    %4233 = vst [vmem:[#allocation4 + $0x18] sm:$0x1] %v4232
    %v4234 = vld [vmem:[#allocation3 + $0x18] sm:$0x1]
    %v4235 = vld [vmem:[#allocation3 + $0x19] sm:$0x1]
    %v4236 = vmax.f32 %v4234, %v4235
    %v4237 = vld [vmem:[#allocation3 + $0x1e] sm:$0x1]
    %v4238 = vmax.f32 %v4236, %v4237
    %v4239 = vld [vmem:[#allocation3 + $0x1f] sm:$0x1]
    %v4240 = vmax.f32 %v4238, %v4239
    %v4241 = vmax.f32 %v4240, 0.0
    %4242 = vst [vmem:[#allocation4 + $0x20] sm:$0x1] %v4241
    %v4243 = vld [vmem:[#allocation3 + $0x1a] sm:$0x1]
    %v4244 = vld [vmem:[#allocation3 + $0x1b] sm:$0x1]
    %v4245 = vmax.f32 %v4243, %v4244
    %v4246 = vld [vmem:[#allocation3 + $0x20] sm:$0x1]
    %v4247 = vmax.f32 %v4245, %v4246
    %v4248 = vld [vmem:[#allocation3 + $0x21] sm:$0x1]
    %v4249 = vmax.f32 %v4247, %v4248
    %v4250 = vmax.f32 %v4249, 0.0
    %4251 = vst [vmem:[#allocation4 + $0x28] sm:$0x1] %v4250
    %v4252 = vld [vmem:[#allocation3 + $0x24] sm:$0x1]
    %v4253 = vld [vmem:[#allocation3 + $0x25] sm:$0x1]
    %v4254 = vmax.f32 %v4252, %v4253
    %v4255 = vld [vmem:[#allocation3 + $0x2a] sm:$0x1]
    %v4256 = vmax.f32 %v4254, %v4255
    %v4257 = vld [vmem:[#allocation3 + $0x2b] sm:$0x1]
    %v4258 = vmax.f32 %v4256, %v4257
    %v4259 = vmax.f32 %v4258, 0.0
    %4260 = vst [vmem:[#allocation4 + $0x30] sm:$0x1] %v4259
    %v4261 = vld [vmem:[#allocation3 + $0x26] sm:$0x1]
    %v4262 = vld [vmem:[#allocation3 + $0x27] sm:$0x1]
    %v4263 = vmax.f32 %v4261, %v4262
    %v4264 = vld [vmem:[#allocation3 + $0x2c] sm:$0x1]
    %v4265 = vmax.f32 %v4263, %v4264
    %v4266 = vld [vmem:[#allocation3 + $0x2d] sm:$0x1]
    %v4267 = vmax.f32 %v4265, %v4266
    %v4268 = vmax.f32 %v4267, 0.0
    %4269 = vst [vmem:[#allocation4 + $0x38] sm:$0x1] %v4268
    %v4270 = vld [vmem:[#allocation3 + $0x30] sm:$0x1]
    %v4271 = vld [vmem:[#allocation3 + $0x31] sm:$0x1]
    %v4272 = vmax.f32 %v4270, %v4271
    %v4273 = vld [vmem:[#allocation3 + $0x36] sm:$0x1]
    %v4274 = vmax.f32 %v4272, %v4273
    %v4275 = vld [vmem:[#allocation3 + $0x37] sm:$0x1]
    %v4276 = vmax.f32 %v4274, %v4275
    %v4277 = vmax.f32 %v4276, 0.0
    %4278 = vst [vmem:[#allocation4 + $0x40] sm:$0x1] %v4277
    %v4279 = vld [vmem:[#allocation3 + $0x32] sm:$0x1]
    %v4280 = vld [vmem:[#allocation3 + $0x33] sm:$0x1]
    %v4281 = vmax.f32 %v4279, %v4280
    %v4282 = vld [vmem:[#allocation3 + $0x38] sm:$0x1]
    %v4283 = vmax.f32 %v4281, %v4282
    %v4284 = vld [vmem:[#allocation3 + $0x39] sm:$0x1]
    %v4285 = vmax.f32 %v4283, %v4284
    %v4286 = vmax.f32 %v4285, 0.0
    %4287 = vst [vmem:[#allocation4 + $0x48] sm:$0x1] %v4286
    %v4288 = vld [vmem:[#allocation3 + $0x54] sm:$0x1]
    %v4289 = vld [vmem:[#allocation3 + $0x55] sm:$0x1]
    %v4290 = vmax.f32 %v4288, %v4289
    %v4291 = vld [vmem:[#allocation3 + $0x5a] sm:$0x1]
    %v4292 = vmax.f32 %v4290, %v4291
    %v4293 = vld [vmem:[#allocation3 + $0x5b] sm:$0x1]
    %v4294 = vmax.f32 %v4292, %v4293
    %v4295 = vmax.f32 %v4294, 0.0
    %4296 = vst [vmem:[#allocation4 + $0x1] sm:$0x1] %v4295
    %v4297 = vld [vmem:[#allocation3 + $0x56] sm:$0x1]
    %v4298 = vld [vmem:[#allocation3 + $0x57] sm:$0x1]
    %v4299 = vmax.f32 %v4297, %v4298
    %v4300 = vld [vmem:[#allocation3 + $0x5c] sm:$0x1]
    %v4301 = vmax.f32 %v4299, %v4300
    %v4302 = vld [vmem:[#allocation3 + $0x5d] sm:$0x1]
    %v4303 = vmax.f32 %v4301, %v4302
    %v4304 = vmax.f32 %v4303, 0.0
    %4305 = vst [vmem:[#allocation4 + $0x9] sm:$0x1] %v4304
    %v4306 = vld [vmem:[#allocation3 + $0x60] sm:$0x1]
    %v4307 = vld [vmem:[#allocation3 + $0x61] sm:$0x1]
    %v4308 = vmax.f32 %v4306, %v4307
    %v4309 = vld [vmem:[#allocation3 + $0x66] sm:$0x1]
    %v4310 = vmax.f32 %v4308, %v4309
    %v4311 = vld [vmem:[#allocation3 + $0x67] sm:$0x1]
    %v4312 = vmax.f32 %v4310, %v4311
    %v4313 = vmax.f32 %v4312, 0.0
    %4314 = vst [vmem:[#allocation4 + $0x11] sm:$0x1] %v4313
    %v4315 = vld [vmem:[#allocation3 + $0x62] sm:$0x1]
    %v4316 = vld [vmem:[#allocation3 + $0x63] sm:$0x1]
    %v4317 = vmax.f32 %v4315, %v4316
    %v4318 = vld [vmem:[#allocation3 + $0x68] sm:$0x1]
    %v4319 = vmax.f32 %v4317, %v4318
    %v4320 = vld [vmem:[#allocation3 + $0x69] sm:$0x1]
    %v4321 = vmax.f32 %v4319, %v4320
    %v4322 = vmax.f32 %v4321, 0.0
    %4323 = vst [vmem:[#allocation4 + $0x19] sm:$0x1] %v4322
    %v4324 = vld [vmem:[#allocation3 + $0x6c] sm:$0x1]
    %v4325 = vld [vmem:[#allocation3 + $0x6d] sm:$0x1]
    %v4326 = vmax.f32 %v4324, %v4325
    %v4327 = vld [vmem:[#allocation3 + $0x72] sm:$0x1]
    %v4328 = vmax.f32 %v4326, %v4327
    %v4329 = vld [vmem:[#allocation3 + $0x73] sm:$0x1]
    %v4330 = vmax.f32 %v4328, %v4329
    %v4331 = vmax.f32 %v4330, 0.0
    %4332 = vst [vmem:[#allocation4 + $0x21] sm:$0x1] %v4331
    %v4333 = vld [vmem:[#allocation3 + $0x6e] sm:$0x1]
    %v4334 = vld [vmem:[#allocation3 + $0x6f] sm:$0x1]
    %v4335 = vmax.f32 %v4333, %v4334
    %v4336 = vld [vmem:[#allocation3 + $0x74] sm:$0x1]
    %v4337 = vmax.f32 %v4335, %v4336
    %v4338 = vld [vmem:[#allocation3 + $0x75] sm:$0x1]
    %v4339 = vmax.f32 %v4337, %v4338
    %v4340 = vmax.f32 %v4339, 0.0
    %4341 = vst [vmem:[#allocation4 + $0x29] sm:$0x1] %v4340
    %v4342 = vld [vmem:[#allocation3 + $0x78] sm:$0x1]
    %v4343 = vld [vmem:[#allocation3 + $0x79] sm:$0x1]
    %v4344 = vmax.f32 %v4342, %v4343
    %v4345 = vld [vmem:[#allocation3 + $0x7e] sm:$0x1]
    %v4346 = vmax.f32 %v4344, %v4345
    %v4347 = vld [vmem:[#allocation3 + $0x7f] sm:$0x1]
    %v4348 = vmax.f32 %v4346, %v4347
    %v4349 = vmax.f32 %v4348, 0.0
    %4350 = vst [vmem:[#allocation4 + $0x31] sm:$0x1] %v4349
    %v4351 = vld [vmem:[#allocation3 + $0x7a] sm:$0x1]
    %v4352 = vld [vmem:[#allocation3 + $0x7b] sm:$0x1]
    %v4353 = vmax.f32 %v4351, %v4352
    %v4354 = vld [vmem:[#allocation3 + $0x80] sm:$0x1]
    %v4355 = vmax.f32 %v4353, %v4354
    %v4356 = vld [vmem:[#allocation3 + $0x81] sm:$0x1]
    %v4357 = vmax.f32 %v4355, %v4356
    %v4358 = vmax.f32 %v4357, 0.0
    %4359 = vst [vmem:[#allocation4 + $0x39] sm:$0x1] %v4358
    %v4360 = vld [vmem:[#allocation3 + $0x84] sm:$0x1]
    %v4361 = vld [vmem:[#allocation3 + $0x85] sm:$0x1]
    %v4362 = vmax.f32 %v4360, %v4361
    %v4363 = vld [vmem:[#allocation3 + $0x8a] sm:$0x1]
    %v4364 = vmax.f32 %v4362, %v4363
    %v4365 = vld [vmem:[#allocation3 + $0x8b] sm:$0x1]
    %v4366 = vmax.f32 %v4364, %v4365
    %v4367 = vmax.f32 %v4366, 0.0
    %4368 = vst [vmem:[#allocation4 + $0x41] sm:$0x1] %v4367
    %v4369 = vld [vmem:[#allocation3 + $0x86] sm:$0x1]
    %v4370 = vld [vmem:[#allocation3 + $0x87] sm:$0x1]
    %v4371 = vmax.f32 %v4369, %v4370
    %v4372 = vld [vmem:[#allocation3 + $0x8c] sm:$0x1]
    %v4373 = vmax.f32 %v4371, %v4372
    %v4374 = vld [vmem:[#allocation3 + $0x8d] sm:$0x1]
    %v4375 = vmax.f32 %v4373, %v4374
    %v4376 = vmax.f32 %v4375, 0.0
    %4377 = vst [vmem:[#allocation4 + $0x49] sm:$0x1] %v4376
    %v4378 = vld [vmem:[#allocation4] sm:$0x3]
    %v4379 = vld [vmem:[#allocation4 + $0x8] sm:$0x3]
    %v4380 = vld [vmem:[#allocation4 + $0x10] sm:$0x3]
    %v4381 = vld [vmem:[#allocation4 + $0x18] sm:$0x3]
    %v4382 = vld [vmem:[#allocation4 + $0x20] sm:$0x3]
    %v4383 = vld [vmem:[#allocation4 + $0x28] sm:$0x3]
    %v4384 = vld [vmem:[#allocation4 + $0x30] sm:$0x3]
    %v4385 = vld [vmem:[#allocation4 + $0x38] sm:$0x3]
    %v4386 = vld [vmem:[#allocation4 + $0x40] sm:$0x3]
    %v4387 = vld [vmem:[#allocation4 + $0x48] sm:$0x3]
    %v4388 = vpack.c.bf16 %v4378, %v4378
    %v4389 = vpack.c.bf16 %v4379, %v4379
    %v4390 = vpack.c.bf16 %v4380, %v4380
    %v4391 = vpack.c.bf16 %v4381, %v4381
    %v4392 = vpack.c.bf16 %v4382, %v4382
    %v4393 = vpack.c.bf16 %v4383, %v4383
    %v4394 = vpack.c.bf16 %v4384, %v4384
    %v4395 = vpack.c.bf16 %v4385, %v4385
    %v4396 = vpack.c.bf16 %v4386, %v4386
    %v4397 = vpack.c.bf16 %v4387, %v4387
    %v4398 = vld [vmem:[%s5] sm:$0xff]
    %v4399 = vld [vmem:[%s5 + $0x8] sm:$0xff]
    %v4400 = vld [vmem:[%s5 + $0x10] sm:$0xff]
    %v4401 = vld [vmem:[%s5 + $0x18] sm:$0xff]
    %v4402 = vld [vmem:[%s5 + $0x20] sm:$0xff]
    %v4403 = vld [vmem:[%s5 + $0x28] sm:$0xff]
    %v4404 = vld [vmem:[%s5 + $0x30] sm:$0xff]
    %v4405 = vld [vmem:[%s5 + $0x38] sm:$0xff]
    %v4406 = vld [vmem:[%s5 + $0x40] sm:$0xff]
    %v4407 = vld [vmem:[%s5 + $0x48] sm:$0xff]
    %v4408 = vld [vmem:[%s5 + $0x50] sm:$0xff]
    %v4409 = vld [vmem:[%s5 + $0x58] sm:$0xff]
    %v4410 = vld [vmem:[%s5 + $0x60] sm:$0xff]
    %v4411 = vld [vmem:[%s5 + $0x68] sm:$0xff]
    %v4412 = vld [vmem:[%s5 + $0x70] sm:$0xff]
    %v4413 = vld [vmem:[%s5 + $0x78] sm:$0xff]
    %v4414 = vld [vmem:[%s5 + $0x80] sm:$0xff]
    %v4415 = vld [vmem:[%s5 + $0x88] sm:$0xff]
    %v4416 = vld [vmem:[%s5 + $0x90] sm:$0xff]
    %v4417 = vld [vmem:[%s5 + $0x98] sm:$0xff]
    %v4418 = vld [vmem:[%s5 + $0xa0] sm:$0xff]
    %v4419 = vld [vmem:[%s5 + $0xa8] sm:$0xff]
    %v4420 = vld [vmem:[%s5 + $0xb0] sm:$0xff]
    %v4421 = vld [vmem:[%s5 + $0xb8] sm:$0xff]
    %v4422 = vld [vmem:[%s5 + $0xc0] sm:$0xff]
    %v4423 = vld [vmem:[%s5 + $0xc8] sm:$0xff]
    %v4424 = vld [vmem:[%s5 + $0xd0] sm:$0xff]
    %v4425 = vld [vmem:[%s5 + $0xd8] sm:$0xff]
    %v4426 = vld [vmem:[%s5 + $0xe0] sm:$0xff]
    %v4427 = vld [vmem:[%s5 + $0xe8] sm:$0xff]
    %v4428 = vld [vmem:[%s5 + $0xf0] sm:$0xff]
    %v4429 = vld [vmem:[%s5 + $0xf8] sm:$0xff]
    %v4430 = vld [vmem:[%s5 + $0x100] sm:$0xff]
    %v4431 = vld [vmem:[%s5 + $0x108] sm:$0xff]
    %v4432 = vld [vmem:[%s5 + $0x110] sm:$0xff]
    %v4433 = vld [vmem:[%s5 + $0x118] sm:$0xff]
    %v4434 = vld [vmem:[%s5 + $0x120] sm:$0xff]
    %v4435 = vld [vmem:[%s5 + $0x128] sm:$0xff]
    %v4436 = vld [vmem:[%s5 + $0x130] sm:$0xff]
    %v4437 = vld [vmem:[%s5 + $0x138] sm:$0xff]
    %v4438 = vld [vmem:[%s5 + $0x140] sm:$0xff]
    %v4439 = vld [vmem:[%s5 + $0x148] sm:$0xff]
    %v4440 = vld [vmem:[%s5 + $0x150] sm:$0xff]
    %v4441 = vld [vmem:[%s5 + $0x158] sm:$0xff]
    %v4442 = vld [vmem:[%s5 + $0x160] sm:$0xff]
    %v4443 = vld [vmem:[%s5 + $0x168] sm:$0xff]
    %v4444 = vld [vmem:[%s5 + $0x170] sm:$0xff]
    %v4445 = vld [vmem:[%s5 + $0x178] sm:$0xff]
    %v4446 = vld [vmem:[%s5 + $0x180] sm:$0xff]
    %v4447 = vld [vmem:[%s5 + $0x188] sm:$0xff]
    %v4448 = vld [vmem:[%s5 + $0x190] sm:$0xff]
    %v4449 = vld [vmem:[%s5 + $0x198] sm:$0xff]
    %v4450 = vld [vmem:[%s5 + $0x1a0] sm:$0xff]
    %v4451 = vld [vmem:[%s5 + $0x1a8] sm:$0xff]
    %v4452 = vld [vmem:[%s5 + $0x1b0] sm:$0xff]
    %v4453 = vld [vmem:[%s5 + $0x1b8] sm:$0xff]
    %v4454 = vld [vmem:[%s5 + $0x1c0] sm:$0xff]
    %v4455 = vld [vmem:[%s5 + $0x1c8] sm:$0xff]
    %v4456 = vld [vmem:[%s5 + $0x1d0] sm:$0xff]
    %v4457 = vld [vmem:[%s5 + $0x1d8] sm:$0xff]
    %v4458 = vld [vmem:[%s5 + $0x1e0] sm:$0xff]
    %v4459 = vld [vmem:[%s5 + $0x1e8] sm:$0xff]
    %v4460 = vld [vmem:[%s5 + $0x1f0] sm:$0xff]
    %v4461 = vld [vmem:[%s5 + $0x1f8] sm:$0xff]
    %v4462 = vld [vmem:[%s5 + $0x200] sm:$0xff]
    %v4463 = vld [vmem:[%s5 + $0x208] sm:$0xff]
    %v4464 = vld [vmem:[%s5 + $0x210] sm:$0xff]
    %v4465 = vld [vmem:[%s5 + $0x218] sm:$0xff]
    %v4466 = vld [vmem:[%s5 + $0x220] sm:$0xff]
    %v4467 = vld [vmem:[%s5 + $0x228] sm:$0xff]
    %v4468 = vld [vmem:[%s5 + $0x230] sm:$0xff]
    %v4469 = vld [vmem:[%s5 + $0x238] sm:$0xff]
    %v4470 = vld [vmem:[%s5 + $0x240] sm:$0xff]
    %v4471 = vld [vmem:[%s5 + $0x248] sm:$0xff]
    %v4472 = vld [vmem:[%s5 + $0x250] sm:$0xff]
    %v4473 = vld [vmem:[%s5 + $0x258] sm:$0xff]
    %v4474 = vld [vmem:[%s5 + $0x260] sm:$0xff]
    %v4475 = vld [vmem:[%s5 + $0x268] sm:$0xff]
    %v4476 = vld [vmem:[%s5 + $0x270] sm:$0xff]
    %v4477 = vld [vmem:[%s5 + $0x278] sm:$0xff]
    %v4478 = vld [vmem:[%s5 + $0x280] sm:$0xff]
    %v4479 = vld [vmem:[%s5 + $0x288] sm:$0xff]
    %v4480 = vld [vmem:[%s5 + $0x290] sm:$0xff]
    %v4481 = vld [vmem:[%s5 + $0x298] sm:$0xff]
    %v4482 = vld [vmem:[%s5 + $0x2a0] sm:$0xff]
    %v4483 = vld [vmem:[%s5 + $0x2a8] sm:$0xff]
    %v4484 = vld [vmem:[%s5 + $0x2b0] sm:$0xff]
    %v4485 = vld [vmem:[%s5 + $0x2b8] sm:$0xff]
    %v4486 = vld [vmem:[%s5 + $0x2c0] sm:$0xff]
    %v4487 = vld [vmem:[%s5 + $0x2c8] sm:$0xff]
    %v4488 = vld [vmem:[%s5 + $0x2d0] sm:$0xff]
    %v4489 = vld [vmem:[%s5 + $0x2d8] sm:$0xff]
    %v4490 = vld [vmem:[%s5 + $0x2e0] sm:$0xff]
    %v4491 = vld [vmem:[%s5 + $0x2e8] sm:$0xff]
    %v4492 = vld [vmem:[%s5 + $0x2f0] sm:$0xff]
    %v4493 = vld [vmem:[%s5 + $0x2f8] sm:$0xff]
    %v4494 = vld [vmem:[%s5 + $0x300] sm:$0xff]
    %v4495 = vld [vmem:[%s5 + $0x308] sm:$0xff]
    %v4496 = vld [vmem:[%s5 + $0x310] sm:$0xff]
    %v4497 = vld [vmem:[%s5 + $0x318] sm:$0xff]
    %v4498 = vld [vmem:[%s5 + $0x320] sm:$0xff]
    %v4499 = vld [vmem:[%s5 + $0x328] sm:$0xff]
    %v4500 = vld [vmem:[%s5 + $0x330] sm:$0xff]
    %v4501 = vld [vmem:[%s5 + $0x338] sm:$0xff]
    %v4502 = vld [vmem:[%s5 + $0x340] sm:$0xff]
    %v4503 = vld [vmem:[%s5 + $0x348] sm:$0xff]
    %v4504 = vld [vmem:[%s5 + $0x350] sm:$0xff]
    %v4505 = vld [vmem:[%s5 + $0x358] sm:$0xff]
    %v4506 = vld [vmem:[%s5 + $0x360] sm:$0xff]
    %v4507 = vld [vmem:[%s5 + $0x368] sm:$0xff]
    %v4508 = vld [vmem:[%s5 + $0x370] sm:$0xff]
    %v4509 = vld [vmem:[%s5 + $0x378] sm:$0xff]
    %v4510 = vld [vmem:[%s5 + $0x380] sm:$0xff]
    %v4511 = vld [vmem:[%s5 + $0x388] sm:$0xff]
    %v4512 = vld [vmem:[%s5 + $0x390] sm:$0xff]
    %v4513 = vld [vmem:[%s5 + $0x398] sm:$0xff]
    %v4514 = vld [vmem:[%s5 + $0x3a0] sm:$0xff]
    %v4515 = vld [vmem:[%s5 + $0x3a8] sm:$0xff]
    %v4516 = vld [vmem:[%s5 + $0x3b0] sm:$0xff]
    %v4517 = vld [vmem:[%s5 + $0x3b8] sm:$0xff]
    %v4518 = vld [vmem:[%s5 + $0x3c0] sm:$0xff]
    %v4519 = vld [vmem:[%s5 + $0x3c8] sm:$0xff]
    %v4520 = vld [vmem:[%s5 + $0x3d0] sm:$0xff]
    %v4521 = vld [vmem:[%s5 + $0x3d8] sm:$0xff]
    %v4522 = vld [vmem:[%s5 + $0x3e0] sm:$0xff]
    %v4523 = vld [vmem:[%s5 + $0x3e8] sm:$0xff]
    %v4524 = vld [vmem:[%s5 + $0x3f0] sm:$0xff]
    %v4525 = vld [vmem:[%s5 + $0x3f8] sm:$0xff]
    %v4526 = vld [vmem:[%s5 + $0x400] sm:$0xff]
    %v4527 = vld [vmem:[%s5 + $0x408] sm:$0xff]
    %v4528 = vld [vmem:[%s5 + $0x410] sm:$0xff]
    %v4529 = vld [vmem:[%s5 + $0x418] sm:$0xff]
    %v4530 = vld [vmem:[%s5 + $0x420] sm:$0xff]
    %v4531 = vld [vmem:[%s5 + $0x428] sm:$0xff]
    %v4532 = vld [vmem:[%s5 + $0x430] sm:$0xff]
    %v4533 = vld [vmem:[%s5 + $0x438] sm:$0xff]
    %v4534 = vld [vmem:[%s5 + $0x440] sm:$0xff]
    %v4535 = vld [vmem:[%s5 + $0x448] sm:$0xff]
    %v4536 = vld [vmem:[%s5 + $0x450] sm:$0xff]
    %v4537 = vld [vmem:[%s5 + $0x458] sm:$0xff]
    %v4538 = vld [vmem:[%s5 + $0x460] sm:$0xff]
    %v4539 = vld [vmem:[%s5 + $0x468] sm:$0xff]
    %v4540 = vld [vmem:[%s5 + $0x470] sm:$0xff]
    %v4541 = vld [vmem:[%s5 + $0x478] sm:$0xff]
    %v4542 = vld [vmem:[%s5 + $0x480] sm:$0xff]
    %v4543 = vld [vmem:[%s5 + $0x488] sm:$0xff]
    %v4544 = vld [vmem:[%s5 + $0x490] sm:$0xff]
    %v4545 = vld [vmem:[%s5 + $0x498] sm:$0xff]
    %v4546 = vld [vmem:[%s5 + $0x4a0] sm:$0xff]
    %v4547 = vld [vmem:[%s5 + $0x4a8] sm:$0xff]
    %v4548 = vld [vmem:[%s5 + $0x4b0] sm:$0xff]
    %v4549 = vld [vmem:[%s5 + $0x4b8] sm:$0xff]
    %v4550 = vld [vmem:[%s5 + $0x4c0] sm:$0xff]
    %v4551 = vld [vmem:[%s5 + $0x4c8] sm:$0xff]
    %v4552 = vld [vmem:[%s5 + $0x4d0] sm:$0xff]
    %v4553 = vld [vmem:[%s5 + $0x4d8] sm:$0xff]
    %v4554 = vld [vmem:[%s5 + $0x4e0] sm:$0xff]
    %v4555 = vld [vmem:[%s5 + $0x4e8] sm:$0xff]
    %v4556 = vld [vmem:[%s5 + $0x4f0] sm:$0xff]
    %v4557 = vld [vmem:[%s5 + $0x4f8] sm:$0xff]
    %v4558 = vld [vmem:[%s5 + $0x500] sm:$0xff]
    %v4559 = vld [vmem:[%s5 + $0x508] sm:$0xff]
    %v4560 = vld [vmem:[%s5 + $0x510] sm:$0xff]
    %v4561 = vld [vmem:[%s5 + $0x518] sm:$0xff]
    %v4562 = vld [vmem:[%s5 + $0x520] sm:$0xff]
    %v4563 = vld [vmem:[%s5 + $0x528] sm:$0xff]
    %v4564 = vld [vmem:[%s5 + $0x530] sm:$0xff]
    %v4565 = vld [vmem:[%s5 + $0x538] sm:$0xff]
    %v4566 = vld [vmem:[%s5 + $0x540] sm:$0xff]
    %v4567 = vld [vmem:[%s5 + $0x548] sm:$0xff]
    %v4568 = vld [vmem:[%s5 + $0x550] sm:$0xff]
    %v4569 = vld [vmem:[%s5 + $0x558] sm:$0xff]
    %v4570 = vld [vmem:[%s5 + $0x560] sm:$0xff]
    %v4571 = vld [vmem:[%s5 + $0x568] sm:$0xff]
    %v4572 = vld [vmem:[%s5 + $0x570] sm:$0xff]
    %v4573 = vld [vmem:[%s5 + $0x578] sm:$0xff]
    %v4574 = vld [vmem:[%s5 + $0x580] sm:$0xff]
    %v4575 = vld [vmem:[%s5 + $0x588] sm:$0xff]
    %v4576 = vld [vmem:[%s5 + $0x590] sm:$0xff]
    %v4577 = vld [vmem:[%s5 + $0x598] sm:$0xff]
    %v4578 = vld [vmem:[%s5 + $0x5a0] sm:$0xff]
    %v4579 = vld [vmem:[%s5 + $0x5a8] sm:$0xff]
    %v4580 = vld [vmem:[%s5 + $0x5b0] sm:$0xff]
    %v4581 = vld [vmem:[%s5 + $0x5b8] sm:$0xff]
    %v4582 = vld [vmem:[%s5 + $0x5c0] sm:$0xff]
    %v4583 = vld [vmem:[%s5 + $0x5c8] sm:$0xff]
    %v4584 = vld [vmem:[%s5 + $0x5d0] sm:$0xff]
    %v4585 = vld [vmem:[%s5 + $0x5d8] sm:$0xff]
    %v4586 = vld [vmem:[%s5 + $0x5e0] sm:$0xff]
    %v4587 = vld [vmem:[%s5 + $0x5e8] sm:$0xff]
    %v4588 = vld [vmem:[%s5 + $0x5f0] sm:$0xff]
    %v4589 = vld [vmem:[%s5 + $0x5f8] sm:$0xff]
    %v4590 = vld [vmem:[%s5 + $0x600] sm:$0xff]
    %v4591 = vld [vmem:[%s5 + $0x608] sm:$0xff]
    %v4592 = vld [vmem:[%s5 + $0x610] sm:$0xff]
    %v4593 = vld [vmem:[%s5 + $0x618] sm:$0xff]
    %v4594 = vld [vmem:[%s5 + $0x620] sm:$0xff]
    %v4595 = vld [vmem:[%s5 + $0x628] sm:$0xff]
    %v4596 = vld [vmem:[%s5 + $0x630] sm:$0xff]
    %v4597 = vld [vmem:[%s5 + $0x638] sm:$0xff]
    %v4598 = vld [vmem:[%s5 + $0x640] sm:$0xff]
    %v4599 = vld [vmem:[%s5 + $0x648] sm:$0xff]
    %v4600 = vld [vmem:[%s5 + $0x650] sm:$0xff]
    %v4601 = vld [vmem:[%s5 + $0x658] sm:$0xff]
    %v4602 = vld [vmem:[%s5 + $0x660] sm:$0xff]
    %v4603 = vld [vmem:[%s5 + $0x668] sm:$0xff]
    %v4604 = vld [vmem:[%s5 + $0x670] sm:$0xff]
    %v4605 = vld [vmem:[%s5 + $0x678] sm:$0xff]
    %v4606 = vld [vmem:[%s5 + $0x680] sm:$0xff]
    %v4607 = vld [vmem:[%s5 + $0x688] sm:$0xff]
    %v4608 = vld [vmem:[%s5 + $0x690] sm:$0xff]
    %v4609 = vld [vmem:[%s5 + $0x698] sm:$0xff]
    %v4610 = vld [vmem:[%s5 + $0x6a0] sm:$0xff]
    %v4611 = vld [vmem:[%s5 + $0x6a8] sm:$0xff]
    %v4612 = vld [vmem:[%s5 + $0x6b0] sm:$0xff]
    %v4613 = vld [vmem:[%s5 + $0x6b8] sm:$0xff]
    %v4614 = vld [vmem:[%s5 + $0x6c0] sm:$0xff]
    %v4615 = vld [vmem:[%s5 + $0x6c8] sm:$0xff]
    %v4616 = vld [vmem:[%s5 + $0x6d0] sm:$0xff]
    %v4617 = vld [vmem:[%s5 + $0x6d8] sm:$0xff]
    %v4618 = vld [vmem:[%s5 + $0x6e0] sm:$0xff]
    %v4619 = vld [vmem:[%s5 + $0x6e8] sm:$0xff]
    %v4620 = vld [vmem:[%s5 + $0x6f0] sm:$0xff]
    %v4621 = vld [vmem:[%s5 + $0x6f8] sm:$0xff]
    %v4622 = vld [vmem:[%s5 + $0x700] sm:$0xff]
    %v4623 = vld [vmem:[%s5 + $0x708] sm:$0xff]
    %v4624 = vld [vmem:[%s5 + $0x710] sm:$0xff]
    %v4625 = vld [vmem:[%s5 + $0x718] sm:$0xff]
    %v4626 = vld [vmem:[%s5 + $0x720] sm:$0xff]
    %v4627 = vld [vmem:[%s5 + $0x728] sm:$0xff]
    %v4628 = vld [vmem:[%s5 + $0x730] sm:$0xff]
    %v4629 = vld [vmem:[%s5 + $0x738] sm:$0xff]
    %v4630 = vld [vmem:[%s5 + $0x740] sm:$0xff]
    %v4631 = vld [vmem:[%s5 + $0x748] sm:$0xff]
    %v4632 = vld [vmem:[%s5 + $0x750] sm:$0xff]
    %v4633 = vld [vmem:[%s5 + $0x758] sm:$0xff]
    %v4634 = vld [vmem:[%s5 + $0x760] sm:$0xff]
    %v4635 = vld [vmem:[%s5 + $0x768] sm:$0xff]
    %v4636 = vld [vmem:[%s5 + $0x770] sm:$0xff]
    %v4637 = vld [vmem:[%s5 + $0x778] sm:$0xff]
    %v4638 = vld [vmem:[%s5 + $0x780] sm:$0xff]
    %v4639 = vld [vmem:[%s5 + $0x788] sm:$0xff]
    %v4640 = vld [vmem:[%s5 + $0x790] sm:$0xff]
    %v4641 = vld [vmem:[%s5 + $0x798] sm:$0xff]
    %v4642 = vld [vmem:[%s5 + $0x7a0] sm:$0xff]
    %v4643 = vld [vmem:[%s5 + $0x7a8] sm:$0xff]
    %v4644 = vld [vmem:[%s5 + $0x7b0] sm:$0xff]
    %v4645 = vld [vmem:[%s5 + $0x7b8] sm:$0xff]
    %v4646 = vld [vmem:[%s5 + $0x7c0] sm:$0xff]
    %v4647 = vld [vmem:[%s5 + $0x7c8] sm:$0xff]
    %v4648 = vld [vmem:[%s5 + $0x7d0] sm:$0xff]
    %v4649 = vld [vmem:[%s5 + $0x7d8] sm:$0xff]
    %v4650 = vld [vmem:[%s5 + $0x7e0] sm:$0xff]
    %v4651 = vld [vmem:[%s5 + $0x7e8] sm:$0xff]
    %v4652 = vld [vmem:[%s5 + $0x7f0] sm:$0xff]
    %v4653 = vld [vmem:[%s5 + $0x7f8] sm:$0xff]
    %v4654 = vld [vmem:[%s5 + $0x800] sm:$0xff]
    %v4655 = vld [vmem:[%s5 + $0x808] sm:$0xff]
    %v4656 = vld [vmem:[%s5 + $0x810] sm:$0xff]
    %v4657 = vld [vmem:[%s5 + $0x818] sm:$0xff]
    %v4658 = vld [vmem:[%s5 + $0x820] sm:$0xff]
    %v4659 = vld [vmem:[%s5 + $0x828] sm:$0xff]
    %v4660 = vld [vmem:[%s5 + $0x830] sm:$0xff]
    %v4661 = vld [vmem:[%s5 + $0x838] sm:$0xff]
    %v4662 = vld [vmem:[%s5 + $0x840] sm:$0xff]
    %v4663 = vld [vmem:[%s5 + $0x848] sm:$0xff]
    %v4664 = vld [vmem:[%s5 + $0x850] sm:$0xff]
    %v4665 = vld [vmem:[%s5 + $0x858] sm:$0xff]
    %v4666 = vld [vmem:[%s5 + $0x860] sm:$0xff]
    %v4667 = vld [vmem:[%s5 + $0x868] sm:$0xff]
    %v4668 = vld [vmem:[%s5 + $0x870] sm:$0xff]
    %v4669 = vld [vmem:[%s5 + $0x878] sm:$0xff]
    %v4670 = vld [vmem:[%s5 + $0x880] sm:$0xff]
    %v4671 = vld [vmem:[%s5 + $0x888] sm:$0xff]
    %v4672 = vld [vmem:[%s5 + $0x890] sm:$0xff]
    %v4673 = vld [vmem:[%s5 + $0x898] sm:$0xff]
    %v4674 = vld [vmem:[%s5 + $0x8a0] sm:$0xff]
    %v4675 = vld [vmem:[%s5 + $0x8a8] sm:$0xff]
    %v4676 = vld [vmem:[%s5 + $0x8b0] sm:$0xff]
    %v4677 = vld [vmem:[%s5 + $0x8b8] sm:$0xff]
    %v4678 = vld [vmem:[%s5 + $0x8c0] sm:$0xff]
    %v4679 = vld [vmem:[%s5 + $0x8c8] sm:$0xff]
    %v4680 = vld [vmem:[%s5 + $0x8d0] sm:$0xff]
    %v4681 = vld [vmem:[%s5 + $0x8d8] sm:$0xff]
    %v4682 = vld [vmem:[%s5 + $0x8e0] sm:$0xff]
    %v4683 = vld [vmem:[%s5 + $0x8e8] sm:$0xff]
    %v4684 = vld [vmem:[%s5 + $0x8f0] sm:$0xff]
    %v4685 = vld [vmem:[%s5 + $0x8f8] sm:$0xff]
    %v4686 = vld [vmem:[%s5 + $0x900] sm:$0xff]
    %v4687 = vld [vmem:[%s5 + $0x908] sm:$0xff]
    %v4688 = vld [vmem:[%s5 + $0x910] sm:$0xff]
    %v4689 = vld [vmem:[%s5 + $0x918] sm:$0xff]
    %v4690 = vld [vmem:[%s5 + $0x920] sm:$0xff]
    %v4691 = vld [vmem:[%s5 + $0x928] sm:$0xff]
    %v4692 = vld [vmem:[%s5 + $0x930] sm:$0xff]
    %v4693 = vld [vmem:[%s5 + $0x938] sm:$0xff]
    %v4694 = vld [vmem:[%s5 + $0x940] sm:$0xff]
    %v4695 = vld [vmem:[%s5 + $0x948] sm:$0xff]
    %v4696 = vld [vmem:[%s5 + $0x950] sm:$0xff]
    %v4697 = vld [vmem:[%s5 + $0x958] sm:$0xff]
    %v4698 = vld [vmem:[%s5 + $0x960] sm:$0xff]
    %v4699 = vld [vmem:[%s5 + $0x968] sm:$0xff]
    %v4700 = vld [vmem:[%s5 + $0x970] sm:$0xff]
    %v4701 = vld [vmem:[%s5 + $0x978] sm:$0xff]
    %v4702 = vld [vmem:[%s5 + $0x980] sm:$0xff]
    %v4703 = vld [vmem:[%s5 + $0x988] sm:$0xff]
    %v4704 = vld [vmem:[%s5 + $0x990] sm:$0xff]
    %v4705 = vld [vmem:[%s5 + $0x998] sm:$0xff]
    %v4706 = vld [vmem:[%s5 + $0x9a0] sm:$0xff]
    %v4707 = vld [vmem:[%s5 + $0x9a8] sm:$0xff]
    %v4708 = vld [vmem:[%s5 + $0x9b0] sm:$0xff]
    %v4709 = vld [vmem:[%s5 + $0x9b8] sm:$0xff]
    %v4710 = vld [vmem:[%s5 + $0x9c0] sm:$0xff]
    %v4711 = vld [vmem:[%s5 + $0x9c8] sm:$0xff]
    %v4712 = vld [vmem:[%s5 + $0x9d0] sm:$0xff]
    %v4713 = vld [vmem:[%s5 + $0x9d8] sm:$0xff]
    %v4714 = vld [vmem:[%s5 + $0x9e0] sm:$0xff]
    %v4715 = vld [vmem:[%s5 + $0x9e8] sm:$0xff]
    %v4716 = vld [vmem:[%s5 + $0x9f0] sm:$0xff]
    %v4717 = vld [vmem:[%s5 + $0x9f8] sm:$0xff]
    %v4718 = vld [vmem:[%s6] sm:$0xf]
    %v4720 = vlaneseq
    %v4721 = vshrl.u32 %v4720, 7
    %v4722 = vsub.s32 0, %v4721
    %v4723 = vrot.slane %v4718, %v4722
    %v4724 = vlaneseq
    %v4725 = vshrl.u32 %v4724, 7
    %v4726 = vsub.s32 1, %v4725
    %v4727 = vrot.slane %v4718, %v4726
    %v4728 = vlaneseq
    %v4729 = vshrl.u32 %v4728, 7
    %v4730 = vsub.s32 2, %v4729
    %v4731 = vrot.slane %v4718, %v4730
    %v4732 = vlaneseq
    %v4733 = vshrl.u32 %v4732, 7
    %v4734 = vsub.s32 3, %v4733
    %v4735 = vrot.slane %v4718, %v4734
    %v5060 = vunpack.c.l.b16 %v4398
    %v5061 = vunpack.c.h.b16 %v4398
    %v5062 = vunpack.c.l.b16 %v4399
    %v5063 = vunpack.c.h.b16 %v4399
    %v5064 = vunpack.c.l.b16 %v4400
    %v5065 = vunpack.c.h.b16 %v4400
    %v5066 = vunpack.c.l.b16 %v4401
    %v5067 = vunpack.c.h.b16 %v4401
    %v5068 = vunpack.c.l.b16 %v4402
    %v5069 = vunpack.c.h.b16 %v4402
    %v5070 = vunpack.c.l.b16 %v4403
    %v5071 = vunpack.c.h.b16 %v4403
    %v5072 = vunpack.c.l.b16 %v4404
    %v5073 = vunpack.c.h.b16 %v4404
    %v5074 = vunpack.c.l.b16 %v4405
    %v5075 = vunpack.c.h.b16 %v4405
    %v5076 = vunpack.c.l.b16 %v4406
    %v5077 = vunpack.c.h.b16 %v4406
    %v5078 = vunpack.c.l.b16 %v4407
    %v5079 = vunpack.c.h.b16 %v4407
    %v5080 = vunpack.c.l.b16 %v4408
    %v5081 = vunpack.c.h.b16 %v4408
    %v5082 = vunpack.c.l.b16 %v4409
    %v5083 = vunpack.c.h.b16 %v4409
    %v5084 = vunpack.c.l.b16 %v4410
    %v5085 = vunpack.c.h.b16 %v4410
    %v5086 = vunpack.c.l.b16 %v4411
    %v5087 = vunpack.c.h.b16 %v4411
    %v5088 = vunpack.c.l.b16 %v4412
    %v5089 = vunpack.c.h.b16 %v4412
    %v5090 = vunpack.c.l.b16 %v4413
    %v5091 = vunpack.c.h.b16 %v4413
    %v5092 = vunpack.c.l.b16 %v4414
    %v5093 = vunpack.c.h.b16 %v4414
    %v5094 = vunpack.c.l.b16 %v4415
    %v5095 = vunpack.c.h.b16 %v4415
    %v5096 = vunpack.c.l.b16 %v4416
    %v5097 = vunpack.c.h.b16 %v4416
    %v5098 = vunpack.c.l.b16 %v4417
    %v5099 = vunpack.c.h.b16 %v4417
    %v5100 = vunpack.c.l.b16 %v4418
    %v5101 = vunpack.c.h.b16 %v4418
    %v5102 = vunpack.c.l.b16 %v4419
    %v5103 = vunpack.c.h.b16 %v4419
    %v5104 = vunpack.c.l.b16 %v4420
    %v5105 = vunpack.c.h.b16 %v4420
    %v5106 = vunpack.c.l.b16 %v4421
    %v5107 = vunpack.c.h.b16 %v4421
    %v5108 = vunpack.c.l.b16 %v4422
    %v5109 = vunpack.c.h.b16 %v4422
    %v5110 = vunpack.c.l.b16 %v4423
    %v5111 = vunpack.c.h.b16 %v4423
    %v5112 = vunpack.c.l.b16 %v4424
    %v5113 = vunpack.c.h.b16 %v4424
    %v5114 = vunpack.c.l.b16 %v4425
    %v5115 = vunpack.c.h.b16 %v4425
    %v5116 = vunpack.c.l.b16 %v4426
    %v5117 = vunpack.c.h.b16 %v4426
    %v5118 = vunpack.c.l.b16 %v4427
    %v5119 = vunpack.c.h.b16 %v4427
    %v5120 = vunpack.c.l.b16 %v4428
    %v5121 = vunpack.c.h.b16 %v4428
    %v5122 = vunpack.c.l.b16 %v4429
    %v5123 = vunpack.c.h.b16 %v4429
    %v5124 = vunpack.c.l.b16 %v4430
    %v5125 = vunpack.c.h.b16 %v4430
    %v5126 = vunpack.c.l.b16 %v4431
    %v5127 = vunpack.c.h.b16 %v4431
    %v5128 = vunpack.c.l.b16 %v4432
    %v5129 = vunpack.c.h.b16 %v4432
    %v5130 = vunpack.c.l.b16 %v4433
    %v5131 = vunpack.c.h.b16 %v4433
    %v5132 = vunpack.c.l.b16 %v4434
    %v5133 = vunpack.c.h.b16 %v4434
    %v5134 = vunpack.c.l.b16 %v4435
    %v5135 = vunpack.c.h.b16 %v4435
    %v5136 = vunpack.c.l.b16 %v4436
    %v5137 = vunpack.c.h.b16 %v4436
    %v5138 = vunpack.c.l.b16 %v4437
    %v5139 = vunpack.c.h.b16 %v4437
    %v5140 = vunpack.c.l.b16 %v4438
    %v5141 = vunpack.c.h.b16 %v4438
    %v5142 = vunpack.c.l.b16 %v4439
    %v5143 = vunpack.c.h.b16 %v4439
    %v5144 = vunpack.c.l.b16 %v4440
    %v5145 = vunpack.c.h.b16 %v4440
    %v5146 = vunpack.c.l.b16 %v4441
    %v5147 = vunpack.c.h.b16 %v4441
    %v5148 = vunpack.c.l.b16 %v4442
    %v5149 = vunpack.c.h.b16 %v4442
    %v5150 = vunpack.c.l.b16 %v4443
    %v5151 = vunpack.c.h.b16 %v4443
    %v5152 = vunpack.c.l.b16 %v4444
    %v5153 = vunpack.c.h.b16 %v4444
    %v5154 = vunpack.c.l.b16 %v4445
    %v5155 = vunpack.c.h.b16 %v4445
    %v5156 = vunpack.c.l.b16 %v4446
    %v5157 = vunpack.c.h.b16 %v4446
    %v5158 = vunpack.c.l.b16 %v4447
    %v5159 = vunpack.c.h.b16 %v4447
    %v5160 = vunpack.c.l.b16 %v4448
    %v5161 = vunpack.c.h.b16 %v4448
    %v5162 = vunpack.c.l.b16 %v4449
    %v5163 = vunpack.c.h.b16 %v4449
    %v5164 = vunpack.c.l.b16 %v4450
    %v5165 = vunpack.c.h.b16 %v4450
    %v5166 = vunpack.c.l.b16 %v4451
    %v5167 = vunpack.c.h.b16 %v4451
    %v5168 = vunpack.c.l.b16 %v4452
    %v5169 = vunpack.c.h.b16 %v4452
    %v5170 = vunpack.c.l.b16 %v4453
    %v5171 = vunpack.c.h.b16 %v4453
    %v5172 = vunpack.c.l.b16 %v4454
    %v5173 = vunpack.c.h.b16 %v4454
    %v5174 = vunpack.c.l.b16 %v4455
    %v5175 = vunpack.c.h.b16 %v4455
    %v5176 = vunpack.c.l.b16 %v4456
    %v5177 = vunpack.c.h.b16 %v4456
    %v5178 = vunpack.c.l.b16 %v4457
    %v5179 = vunpack.c.h.b16 %v4457
    %v5180 = vunpack.c.l.b16 %v4458
    %v5181 = vunpack.c.h.b16 %v4458
    %v5182 = vunpack.c.l.b16 %v4459
    %v5183 = vunpack.c.h.b16 %v4459
    %v5184 = vunpack.c.l.b16 %v4460
    %v5185 = vunpack.c.h.b16 %v4460
    %v5186 = vunpack.c.l.b16 %v4461
    %v5187 = vunpack.c.h.b16 %v4461
    %v5188 = vunpack.c.l.b16 %v4462
    %v5189 = vunpack.c.h.b16 %v4462
    %v5190 = vunpack.c.l.b16 %v4463
    %v5191 = vunpack.c.h.b16 %v4463
    %v5192 = vunpack.c.l.b16 %v4464
    %v5193 = vunpack.c.h.b16 %v4464
    %v5194 = vunpack.c.l.b16 %v4465
    %v5195 = vunpack.c.h.b16 %v4465
    %v5196 = vunpack.c.l.b16 %v4466
    %v5197 = vunpack.c.h.b16 %v4466
    %v5198 = vunpack.c.l.b16 %v4467
    %v5199 = vunpack.c.h.b16 %v4467
    %v5200 = vunpack.c.l.b16 %v4468
    %v5201 = vunpack.c.h.b16 %v4468
    %v5202 = vunpack.c.l.b16 %v4469
    %v5203 = vunpack.c.h.b16 %v4469
    %v5204 = vunpack.c.l.b16 %v4470
    %v5205 = vunpack.c.h.b16 %v4470
    %v5206 = vunpack.c.l.b16 %v4471
    %v5207 = vunpack.c.h.b16 %v4471
    %v5208 = vunpack.c.l.b16 %v4472
    %v5209 = vunpack.c.h.b16 %v4472
    %v5210 = vunpack.c.l.b16 %v4473
    %v5211 = vunpack.c.h.b16 %v4473
    %v5212 = vunpack.c.l.b16 %v4474
    %v5213 = vunpack.c.h.b16 %v4474
    %v5214 = vunpack.c.l.b16 %v4475
    %v5215 = vunpack.c.h.b16 %v4475
    %v5216 = vunpack.c.l.b16 %v4476
    %v5217 = vunpack.c.h.b16 %v4476
    %v5218 = vunpack.c.l.b16 %v4477
    %v5219 = vunpack.c.h.b16 %v4477
    %v5220 = vunpack.c.l.b16 %v4478
    %v5221 = vunpack.c.h.b16 %v4478
    %v5222 = vunpack.c.l.b16 %v4479
    %v5223 = vunpack.c.h.b16 %v4479
    %v5224 = vunpack.c.l.b16 %v4480
    %v5225 = vunpack.c.h.b16 %v4480
    %v5226 = vunpack.c.l.b16 %v4481
    %v5227 = vunpack.c.h.b16 %v4481
    %v5228 = vunpack.c.l.b16 %v4482
    %v5229 = vunpack.c.h.b16 %v4482
    %v5230 = vunpack.c.l.b16 %v4483
    %v5231 = vunpack.c.h.b16 %v4483
    %v5232 = vunpack.c.l.b16 %v4484
    %v5233 = vunpack.c.h.b16 %v4484
    %v5234 = vunpack.c.l.b16 %v4485
    %v5235 = vunpack.c.h.b16 %v4485
    %v5236 = vunpack.c.l.b16 %v4486
    %v5237 = vunpack.c.h.b16 %v4486
    %v5238 = vunpack.c.l.b16 %v4487
    %v5239 = vunpack.c.h.b16 %v4487
    %v5240 = vunpack.c.l.b16 %v4488
    %v5241 = vunpack.c.h.b16 %v4488
    %v5242 = vunpack.c.l.b16 %v4489
    %v5243 = vunpack.c.h.b16 %v4489
    %v5244 = vunpack.c.l.b16 %v4490
    %v5245 = vunpack.c.h.b16 %v4490
    %v5246 = vunpack.c.l.b16 %v4491
    %v5247 = vunpack.c.h.b16 %v4491
    %v5248 = vunpack.c.l.b16 %v4492
    %v5249 = vunpack.c.h.b16 %v4492
    %v5250 = vunpack.c.l.b16 %v4493
    %v5251 = vunpack.c.h.b16 %v4493
    %v5252 = vunpack.c.l.b16 %v4494
    %v5253 = vunpack.c.h.b16 %v4494
    %v5254 = vunpack.c.l.b16 %v4495
    %v5255 = vunpack.c.h.b16 %v4495
    %v5256 = vunpack.c.l.b16 %v4496
    %v5257 = vunpack.c.h.b16 %v4496
    %v5258 = vunpack.c.l.b16 %v4497
    %v5259 = vunpack.c.h.b16 %v4497
    %v5260 = vunpack.c.l.b16 %v4498
    %v5261 = vunpack.c.h.b16 %v4498
    %v5262 = vunpack.c.l.b16 %v4499
    %v5263 = vunpack.c.h.b16 %v4499
    %v5264 = vunpack.c.l.b16 %v4500
    %v5265 = vunpack.c.h.b16 %v4500
    %v5266 = vunpack.c.l.b16 %v4501
    %v5267 = vunpack.c.h.b16 %v4501
    %v5268 = vunpack.c.l.b16 %v4502
    %v5269 = vunpack.c.h.b16 %v4502
    %v5270 = vunpack.c.l.b16 %v4503
    %v5271 = vunpack.c.h.b16 %v4503
    %v5272 = vunpack.c.l.b16 %v4504
    %v5273 = vunpack.c.h.b16 %v4504
    %v5274 = vunpack.c.l.b16 %v4505
    %v5275 = vunpack.c.h.b16 %v4505
    %v5276 = vunpack.c.l.b16 %v4506
    %v5277 = vunpack.c.h.b16 %v4506
    %v5278 = vunpack.c.l.b16 %v4507
    %v5279 = vunpack.c.h.b16 %v4507
    %v5280 = vunpack.c.l.b16 %v4508
    %v5281 = vunpack.c.h.b16 %v4508
    %v5282 = vunpack.c.l.b16 %v4509
    %v5283 = vunpack.c.h.b16 %v4509
    %v5284 = vunpack.c.l.b16 %v4510
    %v5285 = vunpack.c.h.b16 %v4510
    %v5286 = vunpack.c.l.b16 %v4511
    %v5287 = vunpack.c.h.b16 %v4511
    %v5288 = vunpack.c.l.b16 %v4512
    %v5289 = vunpack.c.h.b16 %v4512
    %v5290 = vunpack.c.l.b16 %v4513
    %v5291 = vunpack.c.h.b16 %v4513
    %v5292 = vunpack.c.l.b16 %v4514
    %v5293 = vunpack.c.h.b16 %v4514
    %v5294 = vunpack.c.l.b16 %v4515
    %v5295 = vunpack.c.h.b16 %v4515
    %v5296 = vunpack.c.l.b16 %v4516
    %v5297 = vunpack.c.h.b16 %v4516
    %v5298 = vunpack.c.l.b16 %v4517
    %v5299 = vunpack.c.h.b16 %v4517
    %v5300 = vunpack.c.l.b16 %v4518
    %v5301 = vunpack.c.h.b16 %v4518
    %v5302 = vunpack.c.l.b16 %v4519
    %v5303 = vunpack.c.h.b16 %v4519
    %v5304 = vunpack.c.l.b16 %v4520
    %v5305 = vunpack.c.h.b16 %v4520
    %v5306 = vunpack.c.l.b16 %v4521
    %v5307 = vunpack.c.h.b16 %v4521
    %v5308 = vunpack.c.l.b16 %v4522
    %v5309 = vunpack.c.h.b16 %v4522
    %v5310 = vunpack.c.l.b16 %v4523
    %v5311 = vunpack.c.h.b16 %v4523
    %v5312 = vunpack.c.l.b16 %v4524
    %v5313 = vunpack.c.h.b16 %v4524
    %v5314 = vunpack.c.l.b16 %v4525
    %v5315 = vunpack.c.h.b16 %v4525
    %v5316 = vunpack.c.l.b16 %v4526
    %v5317 = vunpack.c.h.b16 %v4526
    %v5318 = vunpack.c.l.b16 %v4527
    %v5319 = vunpack.c.h.b16 %v4527
    %v5320 = vunpack.c.l.b16 %v4528
    %v5321 = vunpack.c.h.b16 %v4528
    %v5322 = vunpack.c.l.b16 %v4529
    %v5323 = vunpack.c.h.b16 %v4529
    %v5324 = vunpack.c.l.b16 %v4530
    %v5325 = vunpack.c.h.b16 %v4530
    %v5326 = vunpack.c.l.b16 %v4531
    %v5327 = vunpack.c.h.b16 %v4531
    %v5328 = vunpack.c.l.b16 %v4532
    %v5329 = vunpack.c.h.b16 %v4532
    %v5330 = vunpack.c.l.b16 %v4533
    %v5331 = vunpack.c.h.b16 %v4533
    %v5332 = vunpack.c.l.b16 %v4534
    %v5333 = vunpack.c.h.b16 %v4534
    %v5334 = vunpack.c.l.b16 %v4535
    %v5335 = vunpack.c.h.b16 %v4535
    %v5336 = vunpack.c.l.b16 %v4536
    %v5337 = vunpack.c.h.b16 %v4536
    %v5338 = vunpack.c.l.b16 %v4537
    %v5339 = vunpack.c.h.b16 %v4537
    %v5340 = vunpack.c.l.b16 %v4538
    %v5341 = vunpack.c.h.b16 %v4538
    %v5342 = vunpack.c.l.b16 %v4539
    %v5343 = vunpack.c.h.b16 %v4539
    %v5344 = vunpack.c.l.b16 %v4540
    %v5345 = vunpack.c.h.b16 %v4540
    %v5346 = vunpack.c.l.b16 %v4541
    %v5347 = vunpack.c.h.b16 %v4541
    %v5348 = vunpack.c.l.b16 %v4542
    %v5349 = vunpack.c.h.b16 %v4542
    %v5350 = vunpack.c.l.b16 %v4543
    %v5351 = vunpack.c.h.b16 %v4543
    %v5352 = vunpack.c.l.b16 %v4544
    %v5353 = vunpack.c.h.b16 %v4544
    %v5354 = vunpack.c.l.b16 %v4545
    %v5355 = vunpack.c.h.b16 %v4545
    %v5356 = vunpack.c.l.b16 %v4546
    %v5357 = vunpack.c.h.b16 %v4546
    %v5358 = vunpack.c.l.b16 %v4547
    %v5359 = vunpack.c.h.b16 %v4547
    %v5360 = vunpack.c.l.b16 %v4548
    %v5361 = vunpack.c.h.b16 %v4548
    %v5362 = vunpack.c.l.b16 %v4549
    %v5363 = vunpack.c.h.b16 %v4549
    %v5364 = vunpack.c.l.b16 %v4550
    %v5365 = vunpack.c.h.b16 %v4550
    %v5366 = vunpack.c.l.b16 %v4551
    %v5367 = vunpack.c.h.b16 %v4551
    %v5368 = vunpack.c.l.b16 %v4552
    %v5369 = vunpack.c.h.b16 %v4552
    %v5370 = vunpack.c.l.b16 %v4553
    %v5371 = vunpack.c.h.b16 %v4553
    %v5372 = vunpack.c.l.b16 %v4554
    %v5373 = vunpack.c.h.b16 %v4554
    %v5374 = vunpack.c.l.b16 %v4555
    %v5375 = vunpack.c.h.b16 %v4555
    %v5376 = vunpack.c.l.b16 %v4556
    %v5377 = vunpack.c.h.b16 %v4556
    %v5378 = vunpack.c.l.b16 %v4557
    %v5379 = vunpack.c.h.b16 %v4557
    %v5380 = vunpack.c.l.b16 %v4558
    %v5381 = vunpack.c.h.b16 %v4558
    %v5382 = vunpack.c.l.b16 %v4559
    %v5383 = vunpack.c.h.b16 %v4559
    %v5384 = vunpack.c.l.b16 %v4560
    %v5385 = vunpack.c.h.b16 %v4560
    %v5386 = vunpack.c.l.b16 %v4561
    %v5387 = vunpack.c.h.b16 %v4561
    %v5388 = vunpack.c.l.b16 %v4562
    %v5389 = vunpack.c.h.b16 %v4562
    %v5390 = vunpack.c.l.b16 %v4563
    %v5391 = vunpack.c.h.b16 %v4563
    %v5392 = vunpack.c.l.b16 %v4564
    %v5393 = vunpack.c.h.b16 %v4564
    %v5394 = vunpack.c.l.b16 %v4565
    %v5395 = vunpack.c.h.b16 %v4565
    %v5396 = vunpack.c.l.b16 %v4566
    %v5397 = vunpack.c.h.b16 %v4566
    %v5398 = vunpack.c.l.b16 %v4567
    %v5399 = vunpack.c.h.b16 %v4567
    %v5400 = vunpack.c.l.b16 %v4568
    %v5401 = vunpack.c.h.b16 %v4568
    %v5402 = vunpack.c.l.b16 %v4569
    %v5403 = vunpack.c.h.b16 %v4569
    %v5404 = vunpack.c.l.b16 %v4570
    %v5405 = vunpack.c.h.b16 %v4570
    %v5406 = vunpack.c.l.b16 %v4571
    %v5407 = vunpack.c.h.b16 %v4571
    %v5408 = vunpack.c.l.b16 %v4572
    %v5409 = vunpack.c.h.b16 %v4572
    %v5410 = vunpack.c.l.b16 %v4573
    %v5411 = vunpack.c.h.b16 %v4573
    %v5412 = vunpack.c.l.b16 %v4574
    %v5413 = vunpack.c.h.b16 %v4574
    %v5414 = vunpack.c.l.b16 %v4575
    %v5415 = vunpack.c.h.b16 %v4575
    %v5416 = vunpack.c.l.b16 %v4576
    %v5417 = vunpack.c.h.b16 %v4576
    %v5418 = vunpack.c.l.b16 %v4577
    %v5419 = vunpack.c.h.b16 %v4577
    %v5420 = vunpack.c.l.b16 %v4578
    %v5421 = vunpack.c.h.b16 %v4578
    %v5422 = vunpack.c.l.b16 %v4579
    %v5423 = vunpack.c.h.b16 %v4579
    %v5424 = vunpack.c.l.b16 %v4580
    %v5425 = vunpack.c.h.b16 %v4580
    %v5426 = vunpack.c.l.b16 %v4581
    %v5427 = vunpack.c.h.b16 %v4581
    %v5428 = vunpack.c.l.b16 %v4582
    %v5429 = vunpack.c.h.b16 %v4582
    %v5430 = vunpack.c.l.b16 %v4583
    %v5431 = vunpack.c.h.b16 %v4583
    %v5432 = vunpack.c.l.b16 %v4584
    %v5433 = vunpack.c.h.b16 %v4584
    %v5434 = vunpack.c.l.b16 %v4585
    %v5435 = vunpack.c.h.b16 %v4585
    %v5436 = vunpack.c.l.b16 %v4586
    %v5437 = vunpack.c.h.b16 %v4586
    %v5438 = vunpack.c.l.b16 %v4587
    %v5439 = vunpack.c.h.b16 %v4587
    %v5440 = vunpack.c.l.b16 %v4588
    %v5441 = vunpack.c.h.b16 %v4588
    %v5442 = vunpack.c.l.b16 %v4589
    %v5443 = vunpack.c.h.b16 %v4589
    %v5444 = vunpack.c.l.b16 %v4590
    %v5445 = vunpack.c.h.b16 %v4590
    %v5446 = vunpack.c.l.b16 %v4591
    %v5447 = vunpack.c.h.b16 %v4591
    %v5448 = vunpack.c.l.b16 %v4592
    %v5449 = vunpack.c.h.b16 %v4592
    %v5450 = vunpack.c.l.b16 %v4593
    %v5451 = vunpack.c.h.b16 %v4593
    %v5452 = vunpack.c.l.b16 %v4594
    %v5453 = vunpack.c.h.b16 %v4594
    %v5454 = vunpack.c.l.b16 %v4595
    %v5455 = vunpack.c.h.b16 %v4595
    %v5456 = vunpack.c.l.b16 %v4596
    %v5457 = vunpack.c.h.b16 %v4596
    %v5458 = vunpack.c.l.b16 %v4597
    %v5459 = vunpack.c.h.b16 %v4597
    %v5460 = vunpack.c.l.b16 %v4598
    %v5461 = vunpack.c.h.b16 %v4598
    %v5462 = vunpack.c.l.b16 %v4599
    %v5463 = vunpack.c.h.b16 %v4599
    %v5464 = vunpack.c.l.b16 %v4600
    %v5465 = vunpack.c.h.b16 %v4600
    %v5466 = vunpack.c.l.b16 %v4601
    %v5467 = vunpack.c.h.b16 %v4601
    %v5468 = vunpack.c.l.b16 %v4602
    %v5469 = vunpack.c.h.b16 %v4602
    %v5470 = vunpack.c.l.b16 %v4603
    %v5471 = vunpack.c.h.b16 %v4603
    %v5472 = vunpack.c.l.b16 %v4604
    %v5473 = vunpack.c.h.b16 %v4604
    %v5474 = vunpack.c.l.b16 %v4605
    %v5475 = vunpack.c.h.b16 %v4605
    %v5476 = vunpack.c.l.b16 %v4606
    %v5477 = vunpack.c.h.b16 %v4606
    %v5478 = vunpack.c.l.b16 %v4607
    %v5479 = vunpack.c.h.b16 %v4607
    %v5480 = vunpack.c.l.b16 %v4608
    %v5481 = vunpack.c.h.b16 %v4608
    %v5482 = vunpack.c.l.b16 %v4609
    %v5483 = vunpack.c.h.b16 %v4609
    %v5484 = vunpack.c.l.b16 %v4610
    %v5485 = vunpack.c.h.b16 %v4610
    %v5486 = vunpack.c.l.b16 %v4611
    %v5487 = vunpack.c.h.b16 %v4611
    %v5488 = vunpack.c.l.b16 %v4612
    %v5489 = vunpack.c.h.b16 %v4612
    %v5490 = vunpack.c.l.b16 %v4613
    %v5491 = vunpack.c.h.b16 %v4613
    %v5492 = vunpack.c.l.b16 %v4614
    %v5493 = vunpack.c.h.b16 %v4614
    %v5494 = vunpack.c.l.b16 %v4615
    %v5495 = vunpack.c.h.b16 %v4615
    %v5496 = vunpack.c.l.b16 %v4616
    %v5497 = vunpack.c.h.b16 %v4616
    %v5498 = vunpack.c.l.b16 %v4617
    %v5499 = vunpack.c.h.b16 %v4617
    %v5500 = vunpack.c.l.b16 %v4618
    %v5501 = vunpack.c.h.b16 %v4618
    %v5502 = vunpack.c.l.b16 %v4619
    %v5503 = vunpack.c.h.b16 %v4619
    %v5504 = vunpack.c.l.b16 %v4620
    %v5505 = vunpack.c.h.b16 %v4620
    %v5506 = vunpack.c.l.b16 %v4621
    %v5507 = vunpack.c.h.b16 %v4621
    %v5508 = vunpack.c.l.b16 %v4622
    %v5509 = vunpack.c.h.b16 %v4622
    %v5510 = vunpack.c.l.b16 %v4623
    %v5511 = vunpack.c.h.b16 %v4623
    %v5512 = vunpack.c.l.b16 %v4624
    %v5513 = vunpack.c.h.b16 %v4624
    %v5514 = vunpack.c.l.b16 %v4625
    %v5515 = vunpack.c.h.b16 %v4625
    %v5516 = vunpack.c.l.b16 %v4626
    %v5517 = vunpack.c.h.b16 %v4626
    %v5518 = vunpack.c.l.b16 %v4627
    %v5519 = vunpack.c.h.b16 %v4627
    %v5520 = vunpack.c.l.b16 %v4628
    %v5521 = vunpack.c.h.b16 %v4628
    %v5522 = vunpack.c.l.b16 %v4629
    %v5523 = vunpack.c.h.b16 %v4629
    %v5524 = vunpack.c.l.b16 %v4630
    %v5525 = vunpack.c.h.b16 %v4630
    %v5526 = vunpack.c.l.b16 %v4631
    %v5527 = vunpack.c.h.b16 %v4631
    %v5528 = vunpack.c.l.b16 %v4632
    %v5529 = vunpack.c.h.b16 %v4632
    %v5530 = vunpack.c.l.b16 %v4633
    %v5531 = vunpack.c.h.b16 %v4633
    %v5532 = vunpack.c.l.b16 %v4634
    %v5533 = vunpack.c.h.b16 %v4634
    %v5534 = vunpack.c.l.b16 %v4635
    %v5535 = vunpack.c.h.b16 %v4635
    %v5536 = vunpack.c.l.b16 %v4636
    %v5537 = vunpack.c.h.b16 %v4636
    %v5538 = vunpack.c.l.b16 %v4637
    %v5539 = vunpack.c.h.b16 %v4637
    %v5540 = vunpack.c.l.b16 %v4638
    %v5541 = vunpack.c.h.b16 %v4638
    %v5542 = vunpack.c.l.b16 %v4639
    %v5543 = vunpack.c.h.b16 %v4639
    %v5544 = vunpack.c.l.b16 %v4640
    %v5545 = vunpack.c.h.b16 %v4640
    %v5546 = vunpack.c.l.b16 %v4641
    %v5547 = vunpack.c.h.b16 %v4641
    %v5548 = vunpack.c.l.b16 %v4642
    %v5549 = vunpack.c.h.b16 %v4642
    %v5550 = vunpack.c.l.b16 %v4643
    %v5551 = vunpack.c.h.b16 %v4643
    %v5552 = vunpack.c.l.b16 %v4644
    %v5553 = vunpack.c.h.b16 %v4644
    %v5554 = vunpack.c.l.b16 %v4645
    %v5555 = vunpack.c.h.b16 %v4645
    %v5556 = vunpack.c.l.b16 %v4646
    %v5557 = vunpack.c.h.b16 %v4646
    %v5558 = vunpack.c.l.b16 %v4647
    %v5559 = vunpack.c.h.b16 %v4647
    %v5560 = vunpack.c.l.b16 %v4648
    %v5561 = vunpack.c.h.b16 %v4648
    %v5562 = vunpack.c.l.b16 %v4649
    %v5563 = vunpack.c.h.b16 %v4649
    %v5564 = vunpack.c.l.b16 %v4650
    %v5565 = vunpack.c.h.b16 %v4650
    %v5566 = vunpack.c.l.b16 %v4651
    %v5567 = vunpack.c.h.b16 %v4651
    %v5568 = vunpack.c.l.b16 %v4652
    %v5569 = vunpack.c.h.b16 %v4652
    %v5570 = vunpack.c.l.b16 %v4653
    %v5571 = vunpack.c.h.b16 %v4653
    %v5572 = vunpack.c.l.b16 %v4654
    %v5573 = vunpack.c.h.b16 %v4654
    %v5574 = vunpack.c.l.b16 %v4655
    %v5575 = vunpack.c.h.b16 %v4655
    %v5576 = vunpack.c.l.b16 %v4656
    %v5577 = vunpack.c.h.b16 %v4656
    %v5578 = vunpack.c.l.b16 %v4657
    %v5579 = vunpack.c.h.b16 %v4657
    %v5580 = vunpack.c.l.b16 %v4658
    %v5581 = vunpack.c.h.b16 %v4658
    %v5582 = vunpack.c.l.b16 %v4659
    %v5583 = vunpack.c.h.b16 %v4659
    %v5584 = vunpack.c.l.b16 %v4660
    %v5585 = vunpack.c.h.b16 %v4660
    %v5586 = vunpack.c.l.b16 %v4661
    %v5587 = vunpack.c.h.b16 %v4661
    %v5588 = vunpack.c.l.b16 %v4662
    %v5589 = vunpack.c.h.b16 %v4662
    %v5590 = vunpack.c.l.b16 %v4663
    %v5591 = vunpack.c.h.b16 %v4663
    %v5592 = vunpack.c.l.b16 %v4664
    %v5593 = vunpack.c.h.b16 %v4664
    %v5594 = vunpack.c.l.b16 %v4665
    %v5595 = vunpack.c.h.b16 %v4665
    %v5596 = vunpack.c.l.b16 %v4666
    %v5597 = vunpack.c.h.b16 %v4666
    %v5598 = vunpack.c.l.b16 %v4667
    %v5599 = vunpack.c.h.b16 %v4667
    %v5600 = vunpack.c.l.b16 %v4668
    %v5601 = vunpack.c.h.b16 %v4668
    %v5602 = vunpack.c.l.b16 %v4669
    %v5603 = vunpack.c.h.b16 %v4669
    %v5604 = vunpack.c.l.b16 %v4670
    %v5605 = vunpack.c.h.b16 %v4670
    %v5606 = vunpack.c.l.b16 %v4671
    %v5607 = vunpack.c.h.b16 %v4671
    %v5608 = vunpack.c.l.b16 %v4672
    %v5609 = vunpack.c.h.b16 %v4672
    %v5610 = vunpack.c.l.b16 %v4673
    %v5611 = vunpack.c.h.b16 %v4673
    %v5612 = vunpack.c.l.b16 %v4674
    %v5613 = vunpack.c.h.b16 %v4674
    %v5614 = vunpack.c.l.b16 %v4675
    %v5615 = vunpack.c.h.b16 %v4675
    %v5616 = vunpack.c.l.b16 %v4676
    %v5617 = vunpack.c.h.b16 %v4676
    %v5618 = vunpack.c.l.b16 %v4677
    %v5619 = vunpack.c.h.b16 %v4677
    %v5620 = vunpack.c.l.b16 %v4678
    %v5621 = vunpack.c.h.b16 %v4678
    %v5622 = vunpack.c.l.b16 %v4679
    %v5623 = vunpack.c.h.b16 %v4679
    %v5624 = vunpack.c.l.b16 %v4680
    %v5625 = vunpack.c.h.b16 %v4680
    %v5626 = vunpack.c.l.b16 %v4681
    %v5627 = vunpack.c.h.b16 %v4681
    %v5628 = vunpack.c.l.b16 %v4682
    %v5629 = vunpack.c.h.b16 %v4682
    %v5630 = vunpack.c.l.b16 %v4683
    %v5631 = vunpack.c.h.b16 %v4683
    %v5632 = vunpack.c.l.b16 %v4684
    %v5633 = vunpack.c.h.b16 %v4684
    %v5634 = vunpack.c.l.b16 %v4685
    %v5635 = vunpack.c.h.b16 %v4685
    %v5636 = vunpack.c.l.b16 %v4686
    %v5637 = vunpack.c.h.b16 %v4686
    %v5638 = vunpack.c.l.b16 %v4687
    %v5639 = vunpack.c.h.b16 %v4687
    %v5640 = vunpack.c.l.b16 %v4688
    %v5641 = vunpack.c.h.b16 %v4688
    %v5642 = vunpack.c.l.b16 %v4689
    %v5643 = vunpack.c.h.b16 %v4689
    %v5644 = vunpack.c.l.b16 %v4690
    %v5645 = vunpack.c.h.b16 %v4690
    %v5646 = vunpack.c.l.b16 %v4691
    %v5647 = vunpack.c.h.b16 %v4691
    %v5648 = vunpack.c.l.b16 %v4692
    %v5649 = vunpack.c.h.b16 %v4692
    %v5650 = vunpack.c.l.b16 %v4693
    %v5651 = vunpack.c.h.b16 %v4693
    %v5652 = vunpack.c.l.b16 %v4694
    %v5653 = vunpack.c.h.b16 %v4694
    %v5654 = vunpack.c.l.b16 %v4695
    %v5655 = vunpack.c.h.b16 %v4695
    %v5656 = vunpack.c.l.b16 %v4696
    %v5657 = vunpack.c.h.b16 %v4696
    %v5658 = vunpack.c.l.b16 %v4697
    %v5659 = vunpack.c.h.b16 %v4697
    %v5660 = vunpack.c.l.b16 %v4698
    %v5661 = vunpack.c.h.b16 %v4698
    %v5662 = vunpack.c.l.b16 %v4699
    %v5663 = vunpack.c.h.b16 %v4699
    %v5664 = vunpack.c.l.b16 %v4700
    %v5665 = vunpack.c.h.b16 %v4700
    %v5666 = vunpack.c.l.b16 %v4701
    %v5667 = vunpack.c.h.b16 %v4701
    %v5668 = vunpack.c.l.b16 %v4702
    %v5669 = vunpack.c.h.b16 %v4702
    %v5670 = vunpack.c.l.b16 %v4703
    %v5671 = vunpack.c.h.b16 %v4703
    %v5672 = vunpack.c.l.b16 %v4704
    %v5673 = vunpack.c.h.b16 %v4704
    %v5674 = vunpack.c.l.b16 %v4705
    %v5675 = vunpack.c.h.b16 %v4705
    %v5676 = vunpack.c.l.b16 %v4706
    %v5677 = vunpack.c.h.b16 %v4706
    %v5678 = vunpack.c.l.b16 %v4707
    %v5679 = vunpack.c.h.b16 %v4707
    %v5680 = vunpack.c.l.b16 %v4708
    %v5681 = vunpack.c.h.b16 %v4708
    %v5682 = vunpack.c.l.b16 %v4709
    %v5683 = vunpack.c.h.b16 %v4709
    %v5684 = vunpack.c.l.b16 %v4710
    %v5685 = vunpack.c.h.b16 %v4710
    %v5686 = vunpack.c.l.b16 %v4711
    %v5687 = vunpack.c.h.b16 %v4711
    %v5688 = vunpack.c.l.b16 %v4712
    %v5689 = vunpack.c.h.b16 %v4712
    %v5690 = vunpack.c.l.b16 %v4713
    %v5691 = vunpack.c.h.b16 %v4713
    %v5692 = vunpack.c.l.b16 %v4714
    %v5693 = vunpack.c.h.b16 %v4714
    %v5694 = vunpack.c.l.b16 %v4715
    %v5695 = vunpack.c.h.b16 %v4715
    %v5696 = vunpack.c.l.b16 %v4716
    %v5697 = vunpack.c.h.b16 %v4716
    %v5698 = vunpack.c.l.b16 %v4717
    %v5699 = vunpack.c.h.b16 %v4717
    %v5700 = vpack.c.b16 %v5064, %v5060
    %v5701 = vpack.c.b16 %v5065, %v5061
    %v5702 = vpack.c.b16 %v5066, %v5062
    %v5703 = vpack.c.b16 %v5067, %v5063
    %v5704 = vpack.c.b16 %v5072, %v5068
    %v5705 = vpack.c.b16 %v5073, %v5069
    %v5706 = vpack.c.b16 %v5074, %v5070
    %v5707 = vpack.c.b16 %v5075, %v5071
    %v5708 = vpack.c.b16 %v5080, %v5076
    %v5709 = vpack.c.b16 %v5081, %v5077
    %v5710 = vpack.c.b16 %v5082, %v5078
    %v5711 = vpack.c.b16 %v5083, %v5079
    %v5712 = vpack.c.b16 %v5088, %v5084
    %v5713 = vpack.c.b16 %v5089, %v5085
    %v5714 = vpack.c.b16 %v5090, %v5086
    %v5715 = vpack.c.b16 %v5091, %v5087
    %v5716 = vpack.c.b16 %v5096, %v5092
    %v5717 = vpack.c.b16 %v5097, %v5093
    %v5718 = vpack.c.b16 %v5098, %v5094
    %v5719 = vpack.c.b16 %v5099, %v5095
    %v5720 = vpack.c.b16 %v5104, %v5100
    %v5721 = vpack.c.b16 %v5105, %v5101
    %v5722 = vpack.c.b16 %v5106, %v5102
    %v5723 = vpack.c.b16 %v5107, %v5103
    %v5724 = vpack.c.b16 %v5112, %v5108
    %v5725 = vpack.c.b16 %v5113, %v5109
    %v5726 = vpack.c.b16 %v5114, %v5110
    %v5727 = vpack.c.b16 %v5115, %v5111
    %v5728 = vpack.c.b16 %v5120, %v5116
    %v5729 = vpack.c.b16 %v5121, %v5117
    %v5730 = vpack.c.b16 %v5122, %v5118
    %v5731 = vpack.c.b16 %v5123, %v5119
    %v5732 = vpack.c.b16 %v5128, %v5124
    %v5733 = vpack.c.b16 %v5129, %v5125
    %v5734 = vpack.c.b16 %v5130, %v5126
    %v5735 = vpack.c.b16 %v5131, %v5127
    %v5736 = vpack.c.b16 %v5136, %v5132
    %v5737 = vpack.c.b16 %v5137, %v5133
    %v5738 = vpack.c.b16 %v5138, %v5134
    %v5739 = vpack.c.b16 %v5139, %v5135
    %v5740 = vpack.c.b16 %v5144, %v5140
    %v5741 = vpack.c.b16 %v5145, %v5141
    %v5742 = vpack.c.b16 %v5146, %v5142
    %v5743 = vpack.c.b16 %v5147, %v5143
    %v5744 = vpack.c.b16 %v5152, %v5148
    %v5745 = vpack.c.b16 %v5153, %v5149
    %v5746 = vpack.c.b16 %v5154, %v5150
    %v5747 = vpack.c.b16 %v5155, %v5151
    %v5748 = vpack.c.b16 %v5160, %v5156
    %v5749 = vpack.c.b16 %v5161, %v5157
    %v5750 = vpack.c.b16 %v5162, %v5158
    %v5751 = vpack.c.b16 %v5163, %v5159
    %v5752 = vpack.c.b16 %v5168, %v5164
    %v5753 = vpack.c.b16 %v5169, %v5165
    %v5754 = vpack.c.b16 %v5170, %v5166
    %v5755 = vpack.c.b16 %v5171, %v5167
    %v5756 = vpack.c.b16 %v5176, %v5172
    %v5757 = vpack.c.b16 %v5177, %v5173
    %v5758 = vpack.c.b16 %v5178, %v5174
    %v5759 = vpack.c.b16 %v5179, %v5175
    %v5760 = vpack.c.b16 %v5184, %v5180
    %v5761 = vpack.c.b16 %v5185, %v5181
    %v5762 = vpack.c.b16 %v5186, %v5182
    %v5763 = vpack.c.b16 %v5187, %v5183
    %v5764 = vpack.c.b16 %v5192, %v5188
    %v5765 = vpack.c.b16 %v5193, %v5189
    %v5766 = vpack.c.b16 %v5194, %v5190
    %v5767 = vpack.c.b16 %v5195, %v5191
    %v5768 = vpack.c.b16 %v5200, %v5196
    %v5769 = vpack.c.b16 %v5201, %v5197
    %v5770 = vpack.c.b16 %v5202, %v5198
    %v5771 = vpack.c.b16 %v5203, %v5199
    %v5772 = vpack.c.b16 %v5208, %v5204
    %v5773 = vpack.c.b16 %v5209, %v5205
    %v5774 = vpack.c.b16 %v5210, %v5206
    %v5775 = vpack.c.b16 %v5211, %v5207
    %v5776 = vpack.c.b16 %v5216, %v5212
    %v5777 = vpack.c.b16 %v5217, %v5213
    %v5778 = vpack.c.b16 %v5218, %v5214
    %v5779 = vpack.c.b16 %v5219, %v5215
    %v5780 = vpack.c.b16 %v5224, %v5220
    %v5781 = vpack.c.b16 %v5225, %v5221
    %v5782 = vpack.c.b16 %v5226, %v5222
    %v5783 = vpack.c.b16 %v5227, %v5223
    %v5784 = vpack.c.b16 %v5232, %v5228
    %v5785 = vpack.c.b16 %v5233, %v5229
    %v5786 = vpack.c.b16 %v5234, %v5230
    %v5787 = vpack.c.b16 %v5235, %v5231
    %v5788 = vpack.c.b16 %v5240, %v5236
    %v5789 = vpack.c.b16 %v5241, %v5237
    %v5790 = vpack.c.b16 %v5242, %v5238
    %v5791 = vpack.c.b16 %v5243, %v5239
    %v5792 = vpack.c.b16 %v5248, %v5244
    %v5793 = vpack.c.b16 %v5249, %v5245
    %v5794 = vpack.c.b16 %v5250, %v5246
    %v5795 = vpack.c.b16 %v5251, %v5247
    %v5796 = vpack.c.b16 %v5256, %v5252
    %v5797 = vpack.c.b16 %v5257, %v5253
    %v5798 = vpack.c.b16 %v5258, %v5254
    %v5799 = vpack.c.b16 %v5259, %v5255
    %v5800 = vpack.c.b16 %v5264, %v5260
    %v5801 = vpack.c.b16 %v5265, %v5261
    %v5802 = vpack.c.b16 %v5266, %v5262
    %v5803 = vpack.c.b16 %v5267, %v5263
    %v5804 = vpack.c.b16 %v5272, %v5268
    %v5805 = vpack.c.b16 %v5273, %v5269
    %v5806 = vpack.c.b16 %v5274, %v5270
    %v5807 = vpack.c.b16 %v5275, %v5271
    %v5808 = vpack.c.b16 %v5280, %v5276
    %v5809 = vpack.c.b16 %v5281, %v5277
    %v5810 = vpack.c.b16 %v5282, %v5278
    %v5811 = vpack.c.b16 %v5283, %v5279
    %v5812 = vpack.c.b16 %v5288, %v5284
    %v5813 = vpack.c.b16 %v5289, %v5285
    %v5814 = vpack.c.b16 %v5290, %v5286
    %v5815 = vpack.c.b16 %v5291, %v5287
    %v5816 = vpack.c.b16 %v5296, %v5292
    %v5817 = vpack.c.b16 %v5297, %v5293
    %v5818 = vpack.c.b16 %v5298, %v5294
    %v5819 = vpack.c.b16 %v5299, %v5295
    %v5820 = vpack.c.b16 %v5304, %v5300
    %v5821 = vpack.c.b16 %v5305, %v5301
    %v5822 = vpack.c.b16 %v5306, %v5302
    %v5823 = vpack.c.b16 %v5307, %v5303
    %v5824 = vpack.c.b16 %v5312, %v5308
    %v5825 = vpack.c.b16 %v5313, %v5309
    %v5826 = vpack.c.b16 %v5314, %v5310
    %v5827 = vpack.c.b16 %v5315, %v5311
    %v5828 = vpack.c.b16 %v5320, %v5316
    %v5829 = vpack.c.b16 %v5321, %v5317
    %v5830 = vpack.c.b16 %v5322, %v5318
    %v5831 = vpack.c.b16 %v5323, %v5319
    %v5832 = vpack.c.b16 %v5328, %v5324
    %v5833 = vpack.c.b16 %v5329, %v5325
    %v5834 = vpack.c.b16 %v5330, %v5326
    %v5835 = vpack.c.b16 %v5331, %v5327
    %v5836 = vpack.c.b16 %v5336, %v5332
    %v5837 = vpack.c.b16 %v5337, %v5333
    %v5838 = vpack.c.b16 %v5338, %v5334
    %v5839 = vpack.c.b16 %v5339, %v5335
    %v5840 = vpack.c.b16 %v5344, %v5340
    %v5841 = vpack.c.b16 %v5345, %v5341
    %v5842 = vpack.c.b16 %v5346, %v5342
    %v5843 = vpack.c.b16 %v5347, %v5343
    %v5844 = vpack.c.b16 %v5352, %v5348
    %v5845 = vpack.c.b16 %v5353, %v5349
    %v5846 = vpack.c.b16 %v5354, %v5350
    %v5847 = vpack.c.b16 %v5355, %v5351
    %v5848 = vpack.c.b16 %v5360, %v5356
    %v5849 = vpack.c.b16 %v5361, %v5357
    %v5850 = vpack.c.b16 %v5362, %v5358
    %v5851 = vpack.c.b16 %v5363, %v5359
    %v5852 = vpack.c.b16 %v5368, %v5364
    %v5853 = vpack.c.b16 %v5369, %v5365
    %v5854 = vpack.c.b16 %v5370, %v5366
    %v5855 = vpack.c.b16 %v5371, %v5367
    %v5856 = vpack.c.b16 %v5376, %v5372
    %v5857 = vpack.c.b16 %v5377, %v5373
    %v5858 = vpack.c.b16 %v5378, %v5374
    %v5859 = vpack.c.b16 %v5379, %v5375
    %v5860 = vpack.c.b16 %v5384, %v5380
    %v5861 = vpack.c.b16 %v5385, %v5381
    %v5862 = vpack.c.b16 %v5386, %v5382
    %v5863 = vpack.c.b16 %v5387, %v5383
    %v5864 = vpack.c.b16 %v5392, %v5388
    %v5865 = vpack.c.b16 %v5393, %v5389
    %v5866 = vpack.c.b16 %v5394, %v5390
    %v5867 = vpack.c.b16 %v5395, %v5391
    %v5868 = vpack.c.b16 %v5400, %v5396
    %v5869 = vpack.c.b16 %v5401, %v5397
    %v5870 = vpack.c.b16 %v5402, %v5398
    %v5871 = vpack.c.b16 %v5403, %v5399
    %v5872 = vpack.c.b16 %v5408, %v5404
    %v5873 = vpack.c.b16 %v5409, %v5405
    %v5874 = vpack.c.b16 %v5410, %v5406
    %v5875 = vpack.c.b16 %v5411, %v5407
    %v5876 = vpack.c.b16 %v5416, %v5412
    %v5877 = vpack.c.b16 %v5417, %v5413
    %v5878 = vpack.c.b16 %v5418, %v5414
    %v5879 = vpack.c.b16 %v5419, %v5415
    %v5880 = vpack.c.b16 %v5424, %v5420
    %v5881 = vpack.c.b16 %v5425, %v5421
    %v5882 = vpack.c.b16 %v5426, %v5422
    %v5883 = vpack.c.b16 %v5427, %v5423
    %v5884 = vpack.c.b16 %v5432, %v5428
    %v5885 = vpack.c.b16 %v5433, %v5429
    %v5886 = vpack.c.b16 %v5434, %v5430
    %v5887 = vpack.c.b16 %v5435, %v5431
    %v5888 = vpack.c.b16 %v5440, %v5436
    %v5889 = vpack.c.b16 %v5441, %v5437
    %v5890 = vpack.c.b16 %v5442, %v5438
    %v5891 = vpack.c.b16 %v5443, %v5439
    %v5892 = vpack.c.b16 %v5448, %v5444
    %v5893 = vpack.c.b16 %v5449, %v5445
    %v5894 = vpack.c.b16 %v5450, %v5446
    %v5895 = vpack.c.b16 %v5451, %v5447
    %v5896 = vpack.c.b16 %v5456, %v5452
    %v5897 = vpack.c.b16 %v5457, %v5453
    %v5898 = vpack.c.b16 %v5458, %v5454
    %v5899 = vpack.c.b16 %v5459, %v5455
    %v5900 = vpack.c.b16 %v5464, %v5460
    %v5901 = vpack.c.b16 %v5465, %v5461
    %v5902 = vpack.c.b16 %v5466, %v5462
    %v5903 = vpack.c.b16 %v5467, %v5463
    %v5904 = vpack.c.b16 %v5472, %v5468
    %v5905 = vpack.c.b16 %v5473, %v5469
    %v5906 = vpack.c.b16 %v5474, %v5470
    %v5907 = vpack.c.b16 %v5475, %v5471
    %v5908 = vpack.c.b16 %v5480, %v5476
    %v5909 = vpack.c.b16 %v5481, %v5477
    %v5910 = vpack.c.b16 %v5482, %v5478
    %v5911 = vpack.c.b16 %v5483, %v5479
    %v5912 = vpack.c.b16 %v5488, %v5484
    %v5913 = vpack.c.b16 %v5489, %v5485
    %v5914 = vpack.c.b16 %v5490, %v5486
    %v5915 = vpack.c.b16 %v5491, %v5487
    %v5916 = vpack.c.b16 %v5496, %v5492
    %v5917 = vpack.c.b16 %v5497, %v5493
    %v5918 = vpack.c.b16 %v5498, %v5494
    %v5919 = vpack.c.b16 %v5499, %v5495
    %v5920 = vpack.c.b16 %v5504, %v5500
    %v5921 = vpack.c.b16 %v5505, %v5501
    %v5922 = vpack.c.b16 %v5506, %v5502
    %v5923 = vpack.c.b16 %v5507, %v5503
    %v5924 = vpack.c.b16 %v5512, %v5508
    %v5925 = vpack.c.b16 %v5513, %v5509
    %v5926 = vpack.c.b16 %v5514, %v5510
    %v5927 = vpack.c.b16 %v5515, %v5511
    %v5928 = vpack.c.b16 %v5520, %v5516
    %v5929 = vpack.c.b16 %v5521, %v5517
    %v5930 = vpack.c.b16 %v5522, %v5518
    %v5931 = vpack.c.b16 %v5523, %v5519
    %v5932 = vpack.c.b16 %v5528, %v5524
    %v5933 = vpack.c.b16 %v5529, %v5525
    %v5934 = vpack.c.b16 %v5530, %v5526
    %v5935 = vpack.c.b16 %v5531, %v5527
    %v5936 = vpack.c.b16 %v5536, %v5532
    %v5937 = vpack.c.b16 %v5537, %v5533
    %v5938 = vpack.c.b16 %v5538, %v5534
    %v5939 = vpack.c.b16 %v5539, %v5535
    %v5940 = vpack.c.b16 %v5544, %v5540
    %v5941 = vpack.c.b16 %v5545, %v5541
    %v5942 = vpack.c.b16 %v5546, %v5542
    %v5943 = vpack.c.b16 %v5547, %v5543
    %v5944 = vpack.c.b16 %v5552, %v5548
    %v5945 = vpack.c.b16 %v5553, %v5549
    %v5946 = vpack.c.b16 %v5554, %v5550
    %v5947 = vpack.c.b16 %v5555, %v5551
    %v5948 = vpack.c.b16 %v5560, %v5556
    %v5949 = vpack.c.b16 %v5561, %v5557
    %v5950 = vpack.c.b16 %v5562, %v5558
    %v5951 = vpack.c.b16 %v5563, %v5559
    %v5952 = vpack.c.b16 %v5568, %v5564
    %v5953 = vpack.c.b16 %v5569, %v5565
    %v5954 = vpack.c.b16 %v5570, %v5566
    %v5955 = vpack.c.b16 %v5571, %v5567
    %v5956 = vpack.c.b16 %v5576, %v5572
    %v5957 = vpack.c.b16 %v5577, %v5573
    %v5958 = vpack.c.b16 %v5578, %v5574
    %v5959 = vpack.c.b16 %v5579, %v5575
    %v5960 = vpack.c.b16 %v5584, %v5580
    %v5961 = vpack.c.b16 %v5585, %v5581
    %v5962 = vpack.c.b16 %v5586, %v5582
    %v5963 = vpack.c.b16 %v5587, %v5583
    %v5964 = vpack.c.b16 %v5592, %v5588
    %v5965 = vpack.c.b16 %v5593, %v5589
    %v5966 = vpack.c.b16 %v5594, %v5590
    %v5967 = vpack.c.b16 %v5595, %v5591
    %v5968 = vpack.c.b16 %v5600, %v5596
    %v5969 = vpack.c.b16 %v5601, %v5597
    %v5970 = vpack.c.b16 %v5602, %v5598
    %v5971 = vpack.c.b16 %v5603, %v5599
    %v5972 = vpack.c.b16 %v5608, %v5604
    %v5973 = vpack.c.b16 %v5609, %v5605
    %v5974 = vpack.c.b16 %v5610, %v5606
    %v5975 = vpack.c.b16 %v5611, %v5607
    %v5976 = vpack.c.b16 %v5616, %v5612
    %v5977 = vpack.c.b16 %v5617, %v5613
    %v5978 = vpack.c.b16 %v5618, %v5614
    %v5979 = vpack.c.b16 %v5619, %v5615
    %v5980 = vpack.c.b16 %v5624, %v5620
    %v5981 = vpack.c.b16 %v5625, %v5621
    %v5982 = vpack.c.b16 %v5626, %v5622
    %v5983 = vpack.c.b16 %v5627, %v5623
    %v5984 = vpack.c.b16 %v5632, %v5628
    %v5985 = vpack.c.b16 %v5633, %v5629
    %v5986 = vpack.c.b16 %v5634, %v5630
    %v5987 = vpack.c.b16 %v5635, %v5631
    %v5988 = vpack.c.b16 %v5640, %v5636
    %v5989 = vpack.c.b16 %v5641, %v5637
    %v5990 = vpack.c.b16 %v5642, %v5638
    %v5991 = vpack.c.b16 %v5643, %v5639
    %v5992 = vpack.c.b16 %v5648, %v5644
    %v5993 = vpack.c.b16 %v5649, %v5645
    %v5994 = vpack.c.b16 %v5650, %v5646
    %v5995 = vpack.c.b16 %v5651, %v5647
    %v5996 = vpack.c.b16 %v5656, %v5652
    %v5997 = vpack.c.b16 %v5657, %v5653
    %v5998 = vpack.c.b16 %v5658, %v5654
    %v5999 = vpack.c.b16 %v5659, %v5655
    %v6000 = vpack.c.b16 %v5664, %v5660
    %v6001 = vpack.c.b16 %v5665, %v5661
    %v6002 = vpack.c.b16 %v5666, %v5662
    %v6003 = vpack.c.b16 %v5667, %v5663
    %v6004 = vpack.c.b16 %v5672, %v5668
    %v6005 = vpack.c.b16 %v5673, %v5669
    %v6006 = vpack.c.b16 %v5674, %v5670
    %v6007 = vpack.c.b16 %v5675, %v5671
    %v6008 = vpack.c.b16 %v5680, %v5676
    %v6009 = vpack.c.b16 %v5681, %v5677
    %v6010 = vpack.c.b16 %v5682, %v5678
    %v6011 = vpack.c.b16 %v5683, %v5679
    %v6012 = vpack.c.b16 %v5688, %v5684
    %v6013 = vpack.c.b16 %v5689, %v5685
    %v6014 = vpack.c.b16 %v5690, %v5686
    %v6015 = vpack.c.b16 %v5691, %v5687
    %v6016 = vpack.c.b16 %v5696, %v5692
    %v6017 = vpack.c.b16 %v5697, %v5693
    %v6018 = vpack.c.b16 %v5698, %v5694
    %v6019 = vpack.c.b16 %v5699, %v5695
    %6340 = vmatprep.subr.bf16.mxu0 %v5729
    %6341 = vmatpush1.bf16.msra.mxu0 %v5728
    %6342 = vmatprep.subr.bf16.mxu0 %v5725
    %6343 = vmatpush1.bf16.msra.mxu0 %v5724
    %6344 = vmatprep.subr.bf16.mxu0 %v5721
    %6345 = vmatpush1.bf16.msra.mxu0 %v5720
    %6346 = vmatprep.subr.bf16.mxu0 %v5717
    %6347 = vmatpush1.bf16.msra.mxu0 %v5716
    %6348 = vmatprep.subr.bf16.mxu0 %v5713
    %6349 = vmatpush1.bf16.msra.mxu0 %v5712
    %6350 = vmatprep.subr.bf16.mxu0 %v5709
    %6351 = vmatpush1.bf16.msra.mxu0 %v5708
    %6352 = vmatprep.subr.bf16.mxu0 %v5705
    %6353 = vmatpush1.bf16.msra.mxu0 %v5704
    %6354 = vmatprep.subr.bf16.mxu0 %v5701
    %6355 = vmatpush1.bf16.msra.mxu0 %v5700
    %6356 = vmatprep.subr.bf16.mxu0 %v5761
    %6357 = vmatpush2.bf16.msra.mxu0 %v5760
    %6358 = vmatprep.subr.bf16.mxu0 %v5757
    %6359 = vmatpush2.bf16.msra.mxu0 %v5756
    %6360 = vmatprep.subr.bf16.mxu0 %v5753
    %6361 = vmatpush2.bf16.msra.mxu0 %v5752
    %6362 = vmatprep.subr.bf16.mxu0 %v5749
    %6363 = vmatpush2.bf16.msra.mxu0 %v5748
    %6364 = vmatprep.subr.bf16.mxu0 %v5745
    %6365 = vmatpush2.bf16.msra.mxu0 %v5744
    %6366 = vmatprep.subr.bf16.mxu0 %v5741
    %6367 = vmatpush2.bf16.msra.mxu0 %v5740
    %6368 = vmatprep.subr.bf16.mxu0 %v5737
    %6369 = vmatpush2.bf16.msra.mxu0 %v5736
    %6370 = vmatprep.subr.bf16.mxu0 %v5733
    %6371 = vmatpush2.bf16.msra.mxu0 %v5732
    %6372 = vmatprep.mubr.bf16.mxu0 %v4389
    %6373 = vmatmul.mubr.bf16.gmra.mxu0 %v4388
    %v6374 = vpop.f32.mrf.mxu0
    %v6375 = vadd.f32 %v4723, %v6374
    %v6376 = vpop.f32.mrf.mxu0
    %v6377 = vadd.f32 %v4727, %v6376
    %v6378 = vpop.f32.mrf.mxu0
    %v6379 = vpop.f32.mrf.mxu0
    %6380 = vdwg.mxu0
    %6381 = vmatprep.subr.bf16.mxu0 %v5793
    %6382 = vmatpush1.bf16.msra.mxu0 %v5792
    %6383 = vmatprep.subr.bf16.mxu0 %v5789
    %6384 = vmatpush1.bf16.msra.mxu0 %v5788
    %6385 = vmatprep.subr.bf16.mxu0 %v5785
    %6386 = vmatpush1.bf16.msra.mxu0 %v5784
    %6387 = vmatprep.subr.bf16.mxu0 %v5781
    %6388 = vmatpush1.bf16.msra.mxu0 %v5780
    %6389 = vmatprep.subr.bf16.mxu0 %v5777
    %6390 = vmatpush1.bf16.msra.mxu0 %v5776
    %6391 = vmatprep.subr.bf16.mxu0 %v5773
    %6392 = vmatpush1.bf16.msra.mxu0 %v5772
    %6393 = vmatprep.subr.bf16.mxu0 %v5769
    %6394 = vmatpush1.bf16.msra.mxu0 %v5768
    %6395 = vmatprep.subr.bf16.mxu0 %v5765
    %6396 = vmatpush1.bf16.msra.mxu0 %v5764
    %6397 = vmatprep.subr.bf16.mxu0 %v5825
    %6398 = vmatpush2.bf16.msra.mxu0 %v5824
    %6399 = vmatprep.subr.bf16.mxu0 %v5821
    %6400 = vmatpush2.bf16.msra.mxu0 %v5820
    %6401 = vmatprep.subr.bf16.mxu0 %v5817
    %6402 = vmatpush2.bf16.msra.mxu0 %v5816
    %6403 = vmatprep.subr.bf16.mxu0 %v5813
    %6404 = vmatpush2.bf16.msra.mxu0 %v5812
    %6405 = vmatprep.subr.bf16.mxu0 %v5809
    %6406 = vmatpush2.bf16.msra.mxu0 %v5808
    %6407 = vmatprep.subr.bf16.mxu0 %v5805
    %6408 = vmatpush2.bf16.msra.mxu0 %v5804
    %6409 = vmatprep.subr.bf16.mxu0 %v5801
    %6410 = vmatpush2.bf16.msra.mxu0 %v5800
    %6411 = vmatprep.subr.bf16.mxu0 %v5797
    %6412 = vmatpush2.bf16.msra.mxu0 %v5796
    %6413 = vmatprep.mubr.bf16.mxu0 %v4391
    %6414 = vmatmul.mubr.bf16.gmra.mxu0 %v4390
    %v6415 = vpop.f32.mrf.mxu0
    %v6416 = vadd.f32 %v6375, %v6415
    %v6417 = vpop.f32.mrf.mxu0
    %v6418 = vadd.f32 %v6377, %v6417
    %v6419 = vpop.f32.mrf.mxu0
    %v6420 = vpop.f32.mrf.mxu0
    %6421 = vdwg.mxu0
    %6422 = vmatprep.subr.bf16.mxu0 %v5857
    %6423 = vmatpush1.bf16.msra.mxu0 %v5856
    %6424 = vmatprep.subr.bf16.mxu0 %v5853
    %6425 = vmatpush1.bf16.msra.mxu0 %v5852
    %6426 = vmatprep.subr.bf16.mxu0 %v5849
    %6427 = vmatpush1.bf16.msra.mxu0 %v5848
    %6428 = vmatprep.subr.bf16.mxu0 %v5845
    %6429 = vmatpush1.bf16.msra.mxu0 %v5844
    %6430 = vmatprep.subr.bf16.mxu0 %v5841
    %6431 = vmatpush1.bf16.msra.mxu0 %v5840
    %6432 = vmatprep.subr.bf16.mxu0 %v5837
    %6433 = vmatpush1.bf16.msra.mxu0 %v5836
    %6434 = vmatprep.subr.bf16.mxu0 %v5833
    %6435 = vmatpush1.bf16.msra.mxu0 %v5832
    %6436 = vmatprep.subr.bf16.mxu0 %v5829
    %6437 = vmatpush1.bf16.msra.mxu0 %v5828
    %6438 = vmatprep.subr.bf16.mxu0 %v5889
    %6439 = vmatpush2.bf16.msra.mxu0 %v5888
    %6440 = vmatprep.subr.bf16.mxu0 %v5885
    %6441 = vmatpush2.bf16.msra.mxu0 %v5884
    %6442 = vmatprep.subr.bf16.mxu0 %v5881
    %6443 = vmatpush2.bf16.msra.mxu0 %v5880
    %6444 = vmatprep.subr.bf16.mxu0 %v5877
    %6445 = vmatpush2.bf16.msra.mxu0 %v5876
    %6446 = vmatprep.subr.bf16.mxu0 %v5873
    %6447 = vmatpush2.bf16.msra.mxu0 %v5872
    %6448 = vmatprep.subr.bf16.mxu0 %v5869
    %6449 = vmatpush2.bf16.msra.mxu0 %v5868
    %6450 = vmatprep.subr.bf16.mxu0 %v5865
    %6451 = vmatpush2.bf16.msra.mxu0 %v5864
    %6452 = vmatprep.subr.bf16.mxu0 %v5861
    %6453 = vmatpush2.bf16.msra.mxu0 %v5860
    %6454 = vmatprep.mubr.bf16.mxu0 %v4393
    %6455 = vmatmul.mubr.bf16.gmra.mxu0 %v4392
    %v6456 = vpop.f32.mrf.mxu0
    %v6457 = vadd.f32 %v6416, %v6456
    %v6458 = vpop.f32.mrf.mxu0
    %v6459 = vadd.f32 %v6418, %v6458
    %v6460 = vpop.f32.mrf.mxu0
    %v6461 = vpop.f32.mrf.mxu0
    %6462 = vdwg.mxu0
    %6463 = vmatprep.subr.bf16.mxu0 %v5921
    %6464 = vmatpush1.bf16.msra.mxu0 %v5920
    %6465 = vmatprep.subr.bf16.mxu0 %v5917
    %6466 = vmatpush1.bf16.msra.mxu0 %v5916
    %6467 = vmatprep.subr.bf16.mxu0 %v5913
    %6468 = vmatpush1.bf16.msra.mxu0 %v5912
    %6469 = vmatprep.subr.bf16.mxu0 %v5909
    %6470 = vmatpush1.bf16.msra.mxu0 %v5908
    %6471 = vmatprep.subr.bf16.mxu0 %v5905
    %6472 = vmatpush1.bf16.msra.mxu0 %v5904
    %6473 = vmatprep.subr.bf16.mxu0 %v5901
    %6474 = vmatpush1.bf16.msra.mxu0 %v5900
    %6475 = vmatprep.subr.bf16.mxu0 %v5897
    %6476 = vmatpush1.bf16.msra.mxu0 %v5896
    %6477 = vmatprep.subr.bf16.mxu0 %v5893
    %6478 = vmatpush1.bf16.msra.mxu0 %v5892
    %6479 = vmatprep.subr.bf16.mxu0 %v5953
    %6480 = vmatpush2.bf16.msra.mxu0 %v5952
    %6481 = vmatprep.subr.bf16.mxu0 %v5949
    %6482 = vmatpush2.bf16.msra.mxu0 %v5948
    %6483 = vmatprep.subr.bf16.mxu0 %v5945
    %6484 = vmatpush2.bf16.msra.mxu0 %v5944
    %6485 = vmatprep.subr.bf16.mxu0 %v5941
    %6486 = vmatpush2.bf16.msra.mxu0 %v5940
    %6487 = vmatprep.subr.bf16.mxu0 %v5937
    %6488 = vmatpush2.bf16.msra.mxu0 %v5936
    %6489 = vmatprep.subr.bf16.mxu0 %v5933
    %6490 = vmatpush2.bf16.msra.mxu0 %v5932
    %6491 = vmatprep.subr.bf16.mxu0 %v5929
    %6492 = vmatpush2.bf16.msra.mxu0 %v5928
    %6493 = vmatprep.subr.bf16.mxu0 %v5925
    %6494 = vmatpush2.bf16.msra.mxu0 %v5924
    %6495 = vmatprep.mubr.bf16.mxu0 %v4395
    %6496 = vmatmul.mubr.bf16.gmra.mxu0 %v4394
    %v6497 = vpop.f32.mrf.mxu0
    %v6498 = vadd.f32 %v6457, %v6497
    %v6499 = vpop.f32.mrf.mxu0
    %v6500 = vadd.f32 %v6459, %v6499
    %v6501 = vpop.f32.mrf.mxu0
    %v6502 = vpop.f32.mrf.mxu0
    %6503 = vdwg.mxu0
    %6504 = vmatprep.subr.bf16.mxu0 %v5985
    %6505 = vmatpush1.bf16.msra.mxu0 %v5984
    %6506 = vmatprep.subr.bf16.mxu0 %v5981
    %6507 = vmatpush1.bf16.msra.mxu0 %v5980
    %6508 = vmatprep.subr.bf16.mxu0 %v5977
    %6509 = vmatpush1.bf16.msra.mxu0 %v5976
    %6510 = vmatprep.subr.bf16.mxu0 %v5973
    %6511 = vmatpush1.bf16.msra.mxu0 %v5972
    %6512 = vmatprep.subr.bf16.mxu0 %v5969
    %6513 = vmatpush1.bf16.msra.mxu0 %v5968
    %6514 = vmatprep.subr.bf16.mxu0 %v5965
    %6515 = vmatpush1.bf16.msra.mxu0 %v5964
    %6516 = vmatprep.subr.bf16.mxu0 %v5961
    %6517 = vmatpush1.bf16.msra.mxu0 %v5960
    %6518 = vmatprep.subr.bf16.mxu0 %v5957
    %6519 = vmatpush1.bf16.msra.mxu0 %v5956
    %6520 = vmatprep.subr.bf16.mxu0 %v6017
    %6521 = vmatpush2.bf16.msra.mxu0 %v6016
    %6522 = vmatprep.subr.bf16.mxu0 %v6013
    %6523 = vmatpush2.bf16.msra.mxu0 %v6012
    %6524 = vmatprep.subr.bf16.mxu0 %v6009
    %6525 = vmatpush2.bf16.msra.mxu0 %v6008
    %6526 = vmatprep.subr.bf16.mxu0 %v6005
    %6527 = vmatpush2.bf16.msra.mxu0 %v6004
    %6528 = vmatprep.subr.bf16.mxu0 %v6001
    %6529 = vmatpush2.bf16.msra.mxu0 %v6000
    %6530 = vmatprep.subr.bf16.mxu0 %v5997
    %6531 = vmatpush2.bf16.msra.mxu0 %v5996
    %6532 = vmatprep.subr.bf16.mxu0 %v5993
    %6533 = vmatpush2.bf16.msra.mxu0 %v5992
    %6534 = vmatprep.subr.bf16.mxu0 %v5989
    %6535 = vmatpush2.bf16.msra.mxu0 %v5988
    %6536 = vmatprep.mubr.bf16.mxu0 %v4397
    %6537 = vmatmul.mubr.bf16.gmra.mxu0 %v4396
    %v6538 = vpop.f32.mrf.mxu0
    %v6539 = vadd.f32 %v6498, %v6538
    %v6540 = vpop.f32.mrf.mxu0
    %v6541 = vadd.f32 %v6500, %v6540
    %v6542 = vpop.f32.mrf.mxu0
    %v6543 = vpop.f32.mrf.mxu0
    %6544 = vdwg.mxu0
    %6545 = vmatprep.subr.bf16.mxu0 %v5731
    %6546 = vmatpush1.bf16.msra.mxu0 %v5730
    %6547 = vmatprep.subr.bf16.mxu0 %v5727
    %6548 = vmatpush1.bf16.msra.mxu0 %v5726
    %6549 = vmatprep.subr.bf16.mxu0 %v5723
    %6550 = vmatpush1.bf16.msra.mxu0 %v5722
    %6551 = vmatprep.subr.bf16.mxu0 %v5719
    %6552 = vmatpush1.bf16.msra.mxu0 %v5718
    %6553 = vmatprep.subr.bf16.mxu0 %v5715
    %6554 = vmatpush1.bf16.msra.mxu0 %v5714
    %6555 = vmatprep.subr.bf16.mxu0 %v5711
    %6556 = vmatpush1.bf16.msra.mxu0 %v5710
    %6557 = vmatprep.subr.bf16.mxu0 %v5707
    %6558 = vmatpush1.bf16.msra.mxu0 %v5706
    %6559 = vmatprep.subr.bf16.mxu0 %v5703
    %6560 = vmatpush1.bf16.msra.mxu0 %v5702
    %6561 = vmatprep.subr.bf16.mxu0 %v5763
    %6562 = vmatpush2.bf16.msra.mxu0 %v5762
    %6563 = vmatprep.subr.bf16.mxu0 %v5759
    %6564 = vmatpush2.bf16.msra.mxu0 %v5758
    %6565 = vmatprep.subr.bf16.mxu0 %v5755
    %6566 = vmatpush2.bf16.msra.mxu0 %v5754
    %6567 = vmatprep.subr.bf16.mxu0 %v5751
    %6568 = vmatpush2.bf16.msra.mxu0 %v5750
    %6569 = vmatprep.subr.bf16.mxu0 %v5747
    %6570 = vmatpush2.bf16.msra.mxu0 %v5746
    %6571 = vmatprep.subr.bf16.mxu0 %v5743
    %6572 = vmatpush2.bf16.msra.mxu0 %v5742
    %6573 = vmatprep.subr.bf16.mxu0 %v5739
    %6574 = vmatpush2.bf16.msra.mxu0 %v5738
    %6575 = vmatprep.subr.bf16.mxu0 %v5735
    %6576 = vmatpush2.bf16.msra.mxu0 %v5734
    %6577 = vmatprep.mubr.bf16.mxu0 %v4389
    %6578 = vmatmul.mubr.bf16.gmra.mxu0 %v4388
    %v6579 = vpop.f32.mrf.mxu0
    %v6580 = vadd.f32 %v4731, %v6579
    %v6581 = vpop.f32.mrf.mxu0
    %v6582 = vadd.f32 %v4735, %v6581
    %v6583 = vpop.f32.mrf.mxu0
    %v6584 = vpop.f32.mrf.mxu0
    %6585 = vdwg.mxu0
    %6586 = vmatprep.subr.bf16.mxu0 %v5795
    %6587 = vmatpush1.bf16.msra.mxu0 %v5794
    %6588 = vmatprep.subr.bf16.mxu0 %v5791
    %6589 = vmatpush1.bf16.msra.mxu0 %v5790
    %6590 = vmatprep.subr.bf16.mxu0 %v5787
    %6591 = vmatpush1.bf16.msra.mxu0 %v5786
    %6592 = vmatprep.subr.bf16.mxu0 %v5783
    %6593 = vmatpush1.bf16.msra.mxu0 %v5782
    %6594 = vmatprep.subr.bf16.mxu0 %v5779
    %6595 = vmatpush1.bf16.msra.mxu0 %v5778
    %6596 = vmatprep.subr.bf16.mxu0 %v5775
    %6597 = vmatpush1.bf16.msra.mxu0 %v5774
    %6598 = vmatprep.subr.bf16.mxu0 %v5771
    %6599 = vmatpush1.bf16.msra.mxu0 %v5770
    %6600 = vmatprep.subr.bf16.mxu0 %v5767
    %6601 = vmatpush1.bf16.msra.mxu0 %v5766
    %6602 = vmatprep.subr.bf16.mxu0 %v5827
    %6603 = vmatpush2.bf16.msra.mxu0 %v5826
    %6604 = vmatprep.subr.bf16.mxu0 %v5823
    %6605 = vmatpush2.bf16.msra.mxu0 %v5822
    %6606 = vmatprep.subr.bf16.mxu0 %v5819
    %6607 = vmatpush2.bf16.msra.mxu0 %v5818
    %6608 = vmatprep.subr.bf16.mxu0 %v5815
    %6609 = vmatpush2.bf16.msra.mxu0 %v5814
    %6610 = vmatprep.subr.bf16.mxu0 %v5811
    %6611 = vmatpush2.bf16.msra.mxu0 %v5810
    %6612 = vmatprep.subr.bf16.mxu0 %v5807
    %6613 = vmatpush2.bf16.msra.mxu0 %v5806
    %6614 = vmatprep.subr.bf16.mxu0 %v5803
    %6615 = vmatpush2.bf16.msra.mxu0 %v5802
    %6616 = vmatprep.subr.bf16.mxu0 %v5799
    %6617 = vmatpush2.bf16.msra.mxu0 %v5798
    %6618 = vmatprep.mubr.bf16.mxu0 %v4391
    %6619 = vmatmul.mubr.bf16.gmra.mxu0 %v4390
    %v6620 = vpop.f32.mrf.mxu0
    %v6621 = vadd.f32 %v6580, %v6620
    %v6622 = vpop.f32.mrf.mxu0
    %v6623 = vadd.f32 %v6582, %v6622
    %v6624 = vpop.f32.mrf.mxu0
    %v6625 = vpop.f32.mrf.mxu0
    %6626 = vdwg.mxu0
    %6627 = vmatprep.subr.bf16.mxu0 %v5859
    %6628 = vmatpush1.bf16.msra.mxu0 %v5858
    %6629 = vmatprep.subr.bf16.mxu0 %v5855
    %6630 = vmatpush1.bf16.msra.mxu0 %v5854
    %6631 = vmatprep.subr.bf16.mxu0 %v5851
    %6632 = vmatpush1.bf16.msra.mxu0 %v5850
    %6633 = vmatprep.subr.bf16.mxu0 %v5847
    %6634 = vmatpush1.bf16.msra.mxu0 %v5846
    %6635 = vmatprep.subr.bf16.mxu0 %v5843
    %6636 = vmatpush1.bf16.msra.mxu0 %v5842
    %6637 = vmatprep.subr.bf16.mxu0 %v5839
    %6638 = vmatpush1.bf16.msra.mxu0 %v5838
    %6639 = vmatprep.subr.bf16.mxu0 %v5835
    %6640 = vmatpush1.bf16.msra.mxu0 %v5834
    %6641 = vmatprep.subr.bf16.mxu0 %v5831
    %6642 = vmatpush1.bf16.msra.mxu0 %v5830
    %6643 = vmatprep.subr.bf16.mxu0 %v5891
    %6644 = vmatpush2.bf16.msra.mxu0 %v5890
    %6645 = vmatprep.subr.bf16.mxu0 %v5887
    %6646 = vmatpush2.bf16.msra.mxu0 %v5886
    %6647 = vmatprep.subr.bf16.mxu0 %v5883
    %6648 = vmatpush2.bf16.msra.mxu0 %v5882
    %6649 = vmatprep.subr.bf16.mxu0 %v5879
    %6650 = vmatpush2.bf16.msra.mxu0 %v5878
    %6651 = vmatprep.subr.bf16.mxu0 %v5875
    %6652 = vmatpush2.bf16.msra.mxu0 %v5874
    %6653 = vmatprep.subr.bf16.mxu0 %v5871
    %6654 = vmatpush2.bf16.msra.mxu0 %v5870
    %6655 = vmatprep.subr.bf16.mxu0 %v5867
    %6656 = vmatpush2.bf16.msra.mxu0 %v5866
    %6657 = vmatprep.subr.bf16.mxu0 %v5863
    %6658 = vmatpush2.bf16.msra.mxu0 %v5862
    %6659 = vmatprep.mubr.bf16.mxu0 %v4393
    %6660 = vmatmul.mubr.bf16.gmra.mxu0 %v4392
    %v6661 = vpop.f32.mrf.mxu0
    %v6662 = vadd.f32 %v6621, %v6661
    %v6663 = vpop.f32.mrf.mxu0
    %v6664 = vadd.f32 %v6623, %v6663
    %v6665 = vpop.f32.mrf.mxu0
    %v6666 = vpop.f32.mrf.mxu0
    %6667 = vdwg.mxu0
    %6668 = vmatprep.subr.bf16.mxu0 %v5923
    %6669 = vmatpush1.bf16.msra.mxu0 %v5922
    %6670 = vmatprep.subr.bf16.mxu0 %v5919
    %6671 = vmatpush1.bf16.msra.mxu0 %v5918
    %6672 = vmatprep.subr.bf16.mxu0 %v5915
    %6673 = vmatpush1.bf16.msra.mxu0 %v5914
    %6674 = vmatprep.subr.bf16.mxu0 %v5911
    %6675 = vmatpush1.bf16.msra.mxu0 %v5910
    %6676 = vmatprep.subr.bf16.mxu0 %v5907
    %6677 = vmatpush1.bf16.msra.mxu0 %v5906
    %6678 = vmatprep.subr.bf16.mxu0 %v5903
    %6679 = vmatpush1.bf16.msra.mxu0 %v5902
    %6680 = vmatprep.subr.bf16.mxu0 %v5899
    %6681 = vmatpush1.bf16.msra.mxu0 %v5898
    %6682 = vmatprep.subr.bf16.mxu0 %v5895
    %6683 = vmatpush1.bf16.msra.mxu0 %v5894
    %6684 = vmatprep.subr.bf16.mxu0 %v5955
    %6685 = vmatpush2.bf16.msra.mxu0 %v5954
    %6686 = vmatprep.subr.bf16.mxu0 %v5951
    %6687 = vmatpush2.bf16.msra.mxu0 %v5950
    %6688 = vmatprep.subr.bf16.mxu0 %v5947
    %6689 = vmatpush2.bf16.msra.mxu0 %v5946
    %6690 = vmatprep.subr.bf16.mxu0 %v5943
    %6691 = vmatpush2.bf16.msra.mxu0 %v5942
    %6692 = vmatprep.subr.bf16.mxu0 %v5939
    %6693 = vmatpush2.bf16.msra.mxu0 %v5938
    %6694 = vmatprep.subr.bf16.mxu0 %v5935
    %6695 = vmatpush2.bf16.msra.mxu0 %v5934
    %6696 = vmatprep.subr.bf16.mxu0 %v5931
    %6697 = vmatpush2.bf16.msra.mxu0 %v5930
    %6698 = vmatprep.subr.bf16.mxu0 %v5927
    %6699 = vmatpush2.bf16.msra.mxu0 %v5926
    %6700 = vmatprep.mubr.bf16.mxu0 %v4395
    %6701 = vmatmul.mubr.bf16.gmra.mxu0 %v4394
    %v6702 = vpop.f32.mrf.mxu0
    %v6703 = vadd.f32 %v6662, %v6702
    %v6704 = vpop.f32.mrf.mxu0
    %v6705 = vadd.f32 %v6664, %v6704
    %v6706 = vpop.f32.mrf.mxu0
    %v6707 = vpop.f32.mrf.mxu0
    %6708 = vdwg.mxu0
    %6709 = vmatprep.subr.bf16.mxu0 %v5987
    %6710 = vmatpush1.bf16.msra.mxu0 %v5986
    %6711 = vmatprep.subr.bf16.mxu0 %v5983
    %6712 = vmatpush1.bf16.msra.mxu0 %v5982
    %6713 = vmatprep.subr.bf16.mxu0 %v5979
    %6714 = vmatpush1.bf16.msra.mxu0 %v5978
    %6715 = vmatprep.subr.bf16.mxu0 %v5975
    %6716 = vmatpush1.bf16.msra.mxu0 %v5974
    %6717 = vmatprep.subr.bf16.mxu0 %v5971
    %6718 = vmatpush1.bf16.msra.mxu0 %v5970
    %6719 = vmatprep.subr.bf16.mxu0 %v5967
    %6720 = vmatpush1.bf16.msra.mxu0 %v5966
    %6721 = vmatprep.subr.bf16.mxu0 %v5963
    %6722 = vmatpush1.bf16.msra.mxu0 %v5962
    %6723 = vmatprep.subr.bf16.mxu0 %v5959
    %6724 = vmatpush1.bf16.msra.mxu0 %v5958
    %6725 = vmatprep.subr.bf16.mxu0 %v6019
    %6726 = vmatpush2.bf16.msra.mxu0 %v6018
    %6727 = vmatprep.subr.bf16.mxu0 %v6015
    %6728 = vmatpush2.bf16.msra.mxu0 %v6014
    %6729 = vmatprep.subr.bf16.mxu0 %v6011
    %6730 = vmatpush2.bf16.msra.mxu0 %v6010
    %6731 = vmatprep.subr.bf16.mxu0 %v6007
    %6732 = vmatpush2.bf16.msra.mxu0 %v6006
    %6733 = vmatprep.subr.bf16.mxu0 %v6003
    %6734 = vmatpush2.bf16.msra.mxu0 %v6002
    %6735 = vmatprep.subr.bf16.mxu0 %v5999
    %6736 = vmatpush2.bf16.msra.mxu0 %v5998
    %6737 = vmatprep.subr.bf16.mxu0 %v5995
    %6738 = vmatpush2.bf16.msra.mxu0 %v5994
    %6739 = vmatprep.subr.bf16.mxu0 %v5991
    %6740 = vmatpush2.bf16.msra.mxu0 %v5990
    %6741 = vmatprep.mubr.bf16.mxu0 %v4397
    %6742 = vmatmul.mubr.bf16.gmra.mxu0 %v4396
    %v6743 = vpop.f32.mrf.mxu0
    %v6744 = vadd.f32 %v6703, %v6743
    %v6745 = vpop.f32.mrf.mxu0
    %v6746 = vadd.f32 %v6705, %v6745
    %v6747 = vpop.f32.mrf.mxu0
    %v6748 = vpop.f32.mrf.mxu0
    %6749 = vdwg.mxu0
    %v6750 = vmax.f32 %v6539, 0.0
    %v6751 = vmax.f32 %v6541, 0.0
    %v6752 = vmax.f32 %v6744, 0.0
    %v6753 = vmax.f32 %v6746, 0.0
    %v6754 = vpack.c.bf16 %v6750, %v6750
    %v6755 = vpack.c.bf16 %v6751, %v6751
    %v6756 = vpack.c.bf16 %v6752, %v6752
    %v6757 = vpack.c.bf16 %v6753, %v6753
    %v6758 = vld [vmem:[%s7] sm:$0xff]
    %v6759 = vld [vmem:[%s7 + $0x8] sm:$0xff]
    %v6760 = vld [vmem:[%s7 + $0x10] sm:$0xff]
    %v6761 = vld [vmem:[%s7 + $0x18] sm:$0xff]
    %v6762 = vld [vmem:[%s7 + $0x20] sm:$0xff]
    %v6763 = vld [vmem:[%s7 + $0x28] sm:$0xff]
    %v6764 = vld [vmem:[%s7 + $0x30] sm:$0xff]
    %v6765 = vld [vmem:[%s7 + $0x38] sm:$0xff]
    %v6766 = vld [vmem:[%s7 + $0x40] sm:$0xff]
    %v6767 = vld [vmem:[%s7 + $0x48] sm:$0xff]
    %v6768 = vld [vmem:[%s7 + $0x50] sm:$0xff]
    %v6769 = vld [vmem:[%s7 + $0x58] sm:$0xff]
    %v6770 = vld [vmem:[%s7 + $0x60] sm:$0xff]
    %v6771 = vld [vmem:[%s7 + $0x68] sm:$0xff]
    %v6772 = vld [vmem:[%s7 + $0x70] sm:$0xff]
    %v6773 = vld [vmem:[%s7 + $0x78] sm:$0xff]
    %v6774 = vld [vmem:[%s7 + $0x80] sm:$0xff]
    %v6775 = vld [vmem:[%s7 + $0x88] sm:$0xff]
    %v6776 = vld [vmem:[%s7 + $0x90] sm:$0xff]
    %v6777 = vld [vmem:[%s7 + $0x98] sm:$0xff]
    %v6778 = vld [vmem:[%s7 + $0xa0] sm:$0xff]
    %v6779 = vld [vmem:[%s7 + $0xa8] sm:$0xff]
    %v6780 = vld [vmem:[%s7 + $0xb0] sm:$0xff]
    %v6781 = vld [vmem:[%s7 + $0xb8] sm:$0xff]
    %v6782 = vld [vmem:[%s7 + $0xc0] sm:$0xff]
    %v6783 = vld [vmem:[%s7 + $0xc8] sm:$0xff]
    %v6784 = vld [vmem:[%s7 + $0xd0] sm:$0xff]
    %v6785 = vld [vmem:[%s7 + $0xd8] sm:$0xff]
    %v6786 = vld [vmem:[%s7 + $0xe0] sm:$0xff]
    %v6787 = vld [vmem:[%s7 + $0xe8] sm:$0xff]
    %v6788 = vld [vmem:[%s7 + $0xf0] sm:$0xff]
    %v6789 = vld [vmem:[%s7 + $0xf8] sm:$0xff]
    %v6790 = vld [vmem:[%s7 + $0x100] sm:$0xff]
    %v6791 = vld [vmem:[%s7 + $0x108] sm:$0xff]
    %v6792 = vld [vmem:[%s7 + $0x110] sm:$0xff]
    %v6793 = vld [vmem:[%s7 + $0x118] sm:$0xff]
    %v6794 = vld [vmem:[%s7 + $0x120] sm:$0xff]
    %v6795 = vld [vmem:[%s7 + $0x128] sm:$0xff]
    %v6796 = vld [vmem:[%s7 + $0x130] sm:$0xff]
    %v6797 = vld [vmem:[%s7 + $0x138] sm:$0xff]
    %v6798 = vld [vmem:[%s7 + $0x140] sm:$0xff]
    %v6799 = vld [vmem:[%s7 + $0x148] sm:$0xff]
    %v6800 = vld [vmem:[%s7 + $0x150] sm:$0xff]
    %v6801 = vld [vmem:[%s7 + $0x158] sm:$0xff]
    %v6802 = vld [vmem:[%s7 + $0x160] sm:$0xff]
    %v6803 = vld [vmem:[%s7 + $0x168] sm:$0xff]
    %v6804 = vld [vmem:[%s7 + $0x170] sm:$0xff]
    %v6805 = vld [vmem:[%s7 + $0x178] sm:$0xff]
    %v6806 = vld [vmem:[%s7 + $0x180] sm:$0xff]
    %v6807 = vld [vmem:[%s7 + $0x188] sm:$0xff]
    %v6808 = vld [vmem:[%s7 + $0x190] sm:$0xff]
    %v6809 = vld [vmem:[%s7 + $0x198] sm:$0xff]
    %v6810 = vld [vmem:[%s7 + $0x1a0] sm:$0xff]
    %v6811 = vld [vmem:[%s7 + $0x1a8] sm:$0xff]
    %v6812 = vld [vmem:[%s7 + $0x1b0] sm:$0xff]
    %v6813 = vld [vmem:[%s7 + $0x1b8] sm:$0xff]
    %v6814 = vld [vmem:[%s7 + $0x1c0] sm:$0xff]
    %v6815 = vld [vmem:[%s7 + $0x1c8] sm:$0xff]
    %v6816 = vld [vmem:[%s7 + $0x1d0] sm:$0xff]
    %v6817 = vld [vmem:[%s7 + $0x1d8] sm:$0xff]
    %v6818 = vld [vmem:[%s7 + $0x1e0] sm:$0xff]
    %v6819 = vld [vmem:[%s7 + $0x1e8] sm:$0xff]
    %v6820 = vld [vmem:[%s7 + $0x1f0] sm:$0xff]
    %v6821 = vld [vmem:[%s7 + $0x1f8] sm:$0xff]
    %v6822 = vld [vmem:[%s8] sm:$0x3]
    %v6824 = vlaneseq
    %v6825 = vshrl.u32 %v6824, 7
    %v6826 = vsub.s32 0, %v6825
    %v6827 = vrot.slane %v6822, %v6826
    %v6828 = vlaneseq
    %v6829 = vshrl.u32 %v6828, 7
    %v6830 = vsub.s32 1, %v6829
    %v6831 = vrot.slane %v6822, %v6830
    %v6898 = vunpack.c.l.b16 %v6758
    %v6899 = vunpack.c.h.b16 %v6758
    %v6900 = vunpack.c.l.b16 %v6759
    %v6901 = vunpack.c.h.b16 %v6759
    %v6902 = vunpack.c.l.b16 %v6760
    %v6903 = vunpack.c.h.b16 %v6760
    %v6904 = vunpack.c.l.b16 %v6761
    %v6905 = vunpack.c.h.b16 %v6761
    %v6906 = vunpack.c.l.b16 %v6762
    %v6907 = vunpack.c.h.b16 %v6762
    %v6908 = vunpack.c.l.b16 %v6763
    %v6909 = vunpack.c.h.b16 %v6763
    %v6910 = vunpack.c.l.b16 %v6764
    %v6911 = vunpack.c.h.b16 %v6764
    %v6912 = vunpack.c.l.b16 %v6765
    %v6913 = vunpack.c.h.b16 %v6765
    %v6914 = vunpack.c.l.b16 %v6766
    %v6915 = vunpack.c.h.b16 %v6766
    %v6916 = vunpack.c.l.b16 %v6767
    %v6917 = vunpack.c.h.b16 %v6767
    %v6918 = vunpack.c.l.b16 %v6768
    %v6919 = vunpack.c.h.b16 %v6768
    %v6920 = vunpack.c.l.b16 %v6769
    %v6921 = vunpack.c.h.b16 %v6769
    %v6922 = vunpack.c.l.b16 %v6770
    %v6923 = vunpack.c.h.b16 %v6770
    %v6924 = vunpack.c.l.b16 %v6771
    %v6925 = vunpack.c.h.b16 %v6771
    %v6926 = vunpack.c.l.b16 %v6772
    %v6927 = vunpack.c.h.b16 %v6772
    %v6928 = vunpack.c.l.b16 %v6773
    %v6929 = vunpack.c.h.b16 %v6773
    %v6930 = vunpack.c.l.b16 %v6774
    %v6931 = vunpack.c.h.b16 %v6774
    %v6932 = vunpack.c.l.b16 %v6775
    %v6933 = vunpack.c.h.b16 %v6775
    %v6934 = vunpack.c.l.b16 %v6776
    %v6935 = vunpack.c.h.b16 %v6776
    %v6936 = vunpack.c.l.b16 %v6777
    %v6937 = vunpack.c.h.b16 %v6777
    %v6938 = vunpack.c.l.b16 %v6778
    %v6939 = vunpack.c.h.b16 %v6778
    %v6940 = vunpack.c.l.b16 %v6779
    %v6941 = vunpack.c.h.b16 %v6779
    %v6942 = vunpack.c.l.b16 %v6780
    %v6943 = vunpack.c.h.b16 %v6780
    %v6944 = vunpack.c.l.b16 %v6781
    %v6945 = vunpack.c.h.b16 %v6781
    %v6946 = vunpack.c.l.b16 %v6782
    %v6947 = vunpack.c.h.b16 %v6782
    %v6948 = vunpack.c.l.b16 %v6783
    %v6949 = vunpack.c.h.b16 %v6783
    %v6950 = vunpack.c.l.b16 %v6784
    %v6951 = vunpack.c.h.b16 %v6784
    %v6952 = vunpack.c.l.b16 %v6785
    %v6953 = vunpack.c.h.b16 %v6785
    %v6954 = vunpack.c.l.b16 %v6786
    %v6955 = vunpack.c.h.b16 %v6786
    %v6956 = vunpack.c.l.b16 %v6787
    %v6957 = vunpack.c.h.b16 %v6787
    %v6958 = vunpack.c.l.b16 %v6788
    %v6959 = vunpack.c.h.b16 %v6788
    %v6960 = vunpack.c.l.b16 %v6789
    %v6961 = vunpack.c.h.b16 %v6789
    %v6962 = vunpack.c.l.b16 %v6790
    %v6963 = vunpack.c.h.b16 %v6790
    %v6964 = vunpack.c.l.b16 %v6791
    %v6965 = vunpack.c.h.b16 %v6791
    %v6966 = vunpack.c.l.b16 %v6792
    %v6967 = vunpack.c.h.b16 %v6792
    %v6968 = vunpack.c.l.b16 %v6793
    %v6969 = vunpack.c.h.b16 %v6793
    %v6970 = vunpack.c.l.b16 %v6794
    %v6971 = vunpack.c.h.b16 %v6794
    %v6972 = vunpack.c.l.b16 %v6795
    %v6973 = vunpack.c.h.b16 %v6795
    %v6974 = vunpack.c.l.b16 %v6796
    %v6975 = vunpack.c.h.b16 %v6796
    %v6976 = vunpack.c.l.b16 %v6797
    %v6977 = vunpack.c.h.b16 %v6797
    %v6978 = vunpack.c.l.b16 %v6798
    %v6979 = vunpack.c.h.b16 %v6798
    %v6980 = vunpack.c.l.b16 %v6799
    %v6981 = vunpack.c.h.b16 %v6799
    %v6982 = vunpack.c.l.b16 %v6800
    %v6983 = vunpack.c.h.b16 %v6800
    %v6984 = vunpack.c.l.b16 %v6801
    %v6985 = vunpack.c.h.b16 %v6801
    %v6986 = vunpack.c.l.b16 %v6802
    %v6987 = vunpack.c.h.b16 %v6802
    %v6988 = vunpack.c.l.b16 %v6803
    %v6989 = vunpack.c.h.b16 %v6803
    %v6990 = vunpack.c.l.b16 %v6804
    %v6991 = vunpack.c.h.b16 %v6804
    %v6992 = vunpack.c.l.b16 %v6805
    %v6993 = vunpack.c.h.b16 %v6805
    %v6994 = vunpack.c.l.b16 %v6806
    %v6995 = vunpack.c.h.b16 %v6806
    %v6996 = vunpack.c.l.b16 %v6807
    %v6997 = vunpack.c.h.b16 %v6807
    %v6998 = vunpack.c.l.b16 %v6808
    %v6999 = vunpack.c.h.b16 %v6808
    %v7000 = vunpack.c.l.b16 %v6809
    %v7001 = vunpack.c.h.b16 %v6809
    %v7002 = vunpack.c.l.b16 %v6810
    %v7003 = vunpack.c.h.b16 %v6810
    %v7004 = vunpack.c.l.b16 %v6811
    %v7005 = vunpack.c.h.b16 %v6811
    %v7006 = vunpack.c.l.b16 %v6812
    %v7007 = vunpack.c.h.b16 %v6812
    %v7008 = vunpack.c.l.b16 %v6813
    %v7009 = vunpack.c.h.b16 %v6813
    %v7010 = vunpack.c.l.b16 %v6814
    %v7011 = vunpack.c.h.b16 %v6814
    %v7012 = vunpack.c.l.b16 %v6815
    %v7013 = vunpack.c.h.b16 %v6815
    %v7014 = vunpack.c.l.b16 %v6816
    %v7015 = vunpack.c.h.b16 %v6816
    %v7016 = vunpack.c.l.b16 %v6817
    %v7017 = vunpack.c.h.b16 %v6817
    %v7018 = vunpack.c.l.b16 %v6818
    %v7019 = vunpack.c.h.b16 %v6818
    %v7020 = vunpack.c.l.b16 %v6819
    %v7021 = vunpack.c.h.b16 %v6819
    %v7022 = vunpack.c.l.b16 %v6820
    %v7023 = vunpack.c.h.b16 %v6820
    %v7024 = vunpack.c.l.b16 %v6821
    %v7025 = vunpack.c.h.b16 %v6821
    %v7026 = vpack.c.b16 %v6900, %v6898
    %v7027 = vpack.c.b16 %v6901, %v6899
    %v7028 = vpack.c.b16 %v6904, %v6902
    %v7029 = vpack.c.b16 %v6905, %v6903
    %v7030 = vpack.c.b16 %v6908, %v6906
    %v7031 = vpack.c.b16 %v6909, %v6907
    %v7032 = vpack.c.b16 %v6912, %v6910
    %v7033 = vpack.c.b16 %v6913, %v6911
    %v7034 = vpack.c.b16 %v6916, %v6914
    %v7035 = vpack.c.b16 %v6917, %v6915
    %v7036 = vpack.c.b16 %v6920, %v6918
    %v7037 = vpack.c.b16 %v6921, %v6919
    %v7038 = vpack.c.b16 %v6924, %v6922
    %v7039 = vpack.c.b16 %v6925, %v6923
    %v7040 = vpack.c.b16 %v6928, %v6926
    %v7041 = vpack.c.b16 %v6929, %v6927
    %v7042 = vpack.c.b16 %v6932, %v6930
    %v7043 = vpack.c.b16 %v6933, %v6931
    %v7044 = vpack.c.b16 %v6936, %v6934
    %v7045 = vpack.c.b16 %v6937, %v6935
    %v7046 = vpack.c.b16 %v6940, %v6938
    %v7047 = vpack.c.b16 %v6941, %v6939
    %v7048 = vpack.c.b16 %v6944, %v6942
    %v7049 = vpack.c.b16 %v6945, %v6943
    %v7050 = vpack.c.b16 %v6948, %v6946
    %v7051 = vpack.c.b16 %v6949, %v6947
    %v7052 = vpack.c.b16 %v6952, %v6950
    %v7053 = vpack.c.b16 %v6953, %v6951
    %v7054 = vpack.c.b16 %v6956, %v6954
    %v7055 = vpack.c.b16 %v6957, %v6955
    %v7056 = vpack.c.b16 %v6960, %v6958
    %v7057 = vpack.c.b16 %v6961, %v6959
    %v7058 = vpack.c.b16 %v6964, %v6962
    %v7059 = vpack.c.b16 %v6965, %v6963
    %v7060 = vpack.c.b16 %v6968, %v6966
    %v7061 = vpack.c.b16 %v6969, %v6967
    %v7062 = vpack.c.b16 %v6972, %v6970
    %v7063 = vpack.c.b16 %v6973, %v6971
    %v7064 = vpack.c.b16 %v6976, %v6974
    %v7065 = vpack.c.b16 %v6977, %v6975
    %v7066 = vpack.c.b16 %v6980, %v6978
    %v7067 = vpack.c.b16 %v6981, %v6979
    %v7068 = vpack.c.b16 %v6984, %v6982
    %v7069 = vpack.c.b16 %v6985, %v6983
    %v7070 = vpack.c.b16 %v6988, %v6986
    %v7071 = vpack.c.b16 %v6989, %v6987
    %v7072 = vpack.c.b16 %v6992, %v6990
    %v7073 = vpack.c.b16 %v6993, %v6991
    %v7074 = vpack.c.b16 %v6996, %v6994
    %v7075 = vpack.c.b16 %v6997, %v6995
    %v7076 = vpack.c.b16 %v7000, %v6998
    %v7077 = vpack.c.b16 %v7001, %v6999
    %v7078 = vpack.c.b16 %v7004, %v7002
    %v7079 = vpack.c.b16 %v7005, %v7003
    %v7080 = vpack.c.b16 %v7008, %v7006
    %v7081 = vpack.c.b16 %v7009, %v7007
    %v7082 = vpack.c.b16 %v7012, %v7010
    %v7083 = vpack.c.b16 %v7013, %v7011
    %v7084 = vpack.c.b16 %v7016, %v7014
    %v7085 = vpack.c.b16 %v7017, %v7015
    %v7086 = vpack.c.b16 %v7020, %v7018
    %v7087 = vpack.c.b16 %v7021, %v7019
    %v7088 = vpack.c.b16 %v7024, %v7022
    %v7089 = vpack.c.b16 %v7025, %v7023
    %7154 = vmatprep.subr.bf16.mxu0 %v7041
    %7155 = vmatpush1.bf16.msra.mxu0 %v7040
    %7156 = vmatprep.subr.bf16.mxu0 %v7039
    %7157 = vmatpush1.bf16.msra.mxu0 %v7038
    %7158 = vmatprep.subr.bf16.mxu0 %v7037
    %7159 = vmatpush1.bf16.msra.mxu0 %v7036
    %7160 = vmatprep.subr.bf16.mxu0 %v7035
    %7161 = vmatpush1.bf16.msra.mxu0 %v7034
    %7162 = vmatprep.subr.bf16.mxu0 %v7033
    %7163 = vmatpush1.bf16.msra.mxu0 %v7032
    %7164 = vmatprep.subr.bf16.mxu0 %v7031
    %7165 = vmatpush1.bf16.msra.mxu0 %v7030
    %7166 = vmatprep.subr.bf16.mxu0 %v7029
    %7167 = vmatpush1.bf16.msra.mxu0 %v7028
    %7168 = vmatprep.subr.bf16.mxu0 %v7027
    %7169 = vmatpush1.bf16.msra.mxu0 %v7026
    %7170 = vmatprep.subr.bf16.mxu0 %v7057
    %7171 = vmatpush2.bf16.msra.mxu0 %v7056
    %7172 = vmatprep.subr.bf16.mxu0 %v7055
    %7173 = vmatpush2.bf16.msra.mxu0 %v7054
    %7174 = vmatprep.subr.bf16.mxu0 %v7053
    %7175 = vmatpush2.bf16.msra.mxu0 %v7052
    %7176 = vmatprep.subr.bf16.mxu0 %v7051
    %7177 = vmatpush2.bf16.msra.mxu0 %v7050
    %7178 = vmatprep.subr.bf16.mxu0 %v7049
    %7179 = vmatpush2.bf16.msra.mxu0 %v7048
    %7180 = vmatprep.subr.bf16.mxu0 %v7047
    %7181 = vmatpush2.bf16.msra.mxu0 %v7046
    %7182 = vmatprep.subr.bf16.mxu0 %v7045
    %7183 = vmatpush2.bf16.msra.mxu0 %v7044
    %7184 = vmatprep.subr.bf16.mxu0 %v7043
    %7185 = vmatpush2.bf16.msra.mxu0 %v7042
    %7186 = vmatprep.mubr.bf16.mxu0 %v6755
    %7187 = vmatmul.mubr.bf16.gmra.mxu0 %v6754
    %v7188 = vpop.f32.mrf.mxu0
    %v7189 = vadd.f32 %v6827, %v7188
    %v7190 = vpop.f32.mrf.mxu0
    %v7191 = vadd.f32 %v6831, %v7190
    %v7192 = vpop.f32.mrf.mxu0
    %v7193 = vpop.f32.mrf.mxu0
    %7194 = vdwg.mxu0
    %7195 = vmatprep.subr.bf16.mxu0 %v7073
    %7196 = vmatpush1.bf16.msra.mxu0 %v7072
    %7197 = vmatprep.subr.bf16.mxu0 %v7071
    %7198 = vmatpush1.bf16.msra.mxu0 %v7070
    %7199 = vmatprep.subr.bf16.mxu0 %v7069
    %7200 = vmatpush1.bf16.msra.mxu0 %v7068
    %7201 = vmatprep.subr.bf16.mxu0 %v7067
    %7202 = vmatpush1.bf16.msra.mxu0 %v7066
    %7203 = vmatprep.subr.bf16.mxu0 %v7065
    %7204 = vmatpush1.bf16.msra.mxu0 %v7064
    %7205 = vmatprep.subr.bf16.mxu0 %v7063
    %7206 = vmatpush1.bf16.msra.mxu0 %v7062
    %7207 = vmatprep.subr.bf16.mxu0 %v7061
    %7208 = vmatpush1.bf16.msra.mxu0 %v7060
    %7209 = vmatprep.subr.bf16.mxu0 %v7059
    %7210 = vmatpush1.bf16.msra.mxu0 %v7058
    %7211 = vmatprep.subr.bf16.mxu0 %v7089
    %7212 = vmatpush2.bf16.msra.mxu0 %v7088
    %7213 = vmatprep.subr.bf16.mxu0 %v7087
    %7214 = vmatpush2.bf16.msra.mxu0 %v7086
    %7215 = vmatprep.subr.bf16.mxu0 %v7085
    %7216 = vmatpush2.bf16.msra.mxu0 %v7084
    %7217 = vmatprep.subr.bf16.mxu0 %v7083
    %7218 = vmatpush2.bf16.msra.mxu0 %v7082
    %7219 = vmatprep.subr.bf16.mxu0 %v7081
    %7220 = vmatpush2.bf16.msra.mxu0 %v7080
    %7221 = vmatprep.subr.bf16.mxu0 %v7079
    %7222 = vmatpush2.bf16.msra.mxu0 %v7078
    %7223 = vmatprep.subr.bf16.mxu0 %v7077
    %7224 = vmatpush2.bf16.msra.mxu0 %v7076
    %7225 = vmatprep.subr.bf16.mxu0 %v7075
    %7226 = vmatpush2.bf16.msra.mxu0 %v7074
    %7227 = vmatprep.mubr.bf16.mxu0 %v6757
    %7228 = vmatmul.mubr.bf16.gmra.mxu0 %v6756
    %v7229 = vpop.f32.mrf.mxu0
    %v7230 = vadd.f32 %v7189, %v7229
    %v7231 = vpop.f32.mrf.mxu0
    %v7232 = vadd.f32 %v7191, %v7231
    %v7233 = vpop.f32.mrf.mxu0
    %v7234 = vpop.f32.mrf.mxu0
    %7235 = vdwg.mxu0
    %v7238 = vcombine.low %v7230, %v7232
    %v7240 = vunpack.c.l.s4 1983009808
    %v7241 = vunpack.c.0.s8 %v7240
    %v7242 = vlaneseq
    %v7243 = vshrl.u32 %v7242, 7
    %v7244 = vsub.s32 %v7241, %v7243
    %v7245 = vrot.slane %v7238, %v7244
    %7247 = vst [vmem:[#allocation5] sm:$0xf] %v7245
    // Predicated region
    $region38: #{cifarnet_forward.1} parent=1 // pred_check
      _
    $region39: #{cifarnet_forward.1} parent=1 // pred_check_branch
      %7249 = sbr.rel (0) target = $region41
    $region40: #{cifarnet_forward.1} parent=1 // pred_region
      %s7251 = ssub.s32 64, 64
      %7252 = vsyncadd [#allocation6], %s7251
      %s7254 = sshll.u32 [#allocation5], 4
      %s7255 = int_to_ptr.vmem [resolvable:$true] %s7254
      %7257 = dma.vmem_to_hbm [thread:$0]  %s7255, 64, %s9, [#allocation6]
    $region41: #{cifarnet_forward.1} parent=1 // pred_fallthru
      _
    // Predicated region
    $region42: #{cifarnet_forward.1} parent=1 // pred_check
      _
    $region43: #{cifarnet_forward.1} parent=1 // pred_check_branch
      %7259 = sbr.rel (0) target = $region45
    $region44: #{cifarnet_forward.1} parent=1 // pred_region
      %7260 = dma.done [#allocation6], 64
    $region45: #{cifarnet_forward.1} parent=1 // pred_fallthru
      _
    %7261 = vsyncpa [#allocation6], 1

</llo_original>
